<compile_context>
chip_gen: v7x
topology: tpu7x:2x2x1
jax: 0.10.0
libtpu: 0.0.40
codegen_flags: <defaults>
</compile_context>

<pallas_src>
import jax
import jax.numpy as jnp
from jax.experimental import pallas as pl
from jax.experimental.pallas import tpu as pltpu


# ------------------------------ fused kernel ------------------------------ #

def _siamese_kernel(patches_ref, w1_ref, b1_ref, w2_ref, b2_ref,
                    w3_ref, b3_ref, wfc_ref, bfc_ref, out_ref,
                    hm1_ref, p1p_ref, im2_ref, hm2_ref, p2p_ref, im3_ref,
                    feat_ref):
    f32 = jnp.float32
    Bt = patches_ref.shape[0]

    # Zero the padded conv-input scratches (their borders implement pad=1;
    # the interiors are fully overwritten every step -> megacore-safe).
    p1p_ref[...] = jnp.zeros(p1p_ref.shape, f32)
    p2p_ref[...] = jnp.zeros(p2p_ref.shape, f32)

    # ---- conv1 (1->16, 3x3, pad=1) + ReLU: one (Bt*1024, 9)x(9,16) GEMM ----
    patches = patches_ref[...].reshape(Bt * 1024, 9)
    a1 = jnp.dot(patches, w1_ref[...], preferred_element_type=f32)
    a1 = jnp.maximum(a1 + b1_ref[...], 0.0)                 # (Bt*1024, 16)

    # ---- MaxPool2d(2) #1: H in-register, W via two stride-2 reads ----------
    a1 = a1.reshape(Bt, 16, 2, 32, 16)                      # (b, h2, hp, w, c)
    hm1_ref[...] = jnp.maximum(a1[:, :, 0], a1[:, :, 1])    # (Bt, 16, 32, 16)
    p1p_ref[:, pl.ds(1, 16), pl.ds(1, 16), :] = jnp.maximum(
        hm1_ref[:, :, pl.ds(0, 16, 2), :],
        hm1_ref[:, :, pl.ds(1, 16, 2), :])                  # (Bt, 16, 16, 16)

    # ---- conv2 (16->32) + ReLU: im2col (Bt*256, 144) + ONE GEMM ------------
    for kh in range(3):
        for kw in range(3):
            t = kh * 3 + kw
            win = p1p_ref[:, pl.ds(kh, 16), pl.ds(kw, 16), :]   # (Bt,16,16,16)
            im2_ref[:, pl.ds(16 * t, 16)] = win.reshape(Bt * 256, 16)
    a2 = jnp.dot(im2_ref[...], w2_ref[...], preferred_element_type=f32)
    a2 = jnp.maximum(a2 + b2_ref[...], 0.0)                 # (Bt*256, 32)

    # ---- MaxPool2d(2) #2 ----------------------------------------------------
    a2 = a2.reshape(Bt, 8, 2, 16, 32)                       # (b, h2, hp, w, c)
    hm2_ref[...] = jnp.maximum(a2[:, :, 0], a2[:, :, 1])    # (Bt, 8, 16, 32)
    p2p_ref[:, pl.ds(1, 8), pl.ds(1, 8), :] = jnp.maximum(
        hm2_ref[:, :, pl.ds(0, 8, 2), :],
        hm2_ref[:, :, pl.ds(1, 8, 2), :])                   # (Bt, 8, 8, 32)

    # ---- conv3 (32->64) + ReLU: im2col (Bt*64, 288) + ONE GEMM -------------
    for kh in range(3):
        for kw in range(3):
            t = kh * 3 + kw
            win = p2p_ref[:, pl.ds(kh, 8), pl.ds(kw, 8), :]     # (Bt,8,8,32)
            im3_ref[:, pl.ds(32 * t, 32)] = win.reshape(Bt * 64, 32)
    a3 = jnp.dot(im3_ref[...], w3_ref[...], preferred_element_type=f32)
    a3 = jnp.maximum(a3 + b3_ref[...], 0.0)                 # (Bt*64, 64)

    # ---- AdaptiveAvgPool2d((4,4)) on 8x8 == exact 2x2 mean ------------------
    a3 = a3.reshape(Bt, 4, 2, 8, 64)                        # (b, h2, hp, w, c)
    hsum = a3[:, :, 0] + a3[:, :, 1]                        # (Bt, 4, 8, 64)
    for w2 in range(4):
        col = (hsum[:, :, 2 * w2, :] + hsum[:, :, 2 * w2 + 1, :]) * 0.25
        for h2 in range(4):                                 # col: (Bt, 4, 64)
            feat_ref[:, pl.ds(64 * (h2 * 4 + w2), 64)] = col[:, h2, :]

    # ---- Flatten (torch order folded into wfc) + Linear: ONE GEMM -----------
    emb = jnp.dot(feat_ref[...], wfc_ref[...], preferred_element_type=f32)
    out_ref[:, 0, :] = emb + bfc_ref[...]


# ----------------------------- host-side glue ------------------------------ #

def prepare_params(p):
    """One-time re-layout of torch-style params into kernel layout."""
    ed = p["bfc"].shape[0]
    f32 = jnp.float32
    return {
        # conv weights: (Cout,Cin,3,3) -> rows ordered (kh, kw, cin)
        "w1": jnp.transpose(p["w1"], (2, 3, 1, 0)).reshape(9, 16).astype(f32),
        "b1": p["b1"].reshape(1, 16).astype(f32),
        "w2": jnp.transpose(p["w2"], (2, 3, 1, 0)).reshape(144, 32).astype(f32),
        "b2": p["b2"].reshape(1, 32).astype(f32),
        "w3": jnp.transpose(p["w3"], (2, 3, 1, 0)).reshape(288, 64).astype(f32),
        "b3": p["b3"].reshape(1, 64).astype(f32),
        # fc weight: (ed, 64*4*4) torch (c,h,w)-flatten -> rows (h, w, c)
        "wfc": jnp.transpose(p["wfc"].reshape(ed, 64, 4, 4),
                             (2, 3, 1, 0)).reshape(1024, ed).astype(f32),
        "bfc": p["bfc"].reshape(1, ed).astype(f32),
    }


def _conv1_patches(x):
    """(B,1,32,32) -> (B,1024,9) im2col patches, tap order (kh, kw)."""
    B = x.shape[0]
    xp = jnp.pad(x[:, 0], ((0, 0), (1, 1), (1, 1)))
    cols = [xp[:, kh:kh + 32, kw:kw + 32].reshape(B, 1024, 1)
            for kh in range(3) for kw in range(3)]
    return jnp.concatenate(cols, axis=-1)


def _pick_bt(B, max_bt=4):
    """Largest batch tile <= max_bt dividing B, preferring an even grid."""
    best = 0
    for bt in range(1, max_bt + 1):
        if B % bt == 0 and (B // bt) % 2 == 0:
            best = bt
    if best:
        return best
    for bt in range(max_bt, 0, -1):
        if B % bt == 0:
            return bt
    return 1


def forward_batch(kp, x):
    B, C, H, W = x.shape
    assert (C, H, W) == (1, 32, 32), "kernel specialized to 1x32x32 inputs"
    # TODO(synk): generalize spatial sizes / AdaptiveAvgPool for non-32x32 inputs.
    ed = kp["bfc"].shape[-1]
    Bt = _pick_bt(B)
    nb = B // Bt
    patches = _conv1_patches(x.astype(jnp.float32))

    grid_spec = pltpu.PrefetchScalarGridSpec(
        num_scalar_prefetch=0,
        grid=(nb,),                                   # Bt images per grid step
        in_specs=[
            pl.BlockSpec((Bt, 1024, 9), lambda i: (i, 0, 0)),
            pl.BlockSpec((9, 16), lambda i: (0, 0)),
            pl.BlockSpec((1, 16), lambda i: (0, 0)),
            pl.BlockSpec((144, 32), lambda i: (0, 0)),
            pl.BlockSpec((1, 32), lambda i: (0, 0)),
            pl.BlockSpec((288, 64), lambda i: (0, 0)),
            pl.BlockSpec((1, 64), lambda i: (0, 0)),
            pl.BlockSpec((1024, ed), lambda i: (0, 0)),
            pl.BlockSpec((1, ed), lambda i: (0, 0)),
        ],
        out_specs=pl.BlockSpec((Bt, 1, ed), lambda i: (i, 0, 0)),
        scratch_shapes=[
            pltpu.VMEM((Bt, 16, 32, 16), jnp.float32),   # hm1: H-pooled conv1
            pltpu.VMEM((Bt, 18, 18, 16), jnp.float32),   # p1p: padded conv2 in
            pltpu.VMEM((Bt * 256, 144), jnp.float32),    # im2col for conv2
            pltpu.VMEM((Bt, 8, 16, 32), jnp.float32),    # hm2: H-pooled conv2
            pltpu.VMEM((Bt, 10, 10, 32), jnp.float32),   # p2p: padded conv3 in
            pltpu.VMEM((Bt * 64, 288), jnp.float32),     # im2col for conv3
            pltpu.VMEM((Bt, 1024), jnp.float32),         # lane-dense FC input
        ],
    )
    out = pl.pallas_call(
        _siamese_kernel,
        out_shape=jax.ShapeDtypeStruct((B, 1, ed), jnp.float32),
        grid_spec=grid_spec,
        compiler_params=pltpu.CompilerParams(
            dimension_semantics=("parallel",)),          # v7x: use both TCs
    )(patches, kp["w1"], kp["b1"], kp["w2"], kp["b2"],
      kp["w3"], kp["b3"], kp["wfc"], kp["bfc"])
    return out.reshape(B, ed)


def forward(kp, x1, x2):
    """Siamese forward: both branches batched through one fused kernel."""
    n = x1.shape[0]
    emb = forward_batch(kp, jnp.concatenate([x1, x2], axis=0))
    return emb[:n], emb[n:]


# ----------------------------- parameter init ------------------------------ #

def init_params(key, embedding_dim=128):
    ks = jax.random.split(key, 8)

    def nrm(k, shape, scale):
        return scale * jax.random.normal(k, shape, dtype=jnp.float32)

    return {
        "w1": nrm(ks[0], (16, 1, 3, 3), 0.30),
        "b1": nrm(ks[1], (16,), 0.10),
        "w2": nrm(ks[2], (32, 16, 3, 3), 0.10),
        "b2": nrm(ks[3], (32,), 0.10),
        "w3": nrm(ks[4], (64, 32, 3, 3), 0.05),
        "b3": nrm(ks[5], (64,), 0.10),
        "wfc": nrm(ks[6], (embedding_dim, 64 * 4 * 4), 0.02),
        "bfc": nrm(ks[7], (embedding_dim,), 0.02),
    }


# ---------------------------------- main ----------------------------------- #

if __name__ == "__main__":
    key = jax.random.PRNGKey(0)
    k1, k2, kw = jax.random.split(key, 3)

    # Single-channel 32x32: 32 -> pool -> 16 -> pool -> 8 -> adaptive (4,4).
    x1 = jax.random.normal(k1, (2, 1, 32, 32), dtype=jnp.float32)
    x2 = jax.random.normal(k2, (2, 1, 32, 32), dtype=jnp.float32)

    params = init_params(kw, embedding_dim=128)
    kparams = prepare_params(params)          # weight re-layout hoisted (once)

    fwd = jax.jit(lambda a, b: forward(kparams, a, b))
    e1, e2 = fwd(x1, x2)
    jax.block_until_ready((e1, e2))

    assert e1.shape == (2, 128) and e2.shape == (2, 128)
    assert e1.dtype == jnp.float32 and e2.dtype == jnp.float32
    print("KERNEL_OK")
</pallas_src>

<mosaic_0001>
module attributes {stable_mosaic.version = 11 : i64} {
  func.func @_siamese_kernel(%arg0: i32, %arg1: memref<2x1024x9xf32, #tpu.memory_space<vmem>>, %arg2: memref<9x16xf32, #tpu.memory_space<vmem>>, %arg3: memref<1x16xf32, #tpu.memory_space<vmem>>, %arg4: memref<144x32xf32, #tpu.memory_space<vmem>>, %arg5: memref<1x32xf32, #tpu.memory_space<vmem>>, %arg6: memref<288x64xf32, #tpu.memory_space<vmem>>, %arg7: memref<1x64xf32, #tpu.memory_space<vmem>>, %arg8: memref<1024x128xf32, #tpu.memory_space<vmem>>, %arg9: memref<1x128xf32, #tpu.memory_space<vmem>>, %arg10: memref<2x1x128xf32, #tpu.memory_space<vmem>>, %arg11: memref<2x16x32x16xf32, #tpu.memory_space<vmem>>, %arg12: memref<2x18x18x16xf32, #tpu.memory_space<vmem>>, %arg13: memref<512x144xf32, #tpu.memory_space<vmem>>, %arg14: memref<2x8x16x32xf32, #tpu.memory_space<vmem>>, %arg15: memref<2x10x10x32xf32, #tpu.memory_space<vmem>>, %arg16: memref<128x288xf32, #tpu.memory_space<vmem>>, %arg17: memref<2x1024xf32, #tpu.memory_space<vmem>>) attributes {dimension_semantics = [#tpu.dimension_semantics<parallel>], iteration_bounds = array<i64: 2>, scalar_prefetch = 0 : i64, scratch_operands = 7 : i64, tpu.core_type = #tpu.core_type<tc>, window_params = [{transform_indices = @transform_0, window_bounds = array<i64: 2, 1024, 9>}, {pipeline_mode = #tpu.pipeline_mode<synchronous>, transform_indices = @transform_1, window_bounds = array<i64: 9, 16>}, {pipeline_mode = #tpu.pipeline_mode<synchronous>, transform_indices = @transform_2, window_bounds = array<i64: 1, 16>}, {pipeline_mode = #tpu.pipeline_mode<synchronous>, transform_indices = @transform_3, window_bounds = array<i64: 144, 32>}, {pipeline_mode = #tpu.pipeline_mode<synchronous>, transform_indices = @transform_4, window_bounds = array<i64: 1, 32>}, {pipeline_mode = #tpu.pipeline_mode<synchronous>, transform_indices = @transform_5, window_bounds = array<i64: 288, 64>}, {pipeline_mode = #tpu.pipeline_mode<synchronous>, transform_indices = @transform_6, window_bounds = array<i64: 1, 64>}, {pipeline_mode = #tpu.pipeline_mode<synchronous>, transform_indices = @transform_7, window_bounds = array<i64: 1024, 128>}, {pipeline_mode = #tpu.pipeline_mode<synchronous>, transform_indices = @transform_8, window_bounds = array<i64: 1, 128>}, {transform_indices = @transform_9, window_bounds = array<i64: 2, 1, 128>}]} {
    %cst = arith.constant 0.000000e+00 : f32
    %0 = vector.broadcast %cst : f32 to vector<2x18x18x16xf32>
    %c0 = arith.constant 0 : index
    %c0_0 = arith.constant 0 : index
    %c0_1 = arith.constant 0 : index
    %c0_2 = arith.constant 0 : index
    %1 = vector.load %arg12[%c0, %c0_0, %c0_1, %c0_2] : memref<2x18x18x16xf32, #tpu.memory_space<vmem>>, vector<2x18x18x16xf32>
    tpu.vector_store %arg12[%c0, %c0_0, %c0_1, %c0_2], %0 {strides = array<i32>} : memref<2x18x18x16xf32, #tpu.memory_space<vmem>>, vector<2x18x18x16xf32>,
    %cst_3 = arith.constant 0.000000e+00 : f32
    %2 = vector.broadcast %cst_3 : f32 to vector<2x10x10x32xf32>
    %c0_4 = arith.constant 0 : index
    %c0_5 = arith.constant 0 : index
    %c0_6 = arith.constant 0 : index
    %c0_7 = arith.constant 0 : index
    %3 = vector.load %arg15[%c0_4, %c0_5, %c0_6, %c0_7] : memref<2x10x10x32xf32, #tpu.memory_space<vmem>>, vector<2x10x10x32xf32>
    tpu.vector_store %arg15[%c0_4, %c0_5, %c0_6, %c0_7], %2 {strides = array<i32>} : memref<2x10x10x32xf32, #tpu.memory_space<vmem>>, vector<2x10x10x32xf32>,
    %c0_8 = arith.constant 0 : index
    %c0_9 = arith.constant 0 : index
    %c0_10 = arith.constant 0 : index
    %4 = vector.load %arg1[%c0_8, %c0_9, %c0_10] : memref<2x1024x9xf32, #tpu.memory_space<vmem>>, vector<2x1024x9xf32>
    %5 = vector.shape_cast %4 : vector<2x1024x9xf32> to vector<2048x9xf32>
    %c0_11 = arith.constant 0 : index
    %c0_12 = arith.constant 0 : index
    %6 = vector.load %arg2[%c0_11, %c0_12] : memref<9x16xf32, #tpu.memory_space<vmem>>, vector<9x16xf32>
    %cst_13 = arith.constant dense<0.000000e+00> : vector<2048x16xf32>
    %7 = tpu.matmul %5, %6, %cst_13 {dimension_numbers = #tpu.dot_dimension_numbers<[1], [0], [0], [1], [0, 0, 1, 1], [], []>} : vector<2048x9xf32>, vector<9x16xf32>, vector<2048x16xf32> -> vector<2048x16xf32>
    %c0_14 = arith.constant 0 : index
    %c0_15 = arith.constant 0 : index
    %8 = vector.load %arg3[%c0_14, %c0_15] : memref<1x16xf32, #tpu.memory_space<vmem>>, vector<1x16xf32>
    %9 = vector.broadcast %8 : vector<1x16xf32> to vector<2048x16xf32>
    %10 = arith.addf %7, %9 : vector<2048x16xf32>
    %cst_16 = arith.constant 0.000000e+00 : f32
    %11 = vector.broadcast %cst_16 : f32 to vector<2048x16xf32>
    %12 = arith.maximumf %10, %11 : vector<2048x16xf32>
    %13 = vector.shape_cast %12 : vector<2048x16xf32> to vector<2x16x2x32x16xf32>
    %14 = vector.extract_strided_slice %13 {offsets = [0, 0, 0, 0, 0], sizes = [2, 16, 1, 32, 16], strides = [1, 1, 1, 1, 1]} : vector<2x16x2x32x16xf32> to vector<2x16x1x32x16xf32>
    %15 = vector.shape_cast %14 : vector<2x16x1x32x16xf32> to vector<2x16x32x16xf32>
    %16 = vector.extract_strided_slice %13 {offsets = [0, 0, 1, 0, 0], sizes = [2, 16, 1, 32, 16], strides = [1, 1, 1, 1, 1]} : vector<2x16x2x32x16xf32> to vector<2x16x1x32x16xf32>
    %17 = vector.shape_cast %16 : vector<2x16x1x32x16xf32> to vector<2x16x32x16xf32>
    %18 = arith.maximumf %15, %17 : vector<2x16x32x16xf32>
    %c0_17 = arith.constant 0 : index
    %c0_18 = arith.constant 0 : index
    %c0_19 = arith.constant 0 : index
    %c0_20 = arith.constant 0 : index
    %19 = vector.load %arg11[%c0_17, %c0_18, %c0_19, %c0_20] : memref<2x16x32x16xf32, #tpu.memory_space<vmem>>, vector<2x16x32x16xf32>
    tpu.vector_store %arg11[%c0_17, %c0_18, %c0_19, %c0_20], %18 {strides = array<i32>} : memref<2x16x32x16xf32, #tpu.memory_space<vmem>>, vector<2x16x32x16xf32>,
    %c0_21 = arith.constant 0 : index
    %c0_22 = arith.constant 0 : index
    %c0_23 = arith.constant 0 : index
    %c0_24 = arith.constant 0 : index
    %20 = tpu.strided_load %arg11[%c0_21, %c0_22, %c0_23, %c0_24] {strides = array<i32: 1, 1, 2, 1>} : memref<2x16x32x16xf32, #tpu.memory_space<vmem>>, vector<2x16x16x16xf32>
    %c0_25 = arith.constant 0 : index
    %c0_26 = arith.constant 0 : index
    %c1 = arith.constant 1 : index
    %c0_27 = arith.constant 0 : index
    %21 = tpu.strided_load %arg11[%c0_25, %c0_26, %c1, %c0_27] {strides = array<i32: 1, 1, 2, 1>} : memref<2x16x32x16xf32, #tpu.memory_space<vmem>>, vector<2x16x16x16xf32>
    %22 = arith.maximumf %20, %21 : vector<2x16x16x16xf32>
    %c0_28 = arith.constant 0 : index
    %c1_29 = arith.constant 1 : index
    %c1_30 = arith.constant 1 : index
    %c0_31 = arith.constant 0 : index
    %23 = vector.load %arg12[%c0_28, %c1_29, %c1_30, %c0_31] : memref<2x18x18x16xf32, #tpu.memory_space<vmem>>, vector<2x16x16x16xf32>
    tpu.vector_store %arg12[%c0_28, %c1_29, %c1_30, %c0_31], %22 {strides = array<i32>} : memref<2x18x18x16xf32, #tpu.memory_space<vmem>>, vector<2x16x16x16xf32>,
    %c0_32 = arith.constant 0 : index
    %c0_33 = arith.constant 0 : index
    %c0_34 = arith.constant 0 : index
    %c0_35 = arith.constant 0 : index
    %24 = vector.load %arg12[%c0_32, %c0_33, %c0_34, %c0_35] : memref<2x18x18x16xf32, #tpu.memory_space<vmem>>, vector<2x16x16x16xf32>
    %25 = vector.shape_cast %24 : vector<2x16x16x16xf32> to vector<512x16xf32>
    %c0_36 = arith.constant 0 : index
    %c0_37 = arith.constant 0 : index
    %26 = vector.load %arg13[%c0_36, %c0_37] : memref<512x144xf32, #tpu.memory_space<vmem>>, vector<512x16xf32>
    tpu.vector_store %arg13[%c0_36, %c0_37], %25 {strides = array<i32>} : memref<512x144xf32, #tpu.memory_space<vmem>>, vector<512x16xf32>,
    %c0_38 = arith.constant 0 : index
    %c0_39 = arith.constant 0 : index
    %c1_40 = arith.constant 1 : index
    %c0_41 = arith.constant 0 : index
    %27 = vector.load %arg12[%c0_38, %c0_39, %c1_40, %c0_41] : memref<2x18x18x16xf32, #tpu.memory_space<vmem>>, vector<2x16x16x16xf32>
    %28 = vector.shape_cast %27 : vector<2x16x16x16xf32> to vector<512x16xf32>
    %c0_42 = arith.constant 0 : index
    %c16 = arith.constant 16 : index
    %29 = vector.load %arg13[%c0_42, %c16] : memref<512x144xf32, #tpu.memory_space<vmem>>, vector<512x16xf32>
    tpu.vector_store %arg13[%c0_42, %c16], %28 {strides = array<i32>} : memref<512x144xf32, #tpu.memory_space<vmem>>, vector<512x16xf32>,
    %c0_43 = arith.constant 0 : index
    %c0_44 = arith.constant 0 : index
    %c2 = arith.constant 2 : index
    %c0_45 = arith.constant 0 : index
    %30 = vector.load %arg12[%c0_43, %c0_44, %c2, %c0_45] : memref<2x18x18x16xf32, #tpu.memory_space<vmem>>, vector<2x16x16x16xf32>
    %31 = vector.shape_cast %30 : vector<2x16x16x16xf32> to vector<512x16xf32>
    %c0_46 = arith.constant 0 : index
    %c32 = arith.constant 32 : index
    %32 = vector.load %arg13[%c0_46, %c32] : memref<512x144xf32, #tpu.memory_space<vmem>>, vector<512x16xf32>
    tpu.vector_store %arg13[%c0_46, %c32], %31 {strides = array<i32>} : memref<512x144xf32, #tpu.memory_space<vmem>>, vector<512x16xf32>,
    %c0_47 = arith.constant 0 : index
    %c1_48 = arith.constant 1 : index
    %c0_49 = arith.constant 0 : index
    %c0_50 = arith.constant 0 : index
    %33 = vector.load %arg12[%c0_47, %c1_48, %c0_49, %c0_50] : memref<2x18x18x16xf32, #tpu.memory_space<vmem>>, vector<2x16x16x16xf32>
    %34 = vector.shape_cast %33 : vector<2x16x16x16xf32> to vector<512x16xf32>
    %c0_51 = arith.constant 0 : index
    %c48 = arith.constant 48 : index
    %35 = vector.load %arg13[%c0_51, %c48] : memref<512x144xf32, #tpu.memory_space<vmem>>, vector<512x16xf32>
    tpu.vector_store %arg13[%c0_51, %c48], %34 {strides = array<i32>} : memref<512x144xf32, #tpu.memory_space<vmem>>, vector<512x16xf32>,
    %c0_52 = arith.constant 0 : index
    %c1_53 = arith.constant 1 : index
    %c1_54 = arith.constant 1 : index
    %c0_55 = arith.constant 0 : index
    %36 = vector.load %arg12[%c0_52, %c1_53, %c1_54, %c0_55] : memref<2x18x18x16xf32, #tpu.memory_space<vmem>>, vector<2x16x16x16xf32>
    %37 = vector.shape_cast %36 : vector<2x16x16x16xf32> to vector<512x16xf32>
    %c0_56 = arith.constant 0 : index
    %c64 = arith.constant 64 : index
    %38 = vector.load %arg13[%c0_56, %c64] : memref<512x144xf32, #tpu.memory_space<vmem>>, vector<512x16xf32>
    tpu.vector_store %arg13[%c0_56, %c64], %37 {strides = array<i32>} : memref<512x144xf32, #tpu.memory_space<vmem>>, vector<512x16xf32>,
    %c0_57 = arith.constant 0 : index
    %c1_58 = arith.constant 1 : index
    %c2_59 = arith.constant 2 : index
    %c0_60 = arith.constant 0 : index
    %39 = vector.load %arg12[%c0_57, %c1_58, %c2_59, %c0_60] : memref<2x18x18x16xf32, #tpu.memory_space<vmem>>, vector<2x16x16x16xf32>
    %40 = vector.shape_cast %39 : vector<2x16x16x16xf32> to vector<512x16xf32>
    %c0_61 = arith.constant 0 : index
    %c80 = arith.constant 80 : index
    %41 = vector.load %arg13[%c0_61, %c80] : memref<512x144xf32, #tpu.memory_space<vmem>>, vector<512x16xf32>
    tpu.vector_store %arg13[%c0_61, %c80], %40 {strides = array<i32>} : memref<512x144xf32, #tpu.memory_space<vmem>>, vector<512x16xf32>,
    %c0_62 = arith.constant 0 : index
    %c2_63 = arith.constant 2 : index
    %c0_64 = arith.constant 0 : index
    %c0_65 = arith.constant 0 : index
    %42 = vector.load %arg12[%c0_62, %c2_63, %c0_64, %c0_65] : memref<2x18x18x16xf32, #tpu.memory_space<vmem>>, vector<2x16x16x16xf32>
    %43 = vector.shape_cast %42 : vector<2x16x16x16xf32> to vector<512x16xf32>
    %c0_66 = arith.constant 0 : index
    %c96 = arith.constant 96 : index
    %44 = vector.load %arg13[%c0_66, %c96] : memref<512x144xf32, #tpu.memory_space<vmem>>, vector<512x16xf32>
    tpu.vector_store %arg13[%c0_66, %c96], %43 {strides = array<i32>} : memref<512x144xf32, #tpu.memory_space<vmem>>, vector<512x16xf32>,
    %c0_67 = arith.constant 0 : index
    %c2_68 = arith.constant 2 : index
    %c1_69 = arith.constant 1 : index
    %c0_70 = arith.constant 0 : index
    %45 = vector.load %arg12[%c0_67, %c2_68, %c1_69, %c0_70] : memref<2x18x18x16xf32, #tpu.memory_space<vmem>>, vector<2x16x16x16xf32>
    %46 = vector.shape_cast %45 : vector<2x16x16x16xf32> to vector<512x16xf32>
    %c0_71 = arith.constant 0 : index
    %c112 = arith.constant 112 : index
    %47 = vector.load %arg13[%c0_71, %c112] : memref<512x144xf32, #tpu.memory_space<vmem>>, vector<512x16xf32>
    tpu.vector_store %arg13[%c0_71, %c112], %46 {strides = array<i32>} : memref<512x144xf32, #tpu.memory_space<vmem>>, vector<512x16xf32>,
    %c0_72 = arith.constant 0 : index
    %c2_73 = arith.constant 2 : index
    %c2_74 = arith.constant 2 : index
    %c0_75 = arith.constant 0 : index
    %48 = vector.load %arg12[%c0_72, %c2_73, %c2_74, %c0_75] : memref<2x18x18x16xf32, #tpu.memory_space<vmem>>, vector<2x16x16x16xf32>
    %49 = vector.shape_cast %48 : vector<2x16x16x16xf32> to vector<512x16xf32>
    %c0_76 = arith.constant 0 : index
    %c128 = arith.constant 128 : index
    %50 = vector.load %arg13[%c0_76, %c128] : memref<512x144xf32, #tpu.memory_space<vmem>>, vector<512x16xf32>
    tpu.vector_store %arg13[%c0_76, %c128], %49 {strides = array<i32>} : memref<512x144xf32, #tpu.memory_space<vmem>>, vector<512x16xf32>,
    %c0_77 = arith.constant 0 : index
    %c0_78 = arith.constant 0 : index
    %51 = vector.load %arg13[%c0_77, %c0_78] : memref<512x144xf32, #tpu.memory_space<vmem>>, vector<512x144xf32>
    %c0_79 = arith.constant 0 : index
    %c0_80 = arith.constant 0 : index
    %52 = vector.load %arg4[%c0_79, %c0_80] : memref<144x32xf32, #tpu.memory_space<vmem>>, vector<144x32xf32>
    %cst_81 = arith.constant dense<0.000000e+00> : vector<512x32xf32>
    %53 = tpu.matmul %51, %52, %cst_81 {dimension_numbers = #tpu.dot_dimension_numbers<[1], [0], [0], [1], [0, 0, 1, 1], [], []>} : vector<512x144xf32>, vector<144x32xf32>, vector<512x32xf32> -> vector<512x32xf32>
    %c0_82 = arith.constant 0 : index
    %c0_83 = arith.constant 0 : index
    %54 = vector.load %arg5[%c0_82, %c0_83] : memref<1x32xf32, #tpu.memory_space<vmem>>, vector<1x32xf32>
    %55 = vector.broadcast %54 : vector<1x32xf32> to vector<512x32xf32>
    %56 = arith.addf %53, %55 : vector<512x32xf32>
    %cst_84 = arith.constant 0.000000e+00 : f32
    %57 = vector.broadcast %cst_84 : f32 to vector<512x32xf32>
    %58 = arith.maximumf %56, %57 : vector<512x32xf32>
    %59 = vector.shape_cast %58 : vector<512x32xf32> to vector<2x8x2x16x32xf32>
    %60 = vector.extract_strided_slice %59 {offsets = [0, 0, 0, 0, 0], sizes = [2, 8, 1, 16, 32], strides = [1, 1, 1, 1, 1]} : vector<2x8x2x16x32xf32> to vector<2x8x1x16x32xf32>
    %61 = vector.shape_cast %60 : vector<2x8x1x16x32xf32> to vector<2x8x16x32xf32>
    %62 = vector.extract_strided_slice %59 {offsets = [0, 0, 1, 0, 0], sizes = [2, 8, 1, 16, 32], strides = [1, 1, 1, 1, 1]} : vector<2x8x2x16x32xf32> to vector<2x8x1x16x32xf32>
    %63 = vector.shape_cast %62 : vector<2x8x1x16x32xf32> to vector<2x8x16x32xf32>
    %64 = arith.maximumf %61, %63 : vector<2x8x16x32xf32>
    %c0_85 = arith.constant 0 : index
    %c0_86 = arith.constant 0 : index
    %c0_87 = arith.constant 0 : index
    %c0_88 = arith.constant 0 : index
    %65 = vector.load %arg14[%c0_85, %c0_86, %c0_87, %c0_88] : memref<2x8x16x32xf32, #tpu.memory_space<vmem>>, vector<2x8x16x32xf32>
    tpu.vector_store %arg14[%c0_85, %c0_86, %c0_87, %c0_88], %64 {strides = array<i32>} : memref<2x8x16x32xf32, #tpu.memory_space<vmem>>, vector<2x8x16x32xf32>,
    %c0_89 = arith.constant 0 : index
    %c0_90 = arith.constant 0 : index
    %c0_91 = arith.constant 0 : index
    %c0_92 = arith.constant 0 : index
    %66 = tpu.strided_load %arg14[%c0_89, %c0_90, %c0_91, %c0_92] {strides = array<i32: 1, 1, 2, 1>} : memref<2x8x16x32xf32, #tpu.memory_space<vmem>>, vector<2x8x8x32xf32>
    %c0_93 = arith.constant 0 : index
    %c0_94 = arith.constant 0 : index
    %c1_95 = arith.constant 1 : index
    %c0_96 = arith.constant 0 : index
    %67 = tpu.strided_load %arg14[%c0_93, %c0_94, %c1_95, %c0_96] {strides = array<i32: 1, 1, 2, 1>} : memref<2x8x16x32xf32, #tpu.memory_space<vmem>>, vector<2x8x8x32xf32>
    %68 = arith.maximumf %66, %67 : vector<2x8x8x32xf32>
    %c0_97 = arith.constant 0 : index
    %c1_98 = arith.constant 1 : index
    %c1_99 = arith.constant 1 : index
    %c0_100 = arith.constant 0 : index
    %69 = vector.load %arg15[%c0_97, %c1_98, %c1_99, %c0_100] : memref<2x10x10x32xf32, #tpu.memory_space<vmem>>, vector<2x8x8x32xf32>
    tpu.vector_store %arg15[%c0_97, %c1_98, %c1_99, %c0_100], %68 {strides = array<i32>} : memref<2x10x10x32xf32, #tpu.memory_space<vmem>>, vector<2x8x8x32xf32>,
    %c0_101 = arith.constant 0 : index
    %c0_102 = arith.constant 0 : index
    %c0_103 = arith.constant 0 : index
    %c0_104 = arith.constant 0 : index
    %70 = vector.load %arg15[%c0_101, %c0_102, %c0_103, %c0_104] : memref<2x10x10x32xf32, #tpu.memory_space<vmem>>, vector<2x8x8x32xf32>
    %71 = vector.shape_cast %70 : vector<2x8x8x32xf32> to vector<128x32xf32>
    %c0_105 = arith.constant 0 : index
    %c0_106 = arith.constant 0 : index
    %72 = vector.load %arg16[%c0_105, %c0_106] : memref<128x288xf32, #tpu.memory_space<vmem>>, vector<128x32xf32>
    tpu.vector_store %arg16[%c0_105, %c0_106], %71 {strides = array<i32>} : memref<128x288xf32, #tpu.memory_space<vmem>>, vector<128x32xf32>,
    %c0_107 = arith.constant 0 : index
    %c0_108 = arith.constant 0 : index
    %c1_109 = arith.constant 1 : index
    %c0_110 = arith.constant 0 : index
    %73 = vector.load %arg15[%c0_107, %c0_108, %c1_109, %c0_110] : memref<2x10x10x32xf32, #tpu.memory_space<vmem>>, vector<2x8x8x32xf32>
    %74 = vector.shape_cast %73 : vector<2x8x8x32xf32> to vector<128x32xf32>
    %c0_111 = arith.constant 0 : index
    %c32_112 = arith.constant 32 : index
    %75 = vector.load %arg16[%c0_111, %c32_112] : memref<128x288xf32, #tpu.memory_space<vmem>>, vector<128x32xf32>
    tpu.vector_store %arg16[%c0_111, %c32_112], %74 {strides = array<i32>} : memref<128x288xf32, #tpu.memory_space<vmem>>, vector<128x32xf32>,
    %c0_113 = arith.constant 0 : index
    %c0_114 = arith.constant 0 : index
    %c2_115 = arith.constant 2 : index
    %c0_116 = arith.constant 0 : index
    %76 = vector.load %arg15[%c0_113, %c0_114, %c2_115, %c0_116] : memref<2x10x10x32xf32, #tpu.memory_space<vmem>>, vector<2x8x8x32xf32>
    %77 = vector.shape_cast %76 : vector<2x8x8x32xf32> to vector<128x32xf32>
    %c0_117 = arith.constant 0 : index
    %c64_118 = arith.constant 64 : index
    %78 = vector.load %arg16[%c0_117, %c64_118] : memref<128x288xf32, #tpu.memory_space<vmem>>, vector<128x32xf32>
    tpu.vector_store %arg16[%c0_117, %c64_118], %77 {strides = array<i32>} : memref<128x288xf32, #tpu.memory_space<vmem>>, vector<128x32xf32>,
    %c0_119 = arith.constant 0 : index
    %c1_120 = arith.constant 1 : index
    %c0_121 = arith.constant 0 : index
    %c0_122 = arith.constant 0 : index
    %79 = vector.load %arg15[%c0_119, %c1_120, %c0_121, %c0_122] : memref<2x10x10x32xf32, #tpu.memory_space<vmem>>, vector<2x8x8x32xf32>
    %80 = vector.shape_cast %79 : vector<2x8x8x32xf32> to vector<128x32xf32>
    %c0_123 = arith.constant 0 : index
    %c96_124 = arith.constant 96 : index
    %81 = vector.load %arg16[%c0_123, %c96_124] : memref<128x288xf32, #tpu.memory_space<vmem>>, vector<128x32xf32>
    tpu.vector_store %arg16[%c0_123, %c96_124], %80 {strides = array<i32>} : memref<128x288xf32, #tpu.memory_space<vmem>>, vector<128x32xf32>,
    %c0_125 = arith.constant 0 : index
    %c1_126 = arith.constant 1 : index
    %c1_127 = arith.constant 1 : index
    %c0_128 = arith.constant 0 : index
    %82 = vector.load %arg15[%c0_125, %c1_126, %c1_127, %c0_128] : memref<2x10x10x32xf32, #tpu.memory_space<vmem>>, vector<2x8x8x32xf32>
    %83 = vector.shape_cast %82 : vector<2x8x8x32xf32> to vector<128x32xf32>
    %c0_129 = arith.constant 0 : index
    %c128_130 = arith.constant 128 : index
    %84 = vector.load %arg16[%c0_129, %c128_130] : memref<128x288xf32, #tpu.memory_space<vmem>>, vector<128x32xf32>
    tpu.vector_store %arg16[%c0_129, %c128_130], %83 {strides = array<i32>} : memref<128x288xf32, #tpu.memory_space<vmem>>, vector<128x32xf32>,
    %c0_131 = arith.constant 0 : index
    %c1_132 = arith.constant 1 : index
    %c2_133 = arith.constant 2 : index
    %c0_134 = arith.constant 0 : index
    %85 = vector.load %arg15[%c0_131, %c1_132, %c2_133, %c0_134] : memref<2x10x10x32xf32, #tpu.memory_space<vmem>>, vector<2x8x8x32xf32>
    %86 = vector.shape_cast %85 : vector<2x8x8x32xf32> to vector<128x32xf32>
    %c0_135 = arith.constant 0 : index
    %c160 = arith.constant 160 : index
    %87 = vector.load %arg16[%c0_135, %c160] : memref<128x288xf32, #tpu.memory_space<vmem>>, vector<128x32xf32>
    tpu.vector_store %arg16[%c0_135, %c160], %86 {strides = array<i32>} : memref<128x288xf32, #tpu.memory_space<vmem>>, vector<128x32xf32>,
    %c0_136 = arith.constant 0 : index
    %c2_137 = arith.constant 2 : index
    %c0_138 = arith.constant 0 : index
    %c0_139 = arith.constant 0 : index
    %88 = vector.load %arg15[%c0_136, %c2_137, %c0_138, %c0_139] : memref<2x10x10x32xf32, #tpu.memory_space<vmem>>, vector<2x8x8x32xf32>
    %89 = vector.shape_cast %88 : vector<2x8x8x32xf32> to vector<128x32xf32>
    %c0_140 = arith.constant 0 : index
    %c192 = arith.constant 192 : index
    %90 = vector.load %arg16[%c0_140, %c192] : memref<128x288xf32, #tpu.memory_space<vmem>>, vector<128x32xf32>
    tpu.vector_store %arg16[%c0_140, %c192], %89 {strides = array<i32>} : memref<128x288xf32, #tpu.memory_space<vmem>>, vector<128x32xf32>,
    %c0_141 = arith.constant 0 : index
    %c2_142 = arith.constant 2 : index
    %c1_143 = arith.constant 1 : index
    %c0_144 = arith.constant 0 : index
    %91 = vector.load %arg15[%c0_141, %c2_142, %c1_143, %c0_144] : memref<2x10x10x32xf32, #tpu.memory_space<vmem>>, vector<2x8x8x32xf32>
    %92 = vector.shape_cast %91 : vector<2x8x8x32xf32> to vector<128x32xf32>
    %c0_145 = arith.constant 0 : index
    %c224 = arith.constant 224 : index
    %93 = vector.load %arg16[%c0_145, %c224] : memref<128x288xf32, #tpu.memory_space<vmem>>, vector<128x32xf32>
    tpu.vector_store %arg16[%c0_145, %c224], %92 {strides = array<i32>} : memref<128x288xf32, #tpu.memory_space<vmem>>, vector<128x32xf32>,
    %c0_146 = arith.constant 0 : index
    %c2_147 = arith.constant 2 : index
    %c2_148 = arith.constant 2 : index
    %c0_149 = arith.constant 0 : index
    %94 = vector.load %arg15[%c0_146, %c2_147, %c2_148, %c0_149] : memref<2x10x10x32xf32, #tpu.memory_space<vmem>>, vector<2x8x8x32xf32>
    %95 = vector.shape_cast %94 : vector<2x8x8x32xf32> to vector<128x32xf32>
    %c0_150 = arith.constant 0 : index
    %c256 = arith.constant 256 : index
    %96 = vector.load %arg16[%c0_150, %c256] : memref<128x288xf32, #tpu.memory_space<vmem>>, vector<128x32xf32>
    tpu.vector_store %arg16[%c0_150, %c256], %95 {strides = array<i32>} : memref<128x288xf32, #tpu.memory_space<vmem>>, vector<128x32xf32>,
    %c0_151 = arith.constant 0 : index
    %c0_152 = arith.constant 0 : index
    %97 = vector.load %arg16[%c0_151, %c0_152] : memref<128x288xf32, #tpu.memory_space<vmem>>, vector<128x288xf32>
    %c0_153 = arith.constant 0 : index
    %c0_154 = arith.constant 0 : index
    %98 = vector.load %arg6[%c0_153, %c0_154] : memref<288x64xf32, #tpu.memory_space<vmem>>, vector<288x64xf32>
    %cst_155 = arith.constant dense<0.000000e+00> : vector<128x64xf32>
    %99 = tpu.matmul %97, %98, %cst_155 {dimension_numbers = #tpu.dot_dimension_numbers<[1], [0], [0], [1], [0, 0, 1, 1], [], []>} : vector<128x288xf32>, vector<288x64xf32>, vector<128x64xf32> -> vector<128x64xf32>
    %c0_156 = arith.constant 0 : index
    %c0_157 = arith.constant 0 : index
    %100 = vector.load %arg7[%c0_156, %c0_157] : memref<1x64xf32, #tpu.memory_space<vmem>>, vector<1x64xf32>
    %101 = vector.broadcast %100 : vector<1x64xf32> to vector<128x64xf32>
    %102 = arith.addf %99, %101 : vector<128x64xf32>
    %cst_158 = arith.constant 0.000000e+00 : f32
    %103 = vector.broadcast %cst_158 : f32 to vector<128x64xf32>
    %104 = arith.maximumf %102, %103 : vector<128x64xf32>
    %105 = vector.shape_cast %104 : vector<128x64xf32> to vector<2x4x2x8x64xf32>
    %106 = vector.extract_strided_slice %105 {offsets = [0, 0, 0, 0, 0], sizes = [2, 4, 1, 8, 64], strides = [1, 1, 1, 1, 1]} : vector<2x4x2x8x64xf32> to vector<2x4x1x8x64xf32>
    %107 = vector.shape_cast %106 : vector<2x4x1x8x64xf32> to vector<2x4x8x64xf32>
    %108 = vector.extract_strided_slice %105 {offsets = [0, 0, 1, 0, 0], sizes = [2, 4, 1, 8, 64], strides = [1, 1, 1, 1, 1]} : vector<2x4x2x8x64xf32> to vector<2x4x1x8x64xf32>
    %109 = vector.shape_cast %108 : vector<2x4x1x8x64xf32> to vector<2x4x8x64xf32>
    %110 = arith.addf %107, %109 : vector<2x4x8x64xf32>
    %111 = vector.extract_strided_slice %110 {offsets = [0, 0, 0, 0], sizes = [2, 4, 1, 64], strides = [1, 1, 1, 1]} : vector<2x4x8x64xf32> to vector<2x4x1x64xf32>
    %112 = vector.shape_cast %111 : vector<2x4x1x64xf32> to vector<2x4x64xf32>
    %113 = vector.extract_strided_slice %110 {offsets = [0, 0, 1, 0], sizes = [2, 4, 1, 64], strides = [1, 1, 1, 1]} : vector<2x4x8x64xf32> to vector<2x4x1x64xf32>
    %114 = vector.shape_cast %113 : vector<2x4x1x64xf32> to vector<2x4x64xf32>
    %115 = arith.addf %112, %114 : vector<2x4x64xf32>
    %cst_159 = arith.constant 2.500000e-01 : f32
    %116 = vector.broadcast %cst_159 : f32 to vector<2x4x64xf32>
    %117 = arith.mulf %115, %116 : vector<2x4x64xf32>
    %118 = vector.extract_strided_slice %117 {offsets = [0, 0, 0], sizes = [2, 1, 64], strides = [1, 1, 1]} : vector<2x4x64xf32> to vector<2x1x64xf32>
    %119 = vector.shape_cast %118 : vector<2x1x64xf32> to vector<2x64xf32>
    %c0_160 = arith.constant 0 : index
    %c0_161 = arith.constant 0 : index
    %120 = vector.load %arg17[%c0_160, %c0_161] : memref<2x1024xf32, #tpu.memory_space<vmem>>, vector<2x64xf32>
    tpu.vector_store %arg17[%c0_160, %c0_161], %119 {strides = array<i32>} : memref<2x1024xf32, #tpu.memory_space<vmem>>, vector<2x64xf32>,
    %121 = vector.extract_strided_slice %117 {offsets = [0, 1, 0], sizes = [2, 1, 64], strides = [1, 1, 1]} : vector<2x4x64xf32> to vector<2x1x64xf32>
    %122 = vector.shape_cast %121 : vector<2x1x64xf32> to vector<2x64xf32>
    %c0_162 = arith.constant 0 : index
    %c256_163 = arith.constant 256 : index
    %123 = vector.load %arg17[%c0_162, %c256_163] : memref<2x1024xf32, #tpu.memory_space<vmem>>, vector<2x64xf32>
    tpu.vector_store %arg17[%c0_162, %c256_163], %122 {strides = array<i32>} : memref<2x1024xf32, #tpu.memory_space<vmem>>, vector<2x64xf32>,
    %124 = vector.extract_strided_slice %117 {offsets = [0, 2, 0], sizes = [2, 1, 64], strides = [1, 1, 1]} : vector<2x4x64xf32> to vector<2x1x64xf32>
    %125 = vector.shape_cast %124 : vector<2x1x64xf32> to vector<2x64xf32>
    %c0_164 = arith.constant 0 : index
    %c512 = arith.constant 512 : index
    %126 = vector.load %arg17[%c0_164, %c512] : memref<2x1024xf32, #tpu.memory_space<vmem>>, vector<2x64xf32>
    tpu.vector_store %arg17[%c0_164, %c512], %125 {strides = array<i32>} : memref<2x1024xf32, #tpu.memory_space<vmem>>, vector<2x64xf32>,
    %127 = vector.extract_strided_slice %117 {offsets = [0, 3, 0], sizes = [2, 1, 64], strides = [1, 1, 1]} : vector<2x4x64xf32> to vector<2x1x64xf32>
    %128 = vector.shape_cast %127 : vector<2x1x64xf32> to vector<2x64xf32>
    %c0_165 = arith.constant 0 : index
    %c768 = arith.constant 768 : index
    %129 = vector.load %arg17[%c0_165, %c768] : memref<2x1024xf32, #tpu.memory_space<vmem>>, vector<2x64xf32>
    tpu.vector_store %arg17[%c0_165, %c768], %128 {strides = array<i32>} : memref<2x1024xf32, #tpu.memory_space<vmem>>, vector<2x64xf32>,
    %130 = vector.extract_strided_slice %110 {offsets = [0, 0, 2, 0], sizes = [2, 4, 1, 64], strides = [1, 1, 1, 1]} : vector<2x4x8x64xf32> to vector<2x4x1x64xf32>
    %131 = vector.shape_cast %130 : vector<2x4x1x64xf32> to vector<2x4x64xf32>
    %132 = vector.extract_strided_slice %110 {offsets = [0, 0, 3, 0], sizes = [2, 4, 1, 64], strides = [1, 1, 1, 1]} : vector<2x4x8x64xf32> to vector<2x4x1x64xf32>
    %133 = vector.shape_cast %132 : vector<2x4x1x64xf32> to vector<2x4x64xf32>
    %134 = arith.addf %131, %133 : vector<2x4x64xf32>
    %cst_166 = arith.constant 2.500000e-01 : f32
    %135 = vector.broadcast %cst_166 : f32 to vector<2x4x64xf32>
    %136 = arith.mulf %134, %135 : vector<2x4x64xf32>
    %137 = vector.extract_strided_slice %136 {offsets = [0, 0, 0], sizes = [2, 1, 64], strides = [1, 1, 1]} : vector<2x4x64xf32> to vector<2x1x64xf32>
    %138 = vector.shape_cast %137 : vector<2x1x64xf32> to vector<2x64xf32>
    %c0_167 = arith.constant 0 : index
    %c64_168 = arith.constant 64 : index
    %139 = vector.load %arg17[%c0_167, %c64_168] : memref<2x1024xf32, #tpu.memory_space<vmem>>, vector<2x64xf32>
    tpu.vector_store %arg17[%c0_167, %c64_168], %138 {strides = array<i32>} : memref<2x1024xf32, #tpu.memory_space<vmem>>, vector<2x64xf32>,
    %140 = vector.extract_strided_slice %136 {offsets = [0, 1, 0], sizes = [2, 1, 64], strides = [1, 1, 1]} : vector<2x4x64xf32> to vector<2x1x64xf32>
    %141 = vector.shape_cast %140 : vector<2x1x64xf32> to vector<2x64xf32>
    %c0_169 = arith.constant 0 : index
    %c320 = arith.constant 320 : index
    %142 = vector.load %arg17[%c0_169, %c320] : memref<2x1024xf32, #tpu.memory_space<vmem>>, vector<2x64xf32>
    tpu.vector_store %arg17[%c0_169, %c320], %141 {strides = array<i32>} : memref<2x1024xf32, #tpu.memory_space<vmem>>, vector<2x64xf32>,
    %143 = vector.extract_strided_slice %136 {offsets = [0, 2, 0], sizes = [2, 1, 64], strides = [1, 1, 1]} : vector<2x4x64xf32> to vector<2x1x64xf32>
    %144 = vector.shape_cast %143 : vector<2x1x64xf32> to vector<2x64xf32>
    %c0_170 = arith.constant 0 : index
    %c576 = arith.constant 576 : index
    %145 = vector.load %arg17[%c0_170, %c576] : memref<2x1024xf32, #tpu.memory_space<vmem>>, vector<2x64xf32>
    tpu.vector_store %arg17[%c0_170, %c576], %144 {strides = array<i32>} : memref<2x1024xf32, #tpu.memory_space<vmem>>, vector<2x64xf32>,
    %146 = vector.extract_strided_slice %136 {offsets = [0, 3, 0], sizes = [2, 1, 64], strides = [1, 1, 1]} : vector<2x4x64xf32> to vector<2x1x64xf32>
    %147 = vector.shape_cast %146 : vector<2x1x64xf32> to vector<2x64xf32>
    %c0_171 = arith.constant 0 : index
    %c832 = arith.constant 832 : index
    %148 = vector.load %arg17[%c0_171, %c832] : memref<2x1024xf32, #tpu.memory_space<vmem>>, vector<2x64xf32>
    tpu.vector_store %arg17[%c0_171, %c832], %147 {strides = array<i32>} : memref<2x1024xf32, #tpu.memory_space<vmem>>, vector<2x64xf32>,
    %149 = vector.extract_strided_slice %110 {offsets = [0, 0, 4, 0], sizes = [2, 4, 1, 64], strides = [1, 1, 1, 1]} : vector<2x4x8x64xf32> to vector<2x4x1x64xf32>
    %150 = vector.shape_cast %149 : vector<2x4x1x64xf32> to vector<2x4x64xf32>
    %151 = vector.extract_strided_slice %110 {offsets = [0, 0, 5, 0], sizes = [2, 4, 1, 64], strides = [1, 1, 1, 1]} : vector<2x4x8x64xf32> to vector<2x4x1x64xf32>
    %152 = vector.shape_cast %151 : vector<2x4x1x64xf32> to vector<2x4x64xf32>
    %153 = arith.addf %150, %152 : vector<2x4x64xf32>
    %cst_172 = arith.constant 2.500000e-01 : f32
    %154 = vector.broadcast %cst_172 : f32 to vector<2x4x64xf32>
    %155 = arith.mulf %153, %154 : vector<2x4x64xf32>
    %156 = vector.extract_strided_slice %155 {offsets = [0, 0, 0], sizes = [2, 1, 64], strides = [1, 1, 1]} : vector<2x4x64xf32> to vector<2x1x64xf32>
    %157 = vector.shape_cast %156 : vector<2x1x64xf32> to vector<2x64xf32>
    %c0_173 = arith.constant 0 : index
    %c128_174 = arith.constant 128 : index
    %158 = vector.load %arg17[%c0_173, %c128_174] : memref<2x1024xf32, #tpu.memory_space<vmem>>, vector<2x64xf32>
    tpu.vector_store %arg17[%c0_173, %c128_174], %157 {strides = array<i32>} : memref<2x1024xf32, #tpu.memory_space<vmem>>, vector<2x64xf32>,
    %159 = vector.extract_strided_slice %155 {offsets = [0, 1, 0], sizes = [2, 1, 64], strides = [1, 1, 1]} : vector<2x4x64xf32> to vector<2x1x64xf32>
    %160 = vector.shape_cast %159 : vector<2x1x64xf32> to vector<2x64xf32>
    %c0_175 = arith.constant 0 : index
    %c384 = arith.constant 384 : index
    %161 = vector.load %arg17[%c0_175, %c384] : memref<2x1024xf32, #tpu.memory_space<vmem>>, vector<2x64xf32>
    tpu.vector_store %arg17[%c0_175, %c384], %160 {strides = array<i32>} : memref<2x1024xf32, #tpu.memory_space<vmem>>, vector<2x64xf32>,
    %162 = vector.extract_strided_slice %155 {offsets = [0, 2, 0], sizes = [2, 1, 64], strides = [1, 1, 1]} : vector<2x4x64xf32> to vector<2x1x64xf32>
    %163 = vector.shape_cast %162 : vector<2x1x64xf32> to vector<2x64xf32>
    %c0_176 = arith.constant 0 : index
    %c640 = arith.constant 640 : index
    %164 = vector.load %arg17[%c0_176, %c640] : memref<2x1024xf32, #tpu.memory_space<vmem>>, vector<2x64xf32>
    tpu.vector_store %arg17[%c0_176, %c640], %163 {strides = array<i32>} : memref<2x1024xf32, #tpu.memory_space<vmem>>, vector<2x64xf32>,
    %165 = vector.extract_strided_slice %155 {offsets = [0, 3, 0], sizes = [2, 1, 64], strides = [1, 1, 1]} : vector<2x4x64xf32> to vector<2x1x64xf32>
    %166 = vector.shape_cast %165 : vector<2x1x64xf32> to vector<2x64xf32>
    %c0_177 = arith.constant 0 : index
    %c896 = arith.constant 896 : index
    %167 = vector.load %arg17[%c0_177, %c896] : memref<2x1024xf32, #tpu.memory_space<vmem>>, vector<2x64xf32>
    tpu.vector_store %arg17[%c0_177, %c896], %166 {strides = array<i32>} : memref<2x1024xf32, #tpu.memory_space<vmem>>, vector<2x64xf32>,
    %168 = vector.extract_strided_slice %110 {offsets = [0, 0, 6, 0], sizes = [2, 4, 1, 64], strides = [1, 1, 1, 1]} : vector<2x4x8x64xf32> to vector<2x4x1x64xf32>
    %169 = vector.shape_cast %168 : vector<2x4x1x64xf32> to vector<2x4x64xf32>
    %170 = vector.extract_strided_slice %110 {offsets = [0, 0, 7, 0], sizes = [2, 4, 1, 64], strides = [1, 1, 1, 1]} : vector<2x4x8x64xf32> to vector<2x4x1x64xf32>
    %171 = vector.shape_cast %170 : vector<2x4x1x64xf32> to vector<2x4x64xf32>
    %172 = arith.addf %169, %171 : vector<2x4x64xf32>
    %cst_178 = arith.constant 2.500000e-01 : f32
    %173 = vector.broadcast %cst_178 : f32 to vector<2x4x64xf32>
    %174 = arith.mulf %172, %173 : vector<2x4x64xf32>
    %175 = vector.extract_strided_slice %174 {offsets = [0, 0, 0], sizes = [2, 1, 64], strides = [1, 1, 1]} : vector<2x4x64xf32> to vector<2x1x64xf32>
    %176 = vector.shape_cast %175 : vector<2x1x64xf32> to vector<2x64xf32>
    %c0_179 = arith.constant 0 : index
    %c192_180 = arith.constant 192 : index
    %177 = vector.load %arg17[%c0_179, %c192_180] : memref<2x1024xf32, #tpu.memory_space<vmem>>, vector<2x64xf32>
    tpu.vector_store %arg17[%c0_179, %c192_180], %176 {strides = array<i32>} : memref<2x1024xf32, #tpu.memory_space<vmem>>, vector<2x64xf32>,
    %178 = vector.extract_strided_slice %174 {offsets = [0, 1, 0], sizes = [2, 1, 64], strides = [1, 1, 1]} : vector<2x4x64xf32> to vector<2x1x64xf32>
    %179 = vector.shape_cast %178 : vector<2x1x64xf32> to vector<2x64xf32>
    %c0_181 = arith.constant 0 : index
    %c448 = arith.constant 448 : index
    %180 = vector.load %arg17[%c0_181, %c448] : memref<2x1024xf32, #tpu.memory_space<vmem>>, vector<2x64xf32>
    tpu.vector_store %arg17[%c0_181, %c448], %179 {strides = array<i32>} : memref<2x1024xf32, #tpu.memory_space<vmem>>, vector<2x64xf32>,
    %181 = vector.extract_strided_slice %174 {offsets = [0, 2, 0], sizes = [2, 1, 64], strides = [1, 1, 1]} : vector<2x4x64xf32> to vector<2x1x64xf32>
    %182 = vector.shape_cast %181 : vector<2x1x64xf32> to vector<2x64xf32>
    %c0_182 = arith.constant 0 : index
    %c704 = arith.constant 704 : index
    %183 = vector.load %arg17[%c0_182, %c704] : memref<2x1024xf32, #tpu.memory_space<vmem>>, vector<2x64xf32>
    tpu.vector_store %arg17[%c0_182, %c704], %182 {strides = array<i32>} : memref<2x1024xf32, #tpu.memory_space<vmem>>, vector<2x64xf32>,
    %184 = vector.extract_strided_slice %174 {offsets = [0, 3, 0], sizes = [2, 1, 64], strides = [1, 1, 1]} : vector<2x4x64xf32> to vector<2x1x64xf32>
    %185 = vector.shape_cast %184 : vector<2x1x64xf32> to vector<2x64xf32>
    %c0_183 = arith.constant 0 : index
    %c960 = arith.constant 960 : index
    %186 = vector.load %arg17[%c0_183, %c960] : memref<2x1024xf32, #tpu.memory_space<vmem>>, vector<2x64xf32>
    tpu.vector_store %arg17[%c0_183, %c960], %185 {strides = array<i32>} : memref<2x1024xf32, #tpu.memory_space<vmem>>, vector<2x64xf32>,
    %c0_184 = arith.constant 0 : index
    %c0_185 = arith.constant 0 : index
    %187 = vector.load %arg17[%c0_184, %c0_185] : memref<2x1024xf32, #tpu.memory_space<vmem>>, vector<2x1024xf32>
    %c0_186 = arith.constant 0 : index
    %c0_187 = arith.constant 0 : index
    %188 = vector.load %arg8[%c0_186, %c0_187] : memref<1024x128xf32, #tpu.memory_space<vmem>>, vector<1024x128xf32>
    %cst_188 = arith.constant dense<0.000000e+00> : vector<2x128xf32>
    %189 = tpu.matmul %187, %188, %cst_188 {dimension_numbers = #tpu.dot_dimension_numbers<[1], [0], [0], [1], [0, 0, 1, 1], [], []>} : vector<2x1024xf32>, vector<1024x128xf32>, vector<2x128xf32> -> vector<2x128xf32>
    %c0_189 = arith.constant 0 : index
    %c0_190 = arith.constant 0 : index
    %190 = vector.load %arg9[%c0_189, %c0_190] : memref<1x128xf32, #tpu.memory_space<vmem>>, vector<1x128xf32>
    %191 = vector.broadcast %190 : vector<1x128xf32> to vector<2x128xf32>
    %192 = arith.addf %189, %191 : vector<2x128xf32>
    %c0_191 = arith.constant 0 : index
    %c0_192 = arith.constant 0 : index
    %c0_193 = arith.constant 0 : index
    %193 = vector.load %arg10[%c0_191, %c0_192, %c0_193] : memref<2x1x128xf32, #tpu.memory_space<vmem>>, vector<2x1x128xf32>
    %194 = vector.shape_cast %193 : vector<2x1x128xf32> to vector<2x128xf32>
    %195 = vector.shape_cast %192 : vector<2x128xf32> to vector<2x1x128xf32>
    tpu.vector_store %arg10[%c0_191, %c0_192, %c0_193], %195 {strides = array<i32>} : memref<2x1x128xf32, #tpu.memory_space<vmem>>, vector<2x1x128xf32>,
    return
  }
  func.func @transform_0(%arg0: i32) -> (i32, i32, i32) {
    %c0_i32 = arith.constant 0 : i32
    %c0_i32_0 = arith.constant 0 : i32
    %c0_i32_1 = arith.constant 0 : i32
    return %arg0, %c0_i32, %c0_i32_0 : i32, i32, i32
  }
  func.func @transform_1(%arg0: i32) -> (i32, i32) {
    %c0_i32 = arith.constant 0 : i32
    %c0_i32_0 = arith.constant 0 : i32
    %c0_i32_1 = arith.constant 0 : i32
    return %c0_i32, %c0_i32_0 : i32, i32
  }
  func.func @transform_2(%arg0: i32) -> (i32, i32) {
    %c0_i32 = arith.constant 0 : i32
    %c0_i32_0 = arith.constant 0 : i32
    %c0_i32_1 = arith.constant 0 : i32
    return %c0_i32, %c0_i32_0 : i32, i32
  }
  func.func @transform_3(%arg0: i32) -> (i32, i32) {
    %c0_i32 = arith.constant 0 : i32
    %c0_i32_0 = arith.constant 0 : i32
    %c0_i32_1 = arith.constant 0 : i32
    return %c0_i32, %c0_i32_0 : i32, i32
  }
  func.func @transform_4(%arg0: i32) -> (i32, i32) {
    %c0_i32 = arith.constant 0 : i32
    %c0_i32_0 = arith.constant 0 : i32
    %c0_i32_1 = arith.constant 0 : i32
    return %c0_i32, %c0_i32_0 : i32, i32
  }
  func.func @transform_5(%arg0: i32) -> (i32, i32) {
    %c0_i32 = arith.constant 0 : i32
    %c0_i32_0 = arith.constant 0 : i32
    %c0_i32_1 = arith.constant 0 : i32
    return %c0_i32, %c0_i32_0 : i32, i32
  }
  func.func @transform_6(%arg0: i32) -> (i32, i32) {
    %c0_i32 = arith.constant 0 : i32
    %c0_i32_0 = arith.constant 0 : i32
    %c0_i32_1 = arith.constant 0 : i32
    return %c0_i32, %c0_i32_0 : i32, i32
  }
  func.func @transform_7(%arg0: i32) -> (i32, i32) {
    %c0_i32 = arith.constant 0 : i32
    %c0_i32_0 = arith.constant 0 : i32
    %c0_i32_1 = arith.constant 0 : i32
    return %c0_i32, %c0_i32_0 : i32, i32
  }
  func.func @transform_8(%arg0: i32) -> (i32, i32) {
    %c0_i32 = arith.constant 0 : i32
    %c0_i32_0 = arith.constant 0 : i32
    %c0_i32_1 = arith.constant 0 : i32
    return %c0_i32, %c0_i32_0 : i32, i32
  }
  func.func @transform_9(%arg0: i32) -> (i32, i32, i32) {
    %c0_i32 = arith.constant 0 : i32
    %c0_i32_0 = arith.constant 0 : i32
    %c0_i32_1 = arith.constant 0 : i32
    return %arg0, %c0_i32, %c0_i32_0 : i32, i32, i32
  }
}

</mosaic_0001>

<llo_original>
// kernel: _lambda_.1
$region0: #{_lambda_.1}
  #allocation0 [shape = 'u32[]', space=smem, size = 0x4, offset = 0x4, fixed_abs, tag = 'smem constant byte address 0x4 - core index']
  #allocation1 [shape = 'u32[144,128]{1,0:T(1,128)}', space=vmem, size = 0x12000, scoped, tag = 'internal scratch']
  #allocation2 [shape = 'f32[2,16,32,16]{3,2,1,0:T(8,128)}', space=vmem, size = 0x80000, scoped, tag = 'scratch operand']
  #allocation3 [shape = 'f32[2,18,18,16]{3,2,1,0:T(8,128)}', space=vmem, size = 0x6c000, scoped, tag = 'scratch operand']
  #allocation4 [shape = 'f32[512,144]{1,0:T(8,128)}', space=vmem, size = 0x80000, scoped, tag = 'scratch operand']
  #allocation5 [shape = 'f32[2,8,16,32]{3,2,1,0:T(8,128)}', space=vmem, size = 0x20000, scoped, tag = 'scratch operand']
  #allocation6 [shape = 'f32[2,10,10,32]{3,2,1,0:T(8,128)}', space=vmem, size = 0x28000, scoped, tag = 'scratch operand']
  #allocation7 [shape = 'f32[128,288]{1,0:T(8,128)}', space=vmem, size = 0x30000, scoped, tag = 'scratch operand']
  #allocation8 [shape = 'f32[2,1024]{1,0:T(2,128)}', space=vmem, size = 0x2000, scoped, tag = 'scratch operand']
  %s0 = inlined_call_operand.vmem [shape: f32[4,1024,9], index: 0, kind: input, shape index: {}]
  %s1 = inlined_call_operand.vmem [shape: f32[9,16], index: 1, kind: input, shape index: {}]
  %s2 = inlined_call_operand.vmem [shape: f32[1,16], index: 2, kind: input, shape index: {}]
  %s3 = inlined_call_operand.vmem [shape: f32[144,32], index: 3, kind: input, shape index: {}]
  %s4 = inlined_call_operand.vmem [shape: f32[1,32], index: 4, kind: input, shape index: {}]
  %s5 = inlined_call_operand.vmem [shape: f32[288,64], index: 5, kind: input, shape index: {}]
  %s6 = inlined_call_operand.vmem [shape: f32[1,64], index: 6, kind: input, shape index: {}]
  %s7 = inlined_call_operand.vmem [shape: f32[1024,128], index: 7, kind: input, shape index: {}]
  %s8 = inlined_call_operand.vmem [shape: f32[1,128], index: 8, kind: input, shape index: {}]
  %s9 = inlined_call_operand.vmem [shape: f32[4,1,128], index: 9, kind: output, shape index: {}]
  %s10 = sld [smem:[#allocation0]]
  $region69: #{_lambda_.1} parent=0
    _
  %s12 = ssub.s32 1, %s10
  %s13 = scalar_select 0, %s12, %s10
  loop: start=0, step=1, limit=4
  $region2: #{_lambda_.1} parent=0 // loop_pre_header
    _
  $region3: #{_lambda_.1} parent=0 // loop_header
    %s15 = sphi 0, %s19
    %p16 = scmp.ge.s32.totalorder %s15, 4
    %s25 = sphi 0, %s27
    %s28 = sphi 0, %s25
    %s29 = sphi 0, %s28
    %s45 = sphi 0, %s29
    %s49 = sphi 0, %s49
    %s51 = sphi 0, %s49
    %s52 = sphi 0, %s51
    %s66 = sphi 0, %s52
    %s70 = sphi 0, %s70
    %s72 = sphi 0, %s70
    %s73 = sphi 0, %s72
    %s87 = sphi 0, %s73
    %s91 = sphi 0, %s91
    %s93 = sphi 0, %s91
    %s94 = sphi 0, %s93
    %s108 = sphi 0, %s94
    %s112 = sphi 0, %s112
    %s114 = sphi 0, %s112
    %s115 = sphi 0, %s114
    %s129 = sphi 0, %s115
    %s133 = sphi 0, %s133
    %s135 = sphi 0, %s133
    %s136 = sphi 0, %s135
    %s150 = sphi 0, %s136
    %s154 = sphi 0, %s154
    %s156 = sphi 0, %s154
    %s157 = sphi 0, %s156
    %s171 = sphi 0, %s157
    %s175 = sphi 0, %s175
    %s177 = sphi 0, %s175
    %s178 = sphi 0, %s177
    %s192 = sphi 0, %s178
    %s196 = sphi 0, %s196
    %s198 = sphi 0, %s196
    %s199 = sphi 0, %s198
    %s213 = sphi 0, %s199
    %s219 = sphi 0, %s221
    %s222 = sphi 0, %s219
    %s223 = sphi 0, %s222
    %s239 = sphi 0, %s223
  $region4: #{_lambda_.1} parent=0 // loop_header_branch
    %18 = sbr.rel (%p16) target = $region8
  $region5: #{_lambda_.1} parent=0 // loop_body
    %s20 = ssub.s32 %s15, 1
    %s21 = ssub.s32 %s15, 2
    %s22 = sadd.s32 %s15, 1
    %s23 = ssub.s32 %s15, %s22
    %p24 = scmp.eq.s32.totalorder %s23, 0
    %s26 = sadd.s32 %s25, 1
    %s27 = scalar_select %p24, %s25, %s26
    %p30 = pneg %p24
    %p31 = scmp.eq.s32.totalorder %s15, 1
    %p32 = por %p30, %p31
    %p33 = scmp.ne.s32.totalorder %s25, %s28
    %p34 = scmp.eq.s32.totalorder %s15, 0
    %p35 = por %p33, %p34
    %p36 = scmp.ne.s32.totalorder %s25, %s28
    %p37 = scmp.eq.s32.totalorder %s20, 1
    %p38 = por %p36, %p37
    %p39 = scmp.ne.s32.totalorder %s28, %s29
    %p40 = scmp.eq.s32.totalorder %s20, 0
    %p41 = por %p39, %p40
    %p42 = scmp.ne.s32.totalorder %s28, %s29
    %p43 = scmp.eq.s32.totalorder %s21, 1
    %p44 = por %p42, %p43
    %p46 = scmp.ne.s32.totalorder %s29, %s45
    %p47 = scmp.eq.s32.totalorder %s21, 0
    %p48 = por %p46, %p47
    %s50 = sadd.s32 %s49, 1
    %p53 = scmp.eq.s32.totalorder %s15, 1
    %p54 = scmp.ne.s32.totalorder %s49, %s51
    %p55 = scmp.eq.s32.totalorder %s15, 0
    %p56 = por %p54, %p55
    %p57 = scmp.ne.s32.totalorder %s49, %s51
    %p58 = scmp.eq.s32.totalorder %s20, 1
    %p59 = por %p57, %p58
    %p60 = scmp.ne.s32.totalorder %s51, %s52
    %p61 = scmp.eq.s32.totalorder %s20, 0
    %p62 = por %p60, %p61
    %p63 = scmp.ne.s32.totalorder %s51, %s52
    %p64 = scmp.eq.s32.totalorder %s21, 1
    %p65 = por %p63, %p64
    %p67 = scmp.ne.s32.totalorder %s52, %s66
    %p68 = scmp.eq.s32.totalorder %s21, 0
    %p69 = por %p67, %p68
    %s71 = sadd.s32 %s70, 1
    %p74 = scmp.eq.s32.totalorder %s15, 1
    %p75 = scmp.ne.s32.totalorder %s70, %s72
    %p76 = scmp.eq.s32.totalorder %s15, 0
    %p77 = por %p75, %p76
    %p78 = scmp.ne.s32.totalorder %s70, %s72
    %p79 = scmp.eq.s32.totalorder %s20, 1
    %p80 = por %p78, %p79
    %p81 = scmp.ne.s32.totalorder %s72, %s73
    %p82 = scmp.eq.s32.totalorder %s20, 0
    %p83 = por %p81, %p82
    %p84 = scmp.ne.s32.totalorder %s72, %s73
    %p85 = scmp.eq.s32.totalorder %s21, 1
    %p86 = por %p84, %p85
    %p88 = scmp.ne.s32.totalorder %s73, %s87
    %p89 = scmp.eq.s32.totalorder %s21, 0
    %p90 = por %p88, %p89
    %s92 = sadd.s32 %s91, 1
    %p95 = scmp.eq.s32.totalorder %s15, 1
    %p96 = scmp.ne.s32.totalorder %s91, %s93
    %p97 = scmp.eq.s32.totalorder %s15, 0
    %p98 = por %p96, %p97
    %p99 = scmp.ne.s32.totalorder %s91, %s93
    %p100 = scmp.eq.s32.totalorder %s20, 1
    %p101 = por %p99, %p100
    %p102 = scmp.ne.s32.totalorder %s93, %s94
    %p103 = scmp.eq.s32.totalorder %s20, 0
    %p104 = por %p102, %p103
    %p105 = scmp.ne.s32.totalorder %s93, %s94
    %p106 = scmp.eq.s32.totalorder %s21, 1
    %p107 = por %p105, %p106
    %p109 = scmp.ne.s32.totalorder %s94, %s108
    %p110 = scmp.eq.s32.totalorder %s21, 0
    %p111 = por %p109, %p110
    %s113 = sadd.s32 %s112, 1
    %p116 = scmp.eq.s32.totalorder %s15, 1
    %p117 = scmp.ne.s32.totalorder %s112, %s114
    %p118 = scmp.eq.s32.totalorder %s15, 0
    %p119 = por %p117, %p118
    %p120 = scmp.ne.s32.totalorder %s112, %s114
    %p121 = scmp.eq.s32.totalorder %s20, 1
    %p122 = por %p120, %p121
    %p123 = scmp.ne.s32.totalorder %s114, %s115
    %p124 = scmp.eq.s32.totalorder %s20, 0
    %p125 = por %p123, %p124
    %p126 = scmp.ne.s32.totalorder %s114, %s115
    %p127 = scmp.eq.s32.totalorder %s21, 1
    %p128 = por %p126, %p127
    %p130 = scmp.ne.s32.totalorder %s115, %s129
    %p131 = scmp.eq.s32.totalorder %s21, 0
    %p132 = por %p130, %p131
    %s134 = sadd.s32 %s133, 1
    %p137 = scmp.eq.s32.totalorder %s15, 1
    %p138 = scmp.ne.s32.totalorder %s133, %s135
    %p139 = scmp.eq.s32.totalorder %s15, 0
    %p140 = por %p138, %p139
    %p141 = scmp.ne.s32.totalorder %s133, %s135
    %p142 = scmp.eq.s32.totalorder %s20, 1
    %p143 = por %p141, %p142
    %p144 = scmp.ne.s32.totalorder %s135, %s136
    %p145 = scmp.eq.s32.totalorder %s20, 0
    %p146 = por %p144, %p145
    %p147 = scmp.ne.s32.totalorder %s135, %s136
    %p148 = scmp.eq.s32.totalorder %s21, 1
    %p149 = por %p147, %p148
    %p151 = scmp.ne.s32.totalorder %s136, %s150
    %p152 = scmp.eq.s32.totalorder %s21, 0
    %p153 = por %p151, %p152
    %s155 = sadd.s32 %s154, 1
    %p158 = scmp.eq.s32.totalorder %s15, 1
    %p159 = scmp.ne.s32.totalorder %s154, %s156
    %p160 = scmp.eq.s32.totalorder %s15, 0
    %p161 = por %p159, %p160
    %p162 = scmp.ne.s32.totalorder %s154, %s156
    %p163 = scmp.eq.s32.totalorder %s20, 1
    %p164 = por %p162, %p163
    %p165 = scmp.ne.s32.totalorder %s156, %s157
    %p166 = scmp.eq.s32.totalorder %s20, 0
    %p167 = por %p165, %p166
    %p168 = scmp.ne.s32.totalorder %s156, %s157
    %p169 = scmp.eq.s32.totalorder %s21, 1
    %p170 = por %p168, %p169
    %p172 = scmp.ne.s32.totalorder %s157, %s171
    %p173 = scmp.eq.s32.totalorder %s21, 0
    %p174 = por %p172, %p173
    %s176 = sadd.s32 %s175, 1
    %p179 = scmp.eq.s32.totalorder %s15, 1
    %p180 = scmp.ne.s32.totalorder %s175, %s177
    %p181 = scmp.eq.s32.totalorder %s15, 0
    %p182 = por %p180, %p181
    %p183 = scmp.ne.s32.totalorder %s175, %s177
    %p184 = scmp.eq.s32.totalorder %s20, 1
    %p185 = por %p183, %p184
    %p186 = scmp.ne.s32.totalorder %s177, %s178
    %p187 = scmp.eq.s32.totalorder %s20, 0
    %p188 = por %p186, %p187
    %p189 = scmp.ne.s32.totalorder %s177, %s178
    %p190 = scmp.eq.s32.totalorder %s21, 1
    %p191 = por %p189, %p190
    %p193 = scmp.ne.s32.totalorder %s178, %s192
    %p194 = scmp.eq.s32.totalorder %s21, 0
    %p195 = por %p193, %p194
    %s197 = sadd.s32 %s196, 1
    %p200 = scmp.eq.s32.totalorder %s15, 1
    %p201 = scmp.ne.s32.totalorder %s196, %s198
    %p202 = scmp.eq.s32.totalorder %s15, 0
    %p203 = por %p201, %p202
    %p204 = scmp.ne.s32.totalorder %s196, %s198
    %p205 = scmp.eq.s32.totalorder %s20, 1
    %p206 = por %p204, %p205
    %p207 = scmp.ne.s32.totalorder %s198, %s199
    %p208 = scmp.eq.s32.totalorder %s20, 0
    %p209 = por %p207, %p208
    %p210 = scmp.ne.s32.totalorder %s198, %s199
    %p211 = scmp.eq.s32.totalorder %s21, 1
    %p212 = por %p210, %p211
    %p214 = scmp.ne.s32.totalorder %s199, %s213
    %p215 = scmp.eq.s32.totalorder %s21, 0
    %p216 = por %p214, %p215
    %s217 = ssub.s32 %s15, %s22
    %p218 = scmp.eq.s32.totalorder %s217, 0
    %s220 = sadd.s32 %s219, 1
    %s221 = scalar_select %p218, %s219, %s220
    %p224 = pneg %p218
    %p225 = scmp.eq.s32.totalorder %s15, 1
    %p226 = por %p224, %p225
    %p227 = scmp.ne.s32.totalorder %s219, %s222
    %p228 = scmp.eq.s32.totalorder %s15, 0
    %p229 = por %p227, %p228
    %p230 = scmp.ne.s32.totalorder %s219, %s222
    %p231 = scmp.eq.s32.totalorder %s20, 1
    %p232 = por %p230, %p231
    %p233 = scmp.ne.s32.totalorder %s222, %s223
    %p234 = scmp.eq.s32.totalorder %s20, 0
    %p235 = por %p233, %p234
    %p236 = scmp.ne.s32.totalorder %s222, %s223
    %p237 = scmp.eq.s32.totalorder %s21, 1
    %p238 = por %p236, %p237
    %p240 = scmp.ne.s32.totalorder %s223, %s239
    %p241 = scmp.eq.s32.totalorder %s21, 0
    %p242 = por %p240, %p241
    %p243 = scmp.le.s32.totalorder 1, %s15
    %p244 = scmp.lt.s32.totalorder %s15, 3
    %p245 = pnand %p243, %p244
    %p246 = pneg %p245
    // Predicated region
    $region9: #{_lambda_.1} parent=5 // pred_check
      _
    $region10: #{_lambda_.1} parent=5 // pred_check_branch
      %248 = sbr.rel (%p245) target = $region12
    $region11: #{_lambda_.1} parent=5 // pred_region
      %s249 = ssub.s32 %s15, 1
      // Predicated region
      $region13: #{_lambda_.1} parent=11 // pred_check
        %p250 = pneg %p62
      $region14: #{_lambda_.1} parent=11 // pred_check_branch
        %252 = sbr.rel (%p250) target = $region16
      $region15: #{_lambda_.1} parent=11 // pred_region
        _
      $region16: #{_lambda_.1} parent=11 // pred_fallthru
        _
      // Predicated region
      $region17: #{_lambda_.1} parent=11 // pred_check
        %p253 = pneg %p83
      $region18: #{_lambda_.1} parent=11 // pred_check_branch
        %255 = sbr.rel (%p253) target = $region20
      $region19: #{_lambda_.1} parent=11 // pred_region
        _
      $region20: #{_lambda_.1} parent=11 // pred_fallthru
        _
      // Predicated region
      $region21: #{_lambda_.1} parent=11 // pred_check
        %p256 = pneg %p104
      $region22: #{_lambda_.1} parent=11 // pred_check_branch
        %258 = sbr.rel (%p256) target = $region24
      $region23: #{_lambda_.1} parent=11 // pred_region
        _
      $region24: #{_lambda_.1} parent=11 // pred_fallthru
        _
      // Predicated region
      $region25: #{_lambda_.1} parent=11 // pred_check
        %p259 = pneg %p125
      $region26: #{_lambda_.1} parent=11 // pred_check_branch
        %261 = sbr.rel (%p259) target = $region28
      $region27: #{_lambda_.1} parent=11 // pred_region
        _
      $region28: #{_lambda_.1} parent=11 // pred_fallthru
        _
      // Predicated region
      $region29: #{_lambda_.1} parent=11 // pred_check
        %p262 = pneg %p146
      $region30: #{_lambda_.1} parent=11 // pred_check_branch
        %264 = sbr.rel (%p262) target = $region32
      $region31: #{_lambda_.1} parent=11 // pred_region
        _
      $region32: #{_lambda_.1} parent=11 // pred_fallthru
        _
      // Predicated region
      $region33: #{_lambda_.1} parent=11 // pred_check
        %p265 = pneg %p167
      $region34: #{_lambda_.1} parent=11 // pred_check_branch
        %267 = sbr.rel (%p265) target = $region36
      $region35: #{_lambda_.1} parent=11 // pred_region
        _
      $region36: #{_lambda_.1} parent=11 // pred_fallthru
        _
      // Predicated region
      $region37: #{_lambda_.1} parent=11 // pred_check
        %p268 = pneg %p188
      $region38: #{_lambda_.1} parent=11 // pred_check_branch
        %270 = sbr.rel (%p268) target = $region40
      $region39: #{_lambda_.1} parent=11 // pred_region
        _
      $region40: #{_lambda_.1} parent=11 // pred_fallthru
        _
      // Predicated region
      $region41: #{_lambda_.1} parent=11 // pred_check
        %p271 = pneg %p209
      $region42: #{_lambda_.1} parent=11 // pred_check_branch
        %273 = sbr.rel (%p271) target = $region44
      $region43: #{_lambda_.1} parent=11 // pred_region
        _
      $region44: #{_lambda_.1} parent=11 // pred_fallthru
        _
    $region12: #{_lambda_.1} parent=5 // pred_fallthru
      _
    %p274 = scmp.lt.s32.totalorder %s15, 2
    // Predicated region
    $region45: #{_lambda_.1} parent=5 // pred_check
      %p275 = pneg %p274
    $region46: #{_lambda_.1} parent=5 // pred_check_branch
      %277 = sbr.rel (%p275) target = $region48
    $region47: #{_lambda_.1} parent=5 // pred_region
      // Predicated region
      $region49: #{_lambda_.1} parent=47 // pred_check
        %p278 = pneg %p35
      $region50: #{_lambda_.1} parent=47 // pred_check_branch
        %280 = sbr.rel (%p278) target = $region52
      $region51: #{_lambda_.1} parent=47 // pred_region
        %s281 = smul.u32 2, %s15
        %p282 = scmp.lt.s32.totalorder %s281, 3
        %s283 = scalar_select %p282, %s281, 3
        %s284 = smul.addr %s283, 128
        %s285 = smul.addr %s284, 8
        %s286 = scalar_lea.vmem %s0, %s285
        %s287 = smul.u32 2, %s15
      $region52: #{_lambda_.1} parent=47 // pred_fallthru
        _
    $region48: #{_lambda_.1} parent=5 // pred_fallthru
      _
    %p288 = scmp.le.s32.totalorder 1, %s15
    %p289 = scmp.lt.s32.totalorder %s15, 3
    %p290 = pnand %p288, %p289
    %p291 = pneg %p290
    // Predicated region
    $region53: #{_lambda_.1} parent=5 // pred_check
      _
    $region54: #{_lambda_.1} parent=5 // pred_check_branch
      %293 = sbr.rel (%p290) target = $region56
    $region55: #{_lambda_.1} parent=5 // pred_region
      %s294 = ssub.s32 %s15, 1
      %s295 = smul.u32 2, %s20
      %p296 = scmp.lt.s32.totalorder %s295, 3
      %s297 = scalar_select %p296, %s295, 3
      %s298 = smul.addr %s297, 128
      %s299 = smul.addr %s298, 8
      %s300 = scalar_lea.vmem %s0, %s299
      %p301 = pneg %p41
      %p302 = pneg %p38
      %p303 = pneg %p62
      %p304 = pneg %p59
      %p305 = pneg %p83
      %p306 = pneg %p80
      %p307 = pneg %p104
      %p308 = pneg %p101
      %p309 = pneg %p125
      %p310 = pneg %p122
      %p311 = pneg %p146
      %p312 = pneg %p143
      %p313 = pneg %p167
      %p314 = pneg %p164
      %p315 = pneg %p188
      %p316 = pneg %p185
      %p317 = pneg %p209
      %p318 = pneg %p206
      %p319 = pneg %p235
      %p320 = pneg %p232
      %s321 = smul.u32 2, %s20
      %p322 = scmp.lt.s32.totalorder %s321, 3
      %s323 = scalar_select %p322, %s321, 3
      %s324 = scalar_lea.vmem %s9, %s323
      %s325 = smul.u32 2, %s20
      %p326 = scmp.lt.s32.totalorder %s325, 3
      %s327 = scalar_select %p326, %s325, 3
      %s328 = smul.addr %s327, 128
      %s329 = smul.addr %s328, 8
      %s330 = scalar_lea.vmem %s0, %s329
      %s331 = smul.u32 2, %s20
      %s332 = smul.u32 2, %s20
      %p333 = scmp.lt.s32.totalorder %s332, 3
      %s334 = scalar_select %p333, %s332, 3
      %s335 = scalar_lea.vmem %s9, %s334
      %s336 = smul.u32 2, %s20
      %vm337 = vcmask 130048
      %338 = vst.msk [vmem:[#allocation3] sm:$0xff] %vm337, 0.0
      %339 = vst.msk [vmem:[#allocation3 + $0x8] sm:$0xff] %vm337, 0.0
      %vm340 = vcmask 123904
      %341 = vst.msk [vmem:[#allocation3 + $0x10] sm:$0x3] %vm340, 0.0
      %342 = vst.msk [vmem:[#allocation3 + $0x18] sm:$0xff] %vm337, 0.0
      %343 = vst.msk [vmem:[#allocation3 + $0x20] sm:$0xff] %vm337, 0.0
      %344 = vst.msk [vmem:[#allocation3 + $0x28] sm:$0x3] %vm340, 0.0
      %345 = vst.msk [vmem:[#allocation3 + $0x30] sm:$0xff] %vm337, 0.0
      %346 = vst.msk [vmem:[#allocation3 + $0x38] sm:$0xff] %vm337, 0.0
      %347 = vst.msk [vmem:[#allocation3 + $0x40] sm:$0x3] %vm340, 0.0
      %348 = vst.msk [vmem:[#allocation3 + $0x48] sm:$0xff] %vm337, 0.0
      %349 = vst.msk [vmem:[#allocation3 + $0x50] sm:$0xff] %vm337, 0.0
      %350 = vst.msk [vmem:[#allocation3 + $0x58] sm:$0x3] %vm340, 0.0
      %351 = vst.msk [vmem:[#allocation3 + $0x60] sm:$0xff] %vm337, 0.0
      %352 = vst.msk [vmem:[#allocation3 + $0x68] sm:$0xff] %vm337, 0.0
      %353 = vst.msk [vmem:[#allocation3 + $0x70] sm:$0x3] %vm340, 0.0
      %354 = vst.msk [vmem:[#allocation3 + $0x78] sm:$0xff] %vm337, 0.0
      %355 = vst.msk [vmem:[#allocation3 + $0x80] sm:$0xff] %vm337, 0.0
      %356 = vst.msk [vmem:[#allocation3 + $0x88] sm:$0x3] %vm340, 0.0
      %357 = vst.msk [vmem:[#allocation3 + $0x90] sm:$0xff] %vm337, 0.0
      %358 = vst.msk [vmem:[#allocation3 + $0x98] sm:$0xff] %vm337, 0.0
      %359 = vst.msk [vmem:[#allocation3 + $0xa0] sm:$0x3] %vm340, 0.0
      %360 = vst.msk [vmem:[#allocation3 + $0xa8] sm:$0xff] %vm337, 0.0
      %361 = vst.msk [vmem:[#allocation3 + $0xb0] sm:$0xff] %vm337, 0.0
      %362 = vst.msk [vmem:[#allocation3 + $0xb8] sm:$0x3] %vm340, 0.0
      %363 = vst.msk [vmem:[#allocation3 + $0xc0] sm:$0xff] %vm337, 0.0
      %364 = vst.msk [vmem:[#allocation3 + $0xc8] sm:$0xff] %vm337, 0.0
      %365 = vst.msk [vmem:[#allocation3 + $0xd0] sm:$0x3] %vm340, 0.0
      %366 = vst.msk [vmem:[#allocation3 + $0xd8] sm:$0xff] %vm337, 0.0
      %367 = vst.msk [vmem:[#allocation3 + $0xe0] sm:$0xff] %vm337, 0.0
      %368 = vst.msk [vmem:[#allocation3 + $0xe8] sm:$0x3] %vm340, 0.0
      %369 = vst.msk [vmem:[#allocation3 + $0xf0] sm:$0xff] %vm337, 0.0
      %370 = vst.msk [vmem:[#allocation3 + $0xf8] sm:$0xff] %vm337, 0.0
      %371 = vst.msk [vmem:[#allocation3 + $0x100] sm:$0x3] %vm340, 0.0
      %372 = vst.msk [vmem:[#allocation3 + $0x108] sm:$0xff] %vm337, 0.0
      %373 = vst.msk [vmem:[#allocation3 + $0x110] sm:$0xff] %vm337, 0.0
      %374 = vst.msk [vmem:[#allocation3 + $0x118] sm:$0x3] %vm340, 0.0
      %375 = vst.msk [vmem:[#allocation3 + $0x120] sm:$0xff] %vm337, 0.0
      %376 = vst.msk [vmem:[#allocation3 + $0x128] sm:$0xff] %vm337, 0.0
      %377 = vst.msk [vmem:[#allocation3 + $0x130] sm:$0x3] %vm340, 0.0
      %378 = vst.msk [vmem:[#allocation3 + $0x138] sm:$0xff] %vm337, 0.0
      %379 = vst.msk [vmem:[#allocation3 + $0x140] sm:$0xff] %vm337, 0.0
      %380 = vst.msk [vmem:[#allocation3 + $0x148] sm:$0x3] %vm340, 0.0
      %381 = vst.msk [vmem:[#allocation3 + $0x150] sm:$0xff] %vm337, 0.0
      %382 = vst.msk [vmem:[#allocation3 + $0x158] sm:$0xff] %vm337, 0.0
      %383 = vst.msk [vmem:[#allocation3 + $0x160] sm:$0x3] %vm340, 0.0
      %384 = vst.msk [vmem:[#allocation3 + $0x168] sm:$0xff] %vm337, 0.0
      %385 = vst.msk [vmem:[#allocation3 + $0x170] sm:$0xff] %vm337, 0.0
      %386 = vst.msk [vmem:[#allocation3 + $0x178] sm:$0x3] %vm340, 0.0
      %387 = vst.msk [vmem:[#allocation3 + $0x180] sm:$0xff] %vm337, 0.0
      %388 = vst.msk [vmem:[#allocation3 + $0x188] sm:$0xff] %vm337, 0.0
      %389 = vst.msk [vmem:[#allocation3 + $0x190] sm:$0x3] %vm340, 0.0
      %390 = vst.msk [vmem:[#allocation3 + $0x198] sm:$0xff] %vm337, 0.0
      %391 = vst.msk [vmem:[#allocation3 + $0x1a0] sm:$0xff] %vm337, 0.0
      %392 = vst.msk [vmem:[#allocation3 + $0x1a8] sm:$0x3] %vm340, 0.0
      %393 = vst.msk [vmem:[#allocation3 + $0x1b0] sm:$0xff] %vm337, 0.0
      %394 = vst.msk [vmem:[#allocation3 + $0x1b8] sm:$0xff] %vm337, 0.0
      %395 = vst.msk [vmem:[#allocation3 + $0x1c0] sm:$0x3] %vm340, 0.0
      %396 = vst.msk [vmem:[#allocation3 + $0x1c8] sm:$0xff] %vm337, 0.0
      %397 = vst.msk [vmem:[#allocation3 + $0x1d0] sm:$0xff] %vm337, 0.0
      %398 = vst.msk [vmem:[#allocation3 + $0x1d8] sm:$0x3] %vm340, 0.0
      %399 = vst.msk [vmem:[#allocation3 + $0x1e0] sm:$0xff] %vm337, 0.0
      %400 = vst.msk [vmem:[#allocation3 + $0x1e8] sm:$0xff] %vm337, 0.0
      %401 = vst.msk [vmem:[#allocation3 + $0x1f0] sm:$0x3] %vm340, 0.0
      %402 = vst.msk [vmem:[#allocation3 + $0x1f8] sm:$0xff] %vm337, 0.0
      %403 = vst.msk [vmem:[#allocation3 + $0x200] sm:$0xff] %vm337, 0.0
      %404 = vst.msk [vmem:[#allocation3 + $0x208] sm:$0x3] %vm340, 0.0
      %405 = vst.msk [vmem:[#allocation3 + $0x210] sm:$0xff] %vm337, 0.0
      %406 = vst.msk [vmem:[#allocation3 + $0x218] sm:$0xff] %vm337, 0.0
      %407 = vst.msk [vmem:[#allocation3 + $0x220] sm:$0x3] %vm340, 0.0
      %408 = vst.msk [vmem:[#allocation3 + $0x228] sm:$0xff] %vm337, 0.0
      %409 = vst.msk [vmem:[#allocation3 + $0x230] sm:$0xff] %vm337, 0.0
      %410 = vst.msk [vmem:[#allocation3 + $0x238] sm:$0x3] %vm340, 0.0
      %411 = vst.msk [vmem:[#allocation3 + $0x240] sm:$0xff] %vm337, 0.0
      %412 = vst.msk [vmem:[#allocation3 + $0x248] sm:$0xff] %vm337, 0.0
      %413 = vst.msk [vmem:[#allocation3 + $0x250] sm:$0x3] %vm340, 0.0
      %414 = vst.msk [vmem:[#allocation3 + $0x258] sm:$0xff] %vm337, 0.0
      %415 = vst.msk [vmem:[#allocation3 + $0x260] sm:$0xff] %vm337, 0.0
      %416 = vst.msk [vmem:[#allocation3 + $0x268] sm:$0x3] %vm340, 0.0
      %417 = vst.msk [vmem:[#allocation3 + $0x270] sm:$0xff] %vm337, 0.0
      %418 = vst.msk [vmem:[#allocation3 + $0x278] sm:$0xff] %vm337, 0.0
      %419 = vst.msk [vmem:[#allocation3 + $0x280] sm:$0x3] %vm340, 0.0
      %420 = vst.msk [vmem:[#allocation3 + $0x288] sm:$0xff] %vm337, 0.0
      %421 = vst.msk [vmem:[#allocation3 + $0x290] sm:$0xff] %vm337, 0.0
      %422 = vst.msk [vmem:[#allocation3 + $0x298] sm:$0x3] %vm340, 0.0
      %423 = vst.msk [vmem:[#allocation3 + $0x2a0] sm:$0xff] %vm337, 0.0
      %424 = vst.msk [vmem:[#allocation3 + $0x2a8] sm:$0xff] %vm337, 0.0
      %425 = vst.msk [vmem:[#allocation3 + $0x2b0] sm:$0x3] %vm340, 0.0
      %426 = vst.msk [vmem:[#allocation3 + $0x2b8] sm:$0xff] %vm337, 0.0
      %427 = vst.msk [vmem:[#allocation3 + $0x2c0] sm:$0xff] %vm337, 0.0
      %428 = vst.msk [vmem:[#allocation3 + $0x2c8] sm:$0x3] %vm340, 0.0
      %429 = vst.msk [vmem:[#allocation3 + $0x2d0] sm:$0xff] %vm337, 0.0
      %430 = vst.msk [vmem:[#allocation3 + $0x2d8] sm:$0xff] %vm337, 0.0
      %431 = vst.msk [vmem:[#allocation3 + $0x2e0] sm:$0x3] %vm340, 0.0
      %432 = vst.msk [vmem:[#allocation3 + $0x2e8] sm:$0xff] %vm337, 0.0
      %433 = vst.msk [vmem:[#allocation3 + $0x2f0] sm:$0xff] %vm337, 0.0
      %434 = vst.msk [vmem:[#allocation3 + $0x2f8] sm:$0x3] %vm340, 0.0
      %435 = vst.msk [vmem:[#allocation3 + $0x300] sm:$0xff] %vm337, 0.0
      %436 = vst.msk [vmem:[#allocation3 + $0x308] sm:$0xff] %vm337, 0.0
      %437 = vst.msk [vmem:[#allocation3 + $0x310] sm:$0x3] %vm340, 0.0
      %438 = vst.msk [vmem:[#allocation3 + $0x318] sm:$0xff] %vm337, 0.0
      %439 = vst.msk [vmem:[#allocation3 + $0x320] sm:$0xff] %vm337, 0.0
      %440 = vst.msk [vmem:[#allocation3 + $0x328] sm:$0x3] %vm340, 0.0
      %441 = vst.msk [vmem:[#allocation3 + $0x330] sm:$0xff] %vm337, 0.0
      %442 = vst.msk [vmem:[#allocation3 + $0x338] sm:$0xff] %vm337, 0.0
      %443 = vst.msk [vmem:[#allocation3 + $0x340] sm:$0x3] %vm340, 0.0
      %444 = vst.msk [vmem:[#allocation3 + $0x348] sm:$0xff] %vm337, 0.0
      %445 = vst.msk [vmem:[#allocation3 + $0x350] sm:$0xff] %vm337, 0.0
      %446 = vst.msk [vmem:[#allocation3 + $0x358] sm:$0x3] %vm340, 0.0
      %vm447 = vcmask 261120
      %448 = vst.msk [vmem:[#allocation6] sm:$0xff] %vm447, 0.0
      %vm449 = vcmask 254976
      %450 = vst.msk [vmem:[#allocation6 + $0x8] sm:$0x3] %vm449, 0.0
      %451 = vst.msk [vmem:[#allocation6 + $0x10] sm:$0xff] %vm447, 0.0
      %452 = vst.msk [vmem:[#allocation6 + $0x18] sm:$0x3] %vm449, 0.0
      %453 = vst.msk [vmem:[#allocation6 + $0x20] sm:$0xff] %vm447, 0.0
      %454 = vst.msk [vmem:[#allocation6 + $0x28] sm:$0x3] %vm449, 0.0
      %455 = vst.msk [vmem:[#allocation6 + $0x30] sm:$0xff] %vm447, 0.0
      %456 = vst.msk [vmem:[#allocation6 + $0x38] sm:$0x3] %vm449, 0.0
      %457 = vst.msk [vmem:[#allocation6 + $0x40] sm:$0xff] %vm447, 0.0
      %458 = vst.msk [vmem:[#allocation6 + $0x48] sm:$0x3] %vm449, 0.0
      %459 = vst.msk [vmem:[#allocation6 + $0x50] sm:$0xff] %vm447, 0.0
      %460 = vst.msk [vmem:[#allocation6 + $0x58] sm:$0x3] %vm449, 0.0
      %461 = vst.msk [vmem:[#allocation6 + $0x60] sm:$0xff] %vm447, 0.0
      %462 = vst.msk [vmem:[#allocation6 + $0x68] sm:$0x3] %vm449, 0.0
      %463 = vst.msk [vmem:[#allocation6 + $0x70] sm:$0xff] %vm447, 0.0
      %464 = vst.msk [vmem:[#allocation6 + $0x78] sm:$0x3] %vm449, 0.0
      %465 = vst.msk [vmem:[#allocation6 + $0x80] sm:$0xff] %vm447, 0.0
      %466 = vst.msk [vmem:[#allocation6 + $0x88] sm:$0x3] %vm449, 0.0
      %467 = vst.msk [vmem:[#allocation6 + $0x90] sm:$0xff] %vm447, 0.0
      %468 = vst.msk [vmem:[#allocation6 + $0x98] sm:$0x3] %vm449, 0.0
      %469 = vst.msk [vmem:[#allocation6 + $0xa0] sm:$0xff] %vm447, 0.0
      %470 = vst.msk [vmem:[#allocation6 + $0xa8] sm:$0x3] %vm449, 0.0
      %471 = vst.msk [vmem:[#allocation6 + $0xb0] sm:$0xff] %vm447, 0.0
      %472 = vst.msk [vmem:[#allocation6 + $0xb8] sm:$0x3] %vm449, 0.0
      %473 = vst.msk [vmem:[#allocation6 + $0xc0] sm:$0xff] %vm447, 0.0
      %474 = vst.msk [vmem:[#allocation6 + $0xc8] sm:$0x3] %vm449, 0.0
      %475 = vst.msk [vmem:[#allocation6 + $0xd0] sm:$0xff] %vm447, 0.0
      %476 = vst.msk [vmem:[#allocation6 + $0xd8] sm:$0x3] %vm449, 0.0
      %477 = vst.msk [vmem:[#allocation6 + $0xe0] sm:$0xff] %vm447, 0.0
      %478 = vst.msk [vmem:[#allocation6 + $0xe8] sm:$0x3] %vm449, 0.0
      %479 = vst.msk [vmem:[#allocation6 + $0xf0] sm:$0xff] %vm447, 0.0
      %480 = vst.msk [vmem:[#allocation6 + $0xf8] sm:$0x3] %vm449, 0.0
      %481 = vst.msk [vmem:[#allocation6 + $0x100] sm:$0xff] %vm447, 0.0
      %482 = vst.msk [vmem:[#allocation6 + $0x108] sm:$0x3] %vm449, 0.0
      %483 = vst.msk [vmem:[#allocation6 + $0x110] sm:$0xff] %vm447, 0.0
      %484 = vst.msk [vmem:[#allocation6 + $0x118] sm:$0x3] %vm449, 0.0
      %485 = vst.msk [vmem:[#allocation6 + $0x120] sm:$0xff] %vm447, 0.0
      %486 = vst.msk [vmem:[#allocation6 + $0x128] sm:$0x3] %vm449, 0.0
      %487 = vst.msk [vmem:[#allocation6 + $0x130] sm:$0xff] %vm447, 0.0
      %488 = vst.msk [vmem:[#allocation6 + $0x138] sm:$0x3] %vm449, 0.0
      %v489 = vld [vmem:[%s330] sm:$0xff]
      %v490 = vld [vmem:[%s330 + $0x8] sm:$0xff]
      %v491 = vld [vmem:[%s330 + $0x10] sm:$0xff]
      %v492 = vld [vmem:[%s330 + $0x18] sm:$0xff]
      %v493 = vld [vmem:[%s330 + $0x20] sm:$0xff]
      %v494 = vld [vmem:[%s330 + $0x28] sm:$0xff]
      %v495 = vld [vmem:[%s330 + $0x30] sm:$0xff]
      %v496 = vld [vmem:[%s330 + $0x38] sm:$0xff]
      %v497 = vld [vmem:[%s330 + $0x40] sm:$0xff]
      %v498 = vld [vmem:[%s330 + $0x48] sm:$0xff]
      %v499 = vld [vmem:[%s330 + $0x50] sm:$0xff]
      %v500 = vld [vmem:[%s330 + $0x58] sm:$0xff]
      %v501 = vld [vmem:[%s330 + $0x60] sm:$0xff]
      %v502 = vld [vmem:[%s330 + $0x68] sm:$0xff]
      %v503 = vld [vmem:[%s330 + $0x70] sm:$0xff]
      %v504 = vld [vmem:[%s330 + $0x78] sm:$0xff]
      %v505 = vld [vmem:[%s330 + $0x80] sm:$0xff]
      %v506 = vld [vmem:[%s330 + $0x88] sm:$0xff]
      %v507 = vld [vmem:[%s330 + $0x90] sm:$0xff]
      %v508 = vld [vmem:[%s330 + $0x98] sm:$0xff]
      %v509 = vld [vmem:[%s330 + $0xa0] sm:$0xff]
      %v510 = vld [vmem:[%s330 + $0xa8] sm:$0xff]
      %v511 = vld [vmem:[%s330 + $0xb0] sm:$0xff]
      %v512 = vld [vmem:[%s330 + $0xb8] sm:$0xff]
      %v513 = vld [vmem:[%s330 + $0xc0] sm:$0xff]
      %v514 = vld [vmem:[%s330 + $0xc8] sm:$0xff]
      %v515 = vld [vmem:[%s330 + $0xd0] sm:$0xff]
      %v516 = vld [vmem:[%s330 + $0xd8] sm:$0xff]
      %v517 = vld [vmem:[%s330 + $0xe0] sm:$0xff]
      %v518 = vld [vmem:[%s330 + $0xe8] sm:$0xff]
      %v519 = vld [vmem:[%s330 + $0xf0] sm:$0xff]
      %v520 = vld [vmem:[%s330 + $0xf8] sm:$0xff]
      %v521 = vld [vmem:[%s330 + $0x100] sm:$0xff]
      %v522 = vld [vmem:[%s330 + $0x108] sm:$0xff]
      %v523 = vld [vmem:[%s330 + $0x110] sm:$0xff]
      %v524 = vld [vmem:[%s330 + $0x118] sm:$0xff]
      %v525 = vld [vmem:[%s330 + $0x120] sm:$0xff]
      %v526 = vld [vmem:[%s330 + $0x128] sm:$0xff]
      %v527 = vld [vmem:[%s330 + $0x130] sm:$0xff]
      %v528 = vld [vmem:[%s330 + $0x138] sm:$0xff]
      %v529 = vld [vmem:[%s330 + $0x140] sm:$0xff]
      %v530 = vld [vmem:[%s330 + $0x148] sm:$0xff]
      %v531 = vld [vmem:[%s330 + $0x150] sm:$0xff]
      %v532 = vld [vmem:[%s330 + $0x158] sm:$0xff]
      %v533 = vld [vmem:[%s330 + $0x160] sm:$0xff]
      %v534 = vld [vmem:[%s330 + $0x168] sm:$0xff]
      %v535 = vld [vmem:[%s330 + $0x170] sm:$0xff]
      %v536 = vld [vmem:[%s330 + $0x178] sm:$0xff]
      %v537 = vld [vmem:[%s330 + $0x180] sm:$0xff]
      %v538 = vld [vmem:[%s330 + $0x188] sm:$0xff]
      %v539 = vld [vmem:[%s330 + $0x190] sm:$0xff]
      %v540 = vld [vmem:[%s330 + $0x198] sm:$0xff]
      %v541 = vld [vmem:[%s330 + $0x1a0] sm:$0xff]
      %v542 = vld [vmem:[%s330 + $0x1a8] sm:$0xff]
      %v543 = vld [vmem:[%s330 + $0x1b0] sm:$0xff]
      %v544 = vld [vmem:[%s330 + $0x1b8] sm:$0xff]
      %v545 = vld [vmem:[%s330 + $0x1c0] sm:$0xff]
      %v546 = vld [vmem:[%s330 + $0x1c8] sm:$0xff]
      %v547 = vld [vmem:[%s330 + $0x1d0] sm:$0xff]
      %v548 = vld [vmem:[%s330 + $0x1d8] sm:$0xff]
      %v549 = vld [vmem:[%s330 + $0x1e0] sm:$0xff]
      %v550 = vld [vmem:[%s330 + $0x1e8] sm:$0xff]
      %v551 = vld [vmem:[%s330 + $0x1f0] sm:$0xff]
      %v552 = vld [vmem:[%s330 + $0x1f8] sm:$0xff]
      %v553 = vld [vmem:[%s330 + $0x200] sm:$0xff]
      %v554 = vld [vmem:[%s330 + $0x208] sm:$0xff]
      %v555 = vld [vmem:[%s330 + $0x210] sm:$0xff]
      %v556 = vld [vmem:[%s330 + $0x218] sm:$0xff]
      %v557 = vld [vmem:[%s330 + $0x220] sm:$0xff]
      %v558 = vld [vmem:[%s330 + $0x228] sm:$0xff]
      %v559 = vld [vmem:[%s330 + $0x230] sm:$0xff]
      %v560 = vld [vmem:[%s330 + $0x238] sm:$0xff]
      %v561 = vld [vmem:[%s330 + $0x240] sm:$0xff]
      %v562 = vld [vmem:[%s330 + $0x248] sm:$0xff]
      %v563 = vld [vmem:[%s330 + $0x250] sm:$0xff]
      %v564 = vld [vmem:[%s330 + $0x258] sm:$0xff]
      %v565 = vld [vmem:[%s330 + $0x260] sm:$0xff]
      %v566 = vld [vmem:[%s330 + $0x268] sm:$0xff]
      %v567 = vld [vmem:[%s330 + $0x270] sm:$0xff]
      %v568 = vld [vmem:[%s330 + $0x278] sm:$0xff]
      %v569 = vld [vmem:[%s330 + $0x280] sm:$0xff]
      %v570 = vld [vmem:[%s330 + $0x288] sm:$0xff]
      %v571 = vld [vmem:[%s330 + $0x290] sm:$0xff]
      %v572 = vld [vmem:[%s330 + $0x298] sm:$0xff]
      %v573 = vld [vmem:[%s330 + $0x2a0] sm:$0xff]
      %v574 = vld [vmem:[%s330 + $0x2a8] sm:$0xff]
      %v575 = vld [vmem:[%s330 + $0x2b0] sm:$0xff]
      %v576 = vld [vmem:[%s330 + $0x2b8] sm:$0xff]
      %v577 = vld [vmem:[%s330 + $0x2c0] sm:$0xff]
      %v578 = vld [vmem:[%s330 + $0x2c8] sm:$0xff]
      %v579 = vld [vmem:[%s330 + $0x2d0] sm:$0xff]
      %v580 = vld [vmem:[%s330 + $0x2d8] sm:$0xff]
      %v581 = vld [vmem:[%s330 + $0x2e0] sm:$0xff]
      %v582 = vld [vmem:[%s330 + $0x2e8] sm:$0xff]
      %v583 = vld [vmem:[%s330 + $0x2f0] sm:$0xff]
      %v584 = vld [vmem:[%s330 + $0x2f8] sm:$0xff]
      %v585 = vld [vmem:[%s330 + $0x300] sm:$0xff]
      %v586 = vld [vmem:[%s330 + $0x308] sm:$0xff]
      %v587 = vld [vmem:[%s330 + $0x310] sm:$0xff]
      %v588 = vld [vmem:[%s330 + $0x318] sm:$0xff]
      %v589 = vld [vmem:[%s330 + $0x320] sm:$0xff]
      %v590 = vld [vmem:[%s330 + $0x328] sm:$0xff]
      %v591 = vld [vmem:[%s330 + $0x330] sm:$0xff]
      %v592 = vld [vmem:[%s330 + $0x338] sm:$0xff]
      %v593 = vld [vmem:[%s330 + $0x340] sm:$0xff]
      %v594 = vld [vmem:[%s330 + $0x348] sm:$0xff]
      %v595 = vld [vmem:[%s330 + $0x350] sm:$0xff]
      %v596 = vld [vmem:[%s330 + $0x358] sm:$0xff]
      %v597 = vld [vmem:[%s330 + $0x360] sm:$0xff]
      %v598 = vld [vmem:[%s330 + $0x368] sm:$0xff]
      %v599 = vld [vmem:[%s330 + $0x370] sm:$0xff]
      %v600 = vld [vmem:[%s330 + $0x378] sm:$0xff]
      %v601 = vld [vmem:[%s330 + $0x380] sm:$0xff]
      %v602 = vld [vmem:[%s330 + $0x388] sm:$0xff]
      %v603 = vld [vmem:[%s330 + $0x390] sm:$0xff]
      %v604 = vld [vmem:[%s330 + $0x398] sm:$0xff]
      %v605 = vld [vmem:[%s330 + $0x3a0] sm:$0xff]
      %v606 = vld [vmem:[%s330 + $0x3a8] sm:$0xff]
      %v607 = vld [vmem:[%s330 + $0x3b0] sm:$0xff]
      %v608 = vld [vmem:[%s330 + $0x3b8] sm:$0xff]
      %v609 = vld [vmem:[%s330 + $0x3c0] sm:$0xff]
      %v610 = vld [vmem:[%s330 + $0x3c8] sm:$0xff]
      %v611 = vld [vmem:[%s330 + $0x3d0] sm:$0xff]
      %v612 = vld [vmem:[%s330 + $0x3d8] sm:$0xff]
      %v613 = vld [vmem:[%s330 + $0x3e0] sm:$0xff]
      %v614 = vld [vmem:[%s330 + $0x3e8] sm:$0xff]
      %v615 = vld [vmem:[%s330 + $0x3f0] sm:$0xff]
      %v616 = vld [vmem:[%s330 + $0x3f8] sm:$0xff]
      %v617 = vld [vmem:[%s330 + $0x400] sm:$0xff]
      %v618 = vld [vmem:[%s330 + $0x408] sm:$0xff]
      %v619 = vld [vmem:[%s330 + $0x410] sm:$0xff]
      %v620 = vld [vmem:[%s330 + $0x418] sm:$0xff]
      %v621 = vld [vmem:[%s330 + $0x420] sm:$0xff]
      %v622 = vld [vmem:[%s330 + $0x428] sm:$0xff]
      %v623 = vld [vmem:[%s330 + $0x430] sm:$0xff]
      %v624 = vld [vmem:[%s330 + $0x438] sm:$0xff]
      %v625 = vld [vmem:[%s330 + $0x440] sm:$0xff]
      %v626 = vld [vmem:[%s330 + $0x448] sm:$0xff]
      %v627 = vld [vmem:[%s330 + $0x450] sm:$0xff]
      %v628 = vld [vmem:[%s330 + $0x458] sm:$0xff]
      %v629 = vld [vmem:[%s330 + $0x460] sm:$0xff]
      %v630 = vld [vmem:[%s330 + $0x468] sm:$0xff]
      %v631 = vld [vmem:[%s330 + $0x470] sm:$0xff]
      %v632 = vld [vmem:[%s330 + $0x478] sm:$0xff]
      %v633 = vld [vmem:[%s330 + $0x480] sm:$0xff]
      %v634 = vld [vmem:[%s330 + $0x488] sm:$0xff]
      %v635 = vld [vmem:[%s330 + $0x490] sm:$0xff]
      %v636 = vld [vmem:[%s330 + $0x498] sm:$0xff]
      %v637 = vld [vmem:[%s330 + $0x4a0] sm:$0xff]
      %v638 = vld [vmem:[%s330 + $0x4a8] sm:$0xff]
      %v639 = vld [vmem:[%s330 + $0x4b0] sm:$0xff]
      %v640 = vld [vmem:[%s330 + $0x4b8] sm:$0xff]
      %v641 = vld [vmem:[%s330 + $0x4c0] sm:$0xff]
      %v642 = vld [vmem:[%s330 + $0x4c8] sm:$0xff]
      %v643 = vld [vmem:[%s330 + $0x4d0] sm:$0xff]
      %v644 = vld [vmem:[%s330 + $0x4d8] sm:$0xff]
      %v645 = vld [vmem:[%s330 + $0x4e0] sm:$0xff]
      %v646 = vld [vmem:[%s330 + $0x4e8] sm:$0xff]
      %v647 = vld [vmem:[%s330 + $0x4f0] sm:$0xff]
      %v648 = vld [vmem:[%s330 + $0x4f8] sm:$0xff]
      %v649 = vld [vmem:[%s330 + $0x500] sm:$0xff]
      %v650 = vld [vmem:[%s330 + $0x508] sm:$0xff]
      %v651 = vld [vmem:[%s330 + $0x510] sm:$0xff]
      %v652 = vld [vmem:[%s330 + $0x518] sm:$0xff]
      %v653 = vld [vmem:[%s330 + $0x520] sm:$0xff]
      %v654 = vld [vmem:[%s330 + $0x528] sm:$0xff]
      %v655 = vld [vmem:[%s330 + $0x530] sm:$0xff]
      %v656 = vld [vmem:[%s330 + $0x538] sm:$0xff]
      %v657 = vld [vmem:[%s330 + $0x540] sm:$0xff]
      %v658 = vld [vmem:[%s330 + $0x548] sm:$0xff]
      %v659 = vld [vmem:[%s330 + $0x550] sm:$0xff]
      %v660 = vld [vmem:[%s330 + $0x558] sm:$0xff]
      %v661 = vld [vmem:[%s330 + $0x560] sm:$0xff]
      %v662 = vld [vmem:[%s330 + $0x568] sm:$0xff]
      %v663 = vld [vmem:[%s330 + $0x570] sm:$0xff]
      %v664 = vld [vmem:[%s330 + $0x578] sm:$0xff]
      %v665 = vld [vmem:[%s330 + $0x580] sm:$0xff]
      %v666 = vld [vmem:[%s330 + $0x588] sm:$0xff]
      %v667 = vld [vmem:[%s330 + $0x590] sm:$0xff]
      %v668 = vld [vmem:[%s330 + $0x598] sm:$0xff]
      %v669 = vld [vmem:[%s330 + $0x5a0] sm:$0xff]
      %v670 = vld [vmem:[%s330 + $0x5a8] sm:$0xff]
      %v671 = vld [vmem:[%s330 + $0x5b0] sm:$0xff]
      %v672 = vld [vmem:[%s330 + $0x5b8] sm:$0xff]
      %v673 = vld [vmem:[%s330 + $0x5c0] sm:$0xff]
      %v674 = vld [vmem:[%s330 + $0x5c8] sm:$0xff]
      %v675 = vld [vmem:[%s330 + $0x5d0] sm:$0xff]
      %v676 = vld [vmem:[%s330 + $0x5d8] sm:$0xff]
      %v677 = vld [vmem:[%s330 + $0x5e0] sm:$0xff]
      %v678 = vld [vmem:[%s330 + $0x5e8] sm:$0xff]
      %v679 = vld [vmem:[%s330 + $0x5f0] sm:$0xff]
      %v680 = vld [vmem:[%s330 + $0x5f8] sm:$0xff]
      %v681 = vld [vmem:[%s330 + $0x600] sm:$0xff]
      %v682 = vld [vmem:[%s330 + $0x608] sm:$0xff]
      %v683 = vld [vmem:[%s330 + $0x610] sm:$0xff]
      %v684 = vld [vmem:[%s330 + $0x618] sm:$0xff]
      %v685 = vld [vmem:[%s330 + $0x620] sm:$0xff]
      %v686 = vld [vmem:[%s330 + $0x628] sm:$0xff]
      %v687 = vld [vmem:[%s330 + $0x630] sm:$0xff]
      %v688 = vld [vmem:[%s330 + $0x638] sm:$0xff]
      %v689 = vld [vmem:[%s330 + $0x640] sm:$0xff]
      %v690 = vld [vmem:[%s330 + $0x648] sm:$0xff]
      %v691 = vld [vmem:[%s330 + $0x650] sm:$0xff]
      %v692 = vld [vmem:[%s330 + $0x658] sm:$0xff]
      %v693 = vld [vmem:[%s330 + $0x660] sm:$0xff]
      %v694 = vld [vmem:[%s330 + $0x668] sm:$0xff]
      %v695 = vld [vmem:[%s330 + $0x670] sm:$0xff]
      %v696 = vld [vmem:[%s330 + $0x678] sm:$0xff]
      %v697 = vld [vmem:[%s330 + $0x680] sm:$0xff]
      %v698 = vld [vmem:[%s330 + $0x688] sm:$0xff]
      %v699 = vld [vmem:[%s330 + $0x690] sm:$0xff]
      %v700 = vld [vmem:[%s330 + $0x698] sm:$0xff]
      %v701 = vld [vmem:[%s330 + $0x6a0] sm:$0xff]
      %v702 = vld [vmem:[%s330 + $0x6a8] sm:$0xff]
      %v703 = vld [vmem:[%s330 + $0x6b0] sm:$0xff]
      %v704 = vld [vmem:[%s330 + $0x6b8] sm:$0xff]
      %v705 = vld [vmem:[%s330 + $0x6c0] sm:$0xff]
      %v706 = vld [vmem:[%s330 + $0x6c8] sm:$0xff]
      %v707 = vld [vmem:[%s330 + $0x6d0] sm:$0xff]
      %v708 = vld [vmem:[%s330 + $0x6d8] sm:$0xff]
      %v709 = vld [vmem:[%s330 + $0x6e0] sm:$0xff]
      %v710 = vld [vmem:[%s330 + $0x6e8] sm:$0xff]
      %v711 = vld [vmem:[%s330 + $0x6f0] sm:$0xff]
      %v712 = vld [vmem:[%s330 + $0x6f8] sm:$0xff]
      %v713 = vld [vmem:[%s330 + $0x700] sm:$0xff]
      %v714 = vld [vmem:[%s330 + $0x708] sm:$0xff]
      %v715 = vld [vmem:[%s330 + $0x710] sm:$0xff]
      %v716 = vld [vmem:[%s330 + $0x718] sm:$0xff]
      %v717 = vld [vmem:[%s330 + $0x720] sm:$0xff]
      %v718 = vld [vmem:[%s330 + $0x728] sm:$0xff]
      %v719 = vld [vmem:[%s330 + $0x730] sm:$0xff]
      %v720 = vld [vmem:[%s330 + $0x738] sm:$0xff]
      %v721 = vld [vmem:[%s330 + $0x740] sm:$0xff]
      %v722 = vld [vmem:[%s330 + $0x748] sm:$0xff]
      %v723 = vld [vmem:[%s330 + $0x750] sm:$0xff]
      %v724 = vld [vmem:[%s330 + $0x758] sm:$0xff]
      %v725 = vld [vmem:[%s330 + $0x760] sm:$0xff]
      %v726 = vld [vmem:[%s330 + $0x768] sm:$0xff]
      %v727 = vld [vmem:[%s330 + $0x770] sm:$0xff]
      %v728 = vld [vmem:[%s330 + $0x778] sm:$0xff]
      %v729 = vld [vmem:[%s330 + $0x780] sm:$0xff]
      %v730 = vld [vmem:[%s330 + $0x788] sm:$0xff]
      %v731 = vld [vmem:[%s330 + $0x790] sm:$0xff]
      %v732 = vld [vmem:[%s330 + $0x798] sm:$0xff]
      %v733 = vld [vmem:[%s330 + $0x7a0] sm:$0xff]
      %v734 = vld [vmem:[%s330 + $0x7a8] sm:$0xff]
      %v735 = vld [vmem:[%s330 + $0x7b0] sm:$0xff]
      %v736 = vld [vmem:[%s330 + $0x7b8] sm:$0xff]
      %v737 = vld [vmem:[%s330 + $0x7c0] sm:$0xff]
      %v738 = vld [vmem:[%s330 + $0x7c8] sm:$0xff]
      %v739 = vld [vmem:[%s330 + $0x7d0] sm:$0xff]
      %v740 = vld [vmem:[%s330 + $0x7d8] sm:$0xff]
      %v741 = vld [vmem:[%s330 + $0x7e0] sm:$0xff]
      %v742 = vld [vmem:[%s330 + $0x7e8] sm:$0xff]
      %v743 = vld [vmem:[%s330 + $0x7f0] sm:$0xff]
      %v744 = vld [vmem:[%s330 + $0x7f8] sm:$0xff]
      %v745 = vld [vmem:[%s1] sm:$0xff]
      %v746 = vld [vmem:[%s1 + $0x8] sm:$0x1]
      %v747 = vld [vmem:[%s2] sm:$0x1]
      %v749 = vlaneseq
      %v750 = vshrl.u32 %v749, 7
      %v751 = vsub.s32 0, %v750
      %v752 = vrot.slane %v747, %v751
      %vm754 = vcmask 72704
      %v756 = vsel %vm754, %v489, 0
      %v759 = vsel %vm754, %v490, 0
      %v762 = vsel %vm754, %v491, 0
      %v765 = vsel %vm754, %v492, 0
      %v768 = vsel %vm754, %v493, 0
      %v771 = vsel %vm754, %v494, 0
      %v774 = vsel %vm754, %v495, 0
      %v777 = vsel %vm754, %v496, 0
      %v780 = vsel %vm754, %v497, 0
      %v783 = vsel %vm754, %v498, 0
      %v786 = vsel %vm754, %v499, 0
      %v789 = vsel %vm754, %v500, 0
      %v792 = vsel %vm754, %v501, 0
      %v795 = vsel %vm754, %v502, 0
      %v798 = vsel %vm754, %v503, 0
      %v801 = vsel %vm754, %v504, 0
      %v804 = vsel %vm754, %v505, 0
      %v807 = vsel %vm754, %v506, 0
      %v810 = vsel %vm754, %v507, 0
      %v813 = vsel %vm754, %v508, 0
      %v816 = vsel %vm754, %v509, 0
      %v819 = vsel %vm754, %v510, 0
      %v822 = vsel %vm754, %v511, 0
      %v825 = vsel %vm754, %v512, 0
      %v828 = vsel %vm754, %v513, 0
      %v831 = vsel %vm754, %v514, 0
      %v834 = vsel %vm754, %v515, 0
      %v837 = vsel %vm754, %v516, 0
      %v840 = vsel %vm754, %v517, 0
      %v843 = vsel %vm754, %v518, 0
      %v846 = vsel %vm754, %v519, 0
      %v849 = vsel %vm754, %v520, 0
      %v852 = vsel %vm754, %v521, 0
      %v855 = vsel %vm754, %v522, 0
      %v858 = vsel %vm754, %v523, 0
      %v861 = vsel %vm754, %v524, 0
      %v864 = vsel %vm754, %v525, 0
      %v867 = vsel %vm754, %v526, 0
      %v870 = vsel %vm754, %v527, 0
      %v873 = vsel %vm754, %v528, 0
      %v876 = vsel %vm754, %v529, 0
      %v879 = vsel %vm754, %v530, 0
      %v882 = vsel %vm754, %v531, 0
      %v885 = vsel %vm754, %v532, 0
      %v888 = vsel %vm754, %v533, 0
      %v891 = vsel %vm754, %v534, 0
      %v894 = vsel %vm754, %v535, 0
      %v897 = vsel %vm754, %v536, 0
      %v900 = vsel %vm754, %v537, 0
      %v903 = vsel %vm754, %v538, 0
      %v906 = vsel %vm754, %v539, 0
      %v909 = vsel %vm754, %v540, 0
      %v912 = vsel %vm754, %v541, 0
      %v915 = vsel %vm754, %v542, 0
      %v918 = vsel %vm754, %v543, 0
      %v921 = vsel %vm754, %v544, 0
      %v924 = vsel %vm754, %v545, 0
      %v927 = vsel %vm754, %v546, 0
      %v930 = vsel %vm754, %v547, 0
      %v933 = vsel %vm754, %v548, 0
      %v936 = vsel %vm754, %v549, 0
      %v939 = vsel %vm754, %v550, 0
      %v942 = vsel %vm754, %v551, 0
      %v945 = vsel %vm754, %v552, 0
      %v948 = vsel %vm754, %v553, 0
      %v951 = vsel %vm754, %v554, 0
      %v954 = vsel %vm754, %v555, 0
      %v957 = vsel %vm754, %v556, 0
      %v960 = vsel %vm754, %v557, 0
      %v963 = vsel %vm754, %v558, 0
      %v966 = vsel %vm754, %v559, 0
      %v969 = vsel %vm754, %v560, 0
      %v972 = vsel %vm754, %v561, 0
      %v975 = vsel %vm754, %v562, 0
      %v978 = vsel %vm754, %v563, 0
      %v981 = vsel %vm754, %v564, 0
      %v984 = vsel %vm754, %v565, 0
      %v987 = vsel %vm754, %v566, 0
      %v990 = vsel %vm754, %v567, 0
      %v993 = vsel %vm754, %v568, 0
      %v996 = vsel %vm754, %v569, 0
      %v999 = vsel %vm754, %v570, 0
      %v1002 = vsel %vm754, %v571, 0
      %v1005 = vsel %vm754, %v572, 0
      %v1008 = vsel %vm754, %v573, 0
      %v1011 = vsel %vm754, %v574, 0
      %v1014 = vsel %vm754, %v575, 0
      %v1017 = vsel %vm754, %v576, 0
      %v1020 = vsel %vm754, %v577, 0
      %v1023 = vsel %vm754, %v578, 0
      %v1026 = vsel %vm754, %v579, 0
      %v1029 = vsel %vm754, %v580, 0
      %v1032 = vsel %vm754, %v581, 0
      %v1035 = vsel %vm754, %v582, 0
      %v1038 = vsel %vm754, %v583, 0
      %v1041 = vsel %vm754, %v584, 0
      %v1044 = vsel %vm754, %v585, 0
      %v1047 = vsel %vm754, %v586, 0
      %v1050 = vsel %vm754, %v587, 0
      %v1053 = vsel %vm754, %v588, 0
      %v1056 = vsel %vm754, %v589, 0
      %v1059 = vsel %vm754, %v590, 0
      %v1062 = vsel %vm754, %v591, 0
      %v1065 = vsel %vm754, %v592, 0
      %v1068 = vsel %vm754, %v593, 0
      %v1071 = vsel %vm754, %v594, 0
      %v1074 = vsel %vm754, %v595, 0
      %v1077 = vsel %vm754, %v596, 0
      %v1080 = vsel %vm754, %v597, 0
      %v1083 = vsel %vm754, %v598, 0
      %v1086 = vsel %vm754, %v599, 0
      %v1089 = vsel %vm754, %v600, 0
      %v1092 = vsel %vm754, %v601, 0
      %v1095 = vsel %vm754, %v602, 0
      %v1098 = vsel %vm754, %v603, 0
      %v1101 = vsel %vm754, %v604, 0
      %v1104 = vsel %vm754, %v605, 0
      %v1107 = vsel %vm754, %v606, 0
      %v1110 = vsel %vm754, %v607, 0
      %v1113 = vsel %vm754, %v608, 0
      %v1116 = vsel %vm754, %v609, 0
      %v1119 = vsel %vm754, %v610, 0
      %v1122 = vsel %vm754, %v611, 0
      %v1125 = vsel %vm754, %v612, 0
      %v1128 = vsel %vm754, %v613, 0
      %v1131 = vsel %vm754, %v614, 0
      %v1134 = vsel %vm754, %v615, 0
      %v1137 = vsel %vm754, %v616, 0
      %v1140 = vsel %vm754, %v617, 0
      %v1143 = vsel %vm754, %v618, 0
      %v1146 = vsel %vm754, %v619, 0
      %v1149 = vsel %vm754, %v620, 0
      %v1152 = vsel %vm754, %v621, 0
      %v1155 = vsel %vm754, %v622, 0
      %v1158 = vsel %vm754, %v623, 0
      %v1161 = vsel %vm754, %v624, 0
      %v1164 = vsel %vm754, %v625, 0
      %v1167 = vsel %vm754, %v626, 0
      %v1170 = vsel %vm754, %v627, 0
      %v1173 = vsel %vm754, %v628, 0
      %v1176 = vsel %vm754, %v629, 0
      %v1179 = vsel %vm754, %v630, 0
      %v1182 = vsel %vm754, %v631, 0
      %v1185 = vsel %vm754, %v632, 0
      %v1188 = vsel %vm754, %v633, 0
      %v1191 = vsel %vm754, %v634, 0
      %v1194 = vsel %vm754, %v635, 0
      %v1197 = vsel %vm754, %v636, 0
      %v1200 = vsel %vm754, %v637, 0
      %v1203 = vsel %vm754, %v638, 0
      %v1206 = vsel %vm754, %v639, 0
      %v1209 = vsel %vm754, %v640, 0
      %v1212 = vsel %vm754, %v641, 0
      %v1215 = vsel %vm754, %v642, 0
      %v1218 = vsel %vm754, %v643, 0
      %v1221 = vsel %vm754, %v644, 0
      %v1224 = vsel %vm754, %v645, 0
      %v1227 = vsel %vm754, %v646, 0
      %v1230 = vsel %vm754, %v647, 0
      %v1233 = vsel %vm754, %v648, 0
      %v1236 = vsel %vm754, %v649, 0
      %v1239 = vsel %vm754, %v650, 0
      %v1242 = vsel %vm754, %v651, 0
      %v1245 = vsel %vm754, %v652, 0
      %v1248 = vsel %vm754, %v653, 0
      %v1251 = vsel %vm754, %v654, 0
      %v1254 = vsel %vm754, %v655, 0
      %v1257 = vsel %vm754, %v656, 0
      %v1260 = vsel %vm754, %v657, 0
      %v1263 = vsel %vm754, %v658, 0
      %v1266 = vsel %vm754, %v659, 0
      %v1269 = vsel %vm754, %v660, 0
      %v1272 = vsel %vm754, %v661, 0
      %v1275 = vsel %vm754, %v662, 0
      %v1278 = vsel %vm754, %v663, 0
      %v1281 = vsel %vm754, %v664, 0
      %v1284 = vsel %vm754, %v665, 0
      %v1287 = vsel %vm754, %v666, 0
      %v1290 = vsel %vm754, %v667, 0
      %v1293 = vsel %vm754, %v668, 0
      %v1296 = vsel %vm754, %v669, 0
      %v1299 = vsel %vm754, %v670, 0
      %v1302 = vsel %vm754, %v671, 0
      %v1305 = vsel %vm754, %v672, 0
      %v1308 = vsel %vm754, %v673, 0
      %v1311 = vsel %vm754, %v674, 0
      %v1314 = vsel %vm754, %v675, 0
      %v1317 = vsel %vm754, %v676, 0
      %v1320 = vsel %vm754, %v677, 0
      %v1323 = vsel %vm754, %v678, 0
      %v1326 = vsel %vm754, %v679, 0
      %v1329 = vsel %vm754, %v680, 0
      %v1332 = vsel %vm754, %v681, 0
      %v1335 = vsel %vm754, %v682, 0
      %v1338 = vsel %vm754, %v683, 0
      %v1341 = vsel %vm754, %v684, 0
      %v1344 = vsel %vm754, %v685, 0
      %v1347 = vsel %vm754, %v686, 0
      %v1350 = vsel %vm754, %v687, 0
      %v1353 = vsel %vm754, %v688, 0
      %v1356 = vsel %vm754, %v689, 0
      %v1359 = vsel %vm754, %v690, 0
      %v1362 = vsel %vm754, %v691, 0
      %v1365 = vsel %vm754, %v692, 0
      %v1368 = vsel %vm754, %v693, 0
      %v1371 = vsel %vm754, %v694, 0
      %v1374 = vsel %vm754, %v695, 0
      %v1377 = vsel %vm754, %v696, 0
      %v1380 = vsel %vm754, %v697, 0
      %v1383 = vsel %vm754, %v698, 0
      %v1386 = vsel %vm754, %v699, 0
      %v1389 = vsel %vm754, %v700, 0
      %v1392 = vsel %vm754, %v701, 0
      %v1395 = vsel %vm754, %v702, 0
      %v1398 = vsel %vm754, %v703, 0
      %v1401 = vsel %vm754, %v704, 0
      %v1404 = vsel %vm754, %v705, 0
      %v1407 = vsel %vm754, %v706, 0
      %v1410 = vsel %vm754, %v707, 0
      %v1413 = vsel %vm754, %v708, 0
      %v1416 = vsel %vm754, %v709, 0
      %v1419 = vsel %vm754, %v710, 0
      %v1422 = vsel %vm754, %v711, 0
      %v1425 = vsel %vm754, %v712, 0
      %v1428 = vsel %vm754, %v713, 0
      %v1431 = vsel %vm754, %v714, 0
      %v1434 = vsel %vm754, %v715, 0
      %v1437 = vsel %vm754, %v716, 0
      %v1440 = vsel %vm754, %v717, 0
      %v1443 = vsel %vm754, %v718, 0
      %v1446 = vsel %vm754, %v719, 0
      %v1449 = vsel %vm754, %v720, 0
      %v1452 = vsel %vm754, %v721, 0
      %v1455 = vsel %vm754, %v722, 0
      %v1458 = vsel %vm754, %v723, 0
      %v1461 = vsel %vm754, %v724, 0
      %v1464 = vsel %vm754, %v725, 0
      %v1467 = vsel %vm754, %v726, 0
      %v1470 = vsel %vm754, %v727, 0
      %v1473 = vsel %vm754, %v728, 0
      %v1476 = vsel %vm754, %v729, 0
      %v1479 = vsel %vm754, %v730, 0
      %v1482 = vsel %vm754, %v731, 0
      %v1485 = vsel %vm754, %v732, 0
      %v1488 = vsel %vm754, %v733, 0
      %v1491 = vsel %vm754, %v734, 0
      %v1494 = vsel %vm754, %v735, 0
      %v1497 = vsel %vm754, %v736, 0
      %v1500 = vsel %vm754, %v737, 0
      %v1503 = vsel %vm754, %v738, 0
      %v1506 = vsel %vm754, %v739, 0
      %v1509 = vsel %vm754, %v740, 0
      %v1512 = vsel %vm754, %v741, 0
      %v1515 = vsel %vm754, %v742, 0
      %v1518 = vsel %vm754, %v743, 0
      %v1521 = vsel %vm754, %v744, 0
      %vm1523 = vcmask 1040384
      %v1525 = vsel %vm1523, %v746, 0
      %1527 = vmatprep.subr.mxu0 0.0
      %1528 = vmatpush1.msra.mxu0 %v745
      %1529 = vmatprep.subr.mxu0 0.0
      %1530 = vmatpush1.msra.mxu0 %v1525
      %1531 = vmatprep.subr.mxu0 0.0
      %1532 = vmatpush1.msra.mxu0 0.0
      %1533 = vmatprep.subr.mxu0 0.0
      %1534 = vmatpush1.msra.mxu0 0.0
      %1535 = vmatprep.subr.mxu0 0.0
      %1536 = vmatpush1.msra.mxu0 0.0
      %1537 = vmatprep.subr.mxu0 0.0
      %1538 = vmatpush1.msra.mxu0 0.0
      %1539 = vmatprep.subr.mxu0 0.0
      %1540 = vmatpush1.msra.mxu0 0.0
      %1541 = vmatprep.subr.mxu0 0.0
      %1542 = vmatpush1.msra.mxu0 0.0
      %1543 = vmatprep.subr.mxu0 0.0
      %1544 = vmatpush1.msra.mxu0 0.0
      %1545 = vmatprep.subr.mxu0 0.0
      %1546 = vmatpush1.msra.mxu0 0.0
      %1547 = vmatprep.subr.mxu0 0.0
      %1548 = vmatpush1.msra.mxu0 0.0
      %1549 = vmatprep.subr.mxu0 0.0
      %1550 = vmatpush1.msra.mxu0 0.0
      %1551 = vmatprep.subr.mxu0 0.0
      %1552 = vmatpush1.msra.mxu0 0.0
      %1553 = vmatprep.subr.mxu0 0.0
      %1554 = vmatpush1.msra.mxu0 0.0
      %1555 = vmatprep.subr.mxu0 0.0
      %1556 = vmatpush1.msra.mxu0 0.0
      %1557 = vmatprep.subr.mxu0 0.0
      %1558 = vmatpush1.msra.mxu0 0.0
      %1559 = vmatprep.subr.mxu0 0.0
      %1560 = vmatpush1.msra.mxu0 0.0
      %1561 = vmatprep.subr.mxu0 0.0
      %1562 = vmatpush1.msra.mxu0 0.0
      %1563 = vmatprep.subr.mxu0 0.0
      %1564 = vmatpush1.msra.mxu0 0.0
      %1565 = vmatprep.subr.mxu0 0.0
      %1566 = vmatpush1.msra.mxu0 0.0
      %1567 = vmatprep.subr.mxu0 0.0
      %1568 = vmatpush1.msra.mxu0 0.0
      %1569 = vmatprep.subr.mxu0 0.0
      %1570 = vmatpush1.msra.mxu0 0.0
      %1571 = vmatprep.subr.mxu0 0.0
      %1572 = vmatpush1.msra.mxu0 0.0
      %1573 = vmatprep.subr.mxu0 0.0
      %1574 = vmatpush1.msra.mxu0 0.0
      %1575 = vmatprep.subr.mxu0 0.0
      %1576 = vmatpush1.msra.mxu0 0.0
      %1577 = vmatprep.subr.mxu0 0.0
      %1578 = vmatpush1.msra.mxu0 0.0
      %1579 = vmatprep.subr.mxu0 0.0
      %1580 = vmatpush1.msra.mxu0 0.0
      %1581 = vmatprep.subr.mxu0 0.0
      %1582 = vmatpush1.msra.mxu0 0.0
      %1583 = vmatprep.subr.mxu0 0.0
      %1584 = vmatpush1.msra.mxu0 0.0
      %1585 = vmatprep.subr.mxu0 0.0
      %1586 = vmatpush1.msra.mxu0 0.0
      %1587 = vmatprep.subr.mxu0 0.0
      %1588 = vmatpush1.msra.mxu0 0.0
      %1589 = vmatprep.subr.mxu0 0.0
      %1590 = vmatpush1.msra.mxu0 0.0
      %1591 = vmatprep.mubr.f32.mxu0 0.0
      %1592 = vmatmul.mubr.f32.gmra.mrb[0].mxu0 %v756
      %v1593 = vpop.f32.mrb[0].mxu0
      %v1594 = vadd.f32 %v752, %v1593
      %v1595 = vpop.f32.mrb[0].mxu0
      %1596 = vmatprep.mubr.f32.mxu0 0.0
      %1597 = vmatmul.mubr.f32.gmra.mrb[0].mxu0 %v759
      %v1598 = vpop.f32.mrb[0].mxu0
      %v1599 = vadd.f32 %v752, %v1598
      %v1600 = vpop.f32.mrb[0].mxu0
      %1601 = vmatprep.mubr.f32.mxu0 0.0
      %1602 = vmatmul.mubr.f32.gmra.mrb[0].mxu0 %v762
      %v1603 = vpop.f32.mrb[0].mxu0
      %v1604 = vadd.f32 %v752, %v1603
      %v1605 = vpop.f32.mrb[0].mxu0
      %1606 = vmatprep.mubr.f32.mxu0 0.0
      %1607 = vmatmul.mubr.f32.gmra.mrb[0].mxu0 %v765
      %v1608 = vpop.f32.mrb[0].mxu0
      %v1609 = vadd.f32 %v752, %v1608
      %v1610 = vpop.f32.mrb[0].mxu0
      %1611 = vmatprep.mubr.f32.mxu0 0.0
      %1612 = vmatmul.mubr.f32.gmra.mrb[0].mxu0 %v768
      %v1613 = vpop.f32.mrb[0].mxu0
      %v1614 = vadd.f32 %v752, %v1613
      %v1615 = vpop.f32.mrb[0].mxu0
      %1616 = vmatprep.mubr.f32.mxu0 0.0
      %1617 = vmatmul.mubr.f32.gmra.mrb[0].mxu0 %v771
      %v1618 = vpop.f32.mrb[0].mxu0
      %v1619 = vadd.f32 %v752, %v1618
      %v1620 = vpop.f32.mrb[0].mxu0
      %1621 = vmatprep.mubr.f32.mxu0 0.0
      %1622 = vmatmul.mubr.f32.gmra.mrb[0].mxu0 %v774
      %v1623 = vpop.f32.mrb[0].mxu0
      %v1624 = vadd.f32 %v752, %v1623
      %v1625 = vpop.f32.mrb[0].mxu0
      %1626 = vmatprep.mubr.f32.mxu0 0.0
      %1627 = vmatmul.mubr.f32.gmra.mrb[0].mxu0 %v777
      %v1628 = vpop.f32.mrb[0].mxu0
      %v1629 = vadd.f32 %v752, %v1628
      %v1630 = vpop.f32.mrb[0].mxu0
      %1631 = vmatprep.mubr.f32.mxu0 0.0
      %1632 = vmatmul.mubr.f32.gmra.mrb[0].mxu0 %v780
      %v1633 = vpop.f32.mrb[0].mxu0
      %v1634 = vadd.f32 %v752, %v1633
      %v1635 = vpop.f32.mrb[0].mxu0
      %1636 = vmatprep.mubr.f32.mxu0 0.0
      %1637 = vmatmul.mubr.f32.gmra.mrb[0].mxu0 %v783
      %v1638 = vpop.f32.mrb[0].mxu0
      %v1639 = vadd.f32 %v752, %v1638
      %v1640 = vpop.f32.mrb[0].mxu0
      %1641 = vmatprep.mubr.f32.mxu0 0.0
      %1642 = vmatmul.mubr.f32.gmra.mrb[0].mxu0 %v786
      %v1643 = vpop.f32.mrb[0].mxu0
      %v1644 = vadd.f32 %v752, %v1643
      %v1645 = vpop.f32.mrb[0].mxu0
      %1646 = vmatprep.mubr.f32.mxu0 0.0
      %1647 = vmatmul.mubr.f32.gmra.mrb[0].mxu0 %v789
      %v1648 = vpop.f32.mrb[0].mxu0
      %v1649 = vadd.f32 %v752, %v1648
      %v1650 = vpop.f32.mrb[0].mxu0
      %1651 = vmatprep.mubr.f32.mxu0 0.0
      %1652 = vmatmul.mubr.f32.gmra.mrb[0].mxu0 %v792
      %v1653 = vpop.f32.mrb[0].mxu0
      %v1654 = vadd.f32 %v752, %v1653
      %v1655 = vpop.f32.mrb[0].mxu0
      %1656 = vmatprep.mubr.f32.mxu0 0.0
      %1657 = vmatmul.mubr.f32.gmra.mrb[0].mxu0 %v795
      %v1658 = vpop.f32.mrb[0].mxu0
      %v1659 = vadd.f32 %v752, %v1658
      %v1660 = vpop.f32.mrb[0].mxu0
      %1661 = vmatprep.mubr.f32.mxu0 0.0
      %1662 = vmatmul.mubr.f32.gmra.mrb[0].mxu0 %v798
      %v1663 = vpop.f32.mrb[0].mxu0
      %v1664 = vadd.f32 %v752, %v1663
      %v1665 = vpop.f32.mrb[0].mxu0
      %1666 = vmatprep.mubr.f32.mxu0 0.0
      %1667 = vmatmul.mubr.f32.gmra.mrb[0].mxu0 %v801
      %v1668 = vpop.f32.mrb[0].mxu0
      %v1669 = vadd.f32 %v752, %v1668
      %v1670 = vpop.f32.mrb[0].mxu0
      %1671 = vmatprep.mubr.f32.mxu0 0.0
      %1672 = vmatmul.mubr.f32.gmra.mrb[0].mxu0 %v804
      %v1673 = vpop.f32.mrb[0].mxu0
      %v1674 = vadd.f32 %v752, %v1673
      %v1675 = vpop.f32.mrb[0].mxu0
      %1676 = vmatprep.mubr.f32.mxu0 0.0
      %1677 = vmatmul.mubr.f32.gmra.mrb[0].mxu0 %v807
      %v1678 = vpop.f32.mrb[0].mxu0
      %v1679 = vadd.f32 %v752, %v1678
      %v1680 = vpop.f32.mrb[0].mxu0
      %1681 = vmatprep.mubr.f32.mxu0 0.0
      %1682 = vmatmul.mubr.f32.gmra.mrb[0].mxu0 %v810
      %v1683 = vpop.f32.mrb[0].mxu0
      %v1684 = vadd.f32 %v752, %v1683
      %v1685 = vpop.f32.mrb[0].mxu0
      %1686 = vmatprep.mubr.f32.mxu0 0.0
      %1687 = vmatmul.mubr.f32.gmra.mrb[0].mxu0 %v813
      %v1688 = vpop.f32.mrb[0].mxu0
      %v1689 = vadd.f32 %v752, %v1688
      %v1690 = vpop.f32.mrb[0].mxu0
      %1691 = vmatprep.mubr.f32.mxu0 0.0
      %1692 = vmatmul.mubr.f32.gmra.mrb[0].mxu0 %v816
      %v1693 = vpop.f32.mrb[0].mxu0
      %v1694 = vadd.f32 %v752, %v1693
      %v1695 = vpop.f32.mrb[0].mxu0
      %1696 = vmatprep.mubr.f32.mxu0 0.0
      %1697 = vmatmul.mubr.f32.gmra.mrb[0].mxu0 %v819
      %v1698 = vpop.f32.mrb[0].mxu0
      %v1699 = vadd.f32 %v752, %v1698
      %v1700 = vpop.f32.mrb[0].mxu0
      %1701 = vmatprep.mubr.f32.mxu0 0.0
      %1702 = vmatmul.mubr.f32.gmra.mrb[0].mxu0 %v822
      %v1703 = vpop.f32.mrb[0].mxu0
      %v1704 = vadd.f32 %v752, %v1703
      %v1705 = vpop.f32.mrb[0].mxu0
      %1706 = vmatprep.mubr.f32.mxu0 0.0
      %1707 = vmatmul.mubr.f32.gmra.mrb[0].mxu0 %v825
      %v1708 = vpop.f32.mrb[0].mxu0
      %v1709 = vadd.f32 %v752, %v1708
      %v1710 = vpop.f32.mrb[0].mxu0
      %1711 = vmatprep.mubr.f32.mxu0 0.0
      %1712 = vmatmul.mubr.f32.gmra.mrb[0].mxu0 %v828
      %v1713 = vpop.f32.mrb[0].mxu0
      %v1714 = vadd.f32 %v752, %v1713
      %v1715 = vpop.f32.mrb[0].mxu0
      %1716 = vmatprep.mubr.f32.mxu0 0.0
      %1717 = vmatmul.mubr.f32.gmra.mrb[0].mxu0 %v831
      %v1718 = vpop.f32.mrb[0].mxu0
      %v1719 = vadd.f32 %v752, %v1718
      %v1720 = vpop.f32.mrb[0].mxu0
      %1721 = vmatprep.mubr.f32.mxu0 0.0
      %1722 = vmatmul.mubr.f32.gmra.mrb[0].mxu0 %v834
      %v1723 = vpop.f32.mrb[0].mxu0
      %v1724 = vadd.f32 %v752, %v1723
      %v1725 = vpop.f32.mrb[0].mxu0
      %1726 = vmatprep.mubr.f32.mxu0 0.0
      %1727 = vmatmul.mubr.f32.gmra.mrb[0].mxu0 %v837
      %v1728 = vpop.f32.mrb[0].mxu0
      %v1729 = vadd.f32 %v752, %v1728
      %v1730 = vpop.f32.mrb[0].mxu0
      %1731 = vmatprep.mubr.f32.mxu0 0.0
      %1732 = vmatmul.mubr.f32.gmra.mrb[0].mxu0 %v840
      %v1733 = vpop.f32.mrb[0].mxu0
      %v1734 = vadd.f32 %v752, %v1733
      %v1735 = vpop.f32.mrb[0].mxu0
      %1736 = vmatprep.mubr.f32.mxu0 0.0
      %1737 = vmatmul.mubr.f32.gmra.mrb[0].mxu0 %v843
      %v1738 = vpop.f32.mrb[0].mxu0
      %v1739 = vadd.f32 %v752, %v1738
      %v1740 = vpop.f32.mrb[0].mxu0
      %1741 = vmatprep.mubr.f32.mxu0 0.0
      %1742 = vmatmul.mubr.f32.gmra.mrb[0].mxu0 %v846
      %v1743 = vpop.f32.mrb[0].mxu0
      %v1744 = vadd.f32 %v752, %v1743
      %v1745 = vpop.f32.mrb[0].mxu0
      %1746 = vmatprep.mubr.f32.mxu0 0.0
      %1747 = vmatmul.mubr.f32.gmra.mrb[0].mxu0 %v849
      %v1748 = vpop.f32.mrb[0].mxu0
      %v1749 = vadd.f32 %v752, %v1748
      %v1750 = vpop.f32.mrb[0].mxu0
      %1751 = vmatprep.mubr.f32.mxu0 0.0
      %1752 = vmatmul.mubr.f32.gmra.mrb[0].mxu0 %v852
      %v1753 = vpop.f32.mrb[0].mxu0
      %v1754 = vadd.f32 %v752, %v1753
      %v1755 = vpop.f32.mrb[0].mxu0
      %1756 = vmatprep.mubr.f32.mxu0 0.0
      %1757 = vmatmul.mubr.f32.gmra.mrb[0].mxu0 %v855
      %v1758 = vpop.f32.mrb[0].mxu0
      %v1759 = vadd.f32 %v752, %v1758
      %v1760 = vpop.f32.mrb[0].mxu0
      %1761 = vmatprep.mubr.f32.mxu0 0.0
      %1762 = vmatmul.mubr.f32.gmra.mrb[0].mxu0 %v858
      %v1763 = vpop.f32.mrb[0].mxu0
      %v1764 = vadd.f32 %v752, %v1763
      %v1765 = vpop.f32.mrb[0].mxu0
      %1766 = vmatprep.mubr.f32.mxu0 0.0
      %1767 = vmatmul.mubr.f32.gmra.mrb[0].mxu0 %v861
      %v1768 = vpop.f32.mrb[0].mxu0
      %v1769 = vadd.f32 %v752, %v1768
      %v1770 = vpop.f32.mrb[0].mxu0
      %1771 = vmatprep.mubr.f32.mxu0 0.0
      %1772 = vmatmul.mubr.f32.gmra.mrb[0].mxu0 %v864
      %v1773 = vpop.f32.mrb[0].mxu0
      %v1774 = vadd.f32 %v752, %v1773
      %v1775 = vpop.f32.mrb[0].mxu0
      %1776 = vmatprep.mubr.f32.mxu0 0.0
      %1777 = vmatmul.mubr.f32.gmra.mrb[0].mxu0 %v867
      %v1778 = vpop.f32.mrb[0].mxu0
      %v1779 = vadd.f32 %v752, %v1778
      %v1780 = vpop.f32.mrb[0].mxu0
      %1781 = vmatprep.mubr.f32.mxu0 0.0
      %1782 = vmatmul.mubr.f32.gmra.mrb[0].mxu0 %v870
      %v1783 = vpop.f32.mrb[0].mxu0
      %v1784 = vadd.f32 %v752, %v1783
      %v1785 = vpop.f32.mrb[0].mxu0
      %1786 = vmatprep.mubr.f32.mxu0 0.0
      %1787 = vmatmul.mubr.f32.gmra.mrb[0].mxu0 %v873
      %v1788 = vpop.f32.mrb[0].mxu0
      %v1789 = vadd.f32 %v752, %v1788
      %v1790 = vpop.f32.mrb[0].mxu0
      %1791 = vmatprep.mubr.f32.mxu0 0.0
      %1792 = vmatmul.mubr.f32.gmra.mrb[0].mxu0 %v876
      %v1793 = vpop.f32.mrb[0].mxu0
      %v1794 = vadd.f32 %v752, %v1793
      %v1795 = vpop.f32.mrb[0].mxu0
      %1796 = vmatprep.mubr.f32.mxu0 0.0
      %1797 = vmatmul.mubr.f32.gmra.mrb[0].mxu0 %v879
      %v1798 = vpop.f32.mrb[0].mxu0
      %v1799 = vadd.f32 %v752, %v1798
      %v1800 = vpop.f32.mrb[0].mxu0
      %1801 = vmatprep.mubr.f32.mxu0 0.0
      %1802 = vmatmul.mubr.f32.gmra.mrb[0].mxu0 %v882
      %v1803 = vpop.f32.mrb[0].mxu0
      %v1804 = vadd.f32 %v752, %v1803
      %v1805 = vpop.f32.mrb[0].mxu0
      %1806 = vmatprep.mubr.f32.mxu0 0.0
      %1807 = vmatmul.mubr.f32.gmra.mrb[0].mxu0 %v885
      %v1808 = vpop.f32.mrb[0].mxu0
      %v1809 = vadd.f32 %v752, %v1808
      %v1810 = vpop.f32.mrb[0].mxu0
      %1811 = vmatprep.mubr.f32.mxu0 0.0
      %1812 = vmatmul.mubr.f32.gmra.mrb[0].mxu0 %v888
      %v1813 = vpop.f32.mrb[0].mxu0
      %v1814 = vadd.f32 %v752, %v1813
      %v1815 = vpop.f32.mrb[0].mxu0
      %1816 = vmatprep.mubr.f32.mxu0 0.0
      %1817 = vmatmul.mubr.f32.gmra.mrb[0].mxu0 %v891
      %v1818 = vpop.f32.mrb[0].mxu0
      %v1819 = vadd.f32 %v752, %v1818
      %v1820 = vpop.f32.mrb[0].mxu0
      %1821 = vmatprep.mubr.f32.mxu0 0.0
      %1822 = vmatmul.mubr.f32.gmra.mrb[0].mxu0 %v894
      %v1823 = vpop.f32.mrb[0].mxu0
      %v1824 = vadd.f32 %v752, %v1823
      %v1825 = vpop.f32.mrb[0].mxu0
      %1826 = vmatprep.mubr.f32.mxu0 0.0
      %1827 = vmatmul.mubr.f32.gmra.mrb[0].mxu0 %v897
      %v1828 = vpop.f32.mrb[0].mxu0
      %v1829 = vadd.f32 %v752, %v1828
      %v1830 = vpop.f32.mrb[0].mxu0
      %1831 = vmatprep.mubr.f32.mxu0 0.0
      %1832 = vmatmul.mubr.f32.gmra.mrb[0].mxu0 %v900
      %v1833 = vpop.f32.mrb[0].mxu0
      %v1834 = vadd.f32 %v752, %v1833
      %v1835 = vpop.f32.mrb[0].mxu0
      %1836 = vmatprep.mubr.f32.mxu0 0.0
      %1837 = vmatmul.mubr.f32.gmra.mrb[0].mxu0 %v903
      %v1838 = vpop.f32.mrb[0].mxu0
      %v1839 = vadd.f32 %v752, %v1838
      %v1840 = vpop.f32.mrb[0].mxu0
      %1841 = vmatprep.mubr.f32.mxu0 0.0
      %1842 = vmatmul.mubr.f32.gmra.mrb[0].mxu0 %v906
      %v1843 = vpop.f32.mrb[0].mxu0
      %v1844 = vadd.f32 %v752, %v1843
      %v1845 = vpop.f32.mrb[0].mxu0
      %1846 = vmatprep.mubr.f32.mxu0 0.0
      %1847 = vmatmul.mubr.f32.gmra.mrb[0].mxu0 %v909
      %v1848 = vpop.f32.mrb[0].mxu0
      %v1849 = vadd.f32 %v752, %v1848
      %v1850 = vpop.f32.mrb[0].mxu0
      %1851 = vmatprep.mubr.f32.mxu0 0.0
      %1852 = vmatmul.mubr.f32.gmra.mrb[0].mxu0 %v912
      %v1853 = vpop.f32.mrb[0].mxu0
      %v1854 = vadd.f32 %v752, %v1853
      %v1855 = vpop.f32.mrb[0].mxu0
      %1856 = vmatprep.mubr.f32.mxu0 0.0
      %1857 = vmatmul.mubr.f32.gmra.mrb[0].mxu0 %v915
      %v1858 = vpop.f32.mrb[0].mxu0
      %v1859 = vadd.f32 %v752, %v1858
      %v1860 = vpop.f32.mrb[0].mxu0
      %1861 = vmatprep.mubr.f32.mxu0 0.0
      %1862 = vmatmul.mubr.f32.gmra.mrb[0].mxu0 %v918
      %v1863 = vpop.f32.mrb[0].mxu0
      %v1864 = vadd.f32 %v752, %v1863
      %v1865 = vpop.f32.mrb[0].mxu0
      %1866 = vmatprep.mubr.f32.mxu0 0.0
      %1867 = vmatmul.mubr.f32.gmra.mrb[0].mxu0 %v921
      %v1868 = vpop.f32.mrb[0].mxu0
      %v1869 = vadd.f32 %v752, %v1868
      %v1870 = vpop.f32.mrb[0].mxu0
      %1871 = vmatprep.mubr.f32.mxu0 0.0
      %1872 = vmatmul.mubr.f32.gmra.mrb[0].mxu0 %v924
      %v1873 = vpop.f32.mrb[0].mxu0
      %v1874 = vadd.f32 %v752, %v1873
      %v1875 = vpop.f32.mrb[0].mxu0
      %1876 = vmatprep.mubr.f32.mxu0 0.0
      %1877 = vmatmul.mubr.f32.gmra.mrb[0].mxu0 %v927
      %v1878 = vpop.f32.mrb[0].mxu0
      %v1879 = vadd.f32 %v752, %v1878
      %v1880 = vpop.f32.mrb[0].mxu0
      %1881 = vmatprep.mubr.f32.mxu0 0.0
      %1882 = vmatmul.mubr.f32.gmra.mrb[0].mxu0 %v930
      %v1883 = vpop.f32.mrb[0].mxu0
      %v1884 = vadd.f32 %v752, %v1883
      %v1885 = vpop.f32.mrb[0].mxu0
      %1886 = vmatprep.mubr.f32.mxu0 0.0
      %1887 = vmatmul.mubr.f32.gmra.mrb[0].mxu0 %v933
      %v1888 = vpop.f32.mrb[0].mxu0
      %v1889 = vadd.f32 %v752, %v1888
      %v1890 = vpop.f32.mrb[0].mxu0
      %1891 = vmatprep.mubr.f32.mxu0 0.0
      %1892 = vmatmul.mubr.f32.gmra.mrb[0].mxu0 %v936
      %v1893 = vpop.f32.mrb[0].mxu0
      %v1894 = vadd.f32 %v752, %v1893
      %v1895 = vpop.f32.mrb[0].mxu0
      %1896 = vmatprep.mubr.f32.mxu0 0.0
      %1897 = vmatmul.mubr.f32.gmra.mrb[0].mxu0 %v939
      %v1898 = vpop.f32.mrb[0].mxu0
      %v1899 = vadd.f32 %v752, %v1898
      %v1900 = vpop.f32.mrb[0].mxu0
      %1901 = vmatprep.mubr.f32.mxu0 0.0
      %1902 = vmatmul.mubr.f32.gmra.mrb[0].mxu0 %v942
      %v1903 = vpop.f32.mrb[0].mxu0
      %v1904 = vadd.f32 %v752, %v1903
      %v1905 = vpop.f32.mrb[0].mxu0
      %1906 = vmatprep.mubr.f32.mxu0 0.0
      %1907 = vmatmul.mubr.f32.gmra.mrb[0].mxu0 %v945
      %v1908 = vpop.f32.mrb[0].mxu0
      %v1909 = vadd.f32 %v752, %v1908
      %v1910 = vpop.f32.mrb[0].mxu0
      %1911 = vmatprep.mubr.f32.mxu0 0.0
      %1912 = vmatmul.mubr.f32.gmra.mrb[0].mxu0 %v948
      %v1913 = vpop.f32.mrb[0].mxu0
      %v1914 = vadd.f32 %v752, %v1913
      %v1915 = vpop.f32.mrb[0].mxu0
      %1916 = vmatprep.mubr.f32.mxu0 0.0
      %1917 = vmatmul.mubr.f32.gmra.mrb[0].mxu0 %v951
      %v1918 = vpop.f32.mrb[0].mxu0
      %v1919 = vadd.f32 %v752, %v1918
      %v1920 = vpop.f32.mrb[0].mxu0
      %1921 = vmatprep.mubr.f32.mxu0 0.0
      %1922 = vmatmul.mubr.f32.gmra.mrb[0].mxu0 %v954
      %v1923 = vpop.f32.mrb[0].mxu0
      %v1924 = vadd.f32 %v752, %v1923
      %v1925 = vpop.f32.mrb[0].mxu0
      %1926 = vmatprep.mubr.f32.mxu0 0.0
      %1927 = vmatmul.mubr.f32.gmra.mrb[0].mxu0 %v957
      %v1928 = vpop.f32.mrb[0].mxu0
      %v1929 = vadd.f32 %v752, %v1928
      %v1930 = vpop.f32.mrb[0].mxu0
      %1931 = vmatprep.mubr.f32.mxu0 0.0
      %1932 = vmatmul.mubr.f32.gmra.mrb[0].mxu0 %v960
      %v1933 = vpop.f32.mrb[0].mxu0
      %v1934 = vadd.f32 %v752, %v1933
      %v1935 = vpop.f32.mrb[0].mxu0
      %1936 = vmatprep.mubr.f32.mxu0 0.0
      %1937 = vmatmul.mubr.f32.gmra.mrb[0].mxu0 %v963
      %v1938 = vpop.f32.mrb[0].mxu0
      %v1939 = vadd.f32 %v752, %v1938
      %v1940 = vpop.f32.mrb[0].mxu0
      %1941 = vmatprep.mubr.f32.mxu0 0.0
      %1942 = vmatmul.mubr.f32.gmra.mrb[0].mxu0 %v966
      %v1943 = vpop.f32.mrb[0].mxu0
      %v1944 = vadd.f32 %v752, %v1943
      %v1945 = vpop.f32.mrb[0].mxu0
      %1946 = vmatprep.mubr.f32.mxu0 0.0
      %1947 = vmatmul.mubr.f32.gmra.mrb[0].mxu0 %v969
      %v1948 = vpop.f32.mrb[0].mxu0
      %v1949 = vadd.f32 %v752, %v1948
      %v1950 = vpop.f32.mrb[0].mxu0
      %1951 = vmatprep.mubr.f32.mxu0 0.0
      %1952 = vmatmul.mubr.f32.gmra.mrb[0].mxu0 %v972
      %v1953 = vpop.f32.mrb[0].mxu0
      %v1954 = vadd.f32 %v752, %v1953
      %v1955 = vpop.f32.mrb[0].mxu0
      %1956 = vmatprep.mubr.f32.mxu0 0.0
      %1957 = vmatmul.mubr.f32.gmra.mrb[0].mxu0 %v975
      %v1958 = vpop.f32.mrb[0].mxu0
      %v1959 = vadd.f32 %v752, %v1958
      %v1960 = vpop.f32.mrb[0].mxu0
      %1961 = vmatprep.mubr.f32.mxu0 0.0
      %1962 = vmatmul.mubr.f32.gmra.mrb[0].mxu0 %v978
      %v1963 = vpop.f32.mrb[0].mxu0
      %v1964 = vadd.f32 %v752, %v1963
      %v1965 = vpop.f32.mrb[0].mxu0
      %1966 = vmatprep.mubr.f32.mxu0 0.0
      %1967 = vmatmul.mubr.f32.gmra.mrb[0].mxu0 %v981
      %v1968 = vpop.f32.mrb[0].mxu0
      %v1969 = vadd.f32 %v752, %v1968
      %v1970 = vpop.f32.mrb[0].mxu0
      %1971 = vmatprep.mubr.f32.mxu0 0.0
      %1972 = vmatmul.mubr.f32.gmra.mrb[0].mxu0 %v984
      %v1973 = vpop.f32.mrb[0].mxu0
      %v1974 = vadd.f32 %v752, %v1973
      %v1975 = vpop.f32.mrb[0].mxu0
      %1976 = vmatprep.mubr.f32.mxu0 0.0
      %1977 = vmatmul.mubr.f32.gmra.mrb[0].mxu0 %v987
      %v1978 = vpop.f32.mrb[0].mxu0
      %v1979 = vadd.f32 %v752, %v1978
      %v1980 = vpop.f32.mrb[0].mxu0
      %1981 = vmatprep.mubr.f32.mxu0 0.0
      %1982 = vmatmul.mubr.f32.gmra.mrb[0].mxu0 %v990
      %v1983 = vpop.f32.mrb[0].mxu0
      %v1984 = vadd.f32 %v752, %v1983
      %v1985 = vpop.f32.mrb[0].mxu0
      %1986 = vmatprep.mubr.f32.mxu0 0.0
      %1987 = vmatmul.mubr.f32.gmra.mrb[0].mxu0 %v993
      %v1988 = vpop.f32.mrb[0].mxu0
      %v1989 = vadd.f32 %v752, %v1988
      %v1990 = vpop.f32.mrb[0].mxu0
      %1991 = vmatprep.mubr.f32.mxu0 0.0
      %1992 = vmatmul.mubr.f32.gmra.mrb[0].mxu0 %v996
      %v1993 = vpop.f32.mrb[0].mxu0
      %v1994 = vadd.f32 %v752, %v1993
      %v1995 = vpop.f32.mrb[0].mxu0
      %1996 = vmatprep.mubr.f32.mxu0 0.0
      %1997 = vmatmul.mubr.f32.gmra.mrb[0].mxu0 %v999
      %v1998 = vpop.f32.mrb[0].mxu0
      %v1999 = vadd.f32 %v752, %v1998
      %v2000 = vpop.f32.mrb[0].mxu0
      %2001 = vmatprep.mubr.f32.mxu0 0.0
      %2002 = vmatmul.mubr.f32.gmra.mrb[0].mxu0 %v1002
      %v2003 = vpop.f32.mrb[0].mxu0
      %v2004 = vadd.f32 %v752, %v2003
      %v2005 = vpop.f32.mrb[0].mxu0
      %2006 = vmatprep.mubr.f32.mxu0 0.0
      %2007 = vmatmul.mubr.f32.gmra.mrb[0].mxu0 %v1005
      %v2008 = vpop.f32.mrb[0].mxu0
      %v2009 = vadd.f32 %v752, %v2008
      %v2010 = vpop.f32.mrb[0].mxu0
      %2011 = vmatprep.mubr.f32.mxu0 0.0
      %2012 = vmatmul.mubr.f32.gmra.mrb[0].mxu0 %v1008
      %v2013 = vpop.f32.mrb[0].mxu0
      %v2014 = vadd.f32 %v752, %v2013
      %v2015 = vpop.f32.mrb[0].mxu0
      %2016 = vmatprep.mubr.f32.mxu0 0.0
      %2017 = vmatmul.mubr.f32.gmra.mrb[0].mxu0 %v1011
      %v2018 = vpop.f32.mrb[0].mxu0
      %v2019 = vadd.f32 %v752, %v2018
      %v2020 = vpop.f32.mrb[0].mxu0
      %2021 = vmatprep.mubr.f32.mxu0 0.0
      %2022 = vmatmul.mubr.f32.gmra.mrb[0].mxu0 %v1014
      %v2023 = vpop.f32.mrb[0].mxu0
      %v2024 = vadd.f32 %v752, %v2023
      %v2025 = vpop.f32.mrb[0].mxu0
      %2026 = vmatprep.mubr.f32.mxu0 0.0
      %2027 = vmatmul.mubr.f32.gmra.mrb[0].mxu0 %v1017
      %v2028 = vpop.f32.mrb[0].mxu0
      %v2029 = vadd.f32 %v752, %v2028
      %v2030 = vpop.f32.mrb[0].mxu0
      %2031 = vmatprep.mubr.f32.mxu0 0.0
      %2032 = vmatmul.mubr.f32.gmra.mrb[0].mxu0 %v1020
      %v2033 = vpop.f32.mrb[0].mxu0
      %v2034 = vadd.f32 %v752, %v2033
      %v2035 = vpop.f32.mrb[0].mxu0
      %2036 = vmatprep.mubr.f32.mxu0 0.0
      %2037 = vmatmul.mubr.f32.gmra.mrb[0].mxu0 %v1023
      %v2038 = vpop.f32.mrb[0].mxu0
      %v2039 = vadd.f32 %v752, %v2038
      %v2040 = vpop.f32.mrb[0].mxu0
      %2041 = vmatprep.mubr.f32.mxu0 0.0
      %2042 = vmatmul.mubr.f32.gmra.mrb[0].mxu0 %v1026
      %v2043 = vpop.f32.mrb[0].mxu0
      %v2044 = vadd.f32 %v752, %v2043
      %v2045 = vpop.f32.mrb[0].mxu0
      %2046 = vmatprep.mubr.f32.mxu0 0.0
      %2047 = vmatmul.mubr.f32.gmra.mrb[0].mxu0 %v1029
      %v2048 = vpop.f32.mrb[0].mxu0
      %v2049 = vadd.f32 %v752, %v2048
      %v2050 = vpop.f32.mrb[0].mxu0
      %2051 = vmatprep.mubr.f32.mxu0 0.0
      %2052 = vmatmul.mubr.f32.gmra.mrb[0].mxu0 %v1032
      %v2053 = vpop.f32.mrb[0].mxu0
      %v2054 = vadd.f32 %v752, %v2053
      %v2055 = vpop.f32.mrb[0].mxu0
      %2056 = vmatprep.mubr.f32.mxu0 0.0
      %2057 = vmatmul.mubr.f32.gmra.mrb[0].mxu0 %v1035
      %v2058 = vpop.f32.mrb[0].mxu0
      %v2059 = vadd.f32 %v752, %v2058
      %v2060 = vpop.f32.mrb[0].mxu0
      %2061 = vmatprep.mubr.f32.mxu0 0.0
      %2062 = vmatmul.mubr.f32.gmra.mrb[0].mxu0 %v1038
      %v2063 = vpop.f32.mrb[0].mxu0
      %v2064 = vadd.f32 %v752, %v2063
      %v2065 = vpop.f32.mrb[0].mxu0
      %2066 = vmatprep.mubr.f32.mxu0 0.0
      %2067 = vmatmul.mubr.f32.gmra.mrb[0].mxu0 %v1041
      %v2068 = vpop.f32.mrb[0].mxu0
      %v2069 = vadd.f32 %v752, %v2068
      %v2070 = vpop.f32.mrb[0].mxu0
      %2071 = vmatprep.mubr.f32.mxu0 0.0
      %2072 = vmatmul.mubr.f32.gmra.mrb[0].mxu0 %v1044
      %v2073 = vpop.f32.mrb[0].mxu0
      %v2074 = vadd.f32 %v752, %v2073
      %v2075 = vpop.f32.mrb[0].mxu0
      %2076 = vmatprep.mubr.f32.mxu0 0.0
      %2077 = vmatmul.mubr.f32.gmra.mrb[0].mxu0 %v1047
      %v2078 = vpop.f32.mrb[0].mxu0
      %v2079 = vadd.f32 %v752, %v2078
      %v2080 = vpop.f32.mrb[0].mxu0
      %2081 = vmatprep.mubr.f32.mxu0 0.0
      %2082 = vmatmul.mubr.f32.gmra.mrb[0].mxu0 %v1050
      %v2083 = vpop.f32.mrb[0].mxu0
      %v2084 = vadd.f32 %v752, %v2083
      %v2085 = vpop.f32.mrb[0].mxu0
      %2086 = vmatprep.mubr.f32.mxu0 0.0
      %2087 = vmatmul.mubr.f32.gmra.mrb[0].mxu0 %v1053
      %v2088 = vpop.f32.mrb[0].mxu0
      %v2089 = vadd.f32 %v752, %v2088
      %v2090 = vpop.f32.mrb[0].mxu0
      %2091 = vmatprep.mubr.f32.mxu0 0.0
      %2092 = vmatmul.mubr.f32.gmra.mrb[0].mxu0 %v1056
      %v2093 = vpop.f32.mrb[0].mxu0
      %v2094 = vadd.f32 %v752, %v2093
      %v2095 = vpop.f32.mrb[0].mxu0
      %2096 = vmatprep.mubr.f32.mxu0 0.0
      %2097 = vmatmul.mubr.f32.gmra.mrb[0].mxu0 %v1059
      %v2098 = vpop.f32.mrb[0].mxu0
      %v2099 = vadd.f32 %v752, %v2098
      %v2100 = vpop.f32.mrb[0].mxu0
      %2101 = vmatprep.mubr.f32.mxu0 0.0
      %2102 = vmatmul.mubr.f32.gmra.mrb[0].mxu0 %v1062
      %v2103 = vpop.f32.mrb[0].mxu0
      %v2104 = vadd.f32 %v752, %v2103
      %v2105 = vpop.f32.mrb[0].mxu0
      %2106 = vmatprep.mubr.f32.mxu0 0.0
      %2107 = vmatmul.mubr.f32.gmra.mrb[0].mxu0 %v1065
      %v2108 = vpop.f32.mrb[0].mxu0
      %v2109 = vadd.f32 %v752, %v2108
      %v2110 = vpop.f32.mrb[0].mxu0
      %2111 = vmatprep.mubr.f32.mxu0 0.0
      %2112 = vmatmul.mubr.f32.gmra.mrb[0].mxu0 %v1068
      %v2113 = vpop.f32.mrb[0].mxu0
      %v2114 = vadd.f32 %v752, %v2113
      %v2115 = vpop.f32.mrb[0].mxu0
      %2116 = vmatprep.mubr.f32.mxu0 0.0
      %2117 = vmatmul.mubr.f32.gmra.mrb[0].mxu0 %v1071
      %v2118 = vpop.f32.mrb[0].mxu0
      %v2119 = vadd.f32 %v752, %v2118
      %v2120 = vpop.f32.mrb[0].mxu0
      %2121 = vmatprep.mubr.f32.mxu0 0.0
      %2122 = vmatmul.mubr.f32.gmra.mrb[0].mxu0 %v1074
      %v2123 = vpop.f32.mrb[0].mxu0
      %v2124 = vadd.f32 %v752, %v2123
      %v2125 = vpop.f32.mrb[0].mxu0
      %2126 = vmatprep.mubr.f32.mxu0 0.0
      %2127 = vmatmul.mubr.f32.gmra.mrb[0].mxu0 %v1077
      %v2128 = vpop.f32.mrb[0].mxu0
      %v2129 = vadd.f32 %v752, %v2128
      %v2130 = vpop.f32.mrb[0].mxu0
      %2131 = vmatprep.mubr.f32.mxu0 0.0
      %2132 = vmatmul.mubr.f32.gmra.mrb[0].mxu0 %v1080
      %v2133 = vpop.f32.mrb[0].mxu0
      %v2134 = vadd.f32 %v752, %v2133
      %v2135 = vpop.f32.mrb[0].mxu0
      %2136 = vmatprep.mubr.f32.mxu0 0.0
      %2137 = vmatmul.mubr.f32.gmra.mrb[0].mxu0 %v1083
      %v2138 = vpop.f32.mrb[0].mxu0
      %v2139 = vadd.f32 %v752, %v2138
      %v2140 = vpop.f32.mrb[0].mxu0
      %2141 = vmatprep.mubr.f32.mxu0 0.0
      %2142 = vmatmul.mubr.f32.gmra.mrb[0].mxu0 %v1086
      %v2143 = vpop.f32.mrb[0].mxu0
      %v2144 = vadd.f32 %v752, %v2143
      %v2145 = vpop.f32.mrb[0].mxu0
      %2146 = vmatprep.mubr.f32.mxu0 0.0
      %2147 = vmatmul.mubr.f32.gmra.mrb[0].mxu0 %v1089
      %v2148 = vpop.f32.mrb[0].mxu0
      %v2149 = vadd.f32 %v752, %v2148
      %v2150 = vpop.f32.mrb[0].mxu0
      %2151 = vmatprep.mubr.f32.mxu0 0.0
      %2152 = vmatmul.mubr.f32.gmra.mrb[0].mxu0 %v1092
      %v2153 = vpop.f32.mrb[0].mxu0
      %v2154 = vadd.f32 %v752, %v2153
      %v2155 = vpop.f32.mrb[0].mxu0
      %2156 = vmatprep.mubr.f32.mxu0 0.0
      %2157 = vmatmul.mubr.f32.gmra.mrb[0].mxu0 %v1095
      %v2158 = vpop.f32.mrb[0].mxu0
      %v2159 = vadd.f32 %v752, %v2158
      %v2160 = vpop.f32.mrb[0].mxu0
      %2161 = vmatprep.mubr.f32.mxu0 0.0
      %2162 = vmatmul.mubr.f32.gmra.mrb[0].mxu0 %v1098
      %v2163 = vpop.f32.mrb[0].mxu0
      %v2164 = vadd.f32 %v752, %v2163
      %v2165 = vpop.f32.mrb[0].mxu0
      %2166 = vmatprep.mubr.f32.mxu0 0.0
      %2167 = vmatmul.mubr.f32.gmra.mrb[0].mxu0 %v1101
      %v2168 = vpop.f32.mrb[0].mxu0
      %v2169 = vadd.f32 %v752, %v2168
      %v2170 = vpop.f32.mrb[0].mxu0
      %2171 = vmatprep.mubr.f32.mxu0 0.0
      %2172 = vmatmul.mubr.f32.gmra.mrb[0].mxu0 %v1104
      %v2173 = vpop.f32.mrb[0].mxu0
      %v2174 = vadd.f32 %v752, %v2173
      %v2175 = vpop.f32.mrb[0].mxu0
      %2176 = vmatprep.mubr.f32.mxu0 0.0
      %2177 = vmatmul.mubr.f32.gmra.mrb[0].mxu0 %v1107
      %v2178 = vpop.f32.mrb[0].mxu0
      %v2179 = vadd.f32 %v752, %v2178
      %v2180 = vpop.f32.mrb[0].mxu0
      %2181 = vmatprep.mubr.f32.mxu0 0.0
      %2182 = vmatmul.mubr.f32.gmra.mrb[0].mxu0 %v1110
      %v2183 = vpop.f32.mrb[0].mxu0
      %v2184 = vadd.f32 %v752, %v2183
      %v2185 = vpop.f32.mrb[0].mxu0
      %2186 = vmatprep.mubr.f32.mxu0 0.0
      %2187 = vmatmul.mubr.f32.gmra.mrb[0].mxu0 %v1113
      %v2188 = vpop.f32.mrb[0].mxu0
      %v2189 = vadd.f32 %v752, %v2188
      %v2190 = vpop.f32.mrb[0].mxu0
      %2191 = vmatprep.mubr.f32.mxu0 0.0
      %2192 = vmatmul.mubr.f32.gmra.mrb[0].mxu0 %v1116
      %v2193 = vpop.f32.mrb[0].mxu0
      %v2194 = vadd.f32 %v752, %v2193
      %v2195 = vpop.f32.mrb[0].mxu0
      %2196 = vmatprep.mubr.f32.mxu0 0.0
      %2197 = vmatmul.mubr.f32.gmra.mrb[0].mxu0 %v1119
      %v2198 = vpop.f32.mrb[0].mxu0
      %v2199 = vadd.f32 %v752, %v2198
      %v2200 = vpop.f32.mrb[0].mxu0
      %2201 = vmatprep.mubr.f32.mxu0 0.0
      %2202 = vmatmul.mubr.f32.gmra.mrb[0].mxu0 %v1122
      %v2203 = vpop.f32.mrb[0].mxu0
      %v2204 = vadd.f32 %v752, %v2203
      %v2205 = vpop.f32.mrb[0].mxu0
      %2206 = vmatprep.mubr.f32.mxu0 0.0
      %2207 = vmatmul.mubr.f32.gmra.mrb[0].mxu0 %v1125
      %v2208 = vpop.f32.mrb[0].mxu0
      %v2209 = vadd.f32 %v752, %v2208
      %v2210 = vpop.f32.mrb[0].mxu0
      %2211 = vmatprep.mubr.f32.mxu0 0.0
      %2212 = vmatmul.mubr.f32.gmra.mrb[0].mxu0 %v1128
      %v2213 = vpop.f32.mrb[0].mxu0
      %v2214 = vadd.f32 %v752, %v2213
      %v2215 = vpop.f32.mrb[0].mxu0
      %2216 = vmatprep.mubr.f32.mxu0 0.0
      %2217 = vmatmul.mubr.f32.gmra.mrb[0].mxu0 %v1131
      %v2218 = vpop.f32.mrb[0].mxu0
      %v2219 = vadd.f32 %v752, %v2218
      %v2220 = vpop.f32.mrb[0].mxu0
      %2221 = vmatprep.mubr.f32.mxu0 0.0
      %2222 = vmatmul.mubr.f32.gmra.mrb[0].mxu0 %v1134
      %v2223 = vpop.f32.mrb[0].mxu0
      %v2224 = vadd.f32 %v752, %v2223
      %v2225 = vpop.f32.mrb[0].mxu0
      %2226 = vmatprep.mubr.f32.mxu0 0.0
      %2227 = vmatmul.mubr.f32.gmra.mrb[0].mxu0 %v1137
      %v2228 = vpop.f32.mrb[0].mxu0
      %v2229 = vadd.f32 %v752, %v2228
      %v2230 = vpop.f32.mrb[0].mxu0
      %2231 = vmatprep.mubr.f32.mxu0 0.0
      %2232 = vmatmul.mubr.f32.gmra.mrb[0].mxu0 %v1140
      %v2233 = vpop.f32.mrb[0].mxu0
      %v2234 = vadd.f32 %v752, %v2233
      %v2235 = vpop.f32.mrb[0].mxu0
      %2236 = vmatprep.mubr.f32.mxu0 0.0
      %2237 = vmatmul.mubr.f32.gmra.mrb[0].mxu0 %v1143
      %v2238 = vpop.f32.mrb[0].mxu0
      %v2239 = vadd.f32 %v752, %v2238
      %v2240 = vpop.f32.mrb[0].mxu0
      %2241 = vmatprep.mubr.f32.mxu0 0.0
      %2242 = vmatmul.mubr.f32.gmra.mrb[0].mxu0 %v1146
      %v2243 = vpop.f32.mrb[0].mxu0
      %v2244 = vadd.f32 %v752, %v2243
      %v2245 = vpop.f32.mrb[0].mxu0
      %2246 = vmatprep.mubr.f32.mxu0 0.0
      %2247 = vmatmul.mubr.f32.gmra.mrb[0].mxu0 %v1149
      %v2248 = vpop.f32.mrb[0].mxu0
      %v2249 = vadd.f32 %v752, %v2248
      %v2250 = vpop.f32.mrb[0].mxu0
      %2251 = vmatprep.mubr.f32.mxu0 0.0
      %2252 = vmatmul.mubr.f32.gmra.mrb[0].mxu0 %v1152
      %v2253 = vpop.f32.mrb[0].mxu0
      %v2254 = vadd.f32 %v752, %v2253
      %v2255 = vpop.f32.mrb[0].mxu0
      %2256 = vmatprep.mubr.f32.mxu0 0.0
      %2257 = vmatmul.mubr.f32.gmra.mrb[0].mxu0 %v1155
      %v2258 = vpop.f32.mrb[0].mxu0
      %v2259 = vadd.f32 %v752, %v2258
      %v2260 = vpop.f32.mrb[0].mxu0
      %2261 = vmatprep.mubr.f32.mxu0 0.0
      %2262 = vmatmul.mubr.f32.gmra.mrb[0].mxu0 %v1158
      %v2263 = vpop.f32.mrb[0].mxu0
      %v2264 = vadd.f32 %v752, %v2263
      %v2265 = vpop.f32.mrb[0].mxu0
      %2266 = vmatprep.mubr.f32.mxu0 0.0
      %2267 = vmatmul.mubr.f32.gmra.mrb[0].mxu0 %v1161
      %v2268 = vpop.f32.mrb[0].mxu0
      %v2269 = vadd.f32 %v752, %v2268
      %v2270 = vpop.f32.mrb[0].mxu0
      %2271 = vmatprep.mubr.f32.mxu0 0.0
      %2272 = vmatmul.mubr.f32.gmra.mrb[0].mxu0 %v1164
      %v2273 = vpop.f32.mrb[0].mxu0
      %v2274 = vadd.f32 %v752, %v2273
      %v2275 = vpop.f32.mrb[0].mxu0
      %2276 = vmatprep.mubr.f32.mxu0 0.0
      %2277 = vmatmul.mubr.f32.gmra.mrb[0].mxu0 %v1167
      %v2278 = vpop.f32.mrb[0].mxu0
      %v2279 = vadd.f32 %v752, %v2278
      %v2280 = vpop.f32.mrb[0].mxu0
      %2281 = vmatprep.mubr.f32.mxu0 0.0
      %2282 = vmatmul.mubr.f32.gmra.mrb[0].mxu0 %v1170
      %v2283 = vpop.f32.mrb[0].mxu0
      %v2284 = vadd.f32 %v752, %v2283
      %v2285 = vpop.f32.mrb[0].mxu0
      %2286 = vmatprep.mubr.f32.mxu0 0.0
      %2287 = vmatmul.mubr.f32.gmra.mrb[0].mxu0 %v1173
      %v2288 = vpop.f32.mrb[0].mxu0
      %v2289 = vadd.f32 %v752, %v2288
      %v2290 = vpop.f32.mrb[0].mxu0
      %2291 = vmatprep.mubr.f32.mxu0 0.0
      %2292 = vmatmul.mubr.f32.gmra.mrb[0].mxu0 %v1176
      %v2293 = vpop.f32.mrb[0].mxu0
      %v2294 = vadd.f32 %v752, %v2293
      %v2295 = vpop.f32.mrb[0].mxu0
      %2296 = vmatprep.mubr.f32.mxu0 0.0
      %2297 = vmatmul.mubr.f32.gmra.mrb[0].mxu0 %v1179
      %v2298 = vpop.f32.mrb[0].mxu0
      %v2299 = vadd.f32 %v752, %v2298
      %v2300 = vpop.f32.mrb[0].mxu0
      %2301 = vmatprep.mubr.f32.mxu0 0.0
      %2302 = vmatmul.mubr.f32.gmra.mrb[0].mxu0 %v1182
      %v2303 = vpop.f32.mrb[0].mxu0
      %v2304 = vadd.f32 %v752, %v2303
      %v2305 = vpop.f32.mrb[0].mxu0
      %2306 = vmatprep.mubr.f32.mxu0 0.0
      %2307 = vmatmul.mubr.f32.gmra.mrb[0].mxu0 %v1185
      %v2308 = vpop.f32.mrb[0].mxu0
      %v2309 = vadd.f32 %v752, %v2308
      %v2310 = vpop.f32.mrb[0].mxu0
      %2311 = vmatprep.mubr.f32.mxu0 0.0
      %2312 = vmatmul.mubr.f32.gmra.mrb[0].mxu0 %v1188
      %v2313 = vpop.f32.mrb[0].mxu0
      %v2314 = vadd.f32 %v752, %v2313
      %v2315 = vpop.f32.mrb[0].mxu0
      %2316 = vmatprep.mubr.f32.mxu0 0.0
      %2317 = vmatmul.mubr.f32.gmra.mrb[0].mxu0 %v1191
      %v2318 = vpop.f32.mrb[0].mxu0
      %v2319 = vadd.f32 %v752, %v2318
      %v2320 = vpop.f32.mrb[0].mxu0
      %2321 = vmatprep.mubr.f32.mxu0 0.0
      %2322 = vmatmul.mubr.f32.gmra.mrb[0].mxu0 %v1194
      %v2323 = vpop.f32.mrb[0].mxu0
      %v2324 = vadd.f32 %v752, %v2323
      %v2325 = vpop.f32.mrb[0].mxu0
      %2326 = vmatprep.mubr.f32.mxu0 0.0
      %2327 = vmatmul.mubr.f32.gmra.mrb[0].mxu0 %v1197
      %v2328 = vpop.f32.mrb[0].mxu0
      %v2329 = vadd.f32 %v752, %v2328
      %v2330 = vpop.f32.mrb[0].mxu0
      %2331 = vmatprep.mubr.f32.mxu0 0.0
      %2332 = vmatmul.mubr.f32.gmra.mrb[0].mxu0 %v1200
      %v2333 = vpop.f32.mrb[0].mxu0
      %v2334 = vadd.f32 %v752, %v2333
      %v2335 = vpop.f32.mrb[0].mxu0
      %2336 = vmatprep.mubr.f32.mxu0 0.0
      %2337 = vmatmul.mubr.f32.gmra.mrb[0].mxu0 %v1203
      %v2338 = vpop.f32.mrb[0].mxu0
      %v2339 = vadd.f32 %v752, %v2338
      %v2340 = vpop.f32.mrb[0].mxu0
      %2341 = vmatprep.mubr.f32.mxu0 0.0
      %2342 = vmatmul.mubr.f32.gmra.mrb[0].mxu0 %v1206
      %v2343 = vpop.f32.mrb[0].mxu0
      %v2344 = vadd.f32 %v752, %v2343
      %v2345 = vpop.f32.mrb[0].mxu0
      %2346 = vmatprep.mubr.f32.mxu0 0.0
      %2347 = vmatmul.mubr.f32.gmra.mrb[0].mxu0 %v1209
      %v2348 = vpop.f32.mrb[0].mxu0
      %v2349 = vadd.f32 %v752, %v2348
      %v2350 = vpop.f32.mrb[0].mxu0
      %2351 = vmatprep.mubr.f32.mxu0 0.0
      %2352 = vmatmul.mubr.f32.gmra.mrb[0].mxu0 %v1212
      %v2353 = vpop.f32.mrb[0].mxu0
      %v2354 = vadd.f32 %v752, %v2353
      %v2355 = vpop.f32.mrb[0].mxu0
      %2356 = vmatprep.mubr.f32.mxu0 0.0
      %2357 = vmatmul.mubr.f32.gmra.mrb[0].mxu0 %v1215
      %v2358 = vpop.f32.mrb[0].mxu0
      %v2359 = vadd.f32 %v752, %v2358
      %v2360 = vpop.f32.mrb[0].mxu0
      %2361 = vmatprep.mubr.f32.mxu0 0.0
      %2362 = vmatmul.mubr.f32.gmra.mrb[0].mxu0 %v1218
      %v2363 = vpop.f32.mrb[0].mxu0
      %v2364 = vadd.f32 %v752, %v2363
      %v2365 = vpop.f32.mrb[0].mxu0
      %2366 = vmatprep.mubr.f32.mxu0 0.0
      %2367 = vmatmul.mubr.f32.gmra.mrb[0].mxu0 %v1221
      %v2368 = vpop.f32.mrb[0].mxu0
      %v2369 = vadd.f32 %v752, %v2368
      %v2370 = vpop.f32.mrb[0].mxu0
      %2371 = vmatprep.mubr.f32.mxu0 0.0
      %2372 = vmatmul.mubr.f32.gmra.mrb[0].mxu0 %v1224
      %v2373 = vpop.f32.mrb[0].mxu0
      %v2374 = vadd.f32 %v752, %v2373
      %v2375 = vpop.f32.mrb[0].mxu0
      %2376 = vmatprep.mubr.f32.mxu0 0.0
      %2377 = vmatmul.mubr.f32.gmra.mrb[0].mxu0 %v1227
      %v2378 = vpop.f32.mrb[0].mxu0
      %v2379 = vadd.f32 %v752, %v2378
      %v2380 = vpop.f32.mrb[0].mxu0
      %2381 = vmatprep.mubr.f32.mxu0 0.0
      %2382 = vmatmul.mubr.f32.gmra.mrb[0].mxu0 %v1230
      %v2383 = vpop.f32.mrb[0].mxu0
      %v2384 = vadd.f32 %v752, %v2383
      %v2385 = vpop.f32.mrb[0].mxu0
      %2386 = vmatprep.mubr.f32.mxu0 0.0
      %2387 = vmatmul.mubr.f32.gmra.mrb[0].mxu0 %v1233
      %v2388 = vpop.f32.mrb[0].mxu0
      %v2389 = vadd.f32 %v752, %v2388
      %v2390 = vpop.f32.mrb[0].mxu0
      %2391 = vmatprep.mubr.f32.mxu0 0.0
      %2392 = vmatmul.mubr.f32.gmra.mrb[0].mxu0 %v1236
      %v2393 = vpop.f32.mrb[0].mxu0
      %v2394 = vadd.f32 %v752, %v2393
      %v2395 = vpop.f32.mrb[0].mxu0
      %2396 = vmatprep.mubr.f32.mxu0 0.0
      %2397 = vmatmul.mubr.f32.gmra.mrb[0].mxu0 %v1239
      %v2398 = vpop.f32.mrb[0].mxu0
      %v2399 = vadd.f32 %v752, %v2398
      %v2400 = vpop.f32.mrb[0].mxu0
      %2401 = vmatprep.mubr.f32.mxu0 0.0
      %2402 = vmatmul.mubr.f32.gmra.mrb[0].mxu0 %v1242
      %v2403 = vpop.f32.mrb[0].mxu0
      %v2404 = vadd.f32 %v752, %v2403
      %v2405 = vpop.f32.mrb[0].mxu0
      %2406 = vmatprep.mubr.f32.mxu0 0.0
      %2407 = vmatmul.mubr.f32.gmra.mrb[0].mxu0 %v1245
      %v2408 = vpop.f32.mrb[0].mxu0
      %v2409 = vadd.f32 %v752, %v2408
      %v2410 = vpop.f32.mrb[0].mxu0
      %2411 = vmatprep.mubr.f32.mxu0 0.0
      %2412 = vmatmul.mubr.f32.gmra.mrb[0].mxu0 %v1248
      %v2413 = vpop.f32.mrb[0].mxu0
      %v2414 = vadd.f32 %v752, %v2413
      %v2415 = vpop.f32.mrb[0].mxu0
      %2416 = vmatprep.mubr.f32.mxu0 0.0
      %2417 = vmatmul.mubr.f32.gmra.mrb[0].mxu0 %v1251
      %v2418 = vpop.f32.mrb[0].mxu0
      %v2419 = vadd.f32 %v752, %v2418
      %v2420 = vpop.f32.mrb[0].mxu0
      %2421 = vmatprep.mubr.f32.mxu0 0.0
      %2422 = vmatmul.mubr.f32.gmra.mrb[0].mxu0 %v1254
      %v2423 = vpop.f32.mrb[0].mxu0
      %v2424 = vadd.f32 %v752, %v2423
      %v2425 = vpop.f32.mrb[0].mxu0
      %2426 = vmatprep.mubr.f32.mxu0 0.0
      %2427 = vmatmul.mubr.f32.gmra.mrb[0].mxu0 %v1257
      %v2428 = vpop.f32.mrb[0].mxu0
      %v2429 = vadd.f32 %v752, %v2428
      %v2430 = vpop.f32.mrb[0].mxu0
      %2431 = vmatprep.mubr.f32.mxu0 0.0
      %2432 = vmatmul.mubr.f32.gmra.mrb[0].mxu0 %v1260
      %v2433 = vpop.f32.mrb[0].mxu0
      %v2434 = vadd.f32 %v752, %v2433
      %v2435 = vpop.f32.mrb[0].mxu0
      %2436 = vmatprep.mubr.f32.mxu0 0.0
      %2437 = vmatmul.mubr.f32.gmra.mrb[0].mxu0 %v1263
      %v2438 = vpop.f32.mrb[0].mxu0
      %v2439 = vadd.f32 %v752, %v2438
      %v2440 = vpop.f32.mrb[0].mxu0
      %2441 = vmatprep.mubr.f32.mxu0 0.0
      %2442 = vmatmul.mubr.f32.gmra.mrb[0].mxu0 %v1266
      %v2443 = vpop.f32.mrb[0].mxu0
      %v2444 = vadd.f32 %v752, %v2443
      %v2445 = vpop.f32.mrb[0].mxu0
      %2446 = vmatprep.mubr.f32.mxu0 0.0
      %2447 = vmatmul.mubr.f32.gmra.mrb[0].mxu0 %v1269
      %v2448 = vpop.f32.mrb[0].mxu0
      %v2449 = vadd.f32 %v752, %v2448
      %v2450 = vpop.f32.mrb[0].mxu0
      %2451 = vmatprep.mubr.f32.mxu0 0.0
      %2452 = vmatmul.mubr.f32.gmra.mrb[0].mxu0 %v1272
      %v2453 = vpop.f32.mrb[0].mxu0
      %v2454 = vadd.f32 %v752, %v2453
      %v2455 = vpop.f32.mrb[0].mxu0
      %2456 = vmatprep.mubr.f32.mxu0 0.0
      %2457 = vmatmul.mubr.f32.gmra.mrb[0].mxu0 %v1275
      %v2458 = vpop.f32.mrb[0].mxu0
      %v2459 = vadd.f32 %v752, %v2458
      %v2460 = vpop.f32.mrb[0].mxu0
      %2461 = vmatprep.mubr.f32.mxu0 0.0
      %2462 = vmatmul.mubr.f32.gmra.mrb[0].mxu0 %v1278
      %v2463 = vpop.f32.mrb[0].mxu0
      %v2464 = vadd.f32 %v752, %v2463
      %v2465 = vpop.f32.mrb[0].mxu0
      %2466 = vmatprep.mubr.f32.mxu0 0.0
      %2467 = vmatmul.mubr.f32.gmra.mrb[0].mxu0 %v1281
      %v2468 = vpop.f32.mrb[0].mxu0
      %v2469 = vadd.f32 %v752, %v2468
      %v2470 = vpop.f32.mrb[0].mxu0
      %2471 = vmatprep.mubr.f32.mxu0 0.0
      %2472 = vmatmul.mubr.f32.gmra.mrb[0].mxu0 %v1284
      %v2473 = vpop.f32.mrb[0].mxu0
      %v2474 = vadd.f32 %v752, %v2473
      %v2475 = vpop.f32.mrb[0].mxu0
      %2476 = vmatprep.mubr.f32.mxu0 0.0
      %2477 = vmatmul.mubr.f32.gmra.mrb[0].mxu0 %v1287
      %v2478 = vpop.f32.mrb[0].mxu0
      %v2479 = vadd.f32 %v752, %v2478
      %v2480 = vpop.f32.mrb[0].mxu0
      %2481 = vmatprep.mubr.f32.mxu0 0.0
      %2482 = vmatmul.mubr.f32.gmra.mrb[0].mxu0 %v1290
      %v2483 = vpop.f32.mrb[0].mxu0
      %v2484 = vadd.f32 %v752, %v2483
      %v2485 = vpop.f32.mrb[0].mxu0
      %2486 = vmatprep.mubr.f32.mxu0 0.0
      %2487 = vmatmul.mubr.f32.gmra.mrb[0].mxu0 %v1293
      %v2488 = vpop.f32.mrb[0].mxu0
      %v2489 = vadd.f32 %v752, %v2488
      %v2490 = vpop.f32.mrb[0].mxu0
      %2491 = vmatprep.mubr.f32.mxu0 0.0
      %2492 = vmatmul.mubr.f32.gmra.mrb[0].mxu0 %v1296
      %v2493 = vpop.f32.mrb[0].mxu0
      %v2494 = vadd.f32 %v752, %v2493
      %v2495 = vpop.f32.mrb[0].mxu0
      %2496 = vmatprep.mubr.f32.mxu0 0.0
      %2497 = vmatmul.mubr.f32.gmra.mrb[0].mxu0 %v1299
      %v2498 = vpop.f32.mrb[0].mxu0
      %v2499 = vadd.f32 %v752, %v2498
      %v2500 = vpop.f32.mrb[0].mxu0
      %2501 = vmatprep.mubr.f32.mxu0 0.0
      %2502 = vmatmul.mubr.f32.gmra.mrb[0].mxu0 %v1302
      %v2503 = vpop.f32.mrb[0].mxu0
      %v2504 = vadd.f32 %v752, %v2503
      %v2505 = vpop.f32.mrb[0].mxu0
      %2506 = vmatprep.mubr.f32.mxu0 0.0
      %2507 = vmatmul.mubr.f32.gmra.mrb[0].mxu0 %v1305
      %v2508 = vpop.f32.mrb[0].mxu0
      %v2509 = vadd.f32 %v752, %v2508
      %v2510 = vpop.f32.mrb[0].mxu0
      %2511 = vmatprep.mubr.f32.mxu0 0.0
      %2512 = vmatmul.mubr.f32.gmra.mrb[0].mxu0 %v1308
      %v2513 = vpop.f32.mrb[0].mxu0
      %v2514 = vadd.f32 %v752, %v2513
      %v2515 = vpop.f32.mrb[0].mxu0
      %2516 = vmatprep.mubr.f32.mxu0 0.0
      %2517 = vmatmul.mubr.f32.gmra.mrb[0].mxu0 %v1311
      %v2518 = vpop.f32.mrb[0].mxu0
      %v2519 = vadd.f32 %v752, %v2518
      %v2520 = vpop.f32.mrb[0].mxu0
      %2521 = vmatprep.mubr.f32.mxu0 0.0
      %2522 = vmatmul.mubr.f32.gmra.mrb[0].mxu0 %v1314
      %v2523 = vpop.f32.mrb[0].mxu0
      %v2524 = vadd.f32 %v752, %v2523
      %v2525 = vpop.f32.mrb[0].mxu0
      %2526 = vmatprep.mubr.f32.mxu0 0.0
      %2527 = vmatmul.mubr.f32.gmra.mrb[0].mxu0 %v1317
      %v2528 = vpop.f32.mrb[0].mxu0
      %v2529 = vadd.f32 %v752, %v2528
      %v2530 = vpop.f32.mrb[0].mxu0
      %2531 = vmatprep.mubr.f32.mxu0 0.0
      %2532 = vmatmul.mubr.f32.gmra.mrb[0].mxu0 %v1320
      %v2533 = vpop.f32.mrb[0].mxu0
      %v2534 = vadd.f32 %v752, %v2533
      %v2535 = vpop.f32.mrb[0].mxu0
      %2536 = vmatprep.mubr.f32.mxu0 0.0
      %2537 = vmatmul.mubr.f32.gmra.mrb[0].mxu0 %v1323
      %v2538 = vpop.f32.mrb[0].mxu0
      %v2539 = vadd.f32 %v752, %v2538
      %v2540 = vpop.f32.mrb[0].mxu0
      %2541 = vmatprep.mubr.f32.mxu0 0.0
      %2542 = vmatmul.mubr.f32.gmra.mrb[0].mxu0 %v1326
      %v2543 = vpop.f32.mrb[0].mxu0
      %v2544 = vadd.f32 %v752, %v2543
      %v2545 = vpop.f32.mrb[0].mxu0
      %2546 = vmatprep.mubr.f32.mxu0 0.0
      %2547 = vmatmul.mubr.f32.gmra.mrb[0].mxu0 %v1329
      %v2548 = vpop.f32.mrb[0].mxu0
      %v2549 = vadd.f32 %v752, %v2548
      %v2550 = vpop.f32.mrb[0].mxu0
      %2551 = vmatprep.mubr.f32.mxu0 0.0
      %2552 = vmatmul.mubr.f32.gmra.mrb[0].mxu0 %v1332
      %v2553 = vpop.f32.mrb[0].mxu0
      %v2554 = vadd.f32 %v752, %v2553
      %v2555 = vpop.f32.mrb[0].mxu0
      %2556 = vmatprep.mubr.f32.mxu0 0.0
      %2557 = vmatmul.mubr.f32.gmra.mrb[0].mxu0 %v1335
      %v2558 = vpop.f32.mrb[0].mxu0
      %v2559 = vadd.f32 %v752, %v2558
      %v2560 = vpop.f32.mrb[0].mxu0
      %2561 = vmatprep.mubr.f32.mxu0 0.0
      %2562 = vmatmul.mubr.f32.gmra.mrb[0].mxu0 %v1338
      %v2563 = vpop.f32.mrb[0].mxu0
      %v2564 = vadd.f32 %v752, %v2563
      %v2565 = vpop.f32.mrb[0].mxu0
      %2566 = vmatprep.mubr.f32.mxu0 0.0
      %2567 = vmatmul.mubr.f32.gmra.mrb[0].mxu0 %v1341
      %v2568 = vpop.f32.mrb[0].mxu0
      %v2569 = vadd.f32 %v752, %v2568
      %v2570 = vpop.f32.mrb[0].mxu0
      %2571 = vmatprep.mubr.f32.mxu0 0.0
      %2572 = vmatmul.mubr.f32.gmra.mrb[0].mxu0 %v1344
      %v2573 = vpop.f32.mrb[0].mxu0
      %v2574 = vadd.f32 %v752, %v2573
      %v2575 = vpop.f32.mrb[0].mxu0
      %2576 = vmatprep.mubr.f32.mxu0 0.0
      %2577 = vmatmul.mubr.f32.gmra.mrb[0].mxu0 %v1347
      %v2578 = vpop.f32.mrb[0].mxu0
      %v2579 = vadd.f32 %v752, %v2578
      %v2580 = vpop.f32.mrb[0].mxu0
      %2581 = vmatprep.mubr.f32.mxu0 0.0
      %2582 = vmatmul.mubr.f32.gmra.mrb[0].mxu0 %v1350
      %v2583 = vpop.f32.mrb[0].mxu0
      %v2584 = vadd.f32 %v752, %v2583
      %v2585 = vpop.f32.mrb[0].mxu0
      %2586 = vmatprep.mubr.f32.mxu0 0.0
      %2587 = vmatmul.mubr.f32.gmra.mrb[0].mxu0 %v1353
      %v2588 = vpop.f32.mrb[0].mxu0
      %v2589 = vadd.f32 %v752, %v2588
      %v2590 = vpop.f32.mrb[0].mxu0
      %2591 = vmatprep.mubr.f32.mxu0 0.0
      %2592 = vmatmul.mubr.f32.gmra.mrb[0].mxu0 %v1356
      %v2593 = vpop.f32.mrb[0].mxu0
      %v2594 = vadd.f32 %v752, %v2593
      %v2595 = vpop.f32.mrb[0].mxu0
      %2596 = vmatprep.mubr.f32.mxu0 0.0
      %2597 = vmatmul.mubr.f32.gmra.mrb[0].mxu0 %v1359
      %v2598 = vpop.f32.mrb[0].mxu0
      %v2599 = vadd.f32 %v752, %v2598
      %v2600 = vpop.f32.mrb[0].mxu0
      %2601 = vmatprep.mubr.f32.mxu0 0.0
      %2602 = vmatmul.mubr.f32.gmra.mrb[0].mxu0 %v1362
      %v2603 = vpop.f32.mrb[0].mxu0
      %v2604 = vadd.f32 %v752, %v2603
      %v2605 = vpop.f32.mrb[0].mxu0
      %2606 = vmatprep.mubr.f32.mxu0 0.0
      %2607 = vmatmul.mubr.f32.gmra.mrb[0].mxu0 %v1365
      %v2608 = vpop.f32.mrb[0].mxu0
      %v2609 = vadd.f32 %v752, %v2608
      %v2610 = vpop.f32.mrb[0].mxu0
      %2611 = vmatprep.mubr.f32.mxu0 0.0
      %2612 = vmatmul.mubr.f32.gmra.mrb[0].mxu0 %v1368
      %v2613 = vpop.f32.mrb[0].mxu0
      %v2614 = vadd.f32 %v752, %v2613
      %v2615 = vpop.f32.mrb[0].mxu0
      %2616 = vmatprep.mubr.f32.mxu0 0.0
      %2617 = vmatmul.mubr.f32.gmra.mrb[0].mxu0 %v1371
      %v2618 = vpop.f32.mrb[0].mxu0
      %v2619 = vadd.f32 %v752, %v2618
      %v2620 = vpop.f32.mrb[0].mxu0
      %2621 = vmatprep.mubr.f32.mxu0 0.0
      %2622 = vmatmul.mubr.f32.gmra.mrb[0].mxu0 %v1374
      %v2623 = vpop.f32.mrb[0].mxu0
      %v2624 = vadd.f32 %v752, %v2623
      %v2625 = vpop.f32.mrb[0].mxu0
      %2626 = vmatprep.mubr.f32.mxu0 0.0
      %2627 = vmatmul.mubr.f32.gmra.mrb[0].mxu0 %v1377
      %v2628 = vpop.f32.mrb[0].mxu0
      %v2629 = vadd.f32 %v752, %v2628
      %v2630 = vpop.f32.mrb[0].mxu0
      %2631 = vmatprep.mubr.f32.mxu0 0.0
      %2632 = vmatmul.mubr.f32.gmra.mrb[0].mxu0 %v1380
      %v2633 = vpop.f32.mrb[0].mxu0
      %v2634 = vadd.f32 %v752, %v2633
      %v2635 = vpop.f32.mrb[0].mxu0
      %2636 = vmatprep.mubr.f32.mxu0 0.0
      %2637 = vmatmul.mubr.f32.gmra.mrb[0].mxu0 %v1383
      %v2638 = vpop.f32.mrb[0].mxu0
      %v2639 = vadd.f32 %v752, %v2638
      %v2640 = vpop.f32.mrb[0].mxu0
      %2641 = vmatprep.mubr.f32.mxu0 0.0
      %2642 = vmatmul.mubr.f32.gmra.mrb[0].mxu0 %v1386
      %v2643 = vpop.f32.mrb[0].mxu0
      %v2644 = vadd.f32 %v752, %v2643
      %v2645 = vpop.f32.mrb[0].mxu0
      %2646 = vmatprep.mubr.f32.mxu0 0.0
      %2647 = vmatmul.mubr.f32.gmra.mrb[0].mxu0 %v1389
      %v2648 = vpop.f32.mrb[0].mxu0
      %v2649 = vadd.f32 %v752, %v2648
      %v2650 = vpop.f32.mrb[0].mxu0
      %2651 = vmatprep.mubr.f32.mxu0 0.0
      %2652 = vmatmul.mubr.f32.gmra.mrb[0].mxu0 %v1392
      %v2653 = vpop.f32.mrb[0].mxu0
      %v2654 = vadd.f32 %v752, %v2653
      %v2655 = vpop.f32.mrb[0].mxu0
      %2656 = vmatprep.mubr.f32.mxu0 0.0
      %2657 = vmatmul.mubr.f32.gmra.mrb[0].mxu0 %v1395
      %v2658 = vpop.f32.mrb[0].mxu0
      %v2659 = vadd.f32 %v752, %v2658
      %v2660 = vpop.f32.mrb[0].mxu0
      %2661 = vmatprep.mubr.f32.mxu0 0.0
      %2662 = vmatmul.mubr.f32.gmra.mrb[0].mxu0 %v1398
      %v2663 = vpop.f32.mrb[0].mxu0
      %v2664 = vadd.f32 %v752, %v2663
      %v2665 = vpop.f32.mrb[0].mxu0
      %2666 = vmatprep.mubr.f32.mxu0 0.0
      %2667 = vmatmul.mubr.f32.gmra.mrb[0].mxu0 %v1401
      %v2668 = vpop.f32.mrb[0].mxu0
      %v2669 = vadd.f32 %v752, %v2668
      %v2670 = vpop.f32.mrb[0].mxu0
      %2671 = vmatprep.mubr.f32.mxu0 0.0
      %2672 = vmatmul.mubr.f32.gmra.mrb[0].mxu0 %v1404
      %v2673 = vpop.f32.mrb[0].mxu0
      %v2674 = vadd.f32 %v752, %v2673
      %v2675 = vpop.f32.mrb[0].mxu0
      %2676 = vmatprep.mubr.f32.mxu0 0.0
      %2677 = vmatmul.mubr.f32.gmra.mrb[0].mxu0 %v1407
      %v2678 = vpop.f32.mrb[0].mxu0
      %v2679 = vadd.f32 %v752, %v2678
      %v2680 = vpop.f32.mrb[0].mxu0
      %2681 = vmatprep.mubr.f32.mxu0 0.0
      %2682 = vmatmul.mubr.f32.gmra.mrb[0].mxu0 %v1410
      %v2683 = vpop.f32.mrb[0].mxu0
      %v2684 = vadd.f32 %v752, %v2683
      %v2685 = vpop.f32.mrb[0].mxu0
      %2686 = vmatprep.mubr.f32.mxu0 0.0
      %2687 = vmatmul.mubr.f32.gmra.mrb[0].mxu0 %v1413
      %v2688 = vpop.f32.mrb[0].mxu0
      %v2689 = vadd.f32 %v752, %v2688
      %v2690 = vpop.f32.mrb[0].mxu0
      %2691 = vmatprep.mubr.f32.mxu0 0.0
      %2692 = vmatmul.mubr.f32.gmra.mrb[0].mxu0 %v1416
      %v2693 = vpop.f32.mrb[0].mxu0
      %v2694 = vadd.f32 %v752, %v2693
      %v2695 = vpop.f32.mrb[0].mxu0
      %2696 = vmatprep.mubr.f32.mxu0 0.0
      %2697 = vmatmul.mubr.f32.gmra.mrb[0].mxu0 %v1419
      %v2698 = vpop.f32.mrb[0].mxu0
      %v2699 = vadd.f32 %v752, %v2698
      %v2700 = vpop.f32.mrb[0].mxu0
      %2701 = vmatprep.mubr.f32.mxu0 0.0
      %2702 = vmatmul.mubr.f32.gmra.mrb[0].mxu0 %v1422
      %v2703 = vpop.f32.mrb[0].mxu0
      %v2704 = vadd.f32 %v752, %v2703
      %v2705 = vpop.f32.mrb[0].mxu0
      %2706 = vmatprep.mubr.f32.mxu0 0.0
      %2707 = vmatmul.mubr.f32.gmra.mrb[0].mxu0 %v1425
      %v2708 = vpop.f32.mrb[0].mxu0
      %v2709 = vadd.f32 %v752, %v2708
      %v2710 = vpop.f32.mrb[0].mxu0
      %2711 = vmatprep.mubr.f32.mxu0 0.0
      %2712 = vmatmul.mubr.f32.gmra.mrb[0].mxu0 %v1428
      %v2713 = vpop.f32.mrb[0].mxu0
      %v2714 = vadd.f32 %v752, %v2713
      %v2715 = vpop.f32.mrb[0].mxu0
      %2716 = vmatprep.mubr.f32.mxu0 0.0
      %2717 = vmatmul.mubr.f32.gmra.mrb[0].mxu0 %v1431
      %v2718 = vpop.f32.mrb[0].mxu0
      %v2719 = vadd.f32 %v752, %v2718
      %v2720 = vpop.f32.mrb[0].mxu0
      %2721 = vmatprep.mubr.f32.mxu0 0.0
      %2722 = vmatmul.mubr.f32.gmra.mrb[0].mxu0 %v1434
      %v2723 = vpop.f32.mrb[0].mxu0
      %v2724 = vadd.f32 %v752, %v2723
      %v2725 = vpop.f32.mrb[0].mxu0
      %2726 = vmatprep.mubr.f32.mxu0 0.0
      %2727 = vmatmul.mubr.f32.gmra.mrb[0].mxu0 %v1437
      %v2728 = vpop.f32.mrb[0].mxu0
      %v2729 = vadd.f32 %v752, %v2728
      %v2730 = vpop.f32.mrb[0].mxu0
      %2731 = vmatprep.mubr.f32.mxu0 0.0
      %2732 = vmatmul.mubr.f32.gmra.mrb[0].mxu0 %v1440
      %v2733 = vpop.f32.mrb[0].mxu0
      %v2734 = vadd.f32 %v752, %v2733
      %v2735 = vpop.f32.mrb[0].mxu0
      %2736 = vmatprep.mubr.f32.mxu0 0.0
      %2737 = vmatmul.mubr.f32.gmra.mrb[0].mxu0 %v1443
      %v2738 = vpop.f32.mrb[0].mxu0
      %v2739 = vadd.f32 %v752, %v2738
      %v2740 = vpop.f32.mrb[0].mxu0
      %2741 = vmatprep.mubr.f32.mxu0 0.0
      %2742 = vmatmul.mubr.f32.gmra.mrb[0].mxu0 %v1446
      %v2743 = vpop.f32.mrb[0].mxu0
      %v2744 = vadd.f32 %v752, %v2743
      %v2745 = vpop.f32.mrb[0].mxu0
      %2746 = vmatprep.mubr.f32.mxu0 0.0
      %2747 = vmatmul.mubr.f32.gmra.mrb[0].mxu0 %v1449
      %v2748 = vpop.f32.mrb[0].mxu0
      %v2749 = vadd.f32 %v752, %v2748
      %v2750 = vpop.f32.mrb[0].mxu0
      %2751 = vmatprep.mubr.f32.mxu0 0.0
      %2752 = vmatmul.mubr.f32.gmra.mrb[0].mxu0 %v1452
      %v2753 = vpop.f32.mrb[0].mxu0
      %v2754 = vadd.f32 %v752, %v2753
      %v2755 = vpop.f32.mrb[0].mxu0
      %2756 = vmatprep.mubr.f32.mxu0 0.0
      %2757 = vmatmul.mubr.f32.gmra.mrb[0].mxu0 %v1455
      %v2758 = vpop.f32.mrb[0].mxu0
      %v2759 = vadd.f32 %v752, %v2758
      %v2760 = vpop.f32.mrb[0].mxu0
      %2761 = vmatprep.mubr.f32.mxu0 0.0
      %2762 = vmatmul.mubr.f32.gmra.mrb[0].mxu0 %v1458
      %v2763 = vpop.f32.mrb[0].mxu0
      %v2764 = vadd.f32 %v752, %v2763
      %v2765 = vpop.f32.mrb[0].mxu0
      %2766 = vmatprep.mubr.f32.mxu0 0.0
      %2767 = vmatmul.mubr.f32.gmra.mrb[0].mxu0 %v1461
      %v2768 = vpop.f32.mrb[0].mxu0
      %v2769 = vadd.f32 %v752, %v2768
      %v2770 = vpop.f32.mrb[0].mxu0
      %2771 = vmatprep.mubr.f32.mxu0 0.0
      %2772 = vmatmul.mubr.f32.gmra.mrb[0].mxu0 %v1464
      %v2773 = vpop.f32.mrb[0].mxu0
      %v2774 = vadd.f32 %v752, %v2773
      %v2775 = vpop.f32.mrb[0].mxu0
      %2776 = vmatprep.mubr.f32.mxu0 0.0
      %2777 = vmatmul.mubr.f32.gmra.mrb[0].mxu0 %v1467
      %v2778 = vpop.f32.mrb[0].mxu0
      %v2779 = vadd.f32 %v752, %v2778
      %v2780 = vpop.f32.mrb[0].mxu0
      %2781 = vmatprep.mubr.f32.mxu0 0.0
      %2782 = vmatmul.mubr.f32.gmra.mrb[0].mxu0 %v1470
      %v2783 = vpop.f32.mrb[0].mxu0
      %v2784 = vadd.f32 %v752, %v2783
      %v2785 = vpop.f32.mrb[0].mxu0
      %2786 = vmatprep.mubr.f32.mxu0 0.0
      %2787 = vmatmul.mubr.f32.gmra.mrb[0].mxu0 %v1473
      %v2788 = vpop.f32.mrb[0].mxu0
      %v2789 = vadd.f32 %v752, %v2788
      %v2790 = vpop.f32.mrb[0].mxu0
      %2791 = vmatprep.mubr.f32.mxu0 0.0
      %2792 = vmatmul.mubr.f32.gmra.mrb[0].mxu0 %v1476
      %v2793 = vpop.f32.mrb[0].mxu0
      %v2794 = vadd.f32 %v752, %v2793
      %v2795 = vpop.f32.mrb[0].mxu0
      %2796 = vmatprep.mubr.f32.mxu0 0.0
      %2797 = vmatmul.mubr.f32.gmra.mrb[0].mxu0 %v1479
      %v2798 = vpop.f32.mrb[0].mxu0
      %v2799 = vadd.f32 %v752, %v2798
      %v2800 = vpop.f32.mrb[0].mxu0
      %2801 = vmatprep.mubr.f32.mxu0 0.0
      %2802 = vmatmul.mubr.f32.gmra.mrb[0].mxu0 %v1482
      %v2803 = vpop.f32.mrb[0].mxu0
      %v2804 = vadd.f32 %v752, %v2803
      %v2805 = vpop.f32.mrb[0].mxu0
      %2806 = vmatprep.mubr.f32.mxu0 0.0
      %2807 = vmatmul.mubr.f32.gmra.mrb[0].mxu0 %v1485
      %v2808 = vpop.f32.mrb[0].mxu0
      %v2809 = vadd.f32 %v752, %v2808
      %v2810 = vpop.f32.mrb[0].mxu0
      %2811 = vmatprep.mubr.f32.mxu0 0.0
      %2812 = vmatmul.mubr.f32.gmra.mrb[0].mxu0 %v1488
      %v2813 = vpop.f32.mrb[0].mxu0
      %v2814 = vadd.f32 %v752, %v2813
      %v2815 = vpop.f32.mrb[0].mxu0
      %2816 = vmatprep.mubr.f32.mxu0 0.0
      %2817 = vmatmul.mubr.f32.gmra.mrb[0].mxu0 %v1491
      %v2818 = vpop.f32.mrb[0].mxu0
      %v2819 = vadd.f32 %v752, %v2818
      %v2820 = vpop.f32.mrb[0].mxu0
      %2821 = vmatprep.mubr.f32.mxu0 0.0
      %2822 = vmatmul.mubr.f32.gmra.mrb[0].mxu0 %v1494
      %v2823 = vpop.f32.mrb[0].mxu0
      %v2824 = vadd.f32 %v752, %v2823
      %v2825 = vpop.f32.mrb[0].mxu0
      %2826 = vmatprep.mubr.f32.mxu0 0.0
      %2827 = vmatmul.mubr.f32.gmra.mrb[0].mxu0 %v1497
      %v2828 = vpop.f32.mrb[0].mxu0
      %v2829 = vadd.f32 %v752, %v2828
      %v2830 = vpop.f32.mrb[0].mxu0
      %2831 = vmatprep.mubr.f32.mxu0 0.0
      %2832 = vmatmul.mubr.f32.gmra.mrb[0].mxu0 %v1500
      %v2833 = vpop.f32.mrb[0].mxu0
      %v2834 = vadd.f32 %v752, %v2833
      %v2835 = vpop.f32.mrb[0].mxu0
      %2836 = vmatprep.mubr.f32.mxu0 0.0
      %2837 = vmatmul.mubr.f32.gmra.mrb[0].mxu0 %v1503
      %v2838 = vpop.f32.mrb[0].mxu0
      %v2839 = vadd.f32 %v752, %v2838
      %v2840 = vpop.f32.mrb[0].mxu0
      %2841 = vmatprep.mubr.f32.mxu0 0.0
      %2842 = vmatmul.mubr.f32.gmra.mrb[0].mxu0 %v1506
      %v2843 = vpop.f32.mrb[0].mxu0
      %v2844 = vadd.f32 %v752, %v2843
      %v2845 = vpop.f32.mrb[0].mxu0
      %2846 = vmatprep.mubr.f32.mxu0 0.0
      %2847 = vmatmul.mubr.f32.gmra.mrb[0].mxu0 %v1509
      %v2848 = vpop.f32.mrb[0].mxu0
      %v2849 = vadd.f32 %v752, %v2848
      %v2850 = vpop.f32.mrb[0].mxu0
      %2851 = vmatprep.mubr.f32.mxu0 0.0
      %2852 = vmatmul.mubr.f32.gmra.mrb[0].mxu0 %v1512
      %v2853 = vpop.f32.mrb[0].mxu0
      %v2854 = vadd.f32 %v752, %v2853
      %v2855 = vpop.f32.mrb[0].mxu0
      %2856 = vmatprep.mubr.f32.mxu0 0.0
      %2857 = vmatmul.mubr.f32.gmra.mrb[0].mxu0 %v1515
      %v2858 = vpop.f32.mrb[0].mxu0
      %v2859 = vadd.f32 %v752, %v2858
      %v2860 = vpop.f32.mrb[0].mxu0
      %2861 = vmatprep.mubr.f32.mxu0 0.0
      %2862 = vmatmul.mubr.f32.gmra.mrb[0].mxu0 %v1518
      %v2863 = vpop.f32.mrb[0].mxu0
      %v2864 = vadd.f32 %v752, %v2863
      %v2865 = vpop.f32.mrb[0].mxu0
      %2866 = vmatprep.mubr.f32.mxu0 0.0
      %2867 = vmatmul.mubr.f32.gmra.mrb[0].mxu0 %v1521
      %v2868 = vpop.f32.mrb[0].mxu0
      %v2869 = vadd.f32 %v752, %v2868
      %v2870 = vpop.f32.mrb[0].mxu0
      %2871 = vdwg.mxu0
      %v2872 = vmax.f32 %v1594, 0.0
      %v2873 = vmax.f32 %v1599, 0.0
      %v2874 = vmax.f32 %v1604, 0.0
      %v2875 = vmax.f32 %v1609, 0.0
      %v2876 = vmax.f32 %v1614, 0.0
      %v2877 = vmax.f32 %v1619, 0.0
      %v2878 = vmax.f32 %v1624, 0.0
      %v2879 = vmax.f32 %v1629, 0.0
      %v2880 = vmax.f32 %v1634, 0.0
      %v2881 = vmax.f32 %v1639, 0.0
      %v2882 = vmax.f32 %v1644, 0.0
      %v2883 = vmax.f32 %v1649, 0.0
      %v2884 = vmax.f32 %v1654, 0.0
      %v2885 = vmax.f32 %v1659, 0.0
      %v2886 = vmax.f32 %v1664, 0.0
      %v2887 = vmax.f32 %v1669, 0.0
      %v2888 = vmax.f32 %v1674, 0.0
      %v2889 = vmax.f32 %v1679, 0.0
      %v2890 = vmax.f32 %v1684, 0.0
      %v2891 = vmax.f32 %v1689, 0.0
      %v2892 = vmax.f32 %v1694, 0.0
      %v2893 = vmax.f32 %v1699, 0.0
      %v2894 = vmax.f32 %v1704, 0.0
      %v2895 = vmax.f32 %v1709, 0.0
      %v2896 = vmax.f32 %v1714, 0.0
      %v2897 = vmax.f32 %v1719, 0.0
      %v2898 = vmax.f32 %v1724, 0.0
      %v2899 = vmax.f32 %v1729, 0.0
      %v2900 = vmax.f32 %v1734, 0.0
      %v2901 = vmax.f32 %v1739, 0.0
      %v2902 = vmax.f32 %v1744, 0.0
      %v2903 = vmax.f32 %v1749, 0.0
      %v2904 = vmax.f32 %v1754, 0.0
      %v2905 = vmax.f32 %v1759, 0.0
      %v2906 = vmax.f32 %v1764, 0.0
      %v2907 = vmax.f32 %v1769, 0.0
      %v2908 = vmax.f32 %v1774, 0.0
      %v2909 = vmax.f32 %v1779, 0.0
      %v2910 = vmax.f32 %v1784, 0.0
      %v2911 = vmax.f32 %v1789, 0.0
      %v2912 = vmax.f32 %v1794, 0.0
      %v2913 = vmax.f32 %v1799, 0.0
      %v2914 = vmax.f32 %v1804, 0.0
      %v2915 = vmax.f32 %v1809, 0.0
      %v2916 = vmax.f32 %v1814, 0.0
      %v2917 = vmax.f32 %v1819, 0.0
      %v2918 = vmax.f32 %v1824, 0.0
      %v2919 = vmax.f32 %v1829, 0.0
      %v2920 = vmax.f32 %v1834, 0.0
      %v2921 = vmax.f32 %v1839, 0.0
      %v2922 = vmax.f32 %v1844, 0.0
      %v2923 = vmax.f32 %v1849, 0.0
      %v2924 = vmax.f32 %v1854, 0.0
      %v2925 = vmax.f32 %v1859, 0.0
      %v2926 = vmax.f32 %v1864, 0.0
      %v2927 = vmax.f32 %v1869, 0.0
      %v2928 = vmax.f32 %v1874, 0.0
      %v2929 = vmax.f32 %v1879, 0.0
      %v2930 = vmax.f32 %v1884, 0.0
      %v2931 = vmax.f32 %v1889, 0.0
      %v2932 = vmax.f32 %v1894, 0.0
      %v2933 = vmax.f32 %v1899, 0.0
      %v2934 = vmax.f32 %v1904, 0.0
      %v2935 = vmax.f32 %v1909, 0.0
      %v2936 = vmax.f32 %v1914, 0.0
      %v2937 = vmax.f32 %v1919, 0.0
      %v2938 = vmax.f32 %v1924, 0.0
      %v2939 = vmax.f32 %v1929, 0.0
      %v2940 = vmax.f32 %v1934, 0.0
      %v2941 = vmax.f32 %v1939, 0.0
      %v2942 = vmax.f32 %v1944, 0.0
      %v2943 = vmax.f32 %v1949, 0.0
      %v2944 = vmax.f32 %v1954, 0.0
      %v2945 = vmax.f32 %v1959, 0.0
      %v2946 = vmax.f32 %v1964, 0.0
      %v2947 = vmax.f32 %v1969, 0.0
      %v2948 = vmax.f32 %v1974, 0.0
      %v2949 = vmax.f32 %v1979, 0.0
      %v2950 = vmax.f32 %v1984, 0.0
      %v2951 = vmax.f32 %v1989, 0.0
      %v2952 = vmax.f32 %v1994, 0.0
      %v2953 = vmax.f32 %v1999, 0.0
      %v2954 = vmax.f32 %v2004, 0.0
      %v2955 = vmax.f32 %v2009, 0.0
      %v2956 = vmax.f32 %v2014, 0.0
      %v2957 = vmax.f32 %v2019, 0.0
      %v2958 = vmax.f32 %v2024, 0.0
      %v2959 = vmax.f32 %v2029, 0.0
      %v2960 = vmax.f32 %v2034, 0.0
      %v2961 = vmax.f32 %v2039, 0.0
      %v2962 = vmax.f32 %v2044, 0.0
      %v2963 = vmax.f32 %v2049, 0.0
      %v2964 = vmax.f32 %v2054, 0.0
      %v2965 = vmax.f32 %v2059, 0.0
      %v2966 = vmax.f32 %v2064, 0.0
      %v2967 = vmax.f32 %v2069, 0.0
      %v2968 = vmax.f32 %v2074, 0.0
      %v2969 = vmax.f32 %v2079, 0.0
      %v2970 = vmax.f32 %v2084, 0.0
      %v2971 = vmax.f32 %v2089, 0.0
      %v2972 = vmax.f32 %v2094, 0.0
      %v2973 = vmax.f32 %v2099, 0.0
      %v2974 = vmax.f32 %v2104, 0.0
      %v2975 = vmax.f32 %v2109, 0.0
      %v2976 = vmax.f32 %v2114, 0.0
      %v2977 = vmax.f32 %v2119, 0.0
      %v2978 = vmax.f32 %v2124, 0.0
      %v2979 = vmax.f32 %v2129, 0.0
      %v2980 = vmax.f32 %v2134, 0.0
      %v2981 = vmax.f32 %v2139, 0.0
      %v2982 = vmax.f32 %v2144, 0.0
      %v2983 = vmax.f32 %v2149, 0.0
      %v2984 = vmax.f32 %v2154, 0.0
      %v2985 = vmax.f32 %v2159, 0.0
      %v2986 = vmax.f32 %v2164, 0.0
      %v2987 = vmax.f32 %v2169, 0.0
      %v2988 = vmax.f32 %v2174, 0.0
      %v2989 = vmax.f32 %v2179, 0.0
      %v2990 = vmax.f32 %v2184, 0.0
      %v2991 = vmax.f32 %v2189, 0.0
      %v2992 = vmax.f32 %v2194, 0.0
      %v2993 = vmax.f32 %v2199, 0.0
      %v2994 = vmax.f32 %v2204, 0.0
      %v2995 = vmax.f32 %v2209, 0.0
      %v2996 = vmax.f32 %v2214, 0.0
      %v2997 = vmax.f32 %v2219, 0.0
      %v2998 = vmax.f32 %v2224, 0.0
      %v2999 = vmax.f32 %v2229, 0.0
      %v3000 = vmax.f32 %v2234, 0.0
      %v3001 = vmax.f32 %v2239, 0.0
      %v3002 = vmax.f32 %v2244, 0.0
      %v3003 = vmax.f32 %v2249, 0.0
      %v3004 = vmax.f32 %v2254, 0.0
      %v3005 = vmax.f32 %v2259, 0.0
      %v3006 = vmax.f32 %v2264, 0.0
      %v3007 = vmax.f32 %v2269, 0.0
      %v3008 = vmax.f32 %v2274, 0.0
      %v3009 = vmax.f32 %v2279, 0.0
      %v3010 = vmax.f32 %v2284, 0.0
      %v3011 = vmax.f32 %v2289, 0.0
      %v3012 = vmax.f32 %v2294, 0.0
      %v3013 = vmax.f32 %v2299, 0.0
      %v3014 = vmax.f32 %v2304, 0.0
      %v3015 = vmax.f32 %v2309, 0.0
      %v3016 = vmax.f32 %v2314, 0.0
      %v3017 = vmax.f32 %v2319, 0.0
      %v3018 = vmax.f32 %v2324, 0.0
      %v3019 = vmax.f32 %v2329, 0.0
      %v3020 = vmax.f32 %v2334, 0.0
      %v3021 = vmax.f32 %v2339, 0.0
      %v3022 = vmax.f32 %v2344, 0.0
      %v3023 = vmax.f32 %v2349, 0.0
      %v3024 = vmax.f32 %v2354, 0.0
      %v3025 = vmax.f32 %v2359, 0.0
      %v3026 = vmax.f32 %v2364, 0.0
      %v3027 = vmax.f32 %v2369, 0.0
      %v3028 = vmax.f32 %v2374, 0.0
      %v3029 = vmax.f32 %v2379, 0.0
      %v3030 = vmax.f32 %v2384, 0.0
      %v3031 = vmax.f32 %v2389, 0.0
      %v3032 = vmax.f32 %v2394, 0.0
      %v3033 = vmax.f32 %v2399, 0.0
      %v3034 = vmax.f32 %v2404, 0.0
      %v3035 = vmax.f32 %v2409, 0.0
      %v3036 = vmax.f32 %v2414, 0.0
      %v3037 = vmax.f32 %v2419, 0.0
      %v3038 = vmax.f32 %v2424, 0.0
      %v3039 = vmax.f32 %v2429, 0.0
      %v3040 = vmax.f32 %v2434, 0.0
      %v3041 = vmax.f32 %v2439, 0.0
      %v3042 = vmax.f32 %v2444, 0.0
      %v3043 = vmax.f32 %v2449, 0.0
      %v3044 = vmax.f32 %v2454, 0.0
      %v3045 = vmax.f32 %v2459, 0.0
      %v3046 = vmax.f32 %v2464, 0.0
      %v3047 = vmax.f32 %v2469, 0.0
      %v3048 = vmax.f32 %v2474, 0.0
      %v3049 = vmax.f32 %v2479, 0.0
      %v3050 = vmax.f32 %v2484, 0.0
      %v3051 = vmax.f32 %v2489, 0.0
      %v3052 = vmax.f32 %v2494, 0.0
      %v3053 = vmax.f32 %v2499, 0.0
      %v3054 = vmax.f32 %v2504, 0.0
      %v3055 = vmax.f32 %v2509, 0.0
      %v3056 = vmax.f32 %v2514, 0.0
      %v3057 = vmax.f32 %v2519, 0.0
      %v3058 = vmax.f32 %v2524, 0.0
      %v3059 = vmax.f32 %v2529, 0.0
      %v3060 = vmax.f32 %v2534, 0.0
      %v3061 = vmax.f32 %v2539, 0.0
      %v3062 = vmax.f32 %v2544, 0.0
      %v3063 = vmax.f32 %v2549, 0.0
      %v3064 = vmax.f32 %v2554, 0.0
      %v3065 = vmax.f32 %v2559, 0.0
      %v3066 = vmax.f32 %v2564, 0.0
      %v3067 = vmax.f32 %v2569, 0.0
      %v3068 = vmax.f32 %v2574, 0.0
      %v3069 = vmax.f32 %v2579, 0.0
      %v3070 = vmax.f32 %v2584, 0.0
      %v3071 = vmax.f32 %v2589, 0.0
      %v3072 = vmax.f32 %v2594, 0.0
      %v3073 = vmax.f32 %v2599, 0.0
      %v3074 = vmax.f32 %v2604, 0.0
      %v3075 = vmax.f32 %v2609, 0.0
      %v3076 = vmax.f32 %v2614, 0.0
      %v3077 = vmax.f32 %v2619, 0.0
      %v3078 = vmax.f32 %v2624, 0.0
      %v3079 = vmax.f32 %v2629, 0.0
      %v3080 = vmax.f32 %v2634, 0.0
      %v3081 = vmax.f32 %v2639, 0.0
      %v3082 = vmax.f32 %v2644, 0.0
      %v3083 = vmax.f32 %v2649, 0.0
      %v3084 = vmax.f32 %v2654, 0.0
      %v3085 = vmax.f32 %v2659, 0.0
      %v3086 = vmax.f32 %v2664, 0.0
      %v3087 = vmax.f32 %v2669, 0.0
      %v3088 = vmax.f32 %v2674, 0.0
      %v3089 = vmax.f32 %v2679, 0.0
      %v3090 = vmax.f32 %v2684, 0.0
      %v3091 = vmax.f32 %v2689, 0.0
      %v3092 = vmax.f32 %v2694, 0.0
      %v3093 = vmax.f32 %v2699, 0.0
      %v3094 = vmax.f32 %v2704, 0.0
      %v3095 = vmax.f32 %v2709, 0.0
      %v3096 = vmax.f32 %v2714, 0.0
      %v3097 = vmax.f32 %v2719, 0.0
      %v3098 = vmax.f32 %v2724, 0.0
      %v3099 = vmax.f32 %v2729, 0.0
      %v3100 = vmax.f32 %v2734, 0.0
      %v3101 = vmax.f32 %v2739, 0.0
      %v3102 = vmax.f32 %v2744, 0.0
      %v3103 = vmax.f32 %v2749, 0.0
      %v3104 = vmax.f32 %v2754, 0.0
      %v3105 = vmax.f32 %v2759, 0.0
      %v3106 = vmax.f32 %v2764, 0.0
      %v3107 = vmax.f32 %v2769, 0.0
      %v3108 = vmax.f32 %v2774, 0.0
      %v3109 = vmax.f32 %v2779, 0.0
      %v3110 = vmax.f32 %v2784, 0.0
      %v3111 = vmax.f32 %v2789, 0.0
      %v3112 = vmax.f32 %v2794, 0.0
      %v3113 = vmax.f32 %v2799, 0.0
      %v3114 = vmax.f32 %v2804, 0.0
      %v3115 = vmax.f32 %v2809, 0.0
      %v3116 = vmax.f32 %v2814, 0.0
      %v3117 = vmax.f32 %v2819, 0.0
      %v3118 = vmax.f32 %v2824, 0.0
      %v3119 = vmax.f32 %v2829, 0.0
      %v3120 = vmax.f32 %v2834, 0.0
      %v3121 = vmax.f32 %v2839, 0.0
      %v3122 = vmax.f32 %v2844, 0.0
      %v3123 = vmax.f32 %v2849, 0.0
      %v3124 = vmax.f32 %v2854, 0.0
      %v3125 = vmax.f32 %v2859, 0.0
      %v3126 = vmax.f32 %v2864, 0.0
      %v3127 = vmax.f32 %v2869, 0.0
      %v3128 = vmax.f32 %v2872, %v2876
      %v3129 = vmax.f32 %v2873, %v2877
      %v3130 = vmax.f32 %v2874, %v2878
      %v3131 = vmax.f32 %v2875, %v2879
      %v3132 = vmax.f32 %v2880, %v2884
      %v3133 = vmax.f32 %v2881, %v2885
      %v3134 = vmax.f32 %v2882, %v2886
      %v3135 = vmax.f32 %v2883, %v2887
      %v3136 = vmax.f32 %v2888, %v2892
      %v3137 = vmax.f32 %v2889, %v2893
      %v3138 = vmax.f32 %v2890, %v2894
      %v3139 = vmax.f32 %v2891, %v2895
      %v3140 = vmax.f32 %v2896, %v2900
      %v3141 = vmax.f32 %v2897, %v2901
      %v3142 = vmax.f32 %v2898, %v2902
      %v3143 = vmax.f32 %v2899, %v2903
      %v3144 = vmax.f32 %v2904, %v2908
      %v3145 = vmax.f32 %v2905, %v2909
      %v3146 = vmax.f32 %v2906, %v2910
      %v3147 = vmax.f32 %v2907, %v2911
      %v3148 = vmax.f32 %v2912, %v2916
      %v3149 = vmax.f32 %v2913, %v2917
      %v3150 = vmax.f32 %v2914, %v2918
      %v3151 = vmax.f32 %v2915, %v2919
      %v3152 = vmax.f32 %v2920, %v2924
      %v3153 = vmax.f32 %v2921, %v2925
      %v3154 = vmax.f32 %v2922, %v2926
      %v3155 = vmax.f32 %v2923, %v2927
      %v3156 = vmax.f32 %v2928, %v2932
      %v3157 = vmax.f32 %v2929, %v2933
      %v3158 = vmax.f32 %v2930, %v2934
      %v3159 = vmax.f32 %v2931, %v2935
      %v3160 = vmax.f32 %v2936, %v2940
      %v3161 = vmax.f32 %v2937, %v2941
      %v3162 = vmax.f32 %v2938, %v2942
      %v3163 = vmax.f32 %v2939, %v2943
      %v3164 = vmax.f32 %v2944, %v2948
      %v3165 = vmax.f32 %v2945, %v2949
      %v3166 = vmax.f32 %v2946, %v2950
      %v3167 = vmax.f32 %v2947, %v2951
      %v3168 = vmax.f32 %v2952, %v2956
      %v3169 = vmax.f32 %v2953, %v2957
      %v3170 = vmax.f32 %v2954, %v2958
      %v3171 = vmax.f32 %v2955, %v2959
      %v3172 = vmax.f32 %v2960, %v2964
      %v3173 = vmax.f32 %v2961, %v2965
      %v3174 = vmax.f32 %v2962, %v2966
      %v3175 = vmax.f32 %v2963, %v2967
      %v3176 = vmax.f32 %v2968, %v2972
      %v3177 = vmax.f32 %v2969, %v2973
      %v3178 = vmax.f32 %v2970, %v2974
      %v3179 = vmax.f32 %v2971, %v2975
      %v3180 = vmax.f32 %v2976, %v2980
      %v3181 = vmax.f32 %v2977, %v2981
      %v3182 = vmax.f32 %v2978, %v2982
      %v3183 = vmax.f32 %v2979, %v2983
      %v3184 = vmax.f32 %v2984, %v2988
      %v3185 = vmax.f32 %v2985, %v2989
      %v3186 = vmax.f32 %v2986, %v2990
      %v3187 = vmax.f32 %v2987, %v2991
      %v3188 = vmax.f32 %v2992, %v2996
      %v3189 = vmax.f32 %v2993, %v2997
      %v3190 = vmax.f32 %v2994, %v2998
      %v3191 = vmax.f32 %v2995, %v2999
      %v3192 = vmax.f32 %v3000, %v3004
      %v3193 = vmax.f32 %v3001, %v3005
      %v3194 = vmax.f32 %v3002, %v3006
      %v3195 = vmax.f32 %v3003, %v3007
      %v3196 = vmax.f32 %v3008, %v3012
      %v3197 = vmax.f32 %v3009, %v3013
      %v3198 = vmax.f32 %v3010, %v3014
      %v3199 = vmax.f32 %v3011, %v3015
      %v3200 = vmax.f32 %v3016, %v3020
      %v3201 = vmax.f32 %v3017, %v3021
      %v3202 = vmax.f32 %v3018, %v3022
      %v3203 = vmax.f32 %v3019, %v3023
      %v3204 = vmax.f32 %v3024, %v3028
      %v3205 = vmax.f32 %v3025, %v3029
      %v3206 = vmax.f32 %v3026, %v3030
      %v3207 = vmax.f32 %v3027, %v3031
      %v3208 = vmax.f32 %v3032, %v3036
      %v3209 = vmax.f32 %v3033, %v3037
      %v3210 = vmax.f32 %v3034, %v3038
      %v3211 = vmax.f32 %v3035, %v3039
      %v3212 = vmax.f32 %v3040, %v3044
      %v3213 = vmax.f32 %v3041, %v3045
      %v3214 = vmax.f32 %v3042, %v3046
      %v3215 = vmax.f32 %v3043, %v3047
      %v3216 = vmax.f32 %v3048, %v3052
      %v3217 = vmax.f32 %v3049, %v3053
      %v3218 = vmax.f32 %v3050, %v3054
      %v3219 = vmax.f32 %v3051, %v3055
      %v3220 = vmax.f32 %v3056, %v3060
      %v3221 = vmax.f32 %v3057, %v3061
      %v3222 = vmax.f32 %v3058, %v3062
      %v3223 = vmax.f32 %v3059, %v3063
      %v3224 = vmax.f32 %v3064, %v3068
      %v3225 = vmax.f32 %v3065, %v3069
      %v3226 = vmax.f32 %v3066, %v3070
      %v3227 = vmax.f32 %v3067, %v3071
      %v3228 = vmax.f32 %v3072, %v3076
      %v3229 = vmax.f32 %v3073, %v3077
      %v3230 = vmax.f32 %v3074, %v3078
      %v3231 = vmax.f32 %v3075, %v3079
      %v3232 = vmax.f32 %v3080, %v3084
      %v3233 = vmax.f32 %v3081, %v3085
      %v3234 = vmax.f32 %v3082, %v3086
      %v3235 = vmax.f32 %v3083, %v3087
      %v3236 = vmax.f32 %v3088, %v3092
      %v3237 = vmax.f32 %v3089, %v3093
      %v3238 = vmax.f32 %v3090, %v3094
      %v3239 = vmax.f32 %v3091, %v3095
      %v3240 = vmax.f32 %v3096, %v3100
      %v3241 = vmax.f32 %v3097, %v3101
      %v3242 = vmax.f32 %v3098, %v3102
      %v3243 = vmax.f32 %v3099, %v3103
      %v3244 = vmax.f32 %v3104, %v3108
      %v3245 = vmax.f32 %v3105, %v3109
      %v3246 = vmax.f32 %v3106, %v3110
      %v3247 = vmax.f32 %v3107, %v3111
      %v3248 = vmax.f32 %v3112, %v3116
      %v3249 = vmax.f32 %v3113, %v3117
      %v3250 = vmax.f32 %v3114, %v3118
      %v3251 = vmax.f32 %v3115, %v3119
      %v3252 = vmax.f32 %v3120, %v3124
      %v3253 = vmax.f32 %v3121, %v3125
      %v3254 = vmax.f32 %v3122, %v3126
      %v3255 = vmax.f32 %v3123, %v3127
      %3256 = vst.msk [vmem:[#allocation2] sm:$0xff] %vm337, %v3128
      %3257 = vst.msk [vmem:[#allocation2 + $0x8] sm:$0xff] %vm337, %v3129
      %3258 = vst.msk [vmem:[#allocation2 + $0x10] sm:$0xff] %vm337, %v3130
      %3259 = vst.msk [vmem:[#allocation2 + $0x18] sm:$0xff] %vm337, %v3131
      %3260 = vst.msk [vmem:[#allocation2 + $0x20] sm:$0xff] %vm337, %v3132
      %3261 = vst.msk [vmem:[#allocation2 + $0x28] sm:$0xff] %vm337, %v3133
      %3262 = vst.msk [vmem:[#allocation2 + $0x30] sm:$0xff] %vm337, %v3134
      %3263 = vst.msk [vmem:[#allocation2 + $0x38] sm:$0xff] %vm337, %v3135
      %3264 = vst.msk [vmem:[#allocation2 + $0x40] sm:$0xff] %vm337, %v3136
      %3265 = vst.msk [vmem:[#allocation2 + $0x48] sm:$0xff] %vm337, %v3137
      %3266 = vst.msk [vmem:[#allocation2 + $0x50] sm:$0xff] %vm337, %v3138
      %3267 = vst.msk [vmem:[#allocation2 + $0x58] sm:$0xff] %vm337, %v3139
      %3268 = vst.msk [vmem:[#allocation2 + $0x60] sm:$0xff] %vm337, %v3140
      %3269 = vst.msk [vmem:[#allocation2 + $0x68] sm:$0xff] %vm337, %v3141
      %3270 = vst.msk [vmem:[#allocation2 + $0x70] sm:$0xff] %vm337, %v3142
      %3271 = vst.msk [vmem:[#allocation2 + $0x78] sm:$0xff] %vm337, %v3143
      %3272 = vst.msk [vmem:[#allocation2 + $0x80] sm:$0xff] %vm337, %v3144
      %3273 = vst.msk [vmem:[#allocation2 + $0x88] sm:$0xff] %vm337, %v3145
      %3274 = vst.msk [vmem:[#allocation2 + $0x90] sm:$0xff] %vm337, %v3146
      %3275 = vst.msk [vmem:[#allocation2 + $0x98] sm:$0xff] %vm337, %v3147
      %3276 = vst.msk [vmem:[#allocation2 + $0xa0] sm:$0xff] %vm337, %v3148
      %3277 = vst.msk [vmem:[#allocation2 + $0xa8] sm:$0xff] %vm337, %v3149
      %3278 = vst.msk [vmem:[#allocation2 + $0xb0] sm:$0xff] %vm337, %v3150
      %3279 = vst.msk [vmem:[#allocation2 + $0xb8] sm:$0xff] %vm337, %v3151
      %3280 = vst.msk [vmem:[#allocation2 + $0xc0] sm:$0xff] %vm337, %v3152
      %3281 = vst.msk [vmem:[#allocation2 + $0xc8] sm:$0xff] %vm337, %v3153
      %3282 = vst.msk [vmem:[#allocation2 + $0xd0] sm:$0xff] %vm337, %v3154
      %3283 = vst.msk [vmem:[#allocation2 + $0xd8] sm:$0xff] %vm337, %v3155
      %3284 = vst.msk [vmem:[#allocation2 + $0xe0] sm:$0xff] %vm337, %v3156
      %3285 = vst.msk [vmem:[#allocation2 + $0xe8] sm:$0xff] %vm337, %v3157
      %3286 = vst.msk [vmem:[#allocation2 + $0xf0] sm:$0xff] %vm337, %v3158
      %3287 = vst.msk [vmem:[#allocation2 + $0xf8] sm:$0xff] %vm337, %v3159
      %3288 = vst.msk [vmem:[#allocation2 + $0x100] sm:$0xff] %vm337, %v3160
      %3289 = vst.msk [vmem:[#allocation2 + $0x108] sm:$0xff] %vm337, %v3161
      %3290 = vst.msk [vmem:[#allocation2 + $0x110] sm:$0xff] %vm337, %v3162
      %3291 = vst.msk [vmem:[#allocation2 + $0x118] sm:$0xff] %vm337, %v3163
      %3292 = vst.msk [vmem:[#allocation2 + $0x120] sm:$0xff] %vm337, %v3164
      %3293 = vst.msk [vmem:[#allocation2 + $0x128] sm:$0xff] %vm337, %v3165
      %3294 = vst.msk [vmem:[#allocation2 + $0x130] sm:$0xff] %vm337, %v3166
      %3295 = vst.msk [vmem:[#allocation2 + $0x138] sm:$0xff] %vm337, %v3167
      %3296 = vst.msk [vmem:[#allocation2 + $0x140] sm:$0xff] %vm337, %v3168
      %3297 = vst.msk [vmem:[#allocation2 + $0x148] sm:$0xff] %vm337, %v3169
      %3298 = vst.msk [vmem:[#allocation2 + $0x150] sm:$0xff] %vm337, %v3170
      %3299 = vst.msk [vmem:[#allocation2 + $0x158] sm:$0xff] %vm337, %v3171
      %3300 = vst.msk [vmem:[#allocation2 + $0x160] sm:$0xff] %vm337, %v3172
      %3301 = vst.msk [vmem:[#allocation2 + $0x168] sm:$0xff] %vm337, %v3173
      %3302 = vst.msk [vmem:[#allocation2 + $0x170] sm:$0xff] %vm337, %v3174
      %3303 = vst.msk [vmem:[#allocation2 + $0x178] sm:$0xff] %vm337, %v3175
      %3304 = vst.msk [vmem:[#allocation2 + $0x180] sm:$0xff] %vm337, %v3176
      %3305 = vst.msk [vmem:[#allocation2 + $0x188] sm:$0xff] %vm337, %v3177
      %3306 = vst.msk [vmem:[#allocation2 + $0x190] sm:$0xff] %vm337, %v3178
      %3307 = vst.msk [vmem:[#allocation2 + $0x198] sm:$0xff] %vm337, %v3179
      %3308 = vst.msk [vmem:[#allocation2 + $0x1a0] sm:$0xff] %vm337, %v3180
      %3309 = vst.msk [vmem:[#allocation2 + $0x1a8] sm:$0xff] %vm337, %v3181
      %3310 = vst.msk [vmem:[#allocation2 + $0x1b0] sm:$0xff] %vm337, %v3182
      %3311 = vst.msk [vmem:[#allocation2 + $0x1b8] sm:$0xff] %vm337, %v3183
      %3312 = vst.msk [vmem:[#allocation2 + $0x1c0] sm:$0xff] %vm337, %v3184
      %3313 = vst.msk [vmem:[#allocation2 + $0x1c8] sm:$0xff] %vm337, %v3185
      %3314 = vst.msk [vmem:[#allocation2 + $0x1d0] sm:$0xff] %vm337, %v3186
      %3315 = vst.msk [vmem:[#allocation2 + $0x1d8] sm:$0xff] %vm337, %v3187
      %3316 = vst.msk [vmem:[#allocation2 + $0x1e0] sm:$0xff] %vm337, %v3188
      %3317 = vst.msk [vmem:[#allocation2 + $0x1e8] sm:$0xff] %vm337, %v3189
      %3318 = vst.msk [vmem:[#allocation2 + $0x1f0] sm:$0xff] %vm337, %v3190
      %3319 = vst.msk [vmem:[#allocation2 + $0x1f8] sm:$0xff] %vm337, %v3191
      %3320 = vst.msk [vmem:[#allocation2 + $0x200] sm:$0xff] %vm337, %v3192
      %3321 = vst.msk [vmem:[#allocation2 + $0x208] sm:$0xff] %vm337, %v3193
      %3322 = vst.msk [vmem:[#allocation2 + $0x210] sm:$0xff] %vm337, %v3194
      %3323 = vst.msk [vmem:[#allocation2 + $0x218] sm:$0xff] %vm337, %v3195
      %3324 = vst.msk [vmem:[#allocation2 + $0x220] sm:$0xff] %vm337, %v3196
      %3325 = vst.msk [vmem:[#allocation2 + $0x228] sm:$0xff] %vm337, %v3197
      %3326 = vst.msk [vmem:[#allocation2 + $0x230] sm:$0xff] %vm337, %v3198
      %3327 = vst.msk [vmem:[#allocation2 + $0x238] sm:$0xff] %vm337, %v3199
      %3328 = vst.msk [vmem:[#allocation2 + $0x240] sm:$0xff] %vm337, %v3200
      %3329 = vst.msk [vmem:[#allocation2 + $0x248] sm:$0xff] %vm337, %v3201
      %3330 = vst.msk [vmem:[#allocation2 + $0x250] sm:$0xff] %vm337, %v3202
      %3331 = vst.msk [vmem:[#allocation2 + $0x258] sm:$0xff] %vm337, %v3203
      %3332 = vst.msk [vmem:[#allocation2 + $0x260] sm:$0xff] %vm337, %v3204
      %3333 = vst.msk [vmem:[#allocation2 + $0x268] sm:$0xff] %vm337, %v3205
      %3334 = vst.msk [vmem:[#allocation2 + $0x270] sm:$0xff] %vm337, %v3206
      %3335 = vst.msk [vmem:[#allocation2 + $0x278] sm:$0xff] %vm337, %v3207
      %3336 = vst.msk [vmem:[#allocation2 + $0x280] sm:$0xff] %vm337, %v3208
      %3337 = vst.msk [vmem:[#allocation2 + $0x288] sm:$0xff] %vm337, %v3209
      %3338 = vst.msk [vmem:[#allocation2 + $0x290] sm:$0xff] %vm337, %v3210
      %3339 = vst.msk [vmem:[#allocation2 + $0x298] sm:$0xff] %vm337, %v3211
      %3340 = vst.msk [vmem:[#allocation2 + $0x2a0] sm:$0xff] %vm337, %v3212
      %3341 = vst.msk [vmem:[#allocation2 + $0x2a8] sm:$0xff] %vm337, %v3213
      %3342 = vst.msk [vmem:[#allocation2 + $0x2b0] sm:$0xff] %vm337, %v3214
      %3343 = vst.msk [vmem:[#allocation2 + $0x2b8] sm:$0xff] %vm337, %v3215
      %3344 = vst.msk [vmem:[#allocation2 + $0x2c0] sm:$0xff] %vm337, %v3216
      %3345 = vst.msk [vmem:[#allocation2 + $0x2c8] sm:$0xff] %vm337, %v3217
      %3346 = vst.msk [vmem:[#allocation2 + $0x2d0] sm:$0xff] %vm337, %v3218
      %3347 = vst.msk [vmem:[#allocation2 + $0x2d8] sm:$0xff] %vm337, %v3219
      %3348 = vst.msk [vmem:[#allocation2 + $0x2e0] sm:$0xff] %vm337, %v3220
      %3349 = vst.msk [vmem:[#allocation2 + $0x2e8] sm:$0xff] %vm337, %v3221
      %3350 = vst.msk [vmem:[#allocation2 + $0x2f0] sm:$0xff] %vm337, %v3222
      %3351 = vst.msk [vmem:[#allocation2 + $0x2f8] sm:$0xff] %vm337, %v3223
      %3352 = vst.msk [vmem:[#allocation2 + $0x300] sm:$0xff] %vm337, %v3224
      %3353 = vst.msk [vmem:[#allocation2 + $0x308] sm:$0xff] %vm337, %v3225
      %3354 = vst.msk [vmem:[#allocation2 + $0x310] sm:$0xff] %vm337, %v3226
      %3355 = vst.msk [vmem:[#allocation2 + $0x318] sm:$0xff] %vm337, %v3227
      %3356 = vst.msk [vmem:[#allocation2 + $0x320] sm:$0xff] %vm337, %v3228
      %3357 = vst.msk [vmem:[#allocation2 + $0x328] sm:$0xff] %vm337, %v3229
      %3358 = vst.msk [vmem:[#allocation2 + $0x330] sm:$0xff] %vm337, %v3230
      %3359 = vst.msk [vmem:[#allocation2 + $0x338] sm:$0xff] %vm337, %v3231
      %3360 = vst.msk [vmem:[#allocation2 + $0x340] sm:$0xff] %vm337, %v3232
      %3361 = vst.msk [vmem:[#allocation2 + $0x348] sm:$0xff] %vm337, %v3233
      %3362 = vst.msk [vmem:[#allocation2 + $0x350] sm:$0xff] %vm337, %v3234
      %3363 = vst.msk [vmem:[#allocation2 + $0x358] sm:$0xff] %vm337, %v3235
      %3364 = vst.msk [vmem:[#allocation2 + $0x360] sm:$0xff] %vm337, %v3236
      %3365 = vst.msk [vmem:[#allocation2 + $0x368] sm:$0xff] %vm337, %v3237
      %3366 = vst.msk [vmem:[#allocation2 + $0x370] sm:$0xff] %vm337, %v3238
      %3367 = vst.msk [vmem:[#allocation2 + $0x378] sm:$0xff] %vm337, %v3239
      %3368 = vst.msk [vmem:[#allocation2 + $0x380] sm:$0xff] %vm337, %v3240
      %3369 = vst.msk [vmem:[#allocation2 + $0x388] sm:$0xff] %vm337, %v3241
      %3370 = vst.msk [vmem:[#allocation2 + $0x390] sm:$0xff] %vm337, %v3242
      %3371 = vst.msk [vmem:[#allocation2 + $0x398] sm:$0xff] %vm337, %v3243
      %3372 = vst.msk [vmem:[#allocation2 + $0x3a0] sm:$0xff] %vm337, %v3244
      %3373 = vst.msk [vmem:[#allocation2 + $0x3a8] sm:$0xff] %vm337, %v3245
      %3374 = vst.msk [vmem:[#allocation2 + $0x3b0] sm:$0xff] %vm337, %v3246
      %3375 = vst.msk [vmem:[#allocation2 + $0x3b8] sm:$0xff] %vm337, %v3247
      %3376 = vst.msk [vmem:[#allocation2 + $0x3c0] sm:$0xff] %vm337, %v3248
      %3377 = vst.msk [vmem:[#allocation2 + $0x3c8] sm:$0xff] %vm337, %v3249
      %3378 = vst.msk [vmem:[#allocation2 + $0x3d0] sm:$0xff] %vm337, %v3250
      %3379 = vst.msk [vmem:[#allocation2 + $0x3d8] sm:$0xff] %vm337, %v3251
      %3380 = vst.msk [vmem:[#allocation2 + $0x3e0] sm:$0xff] %vm337, %v3252
      %3381 = vst.msk [vmem:[#allocation2 + $0x3e8] sm:$0xff] %vm337, %v3253
      %3382 = vst.msk [vmem:[#allocation2 + $0x3f0] sm:$0xff] %vm337, %v3254
      %3383 = vst.msk [vmem:[#allocation2 + $0x3f8] sm:$0xff] %vm337, %v3255
      %v3384 = vld [vmem:[#allocation2] ss:$2 sm:$0xff]
      %s3385 = scalar_lea.vmem [#allocation2], 16
      %v3386 = vld [vmem:[%s3385] ss:$2 sm:$0xff]
      %s3387 = scalar_lea.vmem [#allocation2], 32
      %v3388 = vld [vmem:[%s3387] ss:$2 sm:$0xff]
      %s3389 = scalar_lea.vmem [#allocation2], 48
      %v3390 = vld [vmem:[%s3389] ss:$2 sm:$0xff]
      %s3391 = scalar_lea.vmem [#allocation2], 64
      %v3392 = vld [vmem:[%s3391] ss:$2 sm:$0xff]
      %s3393 = scalar_lea.vmem [#allocation2], 80
      %v3394 = vld [vmem:[%s3393] ss:$2 sm:$0xff]
      %s3395 = scalar_lea.vmem [#allocation2], 96
      %v3396 = vld [vmem:[%s3395] ss:$2 sm:$0xff]
      %s3397 = scalar_lea.vmem [#allocation2], 112
      %v3398 = vld [vmem:[%s3397] ss:$2 sm:$0xff]
      %s3399 = scalar_lea.vmem [#allocation2], 128
      %v3400 = vld [vmem:[%s3399] ss:$2 sm:$0xff]
      %s3401 = scalar_lea.vmem [#allocation2], 144
      %v3402 = vld [vmem:[%s3401] ss:$2 sm:$0xff]
      %s3403 = scalar_lea.vmem [#allocation2], 160
      %v3404 = vld [vmem:[%s3403] ss:$2 sm:$0xff]
      %s3405 = scalar_lea.vmem [#allocation2], 176
      %v3406 = vld [vmem:[%s3405] ss:$2 sm:$0xff]
      %s3407 = scalar_lea.vmem [#allocation2], 192
      %v3408 = vld [vmem:[%s3407] ss:$2 sm:$0xff]
      %s3409 = scalar_lea.vmem [#allocation2], 208
      %v3410 = vld [vmem:[%s3409] ss:$2 sm:$0xff]
      %s3411 = scalar_lea.vmem [#allocation2], 224
      %v3412 = vld [vmem:[%s3411] ss:$2 sm:$0xff]
      %s3413 = scalar_lea.vmem [#allocation2], 240
      %v3414 = vld [vmem:[%s3413] ss:$2 sm:$0xff]
      %s3415 = scalar_lea.vmem [#allocation2], 256
      %v3416 = vld [vmem:[%s3415] ss:$2 sm:$0xff]
      %s3417 = scalar_lea.vmem [#allocation2], 272
      %v3418 = vld [vmem:[%s3417] ss:$2 sm:$0xff]
      %s3419 = scalar_lea.vmem [#allocation2], 288
      %v3420 = vld [vmem:[%s3419] ss:$2 sm:$0xff]
      %s3421 = scalar_lea.vmem [#allocation2], 304
      %v3422 = vld [vmem:[%s3421] ss:$2 sm:$0xff]
      %s3423 = scalar_lea.vmem [#allocation2], 320
      %v3424 = vld [vmem:[%s3423] ss:$2 sm:$0xff]
      %s3425 = scalar_lea.vmem [#allocation2], 336
      %v3426 = vld [vmem:[%s3425] ss:$2 sm:$0xff]
      %s3427 = scalar_lea.vmem [#allocation2], 352
      %v3428 = vld [vmem:[%s3427] ss:$2 sm:$0xff]
      %s3429 = scalar_lea.vmem [#allocation2], 368
      %v3430 = vld [vmem:[%s3429] ss:$2 sm:$0xff]
      %s3431 = scalar_lea.vmem [#allocation2], 384
      %v3432 = vld [vmem:[%s3431] ss:$2 sm:$0xff]
      %s3433 = scalar_lea.vmem [#allocation2], 400
      %v3434 = vld [vmem:[%s3433] ss:$2 sm:$0xff]
      %s3435 = scalar_lea.vmem [#allocation2], 416
      %v3436 = vld [vmem:[%s3435] ss:$2 sm:$0xff]
      %s3437 = scalar_lea.vmem [#allocation2], 432
      %v3438 = vld [vmem:[%s3437] ss:$2 sm:$0xff]
      %s3439 = scalar_lea.vmem [#allocation2], 448
      %v3440 = vld [vmem:[%s3439] ss:$2 sm:$0xff]
      %s3441 = scalar_lea.vmem [#allocation2], 464
      %v3442 = vld [vmem:[%s3441] ss:$2 sm:$0xff]
      %s3443 = scalar_lea.vmem [#allocation2], 480
      %v3444 = vld [vmem:[%s3443] ss:$2 sm:$0xff]
      %s3445 = scalar_lea.vmem [#allocation2], 496
      %v3446 = vld [vmem:[%s3445] ss:$2 sm:$0xff]
      %s3447 = scalar_lea.vmem [#allocation2], 512
      %v3448 = vld [vmem:[%s3447] ss:$2 sm:$0xff]
      %s3449 = scalar_lea.vmem [#allocation2], 528
      %v3450 = vld [vmem:[%s3449] ss:$2 sm:$0xff]
      %s3451 = scalar_lea.vmem [#allocation2], 544
      %v3452 = vld [vmem:[%s3451] ss:$2 sm:$0xff]
      %s3453 = scalar_lea.vmem [#allocation2], 560
      %v3454 = vld [vmem:[%s3453] ss:$2 sm:$0xff]
      %s3455 = scalar_lea.vmem [#allocation2], 576
      %v3456 = vld [vmem:[%s3455] ss:$2 sm:$0xff]
      %s3457 = scalar_lea.vmem [#allocation2], 592
      %v3458 = vld [vmem:[%s3457] ss:$2 sm:$0xff]
      %s3459 = scalar_lea.vmem [#allocation2], 608
      %v3460 = vld [vmem:[%s3459] ss:$2 sm:$0xff]
      %s3461 = scalar_lea.vmem [#allocation2], 624
      %v3462 = vld [vmem:[%s3461] ss:$2 sm:$0xff]
      %s3463 = scalar_lea.vmem [#allocation2], 640
      %v3464 = vld [vmem:[%s3463] ss:$2 sm:$0xff]
      %s3465 = scalar_lea.vmem [#allocation2], 656
      %v3466 = vld [vmem:[%s3465] ss:$2 sm:$0xff]
      %s3467 = scalar_lea.vmem [#allocation2], 672
      %v3468 = vld [vmem:[%s3467] ss:$2 sm:$0xff]
      %s3469 = scalar_lea.vmem [#allocation2], 688
      %v3470 = vld [vmem:[%s3469] ss:$2 sm:$0xff]
      %s3471 = scalar_lea.vmem [#allocation2], 704
      %v3472 = vld [vmem:[%s3471] ss:$2 sm:$0xff]
      %s3473 = scalar_lea.vmem [#allocation2], 720
      %v3474 = vld [vmem:[%s3473] ss:$2 sm:$0xff]
      %s3475 = scalar_lea.vmem [#allocation2], 736
      %v3476 = vld [vmem:[%s3475] ss:$2 sm:$0xff]
      %s3477 = scalar_lea.vmem [#allocation2], 752
      %v3478 = vld [vmem:[%s3477] ss:$2 sm:$0xff]
      %s3479 = scalar_lea.vmem [#allocation2], 768
      %v3480 = vld [vmem:[%s3479] ss:$2 sm:$0xff]
      %s3481 = scalar_lea.vmem [#allocation2], 784
      %v3482 = vld [vmem:[%s3481] ss:$2 sm:$0xff]
      %s3483 = scalar_lea.vmem [#allocation2], 800
      %v3484 = vld [vmem:[%s3483] ss:$2 sm:$0xff]
      %s3485 = scalar_lea.vmem [#allocation2], 816
      %v3486 = vld [vmem:[%s3485] ss:$2 sm:$0xff]
      %s3487 = scalar_lea.vmem [#allocation2], 832
      %v3488 = vld [vmem:[%s3487] ss:$2 sm:$0xff]
      %s3489 = scalar_lea.vmem [#allocation2], 848
      %v3490 = vld [vmem:[%s3489] ss:$2 sm:$0xff]
      %s3491 = scalar_lea.vmem [#allocation2], 864
      %v3492 = vld [vmem:[%s3491] ss:$2 sm:$0xff]
      %s3493 = scalar_lea.vmem [#allocation2], 880
      %v3494 = vld [vmem:[%s3493] ss:$2 sm:$0xff]
      %s3495 = scalar_lea.vmem [#allocation2], 896
      %v3496 = vld [vmem:[%s3495] ss:$2 sm:$0xff]
      %s3497 = scalar_lea.vmem [#allocation2], 912
      %v3498 = vld [vmem:[%s3497] ss:$2 sm:$0xff]
      %s3499 = scalar_lea.vmem [#allocation2], 928
      %v3500 = vld [vmem:[%s3499] ss:$2 sm:$0xff]
      %s3501 = scalar_lea.vmem [#allocation2], 944
      %v3502 = vld [vmem:[%s3501] ss:$2 sm:$0xff]
      %s3503 = scalar_lea.vmem [#allocation2], 960
      %v3504 = vld [vmem:[%s3503] ss:$2 sm:$0xff]
      %s3505 = scalar_lea.vmem [#allocation2], 976
      %v3506 = vld [vmem:[%s3505] ss:$2 sm:$0xff]
      %s3507 = scalar_lea.vmem [#allocation2], 992
      %v3508 = vld [vmem:[%s3507] ss:$2 sm:$0xff]
      %s3509 = scalar_lea.vmem [#allocation2], 1008
      %v3510 = vld [vmem:[%s3509] ss:$2 sm:$0xff]
      %s3511 = scalar_lea.vmem [#allocation2], 1
      %v3512 = vld [vmem:[%s3511] ss:$2 sm:$0xff]
      %s3513 = scalar_lea.vmem [#allocation2], 17
      %v3514 = vld [vmem:[%s3513] ss:$2 sm:$0xff]
      %s3515 = scalar_lea.vmem [#allocation2], 33
      %v3516 = vld [vmem:[%s3515] ss:$2 sm:$0xff]
      %s3517 = scalar_lea.vmem [#allocation2], 49
      %v3518 = vld [vmem:[%s3517] ss:$2 sm:$0xff]
      %s3519 = scalar_lea.vmem [#allocation2], 65
      %v3520 = vld [vmem:[%s3519] ss:$2 sm:$0xff]
      %s3521 = scalar_lea.vmem [#allocation2], 81
      %v3522 = vld [vmem:[%s3521] ss:$2 sm:$0xff]
      %s3523 = scalar_lea.vmem [#allocation2], 97
      %v3524 = vld [vmem:[%s3523] ss:$2 sm:$0xff]
      %s3525 = scalar_lea.vmem [#allocation2], 113
      %v3526 = vld [vmem:[%s3525] ss:$2 sm:$0xff]
      %s3527 = scalar_lea.vmem [#allocation2], 129
      %v3528 = vld [vmem:[%s3527] ss:$2 sm:$0xff]
      %s3529 = scalar_lea.vmem [#allocation2], 145
      %v3530 = vld [vmem:[%s3529] ss:$2 sm:$0xff]
      %s3531 = scalar_lea.vmem [#allocation2], 161
      %v3532 = vld [vmem:[%s3531] ss:$2 sm:$0xff]
      %s3533 = scalar_lea.vmem [#allocation2], 177
      %v3534 = vld [vmem:[%s3533] ss:$2 sm:$0xff]
      %s3535 = scalar_lea.vmem [#allocation2], 193
      %v3536 = vld [vmem:[%s3535] ss:$2 sm:$0xff]
      %s3537 = scalar_lea.vmem [#allocation2], 209
      %v3538 = vld [vmem:[%s3537] ss:$2 sm:$0xff]
      %s3539 = scalar_lea.vmem [#allocation2], 225
      %v3540 = vld [vmem:[%s3539] ss:$2 sm:$0xff]
      %s3541 = scalar_lea.vmem [#allocation2], 241
      %v3542 = vld [vmem:[%s3541] ss:$2 sm:$0xff]
      %s3543 = scalar_lea.vmem [#allocation2], 257
      %v3544 = vld [vmem:[%s3543] ss:$2 sm:$0xff]
      %s3545 = scalar_lea.vmem [#allocation2], 273
      %v3546 = vld [vmem:[%s3545] ss:$2 sm:$0xff]
      %s3547 = scalar_lea.vmem [#allocation2], 289
      %v3548 = vld [vmem:[%s3547] ss:$2 sm:$0xff]
      %s3549 = scalar_lea.vmem [#allocation2], 305
      %v3550 = vld [vmem:[%s3549] ss:$2 sm:$0xff]
      %s3551 = scalar_lea.vmem [#allocation2], 321
      %v3552 = vld [vmem:[%s3551] ss:$2 sm:$0xff]
      %s3553 = scalar_lea.vmem [#allocation2], 337
      %v3554 = vld [vmem:[%s3553] ss:$2 sm:$0xff]
      %s3555 = scalar_lea.vmem [#allocation2], 353
      %v3556 = vld [vmem:[%s3555] ss:$2 sm:$0xff]
      %s3557 = scalar_lea.vmem [#allocation2], 369
      %v3558 = vld [vmem:[%s3557] ss:$2 sm:$0xff]
      %s3559 = scalar_lea.vmem [#allocation2], 385
      %v3560 = vld [vmem:[%s3559] ss:$2 sm:$0xff]
      %s3561 = scalar_lea.vmem [#allocation2], 401
      %v3562 = vld [vmem:[%s3561] ss:$2 sm:$0xff]
      %s3563 = scalar_lea.vmem [#allocation2], 417
      %v3564 = vld [vmem:[%s3563] ss:$2 sm:$0xff]
      %s3565 = scalar_lea.vmem [#allocation2], 433
      %v3566 = vld [vmem:[%s3565] ss:$2 sm:$0xff]
      %s3567 = scalar_lea.vmem [#allocation2], 449
      %v3568 = vld [vmem:[%s3567] ss:$2 sm:$0xff]
      %s3569 = scalar_lea.vmem [#allocation2], 465
      %v3570 = vld [vmem:[%s3569] ss:$2 sm:$0xff]
      %s3571 = scalar_lea.vmem [#allocation2], 481
      %v3572 = vld [vmem:[%s3571] ss:$2 sm:$0xff]
      %s3573 = scalar_lea.vmem [#allocation2], 497
      %v3574 = vld [vmem:[%s3573] ss:$2 sm:$0xff]
      %s3575 = scalar_lea.vmem [#allocation2], 513
      %v3576 = vld [vmem:[%s3575] ss:$2 sm:$0xff]
      %s3577 = scalar_lea.vmem [#allocation2], 529
      %v3578 = vld [vmem:[%s3577] ss:$2 sm:$0xff]
      %s3579 = scalar_lea.vmem [#allocation2], 545
      %v3580 = vld [vmem:[%s3579] ss:$2 sm:$0xff]
      %s3581 = scalar_lea.vmem [#allocation2], 561
      %v3582 = vld [vmem:[%s3581] ss:$2 sm:$0xff]
      %s3583 = scalar_lea.vmem [#allocation2], 577
      %v3584 = vld [vmem:[%s3583] ss:$2 sm:$0xff]
      %s3585 = scalar_lea.vmem [#allocation2], 593
      %v3586 = vld [vmem:[%s3585] ss:$2 sm:$0xff]
      %s3587 = scalar_lea.vmem [#allocation2], 609
      %v3588 = vld [vmem:[%s3587] ss:$2 sm:$0xff]
      %s3589 = scalar_lea.vmem [#allocation2], 625
      %v3590 = vld [vmem:[%s3589] ss:$2 sm:$0xff]
      %s3591 = scalar_lea.vmem [#allocation2], 641
      %v3592 = vld [vmem:[%s3591] ss:$2 sm:$0xff]
      %s3593 = scalar_lea.vmem [#allocation2], 657
      %v3594 = vld [vmem:[%s3593] ss:$2 sm:$0xff]
      %s3595 = scalar_lea.vmem [#allocation2], 673
      %v3596 = vld [vmem:[%s3595] ss:$2 sm:$0xff]
      %s3597 = scalar_lea.vmem [#allocation2], 689
      %v3598 = vld [vmem:[%s3597] ss:$2 sm:$0xff]
      %s3599 = scalar_lea.vmem [#allocation2], 705
      %v3600 = vld [vmem:[%s3599] ss:$2 sm:$0xff]
      %s3601 = scalar_lea.vmem [#allocation2], 721
      %v3602 = vld [vmem:[%s3601] ss:$2 sm:$0xff]
      %s3603 = scalar_lea.vmem [#allocation2], 737
      %v3604 = vld [vmem:[%s3603] ss:$2 sm:$0xff]
      %s3605 = scalar_lea.vmem [#allocation2], 753
      %v3606 = vld [vmem:[%s3605] ss:$2 sm:$0xff]
      %s3607 = scalar_lea.vmem [#allocation2], 769
      %v3608 = vld [vmem:[%s3607] ss:$2 sm:$0xff]
      %s3609 = scalar_lea.vmem [#allocation2], 785
      %v3610 = vld [vmem:[%s3609] ss:$2 sm:$0xff]
      %s3611 = scalar_lea.vmem [#allocation2], 801
      %v3612 = vld [vmem:[%s3611] ss:$2 sm:$0xff]
      %s3613 = scalar_lea.vmem [#allocation2], 817
      %v3614 = vld [vmem:[%s3613] ss:$2 sm:$0xff]
      %s3615 = scalar_lea.vmem [#allocation2], 833
      %v3616 = vld [vmem:[%s3615] ss:$2 sm:$0xff]
      %s3617 = scalar_lea.vmem [#allocation2], 849
      %v3618 = vld [vmem:[%s3617] ss:$2 sm:$0xff]
      %s3619 = scalar_lea.vmem [#allocation2], 865
      %v3620 = vld [vmem:[%s3619] ss:$2 sm:$0xff]
      %s3621 = scalar_lea.vmem [#allocation2], 881
      %v3622 = vld [vmem:[%s3621] ss:$2 sm:$0xff]
      %s3623 = scalar_lea.vmem [#allocation2], 897
      %v3624 = vld [vmem:[%s3623] ss:$2 sm:$0xff]
      %s3625 = scalar_lea.vmem [#allocation2], 913
      %v3626 = vld [vmem:[%s3625] ss:$2 sm:$0xff]
      %s3627 = scalar_lea.vmem [#allocation2], 929
      %v3628 = vld [vmem:[%s3627] ss:$2 sm:$0xff]
      %s3629 = scalar_lea.vmem [#allocation2], 945
      %v3630 = vld [vmem:[%s3629] ss:$2 sm:$0xff]
      %s3631 = scalar_lea.vmem [#allocation2], 961
      %v3632 = vld [vmem:[%s3631] ss:$2 sm:$0xff]
      %s3633 = scalar_lea.vmem [#allocation2], 977
      %v3634 = vld [vmem:[%s3633] ss:$2 sm:$0xff]
      %s3635 = scalar_lea.vmem [#allocation2], 993
      %v3636 = vld [vmem:[%s3635] ss:$2 sm:$0xff]
      %s3637 = scalar_lea.vmem [#allocation2], 1009
      %v3638 = vld [vmem:[%s3637] ss:$2 sm:$0xff]
      %v3639 = vmax.f32 %v3384, %v3512
      %v3640 = vmax.f32 %v3386, %v3514
      %v3641 = vmax.f32 %v3388, %v3516
      %v3642 = vmax.f32 %v3390, %v3518
      %v3643 = vmax.f32 %v3392, %v3520
      %v3644 = vmax.f32 %v3394, %v3522
      %v3645 = vmax.f32 %v3396, %v3524
      %v3646 = vmax.f32 %v3398, %v3526
      %v3647 = vmax.f32 %v3400, %v3528
      %v3648 = vmax.f32 %v3402, %v3530
      %v3649 = vmax.f32 %v3404, %v3532
      %v3650 = vmax.f32 %v3406, %v3534
      %v3651 = vmax.f32 %v3408, %v3536
      %v3652 = vmax.f32 %v3410, %v3538
      %v3653 = vmax.f32 %v3412, %v3540
      %v3654 = vmax.f32 %v3414, %v3542
      %v3655 = vmax.f32 %v3416, %v3544
      %v3656 = vmax.f32 %v3418, %v3546
      %v3657 = vmax.f32 %v3420, %v3548
      %v3658 = vmax.f32 %v3422, %v3550
      %v3659 = vmax.f32 %v3424, %v3552
      %v3660 = vmax.f32 %v3426, %v3554
      %v3661 = vmax.f32 %v3428, %v3556
      %v3662 = vmax.f32 %v3430, %v3558
      %v3663 = vmax.f32 %v3432, %v3560
      %v3664 = vmax.f32 %v3434, %v3562
      %v3665 = vmax.f32 %v3436, %v3564
      %v3666 = vmax.f32 %v3438, %v3566
      %v3667 = vmax.f32 %v3440, %v3568
      %v3668 = vmax.f32 %v3442, %v3570
      %v3669 = vmax.f32 %v3444, %v3572
      %v3670 = vmax.f32 %v3446, %v3574
      %v3671 = vmax.f32 %v3448, %v3576
      %v3672 = vmax.f32 %v3450, %v3578
      %v3673 = vmax.f32 %v3452, %v3580
      %v3674 = vmax.f32 %v3454, %v3582
      %v3675 = vmax.f32 %v3456, %v3584
      %v3676 = vmax.f32 %v3458, %v3586
      %v3677 = vmax.f32 %v3460, %v3588
      %v3678 = vmax.f32 %v3462, %v3590
      %v3679 = vmax.f32 %v3464, %v3592
      %v3680 = vmax.f32 %v3466, %v3594
      %v3681 = vmax.f32 %v3468, %v3596
      %v3682 = vmax.f32 %v3470, %v3598
      %v3683 = vmax.f32 %v3472, %v3600
      %v3684 = vmax.f32 %v3474, %v3602
      %v3685 = vmax.f32 %v3476, %v3604
      %v3686 = vmax.f32 %v3478, %v3606
      %v3687 = vmax.f32 %v3480, %v3608
      %v3688 = vmax.f32 %v3482, %v3610
      %v3689 = vmax.f32 %v3484, %v3612
      %v3690 = vmax.f32 %v3486, %v3614
      %v3691 = vmax.f32 %v3488, %v3616
      %v3692 = vmax.f32 %v3490, %v3618
      %v3693 = vmax.f32 %v3492, %v3620
      %v3694 = vmax.f32 %v3494, %v3622
      %v3695 = vmax.f32 %v3496, %v3624
      %v3696 = vmax.f32 %v3498, %v3626
      %v3697 = vmax.f32 %v3500, %v3628
      %v3698 = vmax.f32 %v3502, %v3630
      %v3699 = vmax.f32 %v3504, %v3632
      %v3700 = vmax.f32 %v3506, %v3634
      %v3701 = vmax.f32 %v3508, %v3636
      %v3702 = vmax.f32 %v3510, %v3638
      %s3703 = scalar_lea.vmem [#allocation3], 24
      %3704 = vst.msk [vmem:[%s3703 + $0x1] sm:$0xff] %vm337, %v3639
      %3705 = vst.msk [vmem:[%s3703 + $0x9] sm:$0xff] %vm337, %v3640
      %3706 = vst.msk [vmem:[%s3703 + $0x19] sm:$0xff] %vm337, %v3641
      %3707 = vst.msk [vmem:[%s3703 + $0x21] sm:$0xff] %vm337, %v3642
      %3708 = vst.msk [vmem:[%s3703 + $0x31] sm:$0xff] %vm337, %v3643
      %3709 = vst.msk [vmem:[%s3703 + $0x39] sm:$0xff] %vm337, %v3644
      %3710 = vst.msk [vmem:[%s3703 + $0x49] sm:$0xff] %vm337, %v3645
      %3711 = vst.msk [vmem:[%s3703 + $0x51] sm:$0xff] %vm337, %v3646
      %3712 = vst.msk [vmem:[%s3703 + $0x61] sm:$0xff] %vm337, %v3647
      %3713 = vst.msk [vmem:[%s3703 + $0x69] sm:$0xff] %vm337, %v3648
      %3714 = vst.msk [vmem:[%s3703 + $0x79] sm:$0xff] %vm337, %v3649
      %3715 = vst.msk [vmem:[%s3703 + $0x81] sm:$0xff] %vm337, %v3650
      %3716 = vst.msk [vmem:[%s3703 + $0x91] sm:$0xff] %vm337, %v3651
      %3717 = vst.msk [vmem:[%s3703 + $0x99] sm:$0xff] %vm337, %v3652
      %3718 = vst.msk [vmem:[%s3703 + $0xa9] sm:$0xff] %vm337, %v3653
      %3719 = vst.msk [vmem:[%s3703 + $0xb1] sm:$0xff] %vm337, %v3654
      %3720 = vst.msk [vmem:[%s3703 + $0xc1] sm:$0xff] %vm337, %v3655
      %3721 = vst.msk [vmem:[%s3703 + $0xc9] sm:$0xff] %vm337, %v3656
      %3722 = vst.msk [vmem:[%s3703 + $0xd9] sm:$0xff] %vm337, %v3657
      %3723 = vst.msk [vmem:[%s3703 + $0xe1] sm:$0xff] %vm337, %v3658
      %3724 = vst.msk [vmem:[%s3703 + $0xf1] sm:$0xff] %vm337, %v3659
      %3725 = vst.msk [vmem:[%s3703 + $0xf9] sm:$0xff] %vm337, %v3660
      %3726 = vst.msk [vmem:[%s3703 + $0x109] sm:$0xff] %vm337, %v3661
      %3727 = vst.msk [vmem:[%s3703 + $0x111] sm:$0xff] %vm337, %v3662
      %3728 = vst.msk [vmem:[%s3703 + $0x121] sm:$0xff] %vm337, %v3663
      %3729 = vst.msk [vmem:[%s3703 + $0x129] sm:$0xff] %vm337, %v3664
      %3730 = vst.msk [vmem:[%s3703 + $0x139] sm:$0xff] %vm337, %v3665
      %3731 = vst.msk [vmem:[%s3703 + $0x141] sm:$0xff] %vm337, %v3666
      %3732 = vst.msk [vmem:[%s3703 + $0x151] sm:$0xff] %vm337, %v3667
      %3733 = vst.msk [vmem:[%s3703 + $0x159] sm:$0xff] %vm337, %v3668
      %3734 = vst.msk [vmem:[%s3703 + $0x169] sm:$0xff] %vm337, %v3669
      %3735 = vst.msk [vmem:[%s3703 + $0x171] sm:$0xff] %vm337, %v3670
      %3736 = vst.msk [vmem:[%s3703 + $0x1b1] sm:$0xff] %vm337, %v3671
      %3737 = vst.msk [vmem:[%s3703 + $0x1b9] sm:$0xff] %vm337, %v3672
      %3738 = vst.msk [vmem:[%s3703 + $0x1c9] sm:$0xff] %vm337, %v3673
      %3739 = vst.msk [vmem:[%s3703 + $0x1d1] sm:$0xff] %vm337, %v3674
      %3740 = vst.msk [vmem:[%s3703 + $0x1e1] sm:$0xff] %vm337, %v3675
      %3741 = vst.msk [vmem:[%s3703 + $0x1e9] sm:$0xff] %vm337, %v3676
      %3742 = vst.msk [vmem:[%s3703 + $0x1f9] sm:$0xff] %vm337, %v3677
      %3743 = vst.msk [vmem:[%s3703 + $0x201] sm:$0xff] %vm337, %v3678
      %3744 = vst.msk [vmem:[%s3703 + $0x211] sm:$0xff] %vm337, %v3679
      %3745 = vst.msk [vmem:[%s3703 + $0x219] sm:$0xff] %vm337, %v3680
      %3746 = vst.msk [vmem:[%s3703 + $0x229] sm:$0xff] %vm337, %v3681
      %3747 = vst.msk [vmem:[%s3703 + $0x231] sm:$0xff] %vm337, %v3682
      %3748 = vst.msk [vmem:[%s3703 + $0x241] sm:$0xff] %vm337, %v3683
      %3749 = vst.msk [vmem:[%s3703 + $0x249] sm:$0xff] %vm337, %v3684
      %3750 = vst.msk [vmem:[%s3703 + $0x259] sm:$0xff] %vm337, %v3685
      %3751 = vst.msk [vmem:[%s3703 + $0x261] sm:$0xff] %vm337, %v3686
      %3752 = vst.msk [vmem:[%s3703 + $0x271] sm:$0xff] %vm337, %v3687
      %3753 = vst.msk [vmem:[%s3703 + $0x279] sm:$0xff] %vm337, %v3688
      %3754 = vst.msk [vmem:[%s3703 + $0x289] sm:$0xff] %vm337, %v3689
      %3755 = vst.msk [vmem:[%s3703 + $0x291] sm:$0xff] %vm337, %v3690
      %3756 = vst.msk [vmem:[%s3703 + $0x2a1] sm:$0xff] %vm337, %v3691
      %3757 = vst.msk [vmem:[%s3703 + $0x2a9] sm:$0xff] %vm337, %v3692
      %3758 = vst.msk [vmem:[%s3703 + $0x2b9] sm:$0xff] %vm337, %v3693
      %3759 = vst.msk [vmem:[%s3703 + $0x2c1] sm:$0xff] %vm337, %v3694
      %3760 = vst.msk [vmem:[%s3703 + $0x2d1] sm:$0xff] %vm337, %v3695
      %3761 = vst.msk [vmem:[%s3703 + $0x2d9] sm:$0xff] %vm337, %v3696
      %3762 = vst.msk [vmem:[%s3703 + $0x2e9] sm:$0xff] %vm337, %v3697
      %3763 = vst.msk [vmem:[%s3703 + $0x2f1] sm:$0xff] %vm337, %v3698
      %3764 = vst.msk [vmem:[%s3703 + $0x301] sm:$0xff] %vm337, %v3699
      %3765 = vst.msk [vmem:[%s3703 + $0x309] sm:$0xff] %vm337, %v3700
      %3766 = vst.msk [vmem:[%s3703 + $0x319] sm:$0xff] %vm337, %v3701
      %3767 = vst.msk [vmem:[%s3703 + $0x321] sm:$0xff] %vm337, %v3702
      %v3768 = vld [vmem:[#allocation3] sm:$0xff]
      %v3769 = vld [vmem:[#allocation3 + $0x8] sm:$0xff]
      %v3770 = vld [vmem:[#allocation3 + $0x18] sm:$0xff]
      %v3771 = vld [vmem:[#allocation3 + $0x20] sm:$0xff]
      %v3772 = vld [vmem:[#allocation3 + $0x30] sm:$0xff]
      %v3773 = vld [vmem:[#allocation3 + $0x38] sm:$0xff]
      %v3774 = vld [vmem:[#allocation3 + $0x48] sm:$0xff]
      %v3775 = vld [vmem:[#allocation3 + $0x50] sm:$0xff]
      %v3776 = vld [vmem:[#allocation3 + $0x60] sm:$0xff]
      %v3777 = vld [vmem:[#allocation3 + $0x68] sm:$0xff]
      %v3778 = vld [vmem:[#allocation3 + $0x78] sm:$0xff]
      %v3779 = vld [vmem:[#allocation3 + $0x80] sm:$0xff]
      %v3780 = vld [vmem:[#allocation3 + $0x90] sm:$0xff]
      %v3781 = vld [vmem:[#allocation3 + $0x98] sm:$0xff]
      %v3782 = vld [vmem:[#allocation3 + $0xa8] sm:$0xff]
      %v3783 = vld [vmem:[#allocation3 + $0xb0] sm:$0xff]
      %v3784 = vld [vmem:[#allocation3 + $0xc0] sm:$0xff]
      %v3785 = vld [vmem:[#allocation3 + $0xc8] sm:$0xff]
      %v3786 = vld [vmem:[#allocation3 + $0xd8] sm:$0xff]
      %v3787 = vld [vmem:[#allocation3 + $0xe0] sm:$0xff]
      %v3788 = vld [vmem:[#allocation3 + $0xf0] sm:$0xff]
      %v3789 = vld [vmem:[#allocation3 + $0xf8] sm:$0xff]
      %v3790 = vld [vmem:[#allocation3 + $0x108] sm:$0xff]
      %v3791 = vld [vmem:[#allocation3 + $0x110] sm:$0xff]
      %v3792 = vld [vmem:[#allocation3 + $0x120] sm:$0xff]
      %v3793 = vld [vmem:[#allocation3 + $0x128] sm:$0xff]
      %v3794 = vld [vmem:[#allocation3 + $0x138] sm:$0xff]
      %v3795 = vld [vmem:[#allocation3 + $0x140] sm:$0xff]
      %v3796 = vld [vmem:[#allocation3 + $0x150] sm:$0xff]
      %v3797 = vld [vmem:[#allocation3 + $0x158] sm:$0xff]
      %v3798 = vld [vmem:[#allocation3 + $0x168] sm:$0xff]
      %v3799 = vld [vmem:[#allocation3 + $0x170] sm:$0xff]
      %v3800 = vld [vmem:[#allocation3 + $0x1b0] sm:$0xff]
      %v3801 = vld [vmem:[#allocation3 + $0x1b8] sm:$0xff]
      %v3802 = vld [vmem:[#allocation3 + $0x1c8] sm:$0xff]
      %v3803 = vld [vmem:[#allocation3 + $0x1d0] sm:$0xff]
      %v3804 = vld [vmem:[#allocation3 + $0x1e0] sm:$0xff]
      %v3805 = vld [vmem:[#allocation3 + $0x1e8] sm:$0xff]
      %v3806 = vld [vmem:[#allocation3 + $0x1f8] sm:$0xff]
      %v3807 = vld [vmem:[#allocation3 + $0x200] sm:$0xff]
      %v3808 = vld [vmem:[#allocation3 + $0x210] sm:$0xff]
      %v3809 = vld [vmem:[#allocation3 + $0x218] sm:$0xff]
      %v3810 = vld [vmem:[#allocation3 + $0x228] sm:$0xff]
      %v3811 = vld [vmem:[#allocation3 + $0x230] sm:$0xff]
      %v3812 = vld [vmem:[#allocation3 + $0x240] sm:$0xff]
      %v3813 = vld [vmem:[#allocation3 + $0x248] sm:$0xff]
      %v3814 = vld [vmem:[#allocation3 + $0x258] sm:$0xff]
      %v3815 = vld [vmem:[#allocation3 + $0x260] sm:$0xff]
      %v3816 = vld [vmem:[#allocation3 + $0x270] sm:$0xff]
      %v3817 = vld [vmem:[#allocation3 + $0x278] sm:$0xff]
      %v3818 = vld [vmem:[#allocation3 + $0x288] sm:$0xff]
      %v3819 = vld [vmem:[#allocation3 + $0x290] sm:$0xff]
      %v3820 = vld [vmem:[#allocation3 + $0x2a0] sm:$0xff]
      %v3821 = vld [vmem:[#allocation3 + $0x2a8] sm:$0xff]
      %v3822 = vld [vmem:[#allocation3 + $0x2b8] sm:$0xff]
      %v3823 = vld [vmem:[#allocation3 + $0x2c0] sm:$0xff]
      %v3824 = vld [vmem:[#allocation3 + $0x2d0] sm:$0xff]
      %v3825 = vld [vmem:[#allocation3 + $0x2d8] sm:$0xff]
      %v3826 = vld [vmem:[#allocation3 + $0x2e8] sm:$0xff]
      %v3827 = vld [vmem:[#allocation3 + $0x2f0] sm:$0xff]
      %v3828 = vld [vmem:[#allocation3 + $0x300] sm:$0xff]
      %v3829 = vld [vmem:[#allocation3 + $0x308] sm:$0xff]
      %v3830 = vld [vmem:[#allocation3 + $0x318] sm:$0xff]
      %v3831 = vld [vmem:[#allocation3 + $0x320] sm:$0xff]
      %3832 = vst.msk [vmem:[#allocation4] sm:$0xff] %vm337, %v3768
      %3833 = vst.msk [vmem:[#allocation4 + $0x10] sm:$0xff] %vm337, %v3769
      %3834 = vst.msk [vmem:[#allocation4 + $0x20] sm:$0xff] %vm337, %v3770
      %3835 = vst.msk [vmem:[#allocation4 + $0x30] sm:$0xff] %vm337, %v3771
      %3836 = vst.msk [vmem:[#allocation4 + $0x40] sm:$0xff] %vm337, %v3772
      %3837 = vst.msk [vmem:[#allocation4 + $0x50] sm:$0xff] %vm337, %v3773
      %3838 = vst.msk [vmem:[#allocation4 + $0x60] sm:$0xff] %vm337, %v3774
      %3839 = vst.msk [vmem:[#allocation4 + $0x70] sm:$0xff] %vm337, %v3775
      %3840 = vst.msk [vmem:[#allocation4 + $0x80] sm:$0xff] %vm337, %v3776
      %3841 = vst.msk [vmem:[#allocation4 + $0x90] sm:$0xff] %vm337, %v3777
      %3842 = vst.msk [vmem:[#allocation4 + $0xa0] sm:$0xff] %vm337, %v3778
      %3843 = vst.msk [vmem:[#allocation4 + $0xb0] sm:$0xff] %vm337, %v3779
      %3844 = vst.msk [vmem:[#allocation4 + $0xc0] sm:$0xff] %vm337, %v3780
      %3845 = vst.msk [vmem:[#allocation4 + $0xd0] sm:$0xff] %vm337, %v3781
      %3846 = vst.msk [vmem:[#allocation4 + $0xe0] sm:$0xff] %vm337, %v3782
      %3847 = vst.msk [vmem:[#allocation4 + $0xf0] sm:$0xff] %vm337, %v3783
      %3848 = vst.msk [vmem:[#allocation4 + $0x100] sm:$0xff] %vm337, %v3784
      %3849 = vst.msk [vmem:[#allocation4 + $0x110] sm:$0xff] %vm337, %v3785
      %3850 = vst.msk [vmem:[#allocation4 + $0x120] sm:$0xff] %vm337, %v3786
      %3851 = vst.msk [vmem:[#allocation4 + $0x130] sm:$0xff] %vm337, %v3787
      %3852 = vst.msk [vmem:[#allocation4 + $0x140] sm:$0xff] %vm337, %v3788
      %3853 = vst.msk [vmem:[#allocation4 + $0x150] sm:$0xff] %vm337, %v3789
      %3854 = vst.msk [vmem:[#allocation4 + $0x160] sm:$0xff] %vm337, %v3790
      %3855 = vst.msk [vmem:[#allocation4 + $0x170] sm:$0xff] %vm337, %v3791
      %3856 = vst.msk [vmem:[#allocation4 + $0x180] sm:$0xff] %vm337, %v3792
      %3857 = vst.msk [vmem:[#allocation4 + $0x190] sm:$0xff] %vm337, %v3793
      %3858 = vst.msk [vmem:[#allocation4 + $0x1a0] sm:$0xff] %vm337, %v3794
      %3859 = vst.msk [vmem:[#allocation4 + $0x1b0] sm:$0xff] %vm337, %v3795
      %3860 = vst.msk [vmem:[#allocation4 + $0x1c0] sm:$0xff] %vm337, %v3796
      %3861 = vst.msk [vmem:[#allocation4 + $0x1d0] sm:$0xff] %vm337, %v3797
      %3862 = vst.msk [vmem:[#allocation4 + $0x1e0] sm:$0xff] %vm337, %v3798
      %3863 = vst.msk [vmem:[#allocation4 + $0x1f0] sm:$0xff] %vm337, %v3799
      %3864 = vst.msk [vmem:[#allocation4 + $0x200] sm:$0xff] %vm337, %v3800
      %3865 = vst.msk [vmem:[#allocation4 + $0x210] sm:$0xff] %vm337, %v3801
      %3866 = vst.msk [vmem:[#allocation4 + $0x220] sm:$0xff] %vm337, %v3802
      %3867 = vst.msk [vmem:[#allocation4 + $0x230] sm:$0xff] %vm337, %v3803
      %3868 = vst.msk [vmem:[#allocation4 + $0x240] sm:$0xff] %vm337, %v3804
      %3869 = vst.msk [vmem:[#allocation4 + $0x250] sm:$0xff] %vm337, %v3805
      %3870 = vst.msk [vmem:[#allocation4 + $0x260] sm:$0xff] %vm337, %v3806
      %3871 = vst.msk [vmem:[#allocation4 + $0x270] sm:$0xff] %vm337, %v3807
      %3872 = vst.msk [vmem:[#allocation4 + $0x280] sm:$0xff] %vm337, %v3808
      %3873 = vst.msk [vmem:[#allocation4 + $0x290] sm:$0xff] %vm337, %v3809
      %3874 = vst.msk [vmem:[#allocation4 + $0x2a0] sm:$0xff] %vm337, %v3810
      %3875 = vst.msk [vmem:[#allocation4 + $0x2b0] sm:$0xff] %vm337, %v3811
      %3876 = vst.msk [vmem:[#allocation4 + $0x2c0] sm:$0xff] %vm337, %v3812
      %3877 = vst.msk [vmem:[#allocation4 + $0x2d0] sm:$0xff] %vm337, %v3813
      %3878 = vst.msk [vmem:[#allocation4 + $0x2e0] sm:$0xff] %vm337, %v3814
      %3879 = vst.msk [vmem:[#allocation4 + $0x2f0] sm:$0xff] %vm337, %v3815
      %3880 = vst.msk [vmem:[#allocation4 + $0x300] sm:$0xff] %vm337, %v3816
      %3881 = vst.msk [vmem:[#allocation4 + $0x310] sm:$0xff] %vm337, %v3817
      %3882 = vst.msk [vmem:[#allocation4 + $0x320] sm:$0xff] %vm337, %v3818
      %3883 = vst.msk [vmem:[#allocation4 + $0x330] sm:$0xff] %vm337, %v3819
      %3884 = vst.msk [vmem:[#allocation4 + $0x340] sm:$0xff] %vm337, %v3820
      %3885 = vst.msk [vmem:[#allocation4 + $0x350] sm:$0xff] %vm337, %v3821
      %3886 = vst.msk [vmem:[#allocation4 + $0x360] sm:$0xff] %vm337, %v3822
      %3887 = vst.msk [vmem:[#allocation4 + $0x370] sm:$0xff] %vm337, %v3823
      %3888 = vst.msk [vmem:[#allocation4 + $0x380] sm:$0xff] %vm337, %v3824
      %3889 = vst.msk [vmem:[#allocation4 + $0x390] sm:$0xff] %vm337, %v3825
      %3890 = vst.msk [vmem:[#allocation4 + $0x3a0] sm:$0xff] %vm337, %v3826
      %3891 = vst.msk [vmem:[#allocation4 + $0x3b0] sm:$0xff] %vm337, %v3827
      %3892 = vst.msk [vmem:[#allocation4 + $0x3c0] sm:$0xff] %vm337, %v3828
      %3893 = vst.msk [vmem:[#allocation4 + $0x3d0] sm:$0xff] %vm337, %v3829
      %3894 = vst.msk [vmem:[#allocation4 + $0x3e0] sm:$0xff] %vm337, %v3830
      %3895 = vst.msk [vmem:[#allocation4 + $0x3f0] sm:$0xff] %vm337, %v3831
      %v3896 = vld [vmem:[#allocation3 + $0x1] sm:$0xff]
      %v3897 = vld [vmem:[#allocation3 + $0x9] sm:$0xff]
      %v3898 = vld [vmem:[#allocation3 + $0x19] sm:$0xff]
      %v3899 = vld [vmem:[#allocation3 + $0x21] sm:$0xff]
      %v3900 = vld [vmem:[#allocation3 + $0x31] sm:$0xff]
      %v3901 = vld [vmem:[#allocation3 + $0x39] sm:$0xff]
      %v3902 = vld [vmem:[#allocation3 + $0x49] sm:$0xff]
      %v3903 = vld [vmem:[#allocation3 + $0x51] sm:$0xff]
      %v3904 = vld [vmem:[#allocation3 + $0x61] sm:$0xff]
      %v3905 = vld [vmem:[#allocation3 + $0x69] sm:$0xff]
      %v3906 = vld [vmem:[#allocation3 + $0x79] sm:$0xff]
      %v3907 = vld [vmem:[#allocation3 + $0x81] sm:$0xff]
      %v3908 = vld [vmem:[#allocation3 + $0x91] sm:$0xff]
      %v3909 = vld [vmem:[#allocation3 + $0x99] sm:$0xff]
      %v3910 = vld [vmem:[#allocation3 + $0xa9] sm:$0xff]
      %v3911 = vld [vmem:[#allocation3 + $0xb1] sm:$0xff]
      %v3912 = vld [vmem:[#allocation3 + $0xc1] sm:$0xff]
      %v3913 = vld [vmem:[#allocation3 + $0xc9] sm:$0xff]
      %v3914 = vld [vmem:[#allocation3 + $0xd9] sm:$0xff]
      %v3915 = vld [vmem:[#allocation3 + $0xe1] sm:$0xff]
      %v3916 = vld [vmem:[#allocation3 + $0xf1] sm:$0xff]
      %v3917 = vld [vmem:[#allocation3 + $0xf9] sm:$0xff]
      %v3918 = vld [vmem:[#allocation3 + $0x109] sm:$0xff]
      %v3919 = vld [vmem:[#allocation3 + $0x111] sm:$0xff]
      %v3920 = vld [vmem:[#allocation3 + $0x121] sm:$0xff]
      %v3921 = vld [vmem:[#allocation3 + $0x129] sm:$0xff]
      %v3922 = vld [vmem:[#allocation3 + $0x139] sm:$0xff]
      %v3923 = vld [vmem:[#allocation3 + $0x141] sm:$0xff]
      %v3924 = vld [vmem:[#allocation3 + $0x151] sm:$0xff]
      %v3925 = vld [vmem:[#allocation3 + $0x159] sm:$0xff]
      %v3926 = vld [vmem:[#allocation3 + $0x169] sm:$0xff]
      %v3927 = vld [vmem:[#allocation3 + $0x171] sm:$0xff]
      %v3928 = vld [vmem:[#allocation3 + $0x1b1] sm:$0xff]
      %v3929 = vld [vmem:[#allocation3 + $0x1b9] sm:$0xff]
      %v3930 = vld [vmem:[#allocation3 + $0x1c9] sm:$0xff]
      %v3931 = vld [vmem:[#allocation3 + $0x1d1] sm:$0xff]
      %v3932 = vld [vmem:[#allocation3 + $0x1e1] sm:$0xff]
      %v3933 = vld [vmem:[#allocation3 + $0x1e9] sm:$0xff]
      %v3934 = vld [vmem:[#allocation3 + $0x1f9] sm:$0xff]
      %v3935 = vld [vmem:[#allocation3 + $0x201] sm:$0xff]
      %v3936 = vld [vmem:[#allocation3 + $0x211] sm:$0xff]
      %v3937 = vld [vmem:[#allocation3 + $0x219] sm:$0xff]
      %v3938 = vld [vmem:[#allocation3 + $0x229] sm:$0xff]
      %v3939 = vld [vmem:[#allocation3 + $0x231] sm:$0xff]
      %v3940 = vld [vmem:[#allocation3 + $0x241] sm:$0xff]
      %v3941 = vld [vmem:[#allocation3 + $0x249] sm:$0xff]
      %v3942 = vld [vmem:[#allocation3 + $0x259] sm:$0xff]
      %v3943 = vld [vmem:[#allocation3 + $0x261] sm:$0xff]
      %v3944 = vld [vmem:[#allocation3 + $0x271] sm:$0xff]
      %v3945 = vld [vmem:[#allocation3 + $0x279] sm:$0xff]
      %v3946 = vld [vmem:[#allocation3 + $0x289] sm:$0xff]
      %v3947 = vld [vmem:[#allocation3 + $0x291] sm:$0xff]
      %v3948 = vld [vmem:[#allocation3 + $0x2a1] sm:$0xff]
      %v3949 = vld [vmem:[#allocation3 + $0x2a9] sm:$0xff]
      %v3950 = vld [vmem:[#allocation3 + $0x2b9] sm:$0xff]
      %v3951 = vld [vmem:[#allocation3 + $0x2c1] sm:$0xff]
      %v3952 = vld [vmem:[#allocation3 + $0x2d1] sm:$0xff]
      %v3953 = vld [vmem:[#allocation3 + $0x2d9] sm:$0xff]
      %v3954 = vld [vmem:[#allocation3 + $0x2e9] sm:$0xff]
      %v3955 = vld [vmem:[#allocation3 + $0x2f1] sm:$0xff]
      %v3956 = vld [vmem:[#allocation3 + $0x301] sm:$0xff]
      %v3957 = vld [vmem:[#allocation3 + $0x309] sm:$0xff]
      %v3958 = vld [vmem:[#allocation3 + $0x319] sm:$0xff]
      %v3959 = vld [vmem:[#allocation3 + $0x321] sm:$0xff]
      %4024 = vrot.lane.b32.xlu0 %v3896, 16
      %v4025 = vpop.permute.xlu0 %4024
      %4026 = vrot.lane.b32.xlu0 %v3897, 16
      %v4027 = vpop.permute.xlu0 %4026
      %4028 = vrot.lane.b32.xlu0 %v3898, 16
      %v4029 = vpop.permute.xlu0 %4028
      %4030 = vrot.lane.b32.xlu0 %v3899, 16
      %v4031 = vpop.permute.xlu0 %4030
      %4032 = vrot.lane.b32.xlu0 %v3900, 16
      %v4033 = vpop.permute.xlu0 %4032
      %4034 = vrot.lane.b32.xlu0 %v3901, 16
      %v4035 = vpop.permute.xlu0 %4034
      %4036 = vrot.lane.b32.xlu0 %v3902, 16
      %v4037 = vpop.permute.xlu0 %4036
      %4038 = vrot.lane.b32.xlu0 %v3903, 16
      %v4039 = vpop.permute.xlu0 %4038
      %4040 = vrot.lane.b32.xlu0 %v3904, 16
      %v4041 = vpop.permute.xlu0 %4040
      %4042 = vrot.lane.b32.xlu0 %v3905, 16
      %v4043 = vpop.permute.xlu0 %4042
      %4044 = vrot.lane.b32.xlu0 %v3906, 16
      %v4045 = vpop.permute.xlu0 %4044
      %4046 = vrot.lane.b32.xlu0 %v3907, 16
      %v4047 = vpop.permute.xlu0 %4046
      %4048 = vrot.lane.b32.xlu0 %v3908, 16
      %v4049 = vpop.permute.xlu0 %4048
      %4050 = vrot.lane.b32.xlu0 %v3909, 16
      %v4051 = vpop.permute.xlu0 %4050
      %4052 = vrot.lane.b32.xlu0 %v3910, 16
      %v4053 = vpop.permute.xlu0 %4052
      %4054 = vrot.lane.b32.xlu0 %v3911, 16
      %v4055 = vpop.permute.xlu0 %4054
      %4056 = vrot.lane.b32.xlu0 %v3912, 16
      %v4057 = vpop.permute.xlu0 %4056
      %4058 = vrot.lane.b32.xlu0 %v3913, 16
      %v4059 = vpop.permute.xlu0 %4058
      %4060 = vrot.lane.b32.xlu0 %v3914, 16
      %v4061 = vpop.permute.xlu0 %4060
      %4062 = vrot.lane.b32.xlu0 %v3915, 16
      %v4063 = vpop.permute.xlu0 %4062
      %4064 = vrot.lane.b32.xlu0 %v3916, 16
      %v4065 = vpop.permute.xlu0 %4064
      %4066 = vrot.lane.b32.xlu0 %v3917, 16
      %v4067 = vpop.permute.xlu0 %4066
      %4068 = vrot.lane.b32.xlu0 %v3918, 16
      %v4069 = vpop.permute.xlu0 %4068
      %4070 = vrot.lane.b32.xlu0 %v3919, 16
      %v4071 = vpop.permute.xlu0 %4070
      %4072 = vrot.lane.b32.xlu0 %v3920, 16
      %v4073 = vpop.permute.xlu0 %4072
      %4074 = vrot.lane.b32.xlu0 %v3921, 16
      %v4075 = vpop.permute.xlu0 %4074
      %4076 = vrot.lane.b32.xlu0 %v3922, 16
      %v4077 = vpop.permute.xlu0 %4076
      %4078 = vrot.lane.b32.xlu0 %v3923, 16
      %v4079 = vpop.permute.xlu0 %4078
      %4080 = vrot.lane.b32.xlu0 %v3924, 16
      %v4081 = vpop.permute.xlu0 %4080
      %4082 = vrot.lane.b32.xlu0 %v3925, 16
      %v4083 = vpop.permute.xlu0 %4082
      %4084 = vrot.lane.b32.xlu0 %v3926, 16
      %v4085 = vpop.permute.xlu0 %4084
      %4086 = vrot.lane.b32.xlu0 %v3927, 16
      %v4087 = vpop.permute.xlu0 %4086
      %4088 = vrot.lane.b32.xlu0 %v3928, 16
      %v4089 = vpop.permute.xlu0 %4088
      %4090 = vrot.lane.b32.xlu0 %v3929, 16
      %v4091 = vpop.permute.xlu0 %4090
      %4092 = vrot.lane.b32.xlu0 %v3930, 16
      %v4093 = vpop.permute.xlu0 %4092
      %4094 = vrot.lane.b32.xlu0 %v3931, 16
      %v4095 = vpop.permute.xlu0 %4094
      %4096 = vrot.lane.b32.xlu0 %v3932, 16
      %v4097 = vpop.permute.xlu0 %4096
      %4098 = vrot.lane.b32.xlu0 %v3933, 16
      %v4099 = vpop.permute.xlu0 %4098
      %4100 = vrot.lane.b32.xlu0 %v3934, 16
      %v4101 = vpop.permute.xlu0 %4100
      %4102 = vrot.lane.b32.xlu0 %v3935, 16
      %v4103 = vpop.permute.xlu0 %4102
      %4104 = vrot.lane.b32.xlu0 %v3936, 16
      %v4105 = vpop.permute.xlu0 %4104
      %4106 = vrot.lane.b32.xlu0 %v3937, 16
      %v4107 = vpop.permute.xlu0 %4106
      %4108 = vrot.lane.b32.xlu0 %v3938, 16
      %v4109 = vpop.permute.xlu0 %4108
      %4110 = vrot.lane.b32.xlu0 %v3939, 16
      %v4111 = vpop.permute.xlu0 %4110
      %4112 = vrot.lane.b32.xlu0 %v3940, 16
      %v4113 = vpop.permute.xlu0 %4112
      %4114 = vrot.lane.b32.xlu0 %v3941, 16
      %v4115 = vpop.permute.xlu0 %4114
      %4116 = vrot.lane.b32.xlu0 %v3942, 16
      %v4117 = vpop.permute.xlu0 %4116
      %4118 = vrot.lane.b32.xlu0 %v3943, 16
      %v4119 = vpop.permute.xlu0 %4118
      %4120 = vrot.lane.b32.xlu0 %v3944, 16
      %v4121 = vpop.permute.xlu0 %4120
      %4122 = vrot.lane.b32.xlu0 %v3945, 16
      %v4123 = vpop.permute.xlu0 %4122
      %4124 = vrot.lane.b32.xlu0 %v3946, 16
      %v4125 = vpop.permute.xlu0 %4124
      %4126 = vrot.lane.b32.xlu0 %v3947, 16
      %v4127 = vpop.permute.xlu0 %4126
      %4128 = vrot.lane.b32.xlu0 %v3948, 16
      %v4129 = vpop.permute.xlu0 %4128
      %4130 = vrot.lane.b32.xlu0 %v3949, 16
      %v4131 = vpop.permute.xlu0 %4130
      %4132 = vrot.lane.b32.xlu0 %v3950, 16
      %v4133 = vpop.permute.xlu0 %4132
      %4134 = vrot.lane.b32.xlu0 %v3951, 16
      %v4135 = vpop.permute.xlu0 %4134
      %4136 = vrot.lane.b32.xlu0 %v3952, 16
      %v4137 = vpop.permute.xlu0 %4136
      %4138 = vrot.lane.b32.xlu0 %v3953, 16
      %v4139 = vpop.permute.xlu0 %4138
      %4140 = vrot.lane.b32.xlu0 %v3954, 16
      %v4141 = vpop.permute.xlu0 %4140
      %4142 = vrot.lane.b32.xlu0 %v3955, 16
      %v4143 = vpop.permute.xlu0 %4142
      %4144 = vrot.lane.b32.xlu0 %v3956, 16
      %v4145 = vpop.permute.xlu0 %4144
      %4146 = vrot.lane.b32.xlu0 %v3957, 16
      %v4147 = vpop.permute.xlu0 %4146
      %4148 = vrot.lane.b32.xlu0 %v3958, 16
      %v4149 = vpop.permute.xlu0 %4148
      %4150 = vrot.lane.b32.xlu0 %v3959, 16
      %v4151 = vpop.permute.xlu0 %4150
      %vm4216 = vcmask 261248
      %4217 = vst.msk [vmem:[#allocation4] sm:$0xff] %vm4216, %v4025
      %4218 = vst.msk [vmem:[#allocation4 + $0x10] sm:$0xff] %vm4216, %v4027
      %4219 = vst.msk [vmem:[#allocation4 + $0x20] sm:$0xff] %vm4216, %v4029
      %4220 = vst.msk [vmem:[#allocation4 + $0x30] sm:$0xff] %vm4216, %v4031
      %4221 = vst.msk [vmem:[#allocation4 + $0x40] sm:$0xff] %vm4216, %v4033
      %4222 = vst.msk [vmem:[#allocation4 + $0x50] sm:$0xff] %vm4216, %v4035
      %4223 = vst.msk [vmem:[#allocation4 + $0x60] sm:$0xff] %vm4216, %v4037
      %4224 = vst.msk [vmem:[#allocation4 + $0x70] sm:$0xff] %vm4216, %v4039
      %4225 = vst.msk [vmem:[#allocation4 + $0x80] sm:$0xff] %vm4216, %v4041
      %4226 = vst.msk [vmem:[#allocation4 + $0x90] sm:$0xff] %vm4216, %v4043
      %4227 = vst.msk [vmem:[#allocation4 + $0xa0] sm:$0xff] %vm4216, %v4045
      %4228 = vst.msk [vmem:[#allocation4 + $0xb0] sm:$0xff] %vm4216, %v4047
      %4229 = vst.msk [vmem:[#allocation4 + $0xc0] sm:$0xff] %vm4216, %v4049
      %4230 = vst.msk [vmem:[#allocation4 + $0xd0] sm:$0xff] %vm4216, %v4051
      %4231 = vst.msk [vmem:[#allocation4 + $0xe0] sm:$0xff] %vm4216, %v4053
      %4232 = vst.msk [vmem:[#allocation4 + $0xf0] sm:$0xff] %vm4216, %v4055
      %4233 = vst.msk [vmem:[#allocation4 + $0x100] sm:$0xff] %vm4216, %v4057
      %4234 = vst.msk [vmem:[#allocation4 + $0x110] sm:$0xff] %vm4216, %v4059
      %4235 = vst.msk [vmem:[#allocation4 + $0x120] sm:$0xff] %vm4216, %v4061
      %4236 = vst.msk [vmem:[#allocation4 + $0x130] sm:$0xff] %vm4216, %v4063
      %4237 = vst.msk [vmem:[#allocation4 + $0x140] sm:$0xff] %vm4216, %v4065
      %4238 = vst.msk [vmem:[#allocation4 + $0x150] sm:$0xff] %vm4216, %v4067
      %4239 = vst.msk [vmem:[#allocation4 + $0x160] sm:$0xff] %vm4216, %v4069
      %4240 = vst.msk [vmem:[#allocation4 + $0x170] sm:$0xff] %vm4216, %v4071
      %4241 = vst.msk [vmem:[#allocation4 + $0x180] sm:$0xff] %vm4216, %v4073
      %4242 = vst.msk [vmem:[#allocation4 + $0x190] sm:$0xff] %vm4216, %v4075
      %4243 = vst.msk [vmem:[#allocation4 + $0x1a0] sm:$0xff] %vm4216, %v4077
      %4244 = vst.msk [vmem:[#allocation4 + $0x1b0] sm:$0xff] %vm4216, %v4079
      %4245 = vst.msk [vmem:[#allocation4 + $0x1c0] sm:$0xff] %vm4216, %v4081
      %4246 = vst.msk [vmem:[#allocation4 + $0x1d0] sm:$0xff] %vm4216, %v4083
      %4247 = vst.msk [vmem:[#allocation4 + $0x1e0] sm:$0xff] %vm4216, %v4085
      %4248 = vst.msk [vmem:[#allocation4 + $0x1f0] sm:$0xff] %vm4216, %v4087
      %4249 = vst.msk [vmem:[#allocation4 + $0x200] sm:$0xff] %vm4216, %v4089
      %4250 = vst.msk [vmem:[#allocation4 + $0x210] sm:$0xff] %vm4216, %v4091
      %4251 = vst.msk [vmem:[#allocation4 + $0x220] sm:$0xff] %vm4216, %v4093
      %4252 = vst.msk [vmem:[#allocation4 + $0x230] sm:$0xff] %vm4216, %v4095
      %4253 = vst.msk [vmem:[#allocation4 + $0x240] sm:$0xff] %vm4216, %v4097
      %4254 = vst.msk [vmem:[#allocation4 + $0x250] sm:$0xff] %vm4216, %v4099
      %4255 = vst.msk [vmem:[#allocation4 + $0x260] sm:$0xff] %vm4216, %v4101
      %4256 = vst.msk [vmem:[#allocation4 + $0x270] sm:$0xff] %vm4216, %v4103
      %4257 = vst.msk [vmem:[#allocation4 + $0x280] sm:$0xff] %vm4216, %v4105
      %4258 = vst.msk [vmem:[#allocation4 + $0x290] sm:$0xff] %vm4216, %v4107
      %4259 = vst.msk [vmem:[#allocation4 + $0x2a0] sm:$0xff] %vm4216, %v4109
      %4260 = vst.msk [vmem:[#allocation4 + $0x2b0] sm:$0xff] %vm4216, %v4111
      %4261 = vst.msk [vmem:[#allocation4 + $0x2c0] sm:$0xff] %vm4216, %v4113
      %4262 = vst.msk [vmem:[#allocation4 + $0x2d0] sm:$0xff] %vm4216, %v4115
      %4263 = vst.msk [vmem:[#allocation4 + $0x2e0] sm:$0xff] %vm4216, %v4117
      %4264 = vst.msk [vmem:[#allocation4 + $0x2f0] sm:$0xff] %vm4216, %v4119
      %4265 = vst.msk [vmem:[#allocation4 + $0x300] sm:$0xff] %vm4216, %v4121
      %4266 = vst.msk [vmem:[#allocation4 + $0x310] sm:$0xff] %vm4216, %v4123
      %4267 = vst.msk [vmem:[#allocation4 + $0x320] sm:$0xff] %vm4216, %v4125
      %4268 = vst.msk [vmem:[#allocation4 + $0x330] sm:$0xff] %vm4216, %v4127
      %4269 = vst.msk [vmem:[#allocation4 + $0x340] sm:$0xff] %vm4216, %v4129
      %4270 = vst.msk [vmem:[#allocation4 + $0x350] sm:$0xff] %vm4216, %v4131
      %4271 = vst.msk [vmem:[#allocation4 + $0x360] sm:$0xff] %vm4216, %v4133
      %4272 = vst.msk [vmem:[#allocation4 + $0x370] sm:$0xff] %vm4216, %v4135
      %4273 = vst.msk [vmem:[#allocation4 + $0x380] sm:$0xff] %vm4216, %v4137
      %4274 = vst.msk [vmem:[#allocation4 + $0x390] sm:$0xff] %vm4216, %v4139
      %4275 = vst.msk [vmem:[#allocation4 + $0x3a0] sm:$0xff] %vm4216, %v4141
      %4276 = vst.msk [vmem:[#allocation4 + $0x3b0] sm:$0xff] %vm4216, %v4143
      %4277 = vst.msk [vmem:[#allocation4 + $0x3c0] sm:$0xff] %vm4216, %v4145
      %4278 = vst.msk [vmem:[#allocation4 + $0x3d0] sm:$0xff] %vm4216, %v4147
      %4279 = vst.msk [vmem:[#allocation4 + $0x3e0] sm:$0xff] %vm4216, %v4149
      %4280 = vst.msk [vmem:[#allocation4 + $0x3f0] sm:$0xff] %vm4216, %v4151
      %v4281 = vld [vmem:[#allocation3 + $0x2] sm:$0xff]
      %v4282 = vld [vmem:[#allocation3 + $0xa] sm:$0xff]
      %v4283 = vld [vmem:[#allocation3 + $0x1a] sm:$0xff]
      %v4284 = vld [vmem:[#allocation3 + $0x22] sm:$0xff]
      %v4285 = vld [vmem:[#allocation3 + $0x32] sm:$0xff]
      %v4286 = vld [vmem:[#allocation3 + $0x3a] sm:$0xff]
      %v4287 = vld [vmem:[#allocation3 + $0x4a] sm:$0xff]
      %v4288 = vld [vmem:[#allocation3 + $0x52] sm:$0xff]
      %v4289 = vld [vmem:[#allocation3 + $0x62] sm:$0xff]
      %v4290 = vld [vmem:[#allocation3 + $0x6a] sm:$0xff]
      %v4291 = vld [vmem:[#allocation3 + $0x7a] sm:$0xff]
      %v4292 = vld [vmem:[#allocation3 + $0x82] sm:$0xff]
      %v4293 = vld [vmem:[#allocation3 + $0x92] sm:$0xff]
      %v4294 = vld [vmem:[#allocation3 + $0x9a] sm:$0xff]
      %v4295 = vld [vmem:[#allocation3 + $0xaa] sm:$0xff]
      %v4296 = vld [vmem:[#allocation3 + $0xb2] sm:$0xff]
      %v4297 = vld [vmem:[#allocation3 + $0xc2] sm:$0xff]
      %v4298 = vld [vmem:[#allocation3 + $0xca] sm:$0xff]
      %v4299 = vld [vmem:[#allocation3 + $0xda] sm:$0xff]
      %v4300 = vld [vmem:[#allocation3 + $0xe2] sm:$0xff]
      %v4301 = vld [vmem:[#allocation3 + $0xf2] sm:$0xff]
      %v4302 = vld [vmem:[#allocation3 + $0xfa] sm:$0xff]
      %v4303 = vld [vmem:[#allocation3 + $0x10a] sm:$0xff]
      %v4304 = vld [vmem:[#allocation3 + $0x112] sm:$0xff]
      %v4305 = vld [vmem:[#allocation3 + $0x122] sm:$0xff]
      %v4306 = vld [vmem:[#allocation3 + $0x12a] sm:$0xff]
      %v4307 = vld [vmem:[#allocation3 + $0x13a] sm:$0xff]
      %v4308 = vld [vmem:[#allocation3 + $0x142] sm:$0xff]
      %v4309 = vld [vmem:[#allocation3 + $0x152] sm:$0xff]
      %v4310 = vld [vmem:[#allocation3 + $0x15a] sm:$0xff]
      %v4311 = vld [vmem:[#allocation3 + $0x16a] sm:$0xff]
      %v4312 = vld [vmem:[#allocation3 + $0x172] sm:$0xff]
      %v4313 = vld [vmem:[#allocation3 + $0x1b2] sm:$0xff]
      %v4314 = vld [vmem:[#allocation3 + $0x1ba] sm:$0xff]
      %v4315 = vld [vmem:[#allocation3 + $0x1ca] sm:$0xff]
      %v4316 = vld [vmem:[#allocation3 + $0x1d2] sm:$0xff]
      %v4317 = vld [vmem:[#allocation3 + $0x1e2] sm:$0xff]
      %v4318 = vld [vmem:[#allocation3 + $0x1ea] sm:$0xff]
      %v4319 = vld [vmem:[#allocation3 + $0x1fa] sm:$0xff]
      %v4320 = vld [vmem:[#allocation3 + $0x202] sm:$0xff]
      %v4321 = vld [vmem:[#allocation3 + $0x212] sm:$0xff]
      %v4322 = vld [vmem:[#allocation3 + $0x21a] sm:$0xff]
      %v4323 = vld [vmem:[#allocation3 + $0x22a] sm:$0xff]
      %v4324 = vld [vmem:[#allocation3 + $0x232] sm:$0xff]
      %v4325 = vld [vmem:[#allocation3 + $0x242] sm:$0xff]
      %v4326 = vld [vmem:[#allocation3 + $0x24a] sm:$0xff]
      %v4327 = vld [vmem:[#allocation3 + $0x25a] sm:$0xff]
      %v4328 = vld [vmem:[#allocation3 + $0x262] sm:$0xff]
      %v4329 = vld [vmem:[#allocation3 + $0x272] sm:$0xff]
      %v4330 = vld [vmem:[#allocation3 + $0x27a] sm:$0xff]
      %v4331 = vld [vmem:[#allocation3 + $0x28a] sm:$0xff]
      %v4332 = vld [vmem:[#allocation3 + $0x292] sm:$0xff]
      %v4333 = vld [vmem:[#allocation3 + $0x2a2] sm:$0xff]
      %v4334 = vld [vmem:[#allocation3 + $0x2aa] sm:$0xff]
      %v4335 = vld [vmem:[#allocation3 + $0x2ba] sm:$0xff]
      %v4336 = vld [vmem:[#allocation3 + $0x2c2] sm:$0xff]
      %v4337 = vld [vmem:[#allocation3 + $0x2d2] sm:$0xff]
      %v4338 = vld [vmem:[#allocation3 + $0x2da] sm:$0xff]
      %v4339 = vld [vmem:[#allocation3 + $0x2ea] sm:$0xff]
      %v4340 = vld [vmem:[#allocation3 + $0x2f2] sm:$0xff]
      %v4341 = vld [vmem:[#allocation3 + $0x302] sm:$0xff]
      %v4342 = vld [vmem:[#allocation3 + $0x30a] sm:$0xff]
      %v4343 = vld [vmem:[#allocation3 + $0x31a] sm:$0xff]
      %v4344 = vld [vmem:[#allocation3 + $0x322] sm:$0xff]
      %4409 = vrot.lane.b32.xlu0 %v4281, 32
      %v4410 = vpop.permute.xlu0 %4409
      %4411 = vrot.lane.b32.xlu0 %v4282, 32
      %v4412 = vpop.permute.xlu0 %4411
      %4413 = vrot.lane.b32.xlu0 %v4283, 32
      %v4414 = vpop.permute.xlu0 %4413
      %4415 = vrot.lane.b32.xlu0 %v4284, 32
      %v4416 = vpop.permute.xlu0 %4415
      %4417 = vrot.lane.b32.xlu0 %v4285, 32
      %v4418 = vpop.permute.xlu0 %4417
      %4419 = vrot.lane.b32.xlu0 %v4286, 32
      %v4420 = vpop.permute.xlu0 %4419
      %4421 = vrot.lane.b32.xlu0 %v4287, 32
      %v4422 = vpop.permute.xlu0 %4421
      %4423 = vrot.lane.b32.xlu0 %v4288, 32
      %v4424 = vpop.permute.xlu0 %4423
      %4425 = vrot.lane.b32.xlu0 %v4289, 32
      %v4426 = vpop.permute.xlu0 %4425
      %4427 = vrot.lane.b32.xlu0 %v4290, 32
      %v4428 = vpop.permute.xlu0 %4427
      %4429 = vrot.lane.b32.xlu0 %v4291, 32
      %v4430 = vpop.permute.xlu0 %4429
      %4431 = vrot.lane.b32.xlu0 %v4292, 32
      %v4432 = vpop.permute.xlu0 %4431
      %4433 = vrot.lane.b32.xlu0 %v4293, 32
      %v4434 = vpop.permute.xlu0 %4433
      %4435 = vrot.lane.b32.xlu0 %v4294, 32
      %v4436 = vpop.permute.xlu0 %4435
      %4437 = vrot.lane.b32.xlu0 %v4295, 32
      %v4438 = vpop.permute.xlu0 %4437
      %4439 = vrot.lane.b32.xlu0 %v4296, 32
      %v4440 = vpop.permute.xlu0 %4439
      %4441 = vrot.lane.b32.xlu0 %v4297, 32
      %v4442 = vpop.permute.xlu0 %4441
      %4443 = vrot.lane.b32.xlu0 %v4298, 32
      %v4444 = vpop.permute.xlu0 %4443
      %4445 = vrot.lane.b32.xlu0 %v4299, 32
      %v4446 = vpop.permute.xlu0 %4445
      %4447 = vrot.lane.b32.xlu0 %v4300, 32
      %v4448 = vpop.permute.xlu0 %4447
      %4449 = vrot.lane.b32.xlu0 %v4301, 32
      %v4450 = vpop.permute.xlu0 %4449
      %4451 = vrot.lane.b32.xlu0 %v4302, 32
      %v4452 = vpop.permute.xlu0 %4451
      %4453 = vrot.lane.b32.xlu0 %v4303, 32
      %v4454 = vpop.permute.xlu0 %4453
      %4455 = vrot.lane.b32.xlu0 %v4304, 32
      %v4456 = vpop.permute.xlu0 %4455
      %4457 = vrot.lane.b32.xlu0 %v4305, 32
      %v4458 = vpop.permute.xlu0 %4457
      %4459 = vrot.lane.b32.xlu0 %v4306, 32
      %v4460 = vpop.permute.xlu0 %4459
      %4461 = vrot.lane.b32.xlu0 %v4307, 32
      %v4462 = vpop.permute.xlu0 %4461
      %4463 = vrot.lane.b32.xlu0 %v4308, 32
      %v4464 = vpop.permute.xlu0 %4463
      %4465 = vrot.lane.b32.xlu0 %v4309, 32
      %v4466 = vpop.permute.xlu0 %4465
      %4467 = vrot.lane.b32.xlu0 %v4310, 32
      %v4468 = vpop.permute.xlu0 %4467
      %4469 = vrot.lane.b32.xlu0 %v4311, 32
      %v4470 = vpop.permute.xlu0 %4469
      %4471 = vrot.lane.b32.xlu0 %v4312, 32
      %v4472 = vpop.permute.xlu0 %4471
      %4473 = vrot.lane.b32.xlu0 %v4313, 32
      %v4474 = vpop.permute.xlu0 %4473
      %4475 = vrot.lane.b32.xlu0 %v4314, 32
      %v4476 = vpop.permute.xlu0 %4475
      %4477 = vrot.lane.b32.xlu0 %v4315, 32
      %v4478 = vpop.permute.xlu0 %4477
      %4479 = vrot.lane.b32.xlu0 %v4316, 32
      %v4480 = vpop.permute.xlu0 %4479
      %4481 = vrot.lane.b32.xlu0 %v4317, 32
      %v4482 = vpop.permute.xlu0 %4481
      %4483 = vrot.lane.b32.xlu0 %v4318, 32
      %v4484 = vpop.permute.xlu0 %4483
      %4485 = vrot.lane.b32.xlu0 %v4319, 32
      %v4486 = vpop.permute.xlu0 %4485
      %4487 = vrot.lane.b32.xlu0 %v4320, 32
      %v4488 = vpop.permute.xlu0 %4487
      %4489 = vrot.lane.b32.xlu0 %v4321, 32
      %v4490 = vpop.permute.xlu0 %4489
      %4491 = vrot.lane.b32.xlu0 %v4322, 32
      %v4492 = vpop.permute.xlu0 %4491
      %4493 = vrot.lane.b32.xlu0 %v4323, 32
      %v4494 = vpop.permute.xlu0 %4493
      %4495 = vrot.lane.b32.xlu0 %v4324, 32
      %v4496 = vpop.permute.xlu0 %4495
      %4497 = vrot.lane.b32.xlu0 %v4325, 32
      %v4498 = vpop.permute.xlu0 %4497
      %4499 = vrot.lane.b32.xlu0 %v4326, 32
      %v4500 = vpop.permute.xlu0 %4499
      %4501 = vrot.lane.b32.xlu0 %v4327, 32
      %v4502 = vpop.permute.xlu0 %4501
      %4503 = vrot.lane.b32.xlu0 %v4328, 32
      %v4504 = vpop.permute.xlu0 %4503
      %4505 = vrot.lane.b32.xlu0 %v4329, 32
      %v4506 = vpop.permute.xlu0 %4505
      %4507 = vrot.lane.b32.xlu0 %v4330, 32
      %v4508 = vpop.permute.xlu0 %4507
      %4509 = vrot.lane.b32.xlu0 %v4331, 32
      %v4510 = vpop.permute.xlu0 %4509
      %4511 = vrot.lane.b32.xlu0 %v4332, 32
      %v4512 = vpop.permute.xlu0 %4511
      %4513 = vrot.lane.b32.xlu0 %v4333, 32
      %v4514 = vpop.permute.xlu0 %4513
      %4515 = vrot.lane.b32.xlu0 %v4334, 32
      %v4516 = vpop.permute.xlu0 %4515
      %4517 = vrot.lane.b32.xlu0 %v4335, 32
      %v4518 = vpop.permute.xlu0 %4517
      %4519 = vrot.lane.b32.xlu0 %v4336, 32
      %v4520 = vpop.permute.xlu0 %4519
      %4521 = vrot.lane.b32.xlu0 %v4337, 32
      %v4522 = vpop.permute.xlu0 %4521
      %4523 = vrot.lane.b32.xlu0 %v4338, 32
      %v4524 = vpop.permute.xlu0 %4523
      %4525 = vrot.lane.b32.xlu0 %v4339, 32
      %v4526 = vpop.permute.xlu0 %4525
      %4527 = vrot.lane.b32.xlu0 %v4340, 32
      %v4528 = vpop.permute.xlu0 %4527
      %4529 = vrot.lane.b32.xlu0 %v4341, 32
      %v4530 = vpop.permute.xlu0 %4529
      %4531 = vrot.lane.b32.xlu0 %v4342, 32
      %v4532 = vpop.permute.xlu0 %4531
      %4533 = vrot.lane.b32.xlu0 %v4343, 32
      %v4534 = vpop.permute.xlu0 %4533
      %4535 = vrot.lane.b32.xlu0 %v4344, 32
      %v4536 = vpop.permute.xlu0 %4535
      %vm4601 = vcmask 392448
      %4602 = vst.msk [vmem:[#allocation4] sm:$0xff] %vm4601, %v4410
      %4603 = vst.msk [vmem:[#allocation4 + $0x10] sm:$0xff] %vm4601, %v4412
      %4604 = vst.msk [vmem:[#allocation4 + $0x20] sm:$0xff] %vm4601, %v4414
      %4605 = vst.msk [vmem:[#allocation4 + $0x30] sm:$0xff] %vm4601, %v4416
      %4606 = vst.msk [vmem:[#allocation4 + $0x40] sm:$0xff] %vm4601, %v4418
      %4607 = vst.msk [vmem:[#allocation4 + $0x50] sm:$0xff] %vm4601, %v4420
      %4608 = vst.msk [vmem:[#allocation4 + $0x60] sm:$0xff] %vm4601, %v4422
      %4609 = vst.msk [vmem:[#allocation4 + $0x70] sm:$0xff] %vm4601, %v4424
      %4610 = vst.msk [vmem:[#allocation4 + $0x80] sm:$0xff] %vm4601, %v4426
      %4611 = vst.msk [vmem:[#allocation4 + $0x90] sm:$0xff] %vm4601, %v4428
      %4612 = vst.msk [vmem:[#allocation4 + $0xa0] sm:$0xff] %vm4601, %v4430
      %4613 = vst.msk [vmem:[#allocation4 + $0xb0] sm:$0xff] %vm4601, %v4432
      %4614 = vst.msk [vmem:[#allocation4 + $0xc0] sm:$0xff] %vm4601, %v4434
      %4615 = vst.msk [vmem:[#allocation4 + $0xd0] sm:$0xff] %vm4601, %v4436
      %4616 = vst.msk [vmem:[#allocation4 + $0xe0] sm:$0xff] %vm4601, %v4438
      %4617 = vst.msk [vmem:[#allocation4 + $0xf0] sm:$0xff] %vm4601, %v4440
      %4618 = vst.msk [vmem:[#allocation4 + $0x100] sm:$0xff] %vm4601, %v4442
      %4619 = vst.msk [vmem:[#allocation4 + $0x110] sm:$0xff] %vm4601, %v4444
      %4620 = vst.msk [vmem:[#allocation4 + $0x120] sm:$0xff] %vm4601, %v4446
      %4621 = vst.msk [vmem:[#allocation4 + $0x130] sm:$0xff] %vm4601, %v4448
      %4622 = vst.msk [vmem:[#allocation4 + $0x140] sm:$0xff] %vm4601, %v4450
      %4623 = vst.msk [vmem:[#allocation4 + $0x150] sm:$0xff] %vm4601, %v4452
      %4624 = vst.msk [vmem:[#allocation4 + $0x160] sm:$0xff] %vm4601, %v4454
      %4625 = vst.msk [vmem:[#allocation4 + $0x170] sm:$0xff] %vm4601, %v4456
      %4626 = vst.msk [vmem:[#allocation4 + $0x180] sm:$0xff] %vm4601, %v4458
      %4627 = vst.msk [vmem:[#allocation4 + $0x190] sm:$0xff] %vm4601, %v4460
      %4628 = vst.msk [vmem:[#allocation4 + $0x1a0] sm:$0xff] %vm4601, %v4462
      %4629 = vst.msk [vmem:[#allocation4 + $0x1b0] sm:$0xff] %vm4601, %v4464
      %4630 = vst.msk [vmem:[#allocation4 + $0x1c0] sm:$0xff] %vm4601, %v4466
      %4631 = vst.msk [vmem:[#allocation4 + $0x1d0] sm:$0xff] %vm4601, %v4468
      %4632 = vst.msk [vmem:[#allocation4 + $0x1e0] sm:$0xff] %vm4601, %v4470
      %4633 = vst.msk [vmem:[#allocation4 + $0x1f0] sm:$0xff] %vm4601, %v4472
      %4634 = vst.msk [vmem:[#allocation4 + $0x200] sm:$0xff] %vm4601, %v4474
      %4635 = vst.msk [vmem:[#allocation4 + $0x210] sm:$0xff] %vm4601, %v4476
      %4636 = vst.msk [vmem:[#allocation4 + $0x220] sm:$0xff] %vm4601, %v4478
      %4637 = vst.msk [vmem:[#allocation4 + $0x230] sm:$0xff] %vm4601, %v4480
      %4638 = vst.msk [vmem:[#allocation4 + $0x240] sm:$0xff] %vm4601, %v4482
      %4639 = vst.msk [vmem:[#allocation4 + $0x250] sm:$0xff] %vm4601, %v4484
      %4640 = vst.msk [vmem:[#allocation4 + $0x260] sm:$0xff] %vm4601, %v4486
      %4641 = vst.msk [vmem:[#allocation4 + $0x270] sm:$0xff] %vm4601, %v4488
      %4642 = vst.msk [vmem:[#allocation4 + $0x280] sm:$0xff] %vm4601, %v4490
      %4643 = vst.msk [vmem:[#allocation4 + $0x290] sm:$0xff] %vm4601, %v4492
      %4644 = vst.msk [vmem:[#allocation4 + $0x2a0] sm:$0xff] %vm4601, %v4494
      %4645 = vst.msk [vmem:[#allocation4 + $0x2b0] sm:$0xff] %vm4601, %v4496
      %4646 = vst.msk [vmem:[#allocation4 + $0x2c0] sm:$0xff] %vm4601, %v4498
      %4647 = vst.msk [vmem:[#allocation4 + $0x2d0] sm:$0xff] %vm4601, %v4500
      %4648 = vst.msk [vmem:[#allocation4 + $0x2e0] sm:$0xff] %vm4601, %v4502
      %4649 = vst.msk [vmem:[#allocation4 + $0x2f0] sm:$0xff] %vm4601, %v4504
      %4650 = vst.msk [vmem:[#allocation4 + $0x300] sm:$0xff] %vm4601, %v4506
      %4651 = vst.msk [vmem:[#allocation4 + $0x310] sm:$0xff] %vm4601, %v4508
      %4652 = vst.msk [vmem:[#allocation4 + $0x320] sm:$0xff] %vm4601, %v4510
      %4653 = vst.msk [vmem:[#allocation4 + $0x330] sm:$0xff] %vm4601, %v4512
      %4654 = vst.msk [vmem:[#allocation4 + $0x340] sm:$0xff] %vm4601, %v4514
      %4655 = vst.msk [vmem:[#allocation4 + $0x350] sm:$0xff] %vm4601, %v4516
      %4656 = vst.msk [vmem:[#allocation4 + $0x360] sm:$0xff] %vm4601, %v4518
      %4657 = vst.msk [vmem:[#allocation4 + $0x370] sm:$0xff] %vm4601, %v4520
      %4658 = vst.msk [vmem:[#allocation4 + $0x380] sm:$0xff] %vm4601, %v4522
      %4659 = vst.msk [vmem:[#allocation4 + $0x390] sm:$0xff] %vm4601, %v4524
      %4660 = vst.msk [vmem:[#allocation4 + $0x3a0] sm:$0xff] %vm4601, %v4526
      %4661 = vst.msk [vmem:[#allocation4 + $0x3b0] sm:$0xff] %vm4601, %v4528
      %4662 = vst.msk [vmem:[#allocation4 + $0x3c0] sm:$0xff] %vm4601, %v4530
      %4663 = vst.msk [vmem:[#allocation4 + $0x3d0] sm:$0xff] %vm4601, %v4532
      %4664 = vst.msk [vmem:[#allocation4 + $0x3e0] sm:$0xff] %vm4601, %v4534
      %4665 = vst.msk [vmem:[#allocation4 + $0x3f0] sm:$0xff] %vm4601, %v4536
      %v4666 = vld [vmem:[%s3703] sm:$0xff]
      %v4667 = vld [vmem:[%s3703 + $0x8] sm:$0xff]
      %v4668 = vld [vmem:[%s3703 + $0x18] sm:$0xff]
      %v4669 = vld [vmem:[%s3703 + $0x20] sm:$0xff]
      %v4670 = vld [vmem:[%s3703 + $0x30] sm:$0xff]
      %v4671 = vld [vmem:[%s3703 + $0x38] sm:$0xff]
      %v4672 = vld [vmem:[%s3703 + $0x48] sm:$0xff]
      %v4673 = vld [vmem:[%s3703 + $0x50] sm:$0xff]
      %v4674 = vld [vmem:[%s3703 + $0x60] sm:$0xff]
      %v4675 = vld [vmem:[%s3703 + $0x68] sm:$0xff]
      %v4676 = vld [vmem:[%s3703 + $0x78] sm:$0xff]
      %v4677 = vld [vmem:[%s3703 + $0x80] sm:$0xff]
      %v4678 = vld [vmem:[%s3703 + $0x90] sm:$0xff]
      %v4679 = vld [vmem:[%s3703 + $0x98] sm:$0xff]
      %v4680 = vld [vmem:[%s3703 + $0xa8] sm:$0xff]
      %v4681 = vld [vmem:[%s3703 + $0xb0] sm:$0xff]
      %v4682 = vld [vmem:[%s3703 + $0xc0] sm:$0xff]
      %v4683 = vld [vmem:[%s3703 + $0xc8] sm:$0xff]
      %v4684 = vld [vmem:[%s3703 + $0xd8] sm:$0xff]
      %v4685 = vld [vmem:[%s3703 + $0xe0] sm:$0xff]
      %v4686 = vld [vmem:[%s3703 + $0xf0] sm:$0xff]
      %v4687 = vld [vmem:[%s3703 + $0xf8] sm:$0xff]
      %v4688 = vld [vmem:[%s3703 + $0x108] sm:$0xff]
      %v4689 = vld [vmem:[%s3703 + $0x110] sm:$0xff]
      %v4690 = vld [vmem:[%s3703 + $0x120] sm:$0xff]
      %v4691 = vld [vmem:[%s3703 + $0x128] sm:$0xff]
      %v4692 = vld [vmem:[%s3703 + $0x138] sm:$0xff]
      %v4693 = vld [vmem:[%s3703 + $0x140] sm:$0xff]
      %v4694 = vld [vmem:[%s3703 + $0x150] sm:$0xff]
      %v4695 = vld [vmem:[%s3703 + $0x158] sm:$0xff]
      %v4696 = vld [vmem:[%s3703 + $0x168] sm:$0xff]
      %v4697 = vld [vmem:[%s3703 + $0x170] sm:$0xff]
      %v4698 = vld [vmem:[%s3703 + $0x1b0] sm:$0xff]
      %v4699 = vld [vmem:[%s3703 + $0x1b8] sm:$0xff]
      %v4700 = vld [vmem:[%s3703 + $0x1c8] sm:$0xff]
      %v4701 = vld [vmem:[%s3703 + $0x1d0] sm:$0xff]
      %v4702 = vld [vmem:[%s3703 + $0x1e0] sm:$0xff]
      %v4703 = vld [vmem:[%s3703 + $0x1e8] sm:$0xff]
      %v4704 = vld [vmem:[%s3703 + $0x1f8] sm:$0xff]
      %v4705 = vld [vmem:[%s3703 + $0x200] sm:$0xff]
      %v4706 = vld [vmem:[%s3703 + $0x210] sm:$0xff]
      %v4707 = vld [vmem:[%s3703 + $0x218] sm:$0xff]
      %v4708 = vld [vmem:[%s3703 + $0x228] sm:$0xff]
      %v4709 = vld [vmem:[%s3703 + $0x230] sm:$0xff]
      %v4710 = vld [vmem:[%s3703 + $0x240] sm:$0xff]
      %v4711 = vld [vmem:[%s3703 + $0x248] sm:$0xff]
      %v4712 = vld [vmem:[%s3703 + $0x258] sm:$0xff]
      %v4713 = vld [vmem:[%s3703 + $0x260] sm:$0xff]
      %v4714 = vld [vmem:[%s3703 + $0x270] sm:$0xff]
      %v4715 = vld [vmem:[%s3703 + $0x278] sm:$0xff]
      %v4716 = vld [vmem:[%s3703 + $0x288] sm:$0xff]
      %v4717 = vld [vmem:[%s3703 + $0x290] sm:$0xff]
      %v4718 = vld [vmem:[%s3703 + $0x2a0] sm:$0xff]
      %v4719 = vld [vmem:[%s3703 + $0x2a8] sm:$0xff]
      %v4720 = vld [vmem:[%s3703 + $0x2b8] sm:$0xff]
      %v4721 = vld [vmem:[%s3703 + $0x2c0] sm:$0xff]
      %v4722 = vld [vmem:[%s3703 + $0x2d0] sm:$0xff]
      %v4723 = vld [vmem:[%s3703 + $0x2d8] sm:$0xff]
      %v4724 = vld [vmem:[%s3703 + $0x2e8] sm:$0xff]
      %v4725 = vld [vmem:[%s3703 + $0x2f0] sm:$0xff]
      %v4726 = vld [vmem:[%s3703 + $0x300] sm:$0xff]
      %v4727 = vld [vmem:[%s3703 + $0x308] sm:$0xff]
      %v4728 = vld [vmem:[%s3703 + $0x318] sm:$0xff]
      %v4729 = vld [vmem:[%s3703 + $0x320] sm:$0xff]
      %4794 = vrot.lane.b32.xlu0 %v4666, 48
      %v4795 = vpop.permute.xlu0 %4794
      %4796 = vrot.lane.b32.xlu0 %v4667, 48
      %v4797 = vpop.permute.xlu0 %4796
      %4798 = vrot.lane.b32.xlu0 %v4668, 48
      %v4799 = vpop.permute.xlu0 %4798
      %4800 = vrot.lane.b32.xlu0 %v4669, 48
      %v4801 = vpop.permute.xlu0 %4800
      %4802 = vrot.lane.b32.xlu0 %v4670, 48
      %v4803 = vpop.permute.xlu0 %4802
      %4804 = vrot.lane.b32.xlu0 %v4671, 48
      %v4805 = vpop.permute.xlu0 %4804
      %4806 = vrot.lane.b32.xlu0 %v4672, 48
      %v4807 = vpop.permute.xlu0 %4806
      %4808 = vrot.lane.b32.xlu0 %v4673, 48
      %v4809 = vpop.permute.xlu0 %4808
      %4810 = vrot.lane.b32.xlu0 %v4674, 48
      %v4811 = vpop.permute.xlu0 %4810
      %4812 = vrot.lane.b32.xlu0 %v4675, 48
      %v4813 = vpop.permute.xlu0 %4812
      %4814 = vrot.lane.b32.xlu0 %v4676, 48
      %v4815 = vpop.permute.xlu0 %4814
      %4816 = vrot.lane.b32.xlu0 %v4677, 48
      %v4817 = vpop.permute.xlu0 %4816
      %4818 = vrot.lane.b32.xlu0 %v4678, 48
      %v4819 = vpop.permute.xlu0 %4818
      %4820 = vrot.lane.b32.xlu0 %v4679, 48
      %v4821 = vpop.permute.xlu0 %4820
      %4822 = vrot.lane.b32.xlu0 %v4680, 48
      %v4823 = vpop.permute.xlu0 %4822
      %4824 = vrot.lane.b32.xlu0 %v4681, 48
      %v4825 = vpop.permute.xlu0 %4824
      %4826 = vrot.lane.b32.xlu0 %v4682, 48
      %v4827 = vpop.permute.xlu0 %4826
      %4828 = vrot.lane.b32.xlu0 %v4683, 48
      %v4829 = vpop.permute.xlu0 %4828
      %4830 = vrot.lane.b32.xlu0 %v4684, 48
      %v4831 = vpop.permute.xlu0 %4830
      %4832 = vrot.lane.b32.xlu0 %v4685, 48
      %v4833 = vpop.permute.xlu0 %4832
      %4834 = vrot.lane.b32.xlu0 %v4686, 48
      %v4835 = vpop.permute.xlu0 %4834
      %4836 = vrot.lane.b32.xlu0 %v4687, 48
      %v4837 = vpop.permute.xlu0 %4836
      %4838 = vrot.lane.b32.xlu0 %v4688, 48
      %v4839 = vpop.permute.xlu0 %4838
      %4840 = vrot.lane.b32.xlu0 %v4689, 48
      %v4841 = vpop.permute.xlu0 %4840
      %4842 = vrot.lane.b32.xlu0 %v4690, 48
      %v4843 = vpop.permute.xlu0 %4842
      %4844 = vrot.lane.b32.xlu0 %v4691, 48
      %v4845 = vpop.permute.xlu0 %4844
      %4846 = vrot.lane.b32.xlu0 %v4692, 48
      %v4847 = vpop.permute.xlu0 %4846
      %4848 = vrot.lane.b32.xlu0 %v4693, 48
      %v4849 = vpop.permute.xlu0 %4848
      %4850 = vrot.lane.b32.xlu0 %v4694, 48
      %v4851 = vpop.permute.xlu0 %4850
      %4852 = vrot.lane.b32.xlu0 %v4695, 48
      %v4853 = vpop.permute.xlu0 %4852
      %4854 = vrot.lane.b32.xlu0 %v4696, 48
      %v4855 = vpop.permute.xlu0 %4854
      %4856 = vrot.lane.b32.xlu0 %v4697, 48
      %v4857 = vpop.permute.xlu0 %4856
      %4858 = vrot.lane.b32.xlu0 %v4698, 48
      %v4859 = vpop.permute.xlu0 %4858
      %4860 = vrot.lane.b32.xlu0 %v4699, 48
      %v4861 = vpop.permute.xlu0 %4860
      %4862 = vrot.lane.b32.xlu0 %v4700, 48
      %v4863 = vpop.permute.xlu0 %4862
      %4864 = vrot.lane.b32.xlu0 %v4701, 48
      %v4865 = vpop.permute.xlu0 %4864
      %4866 = vrot.lane.b32.xlu0 %v4702, 48
      %v4867 = vpop.permute.xlu0 %4866
      %4868 = vrot.lane.b32.xlu0 %v4703, 48
      %v4869 = vpop.permute.xlu0 %4868
      %4870 = vrot.lane.b32.xlu0 %v4704, 48
      %v4871 = vpop.permute.xlu0 %4870
      %4872 = vrot.lane.b32.xlu0 %v4705, 48
      %v4873 = vpop.permute.xlu0 %4872
      %4874 = vrot.lane.b32.xlu0 %v4706, 48
      %v4875 = vpop.permute.xlu0 %4874
      %4876 = vrot.lane.b32.xlu0 %v4707, 48
      %v4877 = vpop.permute.xlu0 %4876
      %4878 = vrot.lane.b32.xlu0 %v4708, 48
      %v4879 = vpop.permute.xlu0 %4878
      %4880 = vrot.lane.b32.xlu0 %v4709, 48
      %v4881 = vpop.permute.xlu0 %4880
      %4882 = vrot.lane.b32.xlu0 %v4710, 48
      %v4883 = vpop.permute.xlu0 %4882
      %4884 = vrot.lane.b32.xlu0 %v4711, 48
      %v4885 = vpop.permute.xlu0 %4884
      %4886 = vrot.lane.b32.xlu0 %v4712, 48
      %v4887 = vpop.permute.xlu0 %4886
      %4888 = vrot.lane.b32.xlu0 %v4713, 48
      %v4889 = vpop.permute.xlu0 %4888
      %4890 = vrot.lane.b32.xlu0 %v4714, 48
      %v4891 = vpop.permute.xlu0 %4890
      %4892 = vrot.lane.b32.xlu0 %v4715, 48
      %v4893 = vpop.permute.xlu0 %4892
      %4894 = vrot.lane.b32.xlu0 %v4716, 48
      %v4895 = vpop.permute.xlu0 %4894
      %4896 = vrot.lane.b32.xlu0 %v4717, 48
      %v4897 = vpop.permute.xlu0 %4896
      %4898 = vrot.lane.b32.xlu0 %v4718, 48
      %v4899 = vpop.permute.xlu0 %4898
      %4900 = vrot.lane.b32.xlu0 %v4719, 48
      %v4901 = vpop.permute.xlu0 %4900
      %4902 = vrot.lane.b32.xlu0 %v4720, 48
      %v4903 = vpop.permute.xlu0 %4902
      %4904 = vrot.lane.b32.xlu0 %v4721, 48
      %v4905 = vpop.permute.xlu0 %4904
      %4906 = vrot.lane.b32.xlu0 %v4722, 48
      %v4907 = vpop.permute.xlu0 %4906
      %4908 = vrot.lane.b32.xlu0 %v4723, 48
      %v4909 = vpop.permute.xlu0 %4908
      %4910 = vrot.lane.b32.xlu0 %v4724, 48
      %v4911 = vpop.permute.xlu0 %4910
      %4912 = vrot.lane.b32.xlu0 %v4725, 48
      %v4913 = vpop.permute.xlu0 %4912
      %4914 = vrot.lane.b32.xlu0 %v4726, 48
      %v4915 = vpop.permute.xlu0 %4914
      %4916 = vrot.lane.b32.xlu0 %v4727, 48
      %v4917 = vpop.permute.xlu0 %4916
      %4918 = vrot.lane.b32.xlu0 %v4728, 48
      %v4919 = vpop.permute.xlu0 %4918
      %4920 = vrot.lane.b32.xlu0 %v4729, 48
      %v4921 = vpop.permute.xlu0 %4920
      %vm4986 = vcmask 523648
      %4987 = vst.msk [vmem:[#allocation4] sm:$0xff] %vm4986, %v4795
      %4988 = vst.msk [vmem:[#allocation4 + $0x10] sm:$0xff] %vm4986, %v4797
      %4989 = vst.msk [vmem:[#allocation4 + $0x20] sm:$0xff] %vm4986, %v4799
      %4990 = vst.msk [vmem:[#allocation4 + $0x30] sm:$0xff] %vm4986, %v4801
      %4991 = vst.msk [vmem:[#allocation4 + $0x40] sm:$0xff] %vm4986, %v4803
      %4992 = vst.msk [vmem:[#allocation4 + $0x50] sm:$0xff] %vm4986, %v4805
      %4993 = vst.msk [vmem:[#allocation4 + $0x60] sm:$0xff] %vm4986, %v4807
      %4994 = vst.msk [vmem:[#allocation4 + $0x70] sm:$0xff] %vm4986, %v4809
      %4995 = vst.msk [vmem:[#allocation4 + $0x80] sm:$0xff] %vm4986, %v4811
      %4996 = vst.msk [vmem:[#allocation4 + $0x90] sm:$0xff] %vm4986, %v4813
      %4997 = vst.msk [vmem:[#allocation4 + $0xa0] sm:$0xff] %vm4986, %v4815
      %4998 = vst.msk [vmem:[#allocation4 + $0xb0] sm:$0xff] %vm4986, %v4817
      %4999 = vst.msk [vmem:[#allocation4 + $0xc0] sm:$0xff] %vm4986, %v4819
      %5000 = vst.msk [vmem:[#allocation4 + $0xd0] sm:$0xff] %vm4986, %v4821
      %5001 = vst.msk [vmem:[#allocation4 + $0xe0] sm:$0xff] %vm4986, %v4823
      %5002 = vst.msk [vmem:[#allocation4 + $0xf0] sm:$0xff] %vm4986, %v4825
      %5003 = vst.msk [vmem:[#allocation4 + $0x100] sm:$0xff] %vm4986, %v4827
      %5004 = vst.msk [vmem:[#allocation4 + $0x110] sm:$0xff] %vm4986, %v4829
      %5005 = vst.msk [vmem:[#allocation4 + $0x120] sm:$0xff] %vm4986, %v4831
      %5006 = vst.msk [vmem:[#allocation4 + $0x130] sm:$0xff] %vm4986, %v4833
      %5007 = vst.msk [vmem:[#allocation4 + $0x140] sm:$0xff] %vm4986, %v4835
      %5008 = vst.msk [vmem:[#allocation4 + $0x150] sm:$0xff] %vm4986, %v4837
      %5009 = vst.msk [vmem:[#allocation4 + $0x160] sm:$0xff] %vm4986, %v4839
      %5010 = vst.msk [vmem:[#allocation4 + $0x170] sm:$0xff] %vm4986, %v4841
      %5011 = vst.msk [vmem:[#allocation4 + $0x180] sm:$0xff] %vm4986, %v4843
      %5012 = vst.msk [vmem:[#allocation4 + $0x190] sm:$0xff] %vm4986, %v4845
      %5013 = vst.msk [vmem:[#allocation4 + $0x1a0] sm:$0xff] %vm4986, %v4847
      %5014 = vst.msk [vmem:[#allocation4 + $0x1b0] sm:$0xff] %vm4986, %v4849
      %5015 = vst.msk [vmem:[#allocation4 + $0x1c0] sm:$0xff] %vm4986, %v4851
      %5016 = vst.msk [vmem:[#allocation4 + $0x1d0] sm:$0xff] %vm4986, %v4853
      %5017 = vst.msk [vmem:[#allocation4 + $0x1e0] sm:$0xff] %vm4986, %v4855
      %5018 = vst.msk [vmem:[#allocation4 + $0x1f0] sm:$0xff] %vm4986, %v4857
      %5019 = vst.msk [vmem:[#allocation4 + $0x200] sm:$0xff] %vm4986, %v4859
      %5020 = vst.msk [vmem:[#allocation4 + $0x210] sm:$0xff] %vm4986, %v4861
      %5021 = vst.msk [vmem:[#allocation4 + $0x220] sm:$0xff] %vm4986, %v4863
      %5022 = vst.msk [vmem:[#allocation4 + $0x230] sm:$0xff] %vm4986, %v4865
      %5023 = vst.msk [vmem:[#allocation4 + $0x240] sm:$0xff] %vm4986, %v4867
      %5024 = vst.msk [vmem:[#allocation4 + $0x250] sm:$0xff] %vm4986, %v4869
      %5025 = vst.msk [vmem:[#allocation4 + $0x260] sm:$0xff] %vm4986, %v4871
      %5026 = vst.msk [vmem:[#allocation4 + $0x270] sm:$0xff] %vm4986, %v4873
      %5027 = vst.msk [vmem:[#allocation4 + $0x280] sm:$0xff] %vm4986, %v4875
      %5028 = vst.msk [vmem:[#allocation4 + $0x290] sm:$0xff] %vm4986, %v4877
      %5029 = vst.msk [vmem:[#allocation4 + $0x2a0] sm:$0xff] %vm4986, %v4879
      %5030 = vst.msk [vmem:[#allocation4 + $0x2b0] sm:$0xff] %vm4986, %v4881
      %5031 = vst.msk [vmem:[#allocation4 + $0x2c0] sm:$0xff] %vm4986, %v4883
      %5032 = vst.msk [vmem:[#allocation4 + $0x2d0] sm:$0xff] %vm4986, %v4885
      %5033 = vst.msk [vmem:[#allocation4 + $0x2e0] sm:$0xff] %vm4986, %v4887
      %5034 = vst.msk [vmem:[#allocation4 + $0x2f0] sm:$0xff] %vm4986, %v4889
      %5035 = vst.msk [vmem:[#allocation4 + $0x300] sm:$0xff] %vm4986, %v4891
      %5036 = vst.msk [vmem:[#allocation4 + $0x310] sm:$0xff] %vm4986, %v4893
      %5037 = vst.msk [vmem:[#allocation4 + $0x320] sm:$0xff] %vm4986, %v4895
      %5038 = vst.msk [vmem:[#allocation4 + $0x330] sm:$0xff] %vm4986, %v4897
      %5039 = vst.msk [vmem:[#allocation4 + $0x340] sm:$0xff] %vm4986, %v4899
      %5040 = vst.msk [vmem:[#allocation4 + $0x350] sm:$0xff] %vm4986, %v4901
      %5041 = vst.msk [vmem:[#allocation4 + $0x360] sm:$0xff] %vm4986, %v4903
      %5042 = vst.msk [vmem:[#allocation4 + $0x370] sm:$0xff] %vm4986, %v4905
      %5043 = vst.msk [vmem:[#allocation4 + $0x380] sm:$0xff] %vm4986, %v4907
      %5044 = vst.msk [vmem:[#allocation4 + $0x390] sm:$0xff] %vm4986, %v4909
      %5045 = vst.msk [vmem:[#allocation4 + $0x3a0] sm:$0xff] %vm4986, %v4911
      %5046 = vst.msk [vmem:[#allocation4 + $0x3b0] sm:$0xff] %vm4986, %v4913
      %5047 = vst.msk [vmem:[#allocation4 + $0x3c0] sm:$0xff] %vm4986, %v4915
      %5048 = vst.msk [vmem:[#allocation4 + $0x3d0] sm:$0xff] %vm4986, %v4917
      %5049 = vst.msk [vmem:[#allocation4 + $0x3e0] sm:$0xff] %vm4986, %v4919
      %5050 = vst.msk [vmem:[#allocation4 + $0x3f0] sm:$0xff] %vm4986, %v4921
      %v5051 = vld [vmem:[%s3703 + $0x1] sm:$0xff]
      %v5052 = vld [vmem:[%s3703 + $0x9] sm:$0xff]
      %v5053 = vld [vmem:[%s3703 + $0x19] sm:$0xff]
      %v5054 = vld [vmem:[%s3703 + $0x21] sm:$0xff]
      %v5055 = vld [vmem:[%s3703 + $0x31] sm:$0xff]
      %v5056 = vld [vmem:[%s3703 + $0x39] sm:$0xff]
      %v5057 = vld [vmem:[%s3703 + $0x49] sm:$0xff]
      %v5058 = vld [vmem:[%s3703 + $0x51] sm:$0xff]
      %v5059 = vld [vmem:[%s3703 + $0x61] sm:$0xff]
      %v5060 = vld [vmem:[%s3703 + $0x69] sm:$0xff]
      %v5061 = vld [vmem:[%s3703 + $0x79] sm:$0xff]
      %v5062 = vld [vmem:[%s3703 + $0x81] sm:$0xff]
      %v5063 = vld [vmem:[%s3703 + $0x91] sm:$0xff]
      %v5064 = vld [vmem:[%s3703 + $0x99] sm:$0xff]
      %v5065 = vld [vmem:[%s3703 + $0xa9] sm:$0xff]
      %v5066 = vld [vmem:[%s3703 + $0xb1] sm:$0xff]
      %v5067 = vld [vmem:[%s3703 + $0xc1] sm:$0xff]
      %v5068 = vld [vmem:[%s3703 + $0xc9] sm:$0xff]
      %v5069 = vld [vmem:[%s3703 + $0xd9] sm:$0xff]
      %v5070 = vld [vmem:[%s3703 + $0xe1] sm:$0xff]
      %v5071 = vld [vmem:[%s3703 + $0xf1] sm:$0xff]
      %v5072 = vld [vmem:[%s3703 + $0xf9] sm:$0xff]
      %v5073 = vld [vmem:[%s3703 + $0x109] sm:$0xff]
      %v5074 = vld [vmem:[%s3703 + $0x111] sm:$0xff]
      %v5075 = vld [vmem:[%s3703 + $0x121] sm:$0xff]
      %v5076 = vld [vmem:[%s3703 + $0x129] sm:$0xff]
      %v5077 = vld [vmem:[%s3703 + $0x139] sm:$0xff]
      %v5078 = vld [vmem:[%s3703 + $0x141] sm:$0xff]
      %v5079 = vld [vmem:[%s3703 + $0x151] sm:$0xff]
      %v5080 = vld [vmem:[%s3703 + $0x159] sm:$0xff]
      %v5081 = vld [vmem:[%s3703 + $0x169] sm:$0xff]
      %v5082 = vld [vmem:[%s3703 + $0x171] sm:$0xff]
      %v5083 = vld [vmem:[%s3703 + $0x1b1] sm:$0xff]
      %v5084 = vld [vmem:[%s3703 + $0x1b9] sm:$0xff]
      %v5085 = vld [vmem:[%s3703 + $0x1c9] sm:$0xff]
      %v5086 = vld [vmem:[%s3703 + $0x1d1] sm:$0xff]
      %v5087 = vld [vmem:[%s3703 + $0x1e1] sm:$0xff]
      %v5088 = vld [vmem:[%s3703 + $0x1e9] sm:$0xff]
      %v5089 = vld [vmem:[%s3703 + $0x1f9] sm:$0xff]
      %v5090 = vld [vmem:[%s3703 + $0x201] sm:$0xff]
      %v5091 = vld [vmem:[%s3703 + $0x211] sm:$0xff]
      %v5092 = vld [vmem:[%s3703 + $0x219] sm:$0xff]
      %v5093 = vld [vmem:[%s3703 + $0x229] sm:$0xff]
      %v5094 = vld [vmem:[%s3703 + $0x231] sm:$0xff]
      %v5095 = vld [vmem:[%s3703 + $0x241] sm:$0xff]
      %v5096 = vld [vmem:[%s3703 + $0x249] sm:$0xff]
      %v5097 = vld [vmem:[%s3703 + $0x259] sm:$0xff]
      %v5098 = vld [vmem:[%s3703 + $0x261] sm:$0xff]
      %v5099 = vld [vmem:[%s3703 + $0x271] sm:$0xff]
      %v5100 = vld [vmem:[%s3703 + $0x279] sm:$0xff]
      %v5101 = vld [vmem:[%s3703 + $0x289] sm:$0xff]
      %v5102 = vld [vmem:[%s3703 + $0x291] sm:$0xff]
      %v5103 = vld [vmem:[%s3703 + $0x2a1] sm:$0xff]
      %v5104 = vld [vmem:[%s3703 + $0x2a9] sm:$0xff]
      %v5105 = vld [vmem:[%s3703 + $0x2b9] sm:$0xff]
      %v5106 = vld [vmem:[%s3703 + $0x2c1] sm:$0xff]
      %v5107 = vld [vmem:[%s3703 + $0x2d1] sm:$0xff]
      %v5108 = vld [vmem:[%s3703 + $0x2d9] sm:$0xff]
      %v5109 = vld [vmem:[%s3703 + $0x2e9] sm:$0xff]
      %v5110 = vld [vmem:[%s3703 + $0x2f1] sm:$0xff]
      %v5111 = vld [vmem:[%s3703 + $0x301] sm:$0xff]
      %v5112 = vld [vmem:[%s3703 + $0x309] sm:$0xff]
      %v5113 = vld [vmem:[%s3703 + $0x319] sm:$0xff]
      %v5114 = vld [vmem:[%s3703 + $0x321] sm:$0xff]
      %5179 = vrot.lane.b32.xlu0 %v5051, 64
      %v5180 = vpop.permute.xlu0 %5179
      %5181 = vrot.lane.b32.xlu0 %v5052, 64
      %v5182 = vpop.permute.xlu0 %5181
      %5183 = vrot.lane.b32.xlu0 %v5053, 64
      %v5184 = vpop.permute.xlu0 %5183
      %5185 = vrot.lane.b32.xlu0 %v5054, 64
      %v5186 = vpop.permute.xlu0 %5185
      %5187 = vrot.lane.b32.xlu0 %v5055, 64
      %v5188 = vpop.permute.xlu0 %5187
      %5189 = vrot.lane.b32.xlu0 %v5056, 64
      %v5190 = vpop.permute.xlu0 %5189
      %5191 = vrot.lane.b32.xlu0 %v5057, 64
      %v5192 = vpop.permute.xlu0 %5191
      %5193 = vrot.lane.b32.xlu0 %v5058, 64
      %v5194 = vpop.permute.xlu0 %5193
      %5195 = vrot.lane.b32.xlu0 %v5059, 64
      %v5196 = vpop.permute.xlu0 %5195
      %5197 = vrot.lane.b32.xlu0 %v5060, 64
      %v5198 = vpop.permute.xlu0 %5197
      %5199 = vrot.lane.b32.xlu0 %v5061, 64
      %v5200 = vpop.permute.xlu0 %5199
      %5201 = vrot.lane.b32.xlu0 %v5062, 64
      %v5202 = vpop.permute.xlu0 %5201
      %5203 = vrot.lane.b32.xlu0 %v5063, 64
      %v5204 = vpop.permute.xlu0 %5203
      %5205 = vrot.lane.b32.xlu0 %v5064, 64
      %v5206 = vpop.permute.xlu0 %5205
      %5207 = vrot.lane.b32.xlu0 %v5065, 64
      %v5208 = vpop.permute.xlu0 %5207
      %5209 = vrot.lane.b32.xlu0 %v5066, 64
      %v5210 = vpop.permute.xlu0 %5209
      %5211 = vrot.lane.b32.xlu0 %v5067, 64
      %v5212 = vpop.permute.xlu0 %5211
      %5213 = vrot.lane.b32.xlu0 %v5068, 64
      %v5214 = vpop.permute.xlu0 %5213
      %5215 = vrot.lane.b32.xlu0 %v5069, 64
      %v5216 = vpop.permute.xlu0 %5215
      %5217 = vrot.lane.b32.xlu0 %v5070, 64
      %v5218 = vpop.permute.xlu0 %5217
      %5219 = vrot.lane.b32.xlu0 %v5071, 64
      %v5220 = vpop.permute.xlu0 %5219
      %5221 = vrot.lane.b32.xlu0 %v5072, 64
      %v5222 = vpop.permute.xlu0 %5221
      %5223 = vrot.lane.b32.xlu0 %v5073, 64
      %v5224 = vpop.permute.xlu0 %5223
      %5225 = vrot.lane.b32.xlu0 %v5074, 64
      %v5226 = vpop.permute.xlu0 %5225
      %5227 = vrot.lane.b32.xlu0 %v5075, 64
      %v5228 = vpop.permute.xlu0 %5227
      %5229 = vrot.lane.b32.xlu0 %v5076, 64
      %v5230 = vpop.permute.xlu0 %5229
      %5231 = vrot.lane.b32.xlu0 %v5077, 64
      %v5232 = vpop.permute.xlu0 %5231
      %5233 = vrot.lane.b32.xlu0 %v5078, 64
      %v5234 = vpop.permute.xlu0 %5233
      %5235 = vrot.lane.b32.xlu0 %v5079, 64
      %v5236 = vpop.permute.xlu0 %5235
      %5237 = vrot.lane.b32.xlu0 %v5080, 64
      %v5238 = vpop.permute.xlu0 %5237
      %5239 = vrot.lane.b32.xlu0 %v5081, 64
      %v5240 = vpop.permute.xlu0 %5239
      %5241 = vrot.lane.b32.xlu0 %v5082, 64
      %v5242 = vpop.permute.xlu0 %5241
      %5243 = vrot.lane.b32.xlu0 %v5083, 64
      %v5244 = vpop.permute.xlu0 %5243
      %5245 = vrot.lane.b32.xlu0 %v5084, 64
      %v5246 = vpop.permute.xlu0 %5245
      %5247 = vrot.lane.b32.xlu0 %v5085, 64
      %v5248 = vpop.permute.xlu0 %5247
      %5249 = vrot.lane.b32.xlu0 %v5086, 64
      %v5250 = vpop.permute.xlu0 %5249
      %5251 = vrot.lane.b32.xlu0 %v5087, 64
      %v5252 = vpop.permute.xlu0 %5251
      %5253 = vrot.lane.b32.xlu0 %v5088, 64
      %v5254 = vpop.permute.xlu0 %5253
      %5255 = vrot.lane.b32.xlu0 %v5089, 64
      %v5256 = vpop.permute.xlu0 %5255
      %5257 = vrot.lane.b32.xlu0 %v5090, 64
      %v5258 = vpop.permute.xlu0 %5257
      %5259 = vrot.lane.b32.xlu0 %v5091, 64
      %v5260 = vpop.permute.xlu0 %5259
      %5261 = vrot.lane.b32.xlu0 %v5092, 64
      %v5262 = vpop.permute.xlu0 %5261
      %5263 = vrot.lane.b32.xlu0 %v5093, 64
      %v5264 = vpop.permute.xlu0 %5263
      %5265 = vrot.lane.b32.xlu0 %v5094, 64
      %v5266 = vpop.permute.xlu0 %5265
      %5267 = vrot.lane.b32.xlu0 %v5095, 64
      %v5268 = vpop.permute.xlu0 %5267
      %5269 = vrot.lane.b32.xlu0 %v5096, 64
      %v5270 = vpop.permute.xlu0 %5269
      %5271 = vrot.lane.b32.xlu0 %v5097, 64
      %v5272 = vpop.permute.xlu0 %5271
      %5273 = vrot.lane.b32.xlu0 %v5098, 64
      %v5274 = vpop.permute.xlu0 %5273
      %5275 = vrot.lane.b32.xlu0 %v5099, 64
      %v5276 = vpop.permute.xlu0 %5275
      %5277 = vrot.lane.b32.xlu0 %v5100, 64
      %v5278 = vpop.permute.xlu0 %5277
      %5279 = vrot.lane.b32.xlu0 %v5101, 64
      %v5280 = vpop.permute.xlu0 %5279
      %5281 = vrot.lane.b32.xlu0 %v5102, 64
      %v5282 = vpop.permute.xlu0 %5281
      %5283 = vrot.lane.b32.xlu0 %v5103, 64
      %v5284 = vpop.permute.xlu0 %5283
      %5285 = vrot.lane.b32.xlu0 %v5104, 64
      %v5286 = vpop.permute.xlu0 %5285
      %5287 = vrot.lane.b32.xlu0 %v5105, 64
      %v5288 = vpop.permute.xlu0 %5287
      %5289 = vrot.lane.b32.xlu0 %v5106, 64
      %v5290 = vpop.permute.xlu0 %5289
      %5291 = vrot.lane.b32.xlu0 %v5107, 64
      %v5292 = vpop.permute.xlu0 %5291
      %5293 = vrot.lane.b32.xlu0 %v5108, 64
      %v5294 = vpop.permute.xlu0 %5293
      %5295 = vrot.lane.b32.xlu0 %v5109, 64
      %v5296 = vpop.permute.xlu0 %5295
      %5297 = vrot.lane.b32.xlu0 %v5110, 64
      %v5298 = vpop.permute.xlu0 %5297
      %5299 = vrot.lane.b32.xlu0 %v5111, 64
      %v5300 = vpop.permute.xlu0 %5299
      %5301 = vrot.lane.b32.xlu0 %v5112, 64
      %v5302 = vpop.permute.xlu0 %5301
      %5303 = vrot.lane.b32.xlu0 %v5113, 64
      %v5304 = vpop.permute.xlu0 %5303
      %5305 = vrot.lane.b32.xlu0 %v5114, 64
      %v5306 = vpop.permute.xlu0 %5305
      %vm5371 = vcmask 654848
      %5372 = vst.msk [vmem:[#allocation4] sm:$0xff] %vm5371, %v5180
      %5373 = vst.msk [vmem:[#allocation4 + $0x10] sm:$0xff] %vm5371, %v5182
      %5374 = vst.msk [vmem:[#allocation4 + $0x20] sm:$0xff] %vm5371, %v5184
      %5375 = vst.msk [vmem:[#allocation4 + $0x30] sm:$0xff] %vm5371, %v5186
      %5376 = vst.msk [vmem:[#allocation4 + $0x40] sm:$0xff] %vm5371, %v5188
      %5377 = vst.msk [vmem:[#allocation4 + $0x50] sm:$0xff] %vm5371, %v5190
      %5378 = vst.msk [vmem:[#allocation4 + $0x60] sm:$0xff] %vm5371, %v5192
      %5379 = vst.msk [vmem:[#allocation4 + $0x70] sm:$0xff] %vm5371, %v5194
      %5380 = vst.msk [vmem:[#allocation4 + $0x80] sm:$0xff] %vm5371, %v5196
      %5381 = vst.msk [vmem:[#allocation4 + $0x90] sm:$0xff] %vm5371, %v5198
      %5382 = vst.msk [vmem:[#allocation4 + $0xa0] sm:$0xff] %vm5371, %v5200
      %5383 = vst.msk [vmem:[#allocation4 + $0xb0] sm:$0xff] %vm5371, %v5202
      %5384 = vst.msk [vmem:[#allocation4 + $0xc0] sm:$0xff] %vm5371, %v5204
      %5385 = vst.msk [vmem:[#allocation4 + $0xd0] sm:$0xff] %vm5371, %v5206
      %5386 = vst.msk [vmem:[#allocation4 + $0xe0] sm:$0xff] %vm5371, %v5208
      %5387 = vst.msk [vmem:[#allocation4 + $0xf0] sm:$0xff] %vm5371, %v5210
      %5388 = vst.msk [vmem:[#allocation4 + $0x100] sm:$0xff] %vm5371, %v5212
      %5389 = vst.msk [vmem:[#allocation4 + $0x110] sm:$0xff] %vm5371, %v5214
      %5390 = vst.msk [vmem:[#allocation4 + $0x120] sm:$0xff] %vm5371, %v5216
      %5391 = vst.msk [vmem:[#allocation4 + $0x130] sm:$0xff] %vm5371, %v5218
      %5392 = vst.msk [vmem:[#allocation4 + $0x140] sm:$0xff] %vm5371, %v5220
      %5393 = vst.msk [vmem:[#allocation4 + $0x150] sm:$0xff] %vm5371, %v5222
      %5394 = vst.msk [vmem:[#allocation4 + $0x160] sm:$0xff] %vm5371, %v5224
      %5395 = vst.msk [vmem:[#allocation4 + $0x170] sm:$0xff] %vm5371, %v5226
      %5396 = vst.msk [vmem:[#allocation4 + $0x180] sm:$0xff] %vm5371, %v5228
      %5397 = vst.msk [vmem:[#allocation4 + $0x190] sm:$0xff] %vm5371, %v5230
      %5398 = vst.msk [vmem:[#allocation4 + $0x1a0] sm:$0xff] %vm5371, %v5232
      %5399 = vst.msk [vmem:[#allocation4 + $0x1b0] sm:$0xff] %vm5371, %v5234
      %5400 = vst.msk [vmem:[#allocation4 + $0x1c0] sm:$0xff] %vm5371, %v5236
      %5401 = vst.msk [vmem:[#allocation4 + $0x1d0] sm:$0xff] %vm5371, %v5238
      %5402 = vst.msk [vmem:[#allocation4 + $0x1e0] sm:$0xff] %vm5371, %v5240
      %5403 = vst.msk [vmem:[#allocation4 + $0x1f0] sm:$0xff] %vm5371, %v5242
      %5404 = vst.msk [vmem:[#allocation4 + $0x200] sm:$0xff] %vm5371, %v5244
      %5405 = vst.msk [vmem:[#allocation4 + $0x210] sm:$0xff] %vm5371, %v5246
      %5406 = vst.msk [vmem:[#allocation4 + $0x220] sm:$0xff] %vm5371, %v5248
      %5407 = vst.msk [vmem:[#allocation4 + $0x230] sm:$0xff] %vm5371, %v5250
      %5408 = vst.msk [vmem:[#allocation4 + $0x240] sm:$0xff] %vm5371, %v5252
      %5409 = vst.msk [vmem:[#allocation4 + $0x250] sm:$0xff] %vm5371, %v5254
      %5410 = vst.msk [vmem:[#allocation4 + $0x260] sm:$0xff] %vm5371, %v5256
      %5411 = vst.msk [vmem:[#allocation4 + $0x270] sm:$0xff] %vm5371, %v5258
      %5412 = vst.msk [vmem:[#allocation4 + $0x280] sm:$0xff] %vm5371, %v5260
      %5413 = vst.msk [vmem:[#allocation4 + $0x290] sm:$0xff] %vm5371, %v5262
      %5414 = vst.msk [vmem:[#allocation4 + $0x2a0] sm:$0xff] %vm5371, %v5264
      %5415 = vst.msk [vmem:[#allocation4 + $0x2b0] sm:$0xff] %vm5371, %v5266
      %5416 = vst.msk [vmem:[#allocation4 + $0x2c0] sm:$0xff] %vm5371, %v5268
      %5417 = vst.msk [vmem:[#allocation4 + $0x2d0] sm:$0xff] %vm5371, %v5270
      %5418 = vst.msk [vmem:[#allocation4 + $0x2e0] sm:$0xff] %vm5371, %v5272
      %5419 = vst.msk [vmem:[#allocation4 + $0x2f0] sm:$0xff] %vm5371, %v5274
      %5420 = vst.msk [vmem:[#allocation4 + $0x300] sm:$0xff] %vm5371, %v5276
      %5421 = vst.msk [vmem:[#allocation4 + $0x310] sm:$0xff] %vm5371, %v5278
      %5422 = vst.msk [vmem:[#allocation4 + $0x320] sm:$0xff] %vm5371, %v5280
      %5423 = vst.msk [vmem:[#allocation4 + $0x330] sm:$0xff] %vm5371, %v5282
      %5424 = vst.msk [vmem:[#allocation4 + $0x340] sm:$0xff] %vm5371, %v5284
      %5425 = vst.msk [vmem:[#allocation4 + $0x350] sm:$0xff] %vm5371, %v5286
      %5426 = vst.msk [vmem:[#allocation4 + $0x360] sm:$0xff] %vm5371, %v5288
      %5427 = vst.msk [vmem:[#allocation4 + $0x370] sm:$0xff] %vm5371, %v5290
      %5428 = vst.msk [vmem:[#allocation4 + $0x380] sm:$0xff] %vm5371, %v5292
      %5429 = vst.msk [vmem:[#allocation4 + $0x390] sm:$0xff] %vm5371, %v5294
      %5430 = vst.msk [vmem:[#allocation4 + $0x3a0] sm:$0xff] %vm5371, %v5296
      %5431 = vst.msk [vmem:[#allocation4 + $0x3b0] sm:$0xff] %vm5371, %v5298
      %5432 = vst.msk [vmem:[#allocation4 + $0x3c0] sm:$0xff] %vm5371, %v5300
      %5433 = vst.msk [vmem:[#allocation4 + $0x3d0] sm:$0xff] %vm5371, %v5302
      %5434 = vst.msk [vmem:[#allocation4 + $0x3e0] sm:$0xff] %vm5371, %v5304
      %5435 = vst.msk [vmem:[#allocation4 + $0x3f0] sm:$0xff] %vm5371, %v5306
      %v5436 = vld [vmem:[%s3703 + $0x2] sm:$0xff]
      %v5437 = vld [vmem:[%s3703 + $0xa] sm:$0xff]
      %v5438 = vld [vmem:[%s3703 + $0x1a] sm:$0xff]
      %v5439 = vld [vmem:[%s3703 + $0x22] sm:$0xff]
      %v5440 = vld [vmem:[%s3703 + $0x32] sm:$0xff]
      %v5441 = vld [vmem:[%s3703 + $0x3a] sm:$0xff]
      %v5442 = vld [vmem:[%s3703 + $0x4a] sm:$0xff]
      %v5443 = vld [vmem:[%s3703 + $0x52] sm:$0xff]
      %v5444 = vld [vmem:[%s3703 + $0x62] sm:$0xff]
      %v5445 = vld [vmem:[%s3703 + $0x6a] sm:$0xff]
      %v5446 = vld [vmem:[%s3703 + $0x7a] sm:$0xff]
      %v5447 = vld [vmem:[%s3703 + $0x82] sm:$0xff]
      %v5448 = vld [vmem:[%s3703 + $0x92] sm:$0xff]
      %v5449 = vld [vmem:[%s3703 + $0x9a] sm:$0xff]
      %v5450 = vld [vmem:[%s3703 + $0xaa] sm:$0xff]
      %v5451 = vld [vmem:[%s3703 + $0xb2] sm:$0xff]
      %v5452 = vld [vmem:[%s3703 + $0xc2] sm:$0xff]
      %v5453 = vld [vmem:[%s3703 + $0xca] sm:$0xff]
      %v5454 = vld [vmem:[%s3703 + $0xda] sm:$0xff]
      %v5455 = vld [vmem:[%s3703 + $0xe2] sm:$0xff]
      %v5456 = vld [vmem:[%s3703 + $0xf2] sm:$0xff]
      %v5457 = vld [vmem:[%s3703 + $0xfa] sm:$0xff]
      %v5458 = vld [vmem:[%s3703 + $0x10a] sm:$0xff]
      %v5459 = vld [vmem:[%s3703 + $0x112] sm:$0xff]
      %v5460 = vld [vmem:[%s3703 + $0x122] sm:$0xff]
      %v5461 = vld [vmem:[%s3703 + $0x12a] sm:$0xff]
      %v5462 = vld [vmem:[%s3703 + $0x13a] sm:$0xff]
      %v5463 = vld [vmem:[%s3703 + $0x142] sm:$0xff]
      %v5464 = vld [vmem:[%s3703 + $0x152] sm:$0xff]
      %v5465 = vld [vmem:[%s3703 + $0x15a] sm:$0xff]
      %v5466 = vld [vmem:[%s3703 + $0x16a] sm:$0xff]
      %v5467 = vld [vmem:[%s3703 + $0x172] sm:$0xff]
      %v5468 = vld [vmem:[%s3703 + $0x1b2] sm:$0xff]
      %v5469 = vld [vmem:[%s3703 + $0x1ba] sm:$0xff]
      %v5470 = vld [vmem:[%s3703 + $0x1ca] sm:$0xff]
      %v5471 = vld [vmem:[%s3703 + $0x1d2] sm:$0xff]
      %v5472 = vld [vmem:[%s3703 + $0x1e2] sm:$0xff]
      %v5473 = vld [vmem:[%s3703 + $0x1ea] sm:$0xff]
      %v5474 = vld [vmem:[%s3703 + $0x1fa] sm:$0xff]
      %v5475 = vld [vmem:[%s3703 + $0x202] sm:$0xff]
      %v5476 = vld [vmem:[%s3703 + $0x212] sm:$0xff]
      %v5477 = vld [vmem:[%s3703 + $0x21a] sm:$0xff]
      %v5478 = vld [vmem:[%s3703 + $0x22a] sm:$0xff]
      %v5479 = vld [vmem:[%s3703 + $0x232] sm:$0xff]
      %v5480 = vld [vmem:[%s3703 + $0x242] sm:$0xff]
      %v5481 = vld [vmem:[%s3703 + $0x24a] sm:$0xff]
      %v5482 = vld [vmem:[%s3703 + $0x25a] sm:$0xff]
      %v5483 = vld [vmem:[%s3703 + $0x262] sm:$0xff]
      %v5484 = vld [vmem:[%s3703 + $0x272] sm:$0xff]
      %v5485 = vld [vmem:[%s3703 + $0x27a] sm:$0xff]
      %v5486 = vld [vmem:[%s3703 + $0x28a] sm:$0xff]
      %v5487 = vld [vmem:[%s3703 + $0x292] sm:$0xff]
      %v5488 = vld [vmem:[%s3703 + $0x2a2] sm:$0xff]
      %v5489 = vld [vmem:[%s3703 + $0x2aa] sm:$0xff]
      %v5490 = vld [vmem:[%s3703 + $0x2ba] sm:$0xff]
      %v5491 = vld [vmem:[%s3703 + $0x2c2] sm:$0xff]
      %v5492 = vld [vmem:[%s3703 + $0x2d2] sm:$0xff]
      %v5493 = vld [vmem:[%s3703 + $0x2da] sm:$0xff]
      %v5494 = vld [vmem:[%s3703 + $0x2ea] sm:$0xff]
      %v5495 = vld [vmem:[%s3703 + $0x2f2] sm:$0xff]
      %v5496 = vld [vmem:[%s3703 + $0x302] sm:$0xff]
      %v5497 = vld [vmem:[%s3703 + $0x30a] sm:$0xff]
      %v5498 = vld [vmem:[%s3703 + $0x31a] sm:$0xff]
      %v5499 = vld [vmem:[%s3703 + $0x322] sm:$0xff]
      %5564 = vrot.lane.b32.xlu0 %v5436, 80
      %v5565 = vpop.permute.xlu0 %5564
      %5566 = vrot.lane.b32.xlu0 %v5437, 80
      %v5567 = vpop.permute.xlu0 %5566
      %5568 = vrot.lane.b32.xlu0 %v5438, 80
      %v5569 = vpop.permute.xlu0 %5568
      %5570 = vrot.lane.b32.xlu0 %v5439, 80
      %v5571 = vpop.permute.xlu0 %5570
      %5572 = vrot.lane.b32.xlu0 %v5440, 80
      %v5573 = vpop.permute.xlu0 %5572
      %5574 = vrot.lane.b32.xlu0 %v5441, 80
      %v5575 = vpop.permute.xlu0 %5574
      %5576 = vrot.lane.b32.xlu0 %v5442, 80
      %v5577 = vpop.permute.xlu0 %5576
      %5578 = vrot.lane.b32.xlu0 %v5443, 80
      %v5579 = vpop.permute.xlu0 %5578
      %5580 = vrot.lane.b32.xlu0 %v5444, 80
      %v5581 = vpop.permute.xlu0 %5580
      %5582 = vrot.lane.b32.xlu0 %v5445, 80
      %v5583 = vpop.permute.xlu0 %5582
      %5584 = vrot.lane.b32.xlu0 %v5446, 80
      %v5585 = vpop.permute.xlu0 %5584
      %5586 = vrot.lane.b32.xlu0 %v5447, 80
      %v5587 = vpop.permute.xlu0 %5586
      %5588 = vrot.lane.b32.xlu0 %v5448, 80
      %v5589 = vpop.permute.xlu0 %5588
      %5590 = vrot.lane.b32.xlu0 %v5449, 80
      %v5591 = vpop.permute.xlu0 %5590
      %5592 = vrot.lane.b32.xlu0 %v5450, 80
      %v5593 = vpop.permute.xlu0 %5592
      %5594 = vrot.lane.b32.xlu0 %v5451, 80
      %v5595 = vpop.permute.xlu0 %5594
      %5596 = vrot.lane.b32.xlu0 %v5452, 80
      %v5597 = vpop.permute.xlu0 %5596
      %5598 = vrot.lane.b32.xlu0 %v5453, 80
      %v5599 = vpop.permute.xlu0 %5598
      %5600 = vrot.lane.b32.xlu0 %v5454, 80
      %v5601 = vpop.permute.xlu0 %5600
      %5602 = vrot.lane.b32.xlu0 %v5455, 80
      %v5603 = vpop.permute.xlu0 %5602
      %5604 = vrot.lane.b32.xlu0 %v5456, 80
      %v5605 = vpop.permute.xlu0 %5604
      %5606 = vrot.lane.b32.xlu0 %v5457, 80
      %v5607 = vpop.permute.xlu0 %5606
      %5608 = vrot.lane.b32.xlu0 %v5458, 80
      %v5609 = vpop.permute.xlu0 %5608
      %5610 = vrot.lane.b32.xlu0 %v5459, 80
      %v5611 = vpop.permute.xlu0 %5610
      %5612 = vrot.lane.b32.xlu0 %v5460, 80
      %v5613 = vpop.permute.xlu0 %5612
      %5614 = vrot.lane.b32.xlu0 %v5461, 80
      %v5615 = vpop.permute.xlu0 %5614
      %5616 = vrot.lane.b32.xlu0 %v5462, 80
      %v5617 = vpop.permute.xlu0 %5616
      %5618 = vrot.lane.b32.xlu0 %v5463, 80
      %v5619 = vpop.permute.xlu0 %5618
      %5620 = vrot.lane.b32.xlu0 %v5464, 80
      %v5621 = vpop.permute.xlu0 %5620
      %5622 = vrot.lane.b32.xlu0 %v5465, 80
      %v5623 = vpop.permute.xlu0 %5622
      %5624 = vrot.lane.b32.xlu0 %v5466, 80
      %v5625 = vpop.permute.xlu0 %5624
      %5626 = vrot.lane.b32.xlu0 %v5467, 80
      %v5627 = vpop.permute.xlu0 %5626
      %5628 = vrot.lane.b32.xlu0 %v5468, 80
      %v5629 = vpop.permute.xlu0 %5628
      %5630 = vrot.lane.b32.xlu0 %v5469, 80
      %v5631 = vpop.permute.xlu0 %5630
      %5632 = vrot.lane.b32.xlu0 %v5470, 80
      %v5633 = vpop.permute.xlu0 %5632
      %5634 = vrot.lane.b32.xlu0 %v5471, 80
      %v5635 = vpop.permute.xlu0 %5634
      %5636 = vrot.lane.b32.xlu0 %v5472, 80
      %v5637 = vpop.permute.xlu0 %5636
      %5638 = vrot.lane.b32.xlu0 %v5473, 80
      %v5639 = vpop.permute.xlu0 %5638
      %5640 = vrot.lane.b32.xlu0 %v5474, 80
      %v5641 = vpop.permute.xlu0 %5640
      %5642 = vrot.lane.b32.xlu0 %v5475, 80
      %v5643 = vpop.permute.xlu0 %5642
      %5644 = vrot.lane.b32.xlu0 %v5476, 80
      %v5645 = vpop.permute.xlu0 %5644
      %5646 = vrot.lane.b32.xlu0 %v5477, 80
      %v5647 = vpop.permute.xlu0 %5646
      %5648 = vrot.lane.b32.xlu0 %v5478, 80
      %v5649 = vpop.permute.xlu0 %5648
      %5650 = vrot.lane.b32.xlu0 %v5479, 80
      %v5651 = vpop.permute.xlu0 %5650
      %5652 = vrot.lane.b32.xlu0 %v5480, 80
      %v5653 = vpop.permute.xlu0 %5652
      %5654 = vrot.lane.b32.xlu0 %v5481, 80
      %v5655 = vpop.permute.xlu0 %5654
      %5656 = vrot.lane.b32.xlu0 %v5482, 80
      %v5657 = vpop.permute.xlu0 %5656
      %5658 = vrot.lane.b32.xlu0 %v5483, 80
      %v5659 = vpop.permute.xlu0 %5658
      %5660 = vrot.lane.b32.xlu0 %v5484, 80
      %v5661 = vpop.permute.xlu0 %5660
      %5662 = vrot.lane.b32.xlu0 %v5485, 80
      %v5663 = vpop.permute.xlu0 %5662
      %5664 = vrot.lane.b32.xlu0 %v5486, 80
      %v5665 = vpop.permute.xlu0 %5664
      %5666 = vrot.lane.b32.xlu0 %v5487, 80
      %v5667 = vpop.permute.xlu0 %5666
      %5668 = vrot.lane.b32.xlu0 %v5488, 80
      %v5669 = vpop.permute.xlu0 %5668
      %5670 = vrot.lane.b32.xlu0 %v5489, 80
      %v5671 = vpop.permute.xlu0 %5670
      %5672 = vrot.lane.b32.xlu0 %v5490, 80
      %v5673 = vpop.permute.xlu0 %5672
      %5674 = vrot.lane.b32.xlu0 %v5491, 80
      %v5675 = vpop.permute.xlu0 %5674
      %5676 = vrot.lane.b32.xlu0 %v5492, 80
      %v5677 = vpop.permute.xlu0 %5676
      %5678 = vrot.lane.b32.xlu0 %v5493, 80
      %v5679 = vpop.permute.xlu0 %5678
      %5680 = vrot.lane.b32.xlu0 %v5494, 80
      %v5681 = vpop.permute.xlu0 %5680
      %5682 = vrot.lane.b32.xlu0 %v5495, 80
      %v5683 = vpop.permute.xlu0 %5682
      %5684 = vrot.lane.b32.xlu0 %v5496, 80
      %v5685 = vpop.permute.xlu0 %5684
      %5686 = vrot.lane.b32.xlu0 %v5497, 80
      %v5687 = vpop.permute.xlu0 %5686
      %5688 = vrot.lane.b32.xlu0 %v5498, 80
      %v5689 = vpop.permute.xlu0 %5688
      %5690 = vrot.lane.b32.xlu0 %v5499, 80
      %v5691 = vpop.permute.xlu0 %5690
      %vm5756 = vcmask 786048
      %5757 = vst.msk [vmem:[#allocation4] sm:$0xff] %vm5756, %v5565
      %5758 = vst.msk [vmem:[#allocation4 + $0x10] sm:$0xff] %vm5756, %v5567
      %5759 = vst.msk [vmem:[#allocation4 + $0x20] sm:$0xff] %vm5756, %v5569
      %5760 = vst.msk [vmem:[#allocation4 + $0x30] sm:$0xff] %vm5756, %v5571
      %5761 = vst.msk [vmem:[#allocation4 + $0x40] sm:$0xff] %vm5756, %v5573
      %5762 = vst.msk [vmem:[#allocation4 + $0x50] sm:$0xff] %vm5756, %v5575
      %5763 = vst.msk [vmem:[#allocation4 + $0x60] sm:$0xff] %vm5756, %v5577
      %5764 = vst.msk [vmem:[#allocation4 + $0x70] sm:$0xff] %vm5756, %v5579
      %5765 = vst.msk [vmem:[#allocation4 + $0x80] sm:$0xff] %vm5756, %v5581
      %5766 = vst.msk [vmem:[#allocation4 + $0x90] sm:$0xff] %vm5756, %v5583
      %5767 = vst.msk [vmem:[#allocation4 + $0xa0] sm:$0xff] %vm5756, %v5585
      %5768 = vst.msk [vmem:[#allocation4 + $0xb0] sm:$0xff] %vm5756, %v5587
      %5769 = vst.msk [vmem:[#allocation4 + $0xc0] sm:$0xff] %vm5756, %v5589
      %5770 = vst.msk [vmem:[#allocation4 + $0xd0] sm:$0xff] %vm5756, %v5591
      %5771 = vst.msk [vmem:[#allocation4 + $0xe0] sm:$0xff] %vm5756, %v5593
      %5772 = vst.msk [vmem:[#allocation4 + $0xf0] sm:$0xff] %vm5756, %v5595
      %5773 = vst.msk [vmem:[#allocation4 + $0x100] sm:$0xff] %vm5756, %v5597
      %5774 = vst.msk [vmem:[#allocation4 + $0x110] sm:$0xff] %vm5756, %v5599
      %5775 = vst.msk [vmem:[#allocation4 + $0x120] sm:$0xff] %vm5756, %v5601
      %5776 = vst.msk [vmem:[#allocation4 + $0x130] sm:$0xff] %vm5756, %v5603
      %5777 = vst.msk [vmem:[#allocation4 + $0x140] sm:$0xff] %vm5756, %v5605
      %5778 = vst.msk [vmem:[#allocation4 + $0x150] sm:$0xff] %vm5756, %v5607
      %5779 = vst.msk [vmem:[#allocation4 + $0x160] sm:$0xff] %vm5756, %v5609
      %5780 = vst.msk [vmem:[#allocation4 + $0x170] sm:$0xff] %vm5756, %v5611
      %5781 = vst.msk [vmem:[#allocation4 + $0x180] sm:$0xff] %vm5756, %v5613
      %5782 = vst.msk [vmem:[#allocation4 + $0x190] sm:$0xff] %vm5756, %v5615
      %5783 = vst.msk [vmem:[#allocation4 + $0x1a0] sm:$0xff] %vm5756, %v5617
      %5784 = vst.msk [vmem:[#allocation4 + $0x1b0] sm:$0xff] %vm5756, %v5619
      %5785 = vst.msk [vmem:[#allocation4 + $0x1c0] sm:$0xff] %vm5756, %v5621
      %5786 = vst.msk [vmem:[#allocation4 + $0x1d0] sm:$0xff] %vm5756, %v5623
      %5787 = vst.msk [vmem:[#allocation4 + $0x1e0] sm:$0xff] %vm5756, %v5625
      %5788 = vst.msk [vmem:[#allocation4 + $0x1f0] sm:$0xff] %vm5756, %v5627
      %5789 = vst.msk [vmem:[#allocation4 + $0x200] sm:$0xff] %vm5756, %v5629
      %5790 = vst.msk [vmem:[#allocation4 + $0x210] sm:$0xff] %vm5756, %v5631
      %5791 = vst.msk [vmem:[#allocation4 + $0x220] sm:$0xff] %vm5756, %v5633
      %5792 = vst.msk [vmem:[#allocation4 + $0x230] sm:$0xff] %vm5756, %v5635
      %5793 = vst.msk [vmem:[#allocation4 + $0x240] sm:$0xff] %vm5756, %v5637
      %5794 = vst.msk [vmem:[#allocation4 + $0x250] sm:$0xff] %vm5756, %v5639
      %5795 = vst.msk [vmem:[#allocation4 + $0x260] sm:$0xff] %vm5756, %v5641
      %5796 = vst.msk [vmem:[#allocation4 + $0x270] sm:$0xff] %vm5756, %v5643
      %5797 = vst.msk [vmem:[#allocation4 + $0x280] sm:$0xff] %vm5756, %v5645
      %5798 = vst.msk [vmem:[#allocation4 + $0x290] sm:$0xff] %vm5756, %v5647
      %5799 = vst.msk [vmem:[#allocation4 + $0x2a0] sm:$0xff] %vm5756, %v5649
      %5800 = vst.msk [vmem:[#allocation4 + $0x2b0] sm:$0xff] %vm5756, %v5651
      %5801 = vst.msk [vmem:[#allocation4 + $0x2c0] sm:$0xff] %vm5756, %v5653
      %5802 = vst.msk [vmem:[#allocation4 + $0x2d0] sm:$0xff] %vm5756, %v5655
      %5803 = vst.msk [vmem:[#allocation4 + $0x2e0] sm:$0xff] %vm5756, %v5657
      %5804 = vst.msk [vmem:[#allocation4 + $0x2f0] sm:$0xff] %vm5756, %v5659
      %5805 = vst.msk [vmem:[#allocation4 + $0x300] sm:$0xff] %vm5756, %v5661
      %5806 = vst.msk [vmem:[#allocation4 + $0x310] sm:$0xff] %vm5756, %v5663
      %5807 = vst.msk [vmem:[#allocation4 + $0x320] sm:$0xff] %vm5756, %v5665
      %5808 = vst.msk [vmem:[#allocation4 + $0x330] sm:$0xff] %vm5756, %v5667
      %5809 = vst.msk [vmem:[#allocation4 + $0x340] sm:$0xff] %vm5756, %v5669
      %5810 = vst.msk [vmem:[#allocation4 + $0x350] sm:$0xff] %vm5756, %v5671
      %5811 = vst.msk [vmem:[#allocation4 + $0x360] sm:$0xff] %vm5756, %v5673
      %5812 = vst.msk [vmem:[#allocation4 + $0x370] sm:$0xff] %vm5756, %v5675
      %5813 = vst.msk [vmem:[#allocation4 + $0x380] sm:$0xff] %vm5756, %v5677
      %5814 = vst.msk [vmem:[#allocation4 + $0x390] sm:$0xff] %vm5756, %v5679
      %5815 = vst.msk [vmem:[#allocation4 + $0x3a0] sm:$0xff] %vm5756, %v5681
      %5816 = vst.msk [vmem:[#allocation4 + $0x3b0] sm:$0xff] %vm5756, %v5683
      %5817 = vst.msk [vmem:[#allocation4 + $0x3c0] sm:$0xff] %vm5756, %v5685
      %5818 = vst.msk [vmem:[#allocation4 + $0x3d0] sm:$0xff] %vm5756, %v5687
      %5819 = vst.msk [vmem:[#allocation4 + $0x3e0] sm:$0xff] %vm5756, %v5689
      %5820 = vst.msk [vmem:[#allocation4 + $0x3f0] sm:$0xff] %vm5756, %v5691
      %s5821 = scalar_lea.vmem [#allocation3], 48
      %v5822 = vld [vmem:[%s5821] sm:$0xff]
      %v5823 = vld [vmem:[%s5821 + $0x8] sm:$0xff]
      %v5824 = vld [vmem:[%s5821 + $0x18] sm:$0xff]
      %v5825 = vld [vmem:[%s5821 + $0x20] sm:$0xff]
      %v5826 = vld [vmem:[%s5821 + $0x30] sm:$0xff]
      %v5827 = vld [vmem:[%s5821 + $0x38] sm:$0xff]
      %v5828 = vld [vmem:[%s5821 + $0x48] sm:$0xff]
      %v5829 = vld [vmem:[%s5821 + $0x50] sm:$0xff]
      %v5830 = vld [vmem:[%s5821 + $0x60] sm:$0xff]
      %v5831 = vld [vmem:[%s5821 + $0x68] sm:$0xff]
      %v5832 = vld [vmem:[%s5821 + $0x78] sm:$0xff]
      %v5833 = vld [vmem:[%s5821 + $0x80] sm:$0xff]
      %v5834 = vld [vmem:[%s5821 + $0x90] sm:$0xff]
      %v5835 = vld [vmem:[%s5821 + $0x98] sm:$0xff]
      %v5836 = vld [vmem:[%s5821 + $0xa8] sm:$0xff]
      %v5837 = vld [vmem:[%s5821 + $0xb0] sm:$0xff]
      %v5838 = vld [vmem:[%s5821 + $0xc0] sm:$0xff]
      %v5839 = vld [vmem:[%s5821 + $0xc8] sm:$0xff]
      %v5840 = vld [vmem:[%s5821 + $0xd8] sm:$0xff]
      %v5841 = vld [vmem:[%s5821 + $0xe0] sm:$0xff]
      %v5842 = vld [vmem:[%s5821 + $0xf0] sm:$0xff]
      %v5843 = vld [vmem:[%s5821 + $0xf8] sm:$0xff]
      %v5844 = vld [vmem:[%s5821 + $0x108] sm:$0xff]
      %v5845 = vld [vmem:[%s5821 + $0x110] sm:$0xff]
      %v5846 = vld [vmem:[%s5821 + $0x120] sm:$0xff]
      %v5847 = vld [vmem:[%s5821 + $0x128] sm:$0xff]
      %v5848 = vld [vmem:[%s5821 + $0x138] sm:$0xff]
      %v5849 = vld [vmem:[%s5821 + $0x140] sm:$0xff]
      %v5850 = vld [vmem:[%s5821 + $0x150] sm:$0xff]
      %v5851 = vld [vmem:[%s5821 + $0x158] sm:$0xff]
      %v5852 = vld [vmem:[%s5821 + $0x168] sm:$0xff]
      %v5853 = vld [vmem:[%s5821 + $0x170] sm:$0xff]
      %v5854 = vld [vmem:[%s5821 + $0x1b0] sm:$0xff]
      %v5855 = vld [vmem:[%s5821 + $0x1b8] sm:$0xff]
      %v5856 = vld [vmem:[%s5821 + $0x1c8] sm:$0xff]
      %v5857 = vld [vmem:[%s5821 + $0x1d0] sm:$0xff]
      %v5858 = vld [vmem:[%s5821 + $0x1e0] sm:$0xff]
      %v5859 = vld [vmem:[%s5821 + $0x1e8] sm:$0xff]
      %v5860 = vld [vmem:[%s5821 + $0x1f8] sm:$0xff]
      %v5861 = vld [vmem:[%s5821 + $0x200] sm:$0xff]
      %v5862 = vld [vmem:[%s5821 + $0x210] sm:$0xff]
      %v5863 = vld [vmem:[%s5821 + $0x218] sm:$0xff]
      %v5864 = vld [vmem:[%s5821 + $0x228] sm:$0xff]
      %v5865 = vld [vmem:[%s5821 + $0x230] sm:$0xff]
      %v5866 = vld [vmem:[%s5821 + $0x240] sm:$0xff]
      %v5867 = vld [vmem:[%s5821 + $0x248] sm:$0xff]
      %v5868 = vld [vmem:[%s5821 + $0x258] sm:$0xff]
      %v5869 = vld [vmem:[%s5821 + $0x260] sm:$0xff]
      %v5870 = vld [vmem:[%s5821 + $0x270] sm:$0xff]
      %v5871 = vld [vmem:[%s5821 + $0x278] sm:$0xff]
      %v5872 = vld [vmem:[%s5821 + $0x288] sm:$0xff]
      %v5873 = vld [vmem:[%s5821 + $0x290] sm:$0xff]
      %v5874 = vld [vmem:[%s5821 + $0x2a0] sm:$0xff]
      %v5875 = vld [vmem:[%s5821 + $0x2a8] sm:$0xff]
      %v5876 = vld [vmem:[%s5821 + $0x2b8] sm:$0xff]
      %v5877 = vld [vmem:[%s5821 + $0x2c0] sm:$0xff]
      %v5878 = vld [vmem:[%s5821 + $0x2d0] sm:$0xff]
      %v5879 = vld [vmem:[%s5821 + $0x2d8] sm:$0xff]
      %v5880 = vld [vmem:[%s5821 + $0x2e8] sm:$0xff]
      %v5881 = vld [vmem:[%s5821 + $0x2f0] sm:$0xff]
      %v5882 = vld [vmem:[%s5821 + $0x300] sm:$0xff]
      %v5883 = vld [vmem:[%s5821 + $0x308] sm:$0xff]
      %v5884 = vld [vmem:[%s5821 + $0x318] sm:$0xff]
      %v5885 = vld [vmem:[%s5821 + $0x320] sm:$0xff]
      %5950 = vrot.lane.b32.xlu0 %v5822, 96
      %v5951 = vpop.permute.xlu0 %5950
      %5952 = vrot.lane.b32.xlu0 %v5823, 96
      %v5953 = vpop.permute.xlu0 %5952
      %5954 = vrot.lane.b32.xlu0 %v5824, 96
      %v5955 = vpop.permute.xlu0 %5954
      %5956 = vrot.lane.b32.xlu0 %v5825, 96
      %v5957 = vpop.permute.xlu0 %5956
      %5958 = vrot.lane.b32.xlu0 %v5826, 96
      %v5959 = vpop.permute.xlu0 %5958
      %5960 = vrot.lane.b32.xlu0 %v5827, 96
      %v5961 = vpop.permute.xlu0 %5960
      %5962 = vrot.lane.b32.xlu0 %v5828, 96
      %v5963 = vpop.permute.xlu0 %5962
      %5964 = vrot.lane.b32.xlu0 %v5829, 96
      %v5965 = vpop.permute.xlu0 %5964
      %5966 = vrot.lane.b32.xlu0 %v5830, 96
      %v5967 = vpop.permute.xlu0 %5966
      %5968 = vrot.lane.b32.xlu0 %v5831, 96
      %v5969 = vpop.permute.xlu0 %5968
      %5970 = vrot.lane.b32.xlu0 %v5832, 96
      %v5971 = vpop.permute.xlu0 %5970
      %5972 = vrot.lane.b32.xlu0 %v5833, 96
      %v5973 = vpop.permute.xlu0 %5972
      %5974 = vrot.lane.b32.xlu0 %v5834, 96
      %v5975 = vpop.permute.xlu0 %5974
      %5976 = vrot.lane.b32.xlu0 %v5835, 96
      %v5977 = vpop.permute.xlu0 %5976
      %5978 = vrot.lane.b32.xlu0 %v5836, 96
      %v5979 = vpop.permute.xlu0 %5978
      %5980 = vrot.lane.b32.xlu0 %v5837, 96
      %v5981 = vpop.permute.xlu0 %5980
      %5982 = vrot.lane.b32.xlu0 %v5838, 96
      %v5983 = vpop.permute.xlu0 %5982
      %5984 = vrot.lane.b32.xlu0 %v5839, 96
      %v5985 = vpop.permute.xlu0 %5984
      %5986 = vrot.lane.b32.xlu0 %v5840, 96
      %v5987 = vpop.permute.xlu0 %5986
      %5988 = vrot.lane.b32.xlu0 %v5841, 96
      %v5989 = vpop.permute.xlu0 %5988
      %5990 = vrot.lane.b32.xlu0 %v5842, 96
      %v5991 = vpop.permute.xlu0 %5990
      %5992 = vrot.lane.b32.xlu0 %v5843, 96
      %v5993 = vpop.permute.xlu0 %5992
      %5994 = vrot.lane.b32.xlu0 %v5844, 96
      %v5995 = vpop.permute.xlu0 %5994
      %5996 = vrot.lane.b32.xlu0 %v5845, 96
      %v5997 = vpop.permute.xlu0 %5996
      %5998 = vrot.lane.b32.xlu0 %v5846, 96
      %v5999 = vpop.permute.xlu0 %5998
      %6000 = vrot.lane.b32.xlu0 %v5847, 96
      %v6001 = vpop.permute.xlu0 %6000
      %6002 = vrot.lane.b32.xlu0 %v5848, 96
      %v6003 = vpop.permute.xlu0 %6002
      %6004 = vrot.lane.b32.xlu0 %v5849, 96
      %v6005 = vpop.permute.xlu0 %6004
      %6006 = vrot.lane.b32.xlu0 %v5850, 96
      %v6007 = vpop.permute.xlu0 %6006
      %6008 = vrot.lane.b32.xlu0 %v5851, 96
      %v6009 = vpop.permute.xlu0 %6008
      %6010 = vrot.lane.b32.xlu0 %v5852, 96
      %v6011 = vpop.permute.xlu0 %6010
      %6012 = vrot.lane.b32.xlu0 %v5853, 96
      %v6013 = vpop.permute.xlu0 %6012
      %6014 = vrot.lane.b32.xlu0 %v5854, 96
      %v6015 = vpop.permute.xlu0 %6014
      %6016 = vrot.lane.b32.xlu0 %v5855, 96
      %v6017 = vpop.permute.xlu0 %6016
      %6018 = vrot.lane.b32.xlu0 %v5856, 96
      %v6019 = vpop.permute.xlu0 %6018
      %6020 = vrot.lane.b32.xlu0 %v5857, 96
      %v6021 = vpop.permute.xlu0 %6020
      %6022 = vrot.lane.b32.xlu0 %v5858, 96
      %v6023 = vpop.permute.xlu0 %6022
      %6024 = vrot.lane.b32.xlu0 %v5859, 96
      %v6025 = vpop.permute.xlu0 %6024
      %6026 = vrot.lane.b32.xlu0 %v5860, 96
      %v6027 = vpop.permute.xlu0 %6026
      %6028 = vrot.lane.b32.xlu0 %v5861, 96
      %v6029 = vpop.permute.xlu0 %6028
      %6030 = vrot.lane.b32.xlu0 %v5862, 96
      %v6031 = vpop.permute.xlu0 %6030
      %6032 = vrot.lane.b32.xlu0 %v5863, 96
      %v6033 = vpop.permute.xlu0 %6032
      %6034 = vrot.lane.b32.xlu0 %v5864, 96
      %v6035 = vpop.permute.xlu0 %6034
      %6036 = vrot.lane.b32.xlu0 %v5865, 96
      %v6037 = vpop.permute.xlu0 %6036
      %6038 = vrot.lane.b32.xlu0 %v5866, 96
      %v6039 = vpop.permute.xlu0 %6038
      %6040 = vrot.lane.b32.xlu0 %v5867, 96
      %v6041 = vpop.permute.xlu0 %6040
      %6042 = vrot.lane.b32.xlu0 %v5868, 96
      %v6043 = vpop.permute.xlu0 %6042
      %6044 = vrot.lane.b32.xlu0 %v5869, 96
      %v6045 = vpop.permute.xlu0 %6044
      %6046 = vrot.lane.b32.xlu0 %v5870, 96
      %v6047 = vpop.permute.xlu0 %6046
      %6048 = vrot.lane.b32.xlu0 %v5871, 96
      %v6049 = vpop.permute.xlu0 %6048
      %6050 = vrot.lane.b32.xlu0 %v5872, 96
      %v6051 = vpop.permute.xlu0 %6050
      %6052 = vrot.lane.b32.xlu0 %v5873, 96
      %v6053 = vpop.permute.xlu0 %6052
      %6054 = vrot.lane.b32.xlu0 %v5874, 96
      %v6055 = vpop.permute.xlu0 %6054
      %6056 = vrot.lane.b32.xlu0 %v5875, 96
      %v6057 = vpop.permute.xlu0 %6056
      %6058 = vrot.lane.b32.xlu0 %v5876, 96
      %v6059 = vpop.permute.xlu0 %6058
      %6060 = vrot.lane.b32.xlu0 %v5877, 96
      %v6061 = vpop.permute.xlu0 %6060
      %6062 = vrot.lane.b32.xlu0 %v5878, 96
      %v6063 = vpop.permute.xlu0 %6062
      %6064 = vrot.lane.b32.xlu0 %v5879, 96
      %v6065 = vpop.permute.xlu0 %6064
      %6066 = vrot.lane.b32.xlu0 %v5880, 96
      %v6067 = vpop.permute.xlu0 %6066
      %6068 = vrot.lane.b32.xlu0 %v5881, 96
      %v6069 = vpop.permute.xlu0 %6068
      %6070 = vrot.lane.b32.xlu0 %v5882, 96
      %v6071 = vpop.permute.xlu0 %6070
      %6072 = vrot.lane.b32.xlu0 %v5883, 96
      %v6073 = vpop.permute.xlu0 %6072
      %6074 = vrot.lane.b32.xlu0 %v5884, 96
      %v6075 = vpop.permute.xlu0 %6074
      %6076 = vrot.lane.b32.xlu0 %v5885, 96
      %v6077 = vpop.permute.xlu0 %6076
      %vm6142 = vcmask 917248
      %6143 = vst.msk [vmem:[#allocation4] sm:$0xff] %vm6142, %v5951
      %6144 = vst.msk [vmem:[#allocation4 + $0x10] sm:$0xff] %vm6142, %v5953
      %6145 = vst.msk [vmem:[#allocation4 + $0x20] sm:$0xff] %vm6142, %v5955
      %6146 = vst.msk [vmem:[#allocation4 + $0x30] sm:$0xff] %vm6142, %v5957
      %6147 = vst.msk [vmem:[#allocation4 + $0x40] sm:$0xff] %vm6142, %v5959
      %6148 = vst.msk [vmem:[#allocation4 + $0x50] sm:$0xff] %vm6142, %v5961
      %6149 = vst.msk [vmem:[#allocation4 + $0x60] sm:$0xff] %vm6142, %v5963
      %6150 = vst.msk [vmem:[#allocation4 + $0x70] sm:$0xff] %vm6142, %v5965
      %6151 = vst.msk [vmem:[#allocation4 + $0x80] sm:$0xff] %vm6142, %v5967
      %6152 = vst.msk [vmem:[#allocation4 + $0x90] sm:$0xff] %vm6142, %v5969
      %6153 = vst.msk [vmem:[#allocation4 + $0xa0] sm:$0xff] %vm6142, %v5971
      %6154 = vst.msk [vmem:[#allocation4 + $0xb0] sm:$0xff] %vm6142, %v5973
      %6155 = vst.msk [vmem:[#allocation4 + $0xc0] sm:$0xff] %vm6142, %v5975
      %6156 = vst.msk [vmem:[#allocation4 + $0xd0] sm:$0xff] %vm6142, %v5977
      %6157 = vst.msk [vmem:[#allocation4 + $0xe0] sm:$0xff] %vm6142, %v5979
      %6158 = vst.msk [vmem:[#allocation4 + $0xf0] sm:$0xff] %vm6142, %v5981
      %6159 = vst.msk [vmem:[#allocation4 + $0x100] sm:$0xff] %vm6142, %v5983
      %6160 = vst.msk [vmem:[#allocation4 + $0x110] sm:$0xff] %vm6142, %v5985
      %6161 = vst.msk [vmem:[#allocation4 + $0x120] sm:$0xff] %vm6142, %v5987
      %6162 = vst.msk [vmem:[#allocation4 + $0x130] sm:$0xff] %vm6142, %v5989
      %6163 = vst.msk [vmem:[#allocation4 + $0x140] sm:$0xff] %vm6142, %v5991
      %6164 = vst.msk [vmem:[#allocation4 + $0x150] sm:$0xff] %vm6142, %v5993
      %6165 = vst.msk [vmem:[#allocation4 + $0x160] sm:$0xff] %vm6142, %v5995
      %6166 = vst.msk [vmem:[#allocation4 + $0x170] sm:$0xff] %vm6142, %v5997
      %6167 = vst.msk [vmem:[#allocation4 + $0x180] sm:$0xff] %vm6142, %v5999
      %6168 = vst.msk [vmem:[#allocation4 + $0x190] sm:$0xff] %vm6142, %v6001
      %6169 = vst.msk [vmem:[#allocation4 + $0x1a0] sm:$0xff] %vm6142, %v6003
      %6170 = vst.msk [vmem:[#allocation4 + $0x1b0] sm:$0xff] %vm6142, %v6005
      %6171 = vst.msk [vmem:[#allocation4 + $0x1c0] sm:$0xff] %vm6142, %v6007
      %6172 = vst.msk [vmem:[#allocation4 + $0x1d0] sm:$0xff] %vm6142, %v6009
      %6173 = vst.msk [vmem:[#allocation4 + $0x1e0] sm:$0xff] %vm6142, %v6011
      %6174 = vst.msk [vmem:[#allocation4 + $0x1f0] sm:$0xff] %vm6142, %v6013
      %6175 = vst.msk [vmem:[#allocation4 + $0x200] sm:$0xff] %vm6142, %v6015
      %6176 = vst.msk [vmem:[#allocation4 + $0x210] sm:$0xff] %vm6142, %v6017
      %6177 = vst.msk [vmem:[#allocation4 + $0x220] sm:$0xff] %vm6142, %v6019
      %6178 = vst.msk [vmem:[#allocation4 + $0x230] sm:$0xff] %vm6142, %v6021
      %6179 = vst.msk [vmem:[#allocation4 + $0x240] sm:$0xff] %vm6142, %v6023
      %6180 = vst.msk [vmem:[#allocation4 + $0x250] sm:$0xff] %vm6142, %v6025
      %6181 = vst.msk [vmem:[#allocation4 + $0x260] sm:$0xff] %vm6142, %v6027
      %6182 = vst.msk [vmem:[#allocation4 + $0x270] sm:$0xff] %vm6142, %v6029
      %6183 = vst.msk [vmem:[#allocation4 + $0x280] sm:$0xff] %vm6142, %v6031
      %6184 = vst.msk [vmem:[#allocation4 + $0x290] sm:$0xff] %vm6142, %v6033
      %6185 = vst.msk [vmem:[#allocation4 + $0x2a0] sm:$0xff] %vm6142, %v6035
      %6186 = vst.msk [vmem:[#allocation4 + $0x2b0] sm:$0xff] %vm6142, %v6037
      %6187 = vst.msk [vmem:[#allocation4 + $0x2c0] sm:$0xff] %vm6142, %v6039
      %6188 = vst.msk [vmem:[#allocation4 + $0x2d0] sm:$0xff] %vm6142, %v6041
      %6189 = vst.msk [vmem:[#allocation4 + $0x2e0] sm:$0xff] %vm6142, %v6043
      %6190 = vst.msk [vmem:[#allocation4 + $0x2f0] sm:$0xff] %vm6142, %v6045
      %6191 = vst.msk [vmem:[#allocation4 + $0x300] sm:$0xff] %vm6142, %v6047
      %6192 = vst.msk [vmem:[#allocation4 + $0x310] sm:$0xff] %vm6142, %v6049
      %6193 = vst.msk [vmem:[#allocation4 + $0x320] sm:$0xff] %vm6142, %v6051
      %6194 = vst.msk [vmem:[#allocation4 + $0x330] sm:$0xff] %vm6142, %v6053
      %6195 = vst.msk [vmem:[#allocation4 + $0x340] sm:$0xff] %vm6142, %v6055
      %6196 = vst.msk [vmem:[#allocation4 + $0x350] sm:$0xff] %vm6142, %v6057
      %6197 = vst.msk [vmem:[#allocation4 + $0x360] sm:$0xff] %vm6142, %v6059
      %6198 = vst.msk [vmem:[#allocation4 + $0x370] sm:$0xff] %vm6142, %v6061
      %6199 = vst.msk [vmem:[#allocation4 + $0x380] sm:$0xff] %vm6142, %v6063
      %6200 = vst.msk [vmem:[#allocation4 + $0x390] sm:$0xff] %vm6142, %v6065
      %6201 = vst.msk [vmem:[#allocation4 + $0x3a0] sm:$0xff] %vm6142, %v6067
      %6202 = vst.msk [vmem:[#allocation4 + $0x3b0] sm:$0xff] %vm6142, %v6069
      %6203 = vst.msk [vmem:[#allocation4 + $0x3c0] sm:$0xff] %vm6142, %v6071
      %6204 = vst.msk [vmem:[#allocation4 + $0x3d0] sm:$0xff] %vm6142, %v6073
      %6205 = vst.msk [vmem:[#allocation4 + $0x3e0] sm:$0xff] %vm6142, %v6075
      %6206 = vst.msk [vmem:[#allocation4 + $0x3f0] sm:$0xff] %vm6142, %v6077
      %v6207 = vld [vmem:[%s5821 + $0x1] sm:$0xff]
      %v6208 = vld [vmem:[%s5821 + $0x9] sm:$0xff]
      %v6209 = vld [vmem:[%s5821 + $0x19] sm:$0xff]
      %v6210 = vld [vmem:[%s5821 + $0x21] sm:$0xff]
      %v6211 = vld [vmem:[%s5821 + $0x31] sm:$0xff]
      %v6212 = vld [vmem:[%s5821 + $0x39] sm:$0xff]
      %v6213 = vld [vmem:[%s5821 + $0x49] sm:$0xff]
      %v6214 = vld [vmem:[%s5821 + $0x51] sm:$0xff]
      %v6215 = vld [vmem:[%s5821 + $0x61] sm:$0xff]
      %v6216 = vld [vmem:[%s5821 + $0x69] sm:$0xff]
      %v6217 = vld [vmem:[%s5821 + $0x79] sm:$0xff]
      %v6218 = vld [vmem:[%s5821 + $0x81] sm:$0xff]
      %v6219 = vld [vmem:[%s5821 + $0x91] sm:$0xff]
      %v6220 = vld [vmem:[%s5821 + $0x99] sm:$0xff]
      %v6221 = vld [vmem:[%s5821 + $0xa9] sm:$0xff]
      %v6222 = vld [vmem:[%s5821 + $0xb1] sm:$0xff]
      %v6223 = vld [vmem:[%s5821 + $0xc1] sm:$0xff]
      %v6224 = vld [vmem:[%s5821 + $0xc9] sm:$0xff]
      %v6225 = vld [vmem:[%s5821 + $0xd9] sm:$0xff]
      %v6226 = vld [vmem:[%s5821 + $0xe1] sm:$0xff]
      %v6227 = vld [vmem:[%s5821 + $0xf1] sm:$0xff]
      %v6228 = vld [vmem:[%s5821 + $0xf9] sm:$0xff]
      %v6229 = vld [vmem:[%s5821 + $0x109] sm:$0xff]
      %v6230 = vld [vmem:[%s5821 + $0x111] sm:$0xff]
      %v6231 = vld [vmem:[%s5821 + $0x121] sm:$0xff]
      %v6232 = vld [vmem:[%s5821 + $0x129] sm:$0xff]
      %v6233 = vld [vmem:[%s5821 + $0x139] sm:$0xff]
      %v6234 = vld [vmem:[%s5821 + $0x141] sm:$0xff]
      %v6235 = vld [vmem:[%s5821 + $0x151] sm:$0xff]
      %v6236 = vld [vmem:[%s5821 + $0x159] sm:$0xff]
      %v6237 = vld [vmem:[%s5821 + $0x169] sm:$0xff]
      %v6238 = vld [vmem:[%s5821 + $0x171] sm:$0xff]
      %v6239 = vld [vmem:[%s5821 + $0x1b1] sm:$0xff]
      %v6240 = vld [vmem:[%s5821 + $0x1b9] sm:$0xff]
      %v6241 = vld [vmem:[%s5821 + $0x1c9] sm:$0xff]
      %v6242 = vld [vmem:[%s5821 + $0x1d1] sm:$0xff]
      %v6243 = vld [vmem:[%s5821 + $0x1e1] sm:$0xff]
      %v6244 = vld [vmem:[%s5821 + $0x1e9] sm:$0xff]
      %v6245 = vld [vmem:[%s5821 + $0x1f9] sm:$0xff]
      %v6246 = vld [vmem:[%s5821 + $0x201] sm:$0xff]
      %v6247 = vld [vmem:[%s5821 + $0x211] sm:$0xff]
      %v6248 = vld [vmem:[%s5821 + $0x219] sm:$0xff]
      %v6249 = vld [vmem:[%s5821 + $0x229] sm:$0xff]
      %v6250 = vld [vmem:[%s5821 + $0x231] sm:$0xff]
      %v6251 = vld [vmem:[%s5821 + $0x241] sm:$0xff]
      %v6252 = vld [vmem:[%s5821 + $0x249] sm:$0xff]
      %v6253 = vld [vmem:[%s5821 + $0x259] sm:$0xff]
      %v6254 = vld [vmem:[%s5821 + $0x261] sm:$0xff]
      %v6255 = vld [vmem:[%s5821 + $0x271] sm:$0xff]
      %v6256 = vld [vmem:[%s5821 + $0x279] sm:$0xff]
      %v6257 = vld [vmem:[%s5821 + $0x289] sm:$0xff]
      %v6258 = vld [vmem:[%s5821 + $0x291] sm:$0xff]
      %v6259 = vld [vmem:[%s5821 + $0x2a1] sm:$0xff]
      %v6260 = vld [vmem:[%s5821 + $0x2a9] sm:$0xff]
      %v6261 = vld [vmem:[%s5821 + $0x2b9] sm:$0xff]
      %v6262 = vld [vmem:[%s5821 + $0x2c1] sm:$0xff]
      %v6263 = vld [vmem:[%s5821 + $0x2d1] sm:$0xff]
      %v6264 = vld [vmem:[%s5821 + $0x2d9] sm:$0xff]
      %v6265 = vld [vmem:[%s5821 + $0x2e9] sm:$0xff]
      %v6266 = vld [vmem:[%s5821 + $0x2f1] sm:$0xff]
      %v6267 = vld [vmem:[%s5821 + $0x301] sm:$0xff]
      %v6268 = vld [vmem:[%s5821 + $0x309] sm:$0xff]
      %v6269 = vld [vmem:[%s5821 + $0x319] sm:$0xff]
      %v6270 = vld [vmem:[%s5821 + $0x321] sm:$0xff]
      %6335 = vrot.lane.b32.xlu0 %v6207, 112
      %v6336 = vpop.permute.xlu0 %6335
      %6337 = vrot.lane.b32.xlu0 %v6208, 112
      %v6338 = vpop.permute.xlu0 %6337
      %6339 = vrot.lane.b32.xlu0 %v6209, 112
      %v6340 = vpop.permute.xlu0 %6339
      %6341 = vrot.lane.b32.xlu0 %v6210, 112
      %v6342 = vpop.permute.xlu0 %6341
      %6343 = vrot.lane.b32.xlu0 %v6211, 112
      %v6344 = vpop.permute.xlu0 %6343
      %6345 = vrot.lane.b32.xlu0 %v6212, 112
      %v6346 = vpop.permute.xlu0 %6345
      %6347 = vrot.lane.b32.xlu0 %v6213, 112
      %v6348 = vpop.permute.xlu0 %6347
      %6349 = vrot.lane.b32.xlu0 %v6214, 112
      %v6350 = vpop.permute.xlu0 %6349
      %6351 = vrot.lane.b32.xlu0 %v6215, 112
      %v6352 = vpop.permute.xlu0 %6351
      %6353 = vrot.lane.b32.xlu0 %v6216, 112
      %v6354 = vpop.permute.xlu0 %6353
      %6355 = vrot.lane.b32.xlu0 %v6217, 112
      %v6356 = vpop.permute.xlu0 %6355
      %6357 = vrot.lane.b32.xlu0 %v6218, 112
      %v6358 = vpop.permute.xlu0 %6357
      %6359 = vrot.lane.b32.xlu0 %v6219, 112
      %v6360 = vpop.permute.xlu0 %6359
      %6361 = vrot.lane.b32.xlu0 %v6220, 112
      %v6362 = vpop.permute.xlu0 %6361
      %6363 = vrot.lane.b32.xlu0 %v6221, 112
      %v6364 = vpop.permute.xlu0 %6363
      %6365 = vrot.lane.b32.xlu0 %v6222, 112
      %v6366 = vpop.permute.xlu0 %6365
      %6367 = vrot.lane.b32.xlu0 %v6223, 112
      %v6368 = vpop.permute.xlu0 %6367
      %6369 = vrot.lane.b32.xlu0 %v6224, 112
      %v6370 = vpop.permute.xlu0 %6369
      %6371 = vrot.lane.b32.xlu0 %v6225, 112
      %v6372 = vpop.permute.xlu0 %6371
      %6373 = vrot.lane.b32.xlu0 %v6226, 112
      %v6374 = vpop.permute.xlu0 %6373
      %6375 = vrot.lane.b32.xlu0 %v6227, 112
      %v6376 = vpop.permute.xlu0 %6375
      %6377 = vrot.lane.b32.xlu0 %v6228, 112
      %v6378 = vpop.permute.xlu0 %6377
      %6379 = vrot.lane.b32.xlu0 %v6229, 112
      %v6380 = vpop.permute.xlu0 %6379
      %6381 = vrot.lane.b32.xlu0 %v6230, 112
      %v6382 = vpop.permute.xlu0 %6381
      %6383 = vrot.lane.b32.xlu0 %v6231, 112
      %v6384 = vpop.permute.xlu0 %6383
      %6385 = vrot.lane.b32.xlu0 %v6232, 112
      %v6386 = vpop.permute.xlu0 %6385
      %6387 = vrot.lane.b32.xlu0 %v6233, 112
      %v6388 = vpop.permute.xlu0 %6387
      %6389 = vrot.lane.b32.xlu0 %v6234, 112
      %v6390 = vpop.permute.xlu0 %6389
      %6391 = vrot.lane.b32.xlu0 %v6235, 112
      %v6392 = vpop.permute.xlu0 %6391
      %6393 = vrot.lane.b32.xlu0 %v6236, 112
      %v6394 = vpop.permute.xlu0 %6393
      %6395 = vrot.lane.b32.xlu0 %v6237, 112
      %v6396 = vpop.permute.xlu0 %6395
      %6397 = vrot.lane.b32.xlu0 %v6238, 112
      %v6398 = vpop.permute.xlu0 %6397
      %6399 = vrot.lane.b32.xlu0 %v6239, 112
      %v6400 = vpop.permute.xlu0 %6399
      %6401 = vrot.lane.b32.xlu0 %v6240, 112
      %v6402 = vpop.permute.xlu0 %6401
      %6403 = vrot.lane.b32.xlu0 %v6241, 112
      %v6404 = vpop.permute.xlu0 %6403
      %6405 = vrot.lane.b32.xlu0 %v6242, 112
      %v6406 = vpop.permute.xlu0 %6405
      %6407 = vrot.lane.b32.xlu0 %v6243, 112
      %v6408 = vpop.permute.xlu0 %6407
      %6409 = vrot.lane.b32.xlu0 %v6244, 112
      %v6410 = vpop.permute.xlu0 %6409
      %6411 = vrot.lane.b32.xlu0 %v6245, 112
      %v6412 = vpop.permute.xlu0 %6411
      %6413 = vrot.lane.b32.xlu0 %v6246, 112
      %v6414 = vpop.permute.xlu0 %6413
      %6415 = vrot.lane.b32.xlu0 %v6247, 112
      %v6416 = vpop.permute.xlu0 %6415
      %6417 = vrot.lane.b32.xlu0 %v6248, 112
      %v6418 = vpop.permute.xlu0 %6417
      %6419 = vrot.lane.b32.xlu0 %v6249, 112
      %v6420 = vpop.permute.xlu0 %6419
      %6421 = vrot.lane.b32.xlu0 %v6250, 112
      %v6422 = vpop.permute.xlu0 %6421
      %6423 = vrot.lane.b32.xlu0 %v6251, 112
      %v6424 = vpop.permute.xlu0 %6423
      %6425 = vrot.lane.b32.xlu0 %v6252, 112
      %v6426 = vpop.permute.xlu0 %6425
      %6427 = vrot.lane.b32.xlu0 %v6253, 112
      %v6428 = vpop.permute.xlu0 %6427
      %6429 = vrot.lane.b32.xlu0 %v6254, 112
      %v6430 = vpop.permute.xlu0 %6429
      %6431 = vrot.lane.b32.xlu0 %v6255, 112
      %v6432 = vpop.permute.xlu0 %6431
      %6433 = vrot.lane.b32.xlu0 %v6256, 112
      %v6434 = vpop.permute.xlu0 %6433
      %6435 = vrot.lane.b32.xlu0 %v6257, 112
      %v6436 = vpop.permute.xlu0 %6435
      %6437 = vrot.lane.b32.xlu0 %v6258, 112
      %v6438 = vpop.permute.xlu0 %6437
      %6439 = vrot.lane.b32.xlu0 %v6259, 112
      %v6440 = vpop.permute.xlu0 %6439
      %6441 = vrot.lane.b32.xlu0 %v6260, 112
      %v6442 = vpop.permute.xlu0 %6441
      %6443 = vrot.lane.b32.xlu0 %v6261, 112
      %v6444 = vpop.permute.xlu0 %6443
      %6445 = vrot.lane.b32.xlu0 %v6262, 112
      %v6446 = vpop.permute.xlu0 %6445
      %6447 = vrot.lane.b32.xlu0 %v6263, 112
      %v6448 = vpop.permute.xlu0 %6447
      %6449 = vrot.lane.b32.xlu0 %v6264, 112
      %v6450 = vpop.permute.xlu0 %6449
      %6451 = vrot.lane.b32.xlu0 %v6265, 112
      %v6452 = vpop.permute.xlu0 %6451
      %6453 = vrot.lane.b32.xlu0 %v6266, 112
      %v6454 = vpop.permute.xlu0 %6453
      %6455 = vrot.lane.b32.xlu0 %v6267, 112
      %v6456 = vpop.permute.xlu0 %6455
      %6457 = vrot.lane.b32.xlu0 %v6268, 112
      %v6458 = vpop.permute.xlu0 %6457
      %6459 = vrot.lane.b32.xlu0 %v6269, 112
      %v6460 = vpop.permute.xlu0 %6459
      %6461 = vrot.lane.b32.xlu0 %v6270, 112
      %v6462 = vpop.permute.xlu0 %6461
      %vm6527 = vcmask 1048448
      %6528 = vst.msk [vmem:[#allocation4] sm:$0xff] %vm6527, %v6336
      %6529 = vst.msk [vmem:[#allocation4 + $0x10] sm:$0xff] %vm6527, %v6338
      %6530 = vst.msk [vmem:[#allocation4 + $0x20] sm:$0xff] %vm6527, %v6340
      %6531 = vst.msk [vmem:[#allocation4 + $0x30] sm:$0xff] %vm6527, %v6342
      %6532 = vst.msk [vmem:[#allocation4 + $0x40] sm:$0xff] %vm6527, %v6344
      %6533 = vst.msk [vmem:[#allocation4 + $0x50] sm:$0xff] %vm6527, %v6346
      %6534 = vst.msk [vmem:[#allocation4 + $0x60] sm:$0xff] %vm6527, %v6348
      %6535 = vst.msk [vmem:[#allocation4 + $0x70] sm:$0xff] %vm6527, %v6350
      %6536 = vst.msk [vmem:[#allocation4 + $0x80] sm:$0xff] %vm6527, %v6352
      %6537 = vst.msk [vmem:[#allocation4 + $0x90] sm:$0xff] %vm6527, %v6354
      %6538 = vst.msk [vmem:[#allocation4 + $0xa0] sm:$0xff] %vm6527, %v6356
      %6539 = vst.msk [vmem:[#allocation4 + $0xb0] sm:$0xff] %vm6527, %v6358
      %6540 = vst.msk [vmem:[#allocation4 + $0xc0] sm:$0xff] %vm6527, %v6360
      %6541 = vst.msk [vmem:[#allocation4 + $0xd0] sm:$0xff] %vm6527, %v6362
      %6542 = vst.msk [vmem:[#allocation4 + $0xe0] sm:$0xff] %vm6527, %v6364
      %6543 = vst.msk [vmem:[#allocation4 + $0xf0] sm:$0xff] %vm6527, %v6366
      %6544 = vst.msk [vmem:[#allocation4 + $0x100] sm:$0xff] %vm6527, %v6368
      %6545 = vst.msk [vmem:[#allocation4 + $0x110] sm:$0xff] %vm6527, %v6370
      %6546 = vst.msk [vmem:[#allocation4 + $0x120] sm:$0xff] %vm6527, %v6372
      %6547 = vst.msk [vmem:[#allocation4 + $0x130] sm:$0xff] %vm6527, %v6374
      %6548 = vst.msk [vmem:[#allocation4 + $0x140] sm:$0xff] %vm6527, %v6376
      %6549 = vst.msk [vmem:[#allocation4 + $0x150] sm:$0xff] %vm6527, %v6378
      %6550 = vst.msk [vmem:[#allocation4 + $0x160] sm:$0xff] %vm6527, %v6380
      %6551 = vst.msk [vmem:[#allocation4 + $0x170] sm:$0xff] %vm6527, %v6382
      %6552 = vst.msk [vmem:[#allocation4 + $0x180] sm:$0xff] %vm6527, %v6384
      %6553 = vst.msk [vmem:[#allocation4 + $0x190] sm:$0xff] %vm6527, %v6386
      %6554 = vst.msk [vmem:[#allocation4 + $0x1a0] sm:$0xff] %vm6527, %v6388
      %6555 = vst.msk [vmem:[#allocation4 + $0x1b0] sm:$0xff] %vm6527, %v6390
      %6556 = vst.msk [vmem:[#allocation4 + $0x1c0] sm:$0xff] %vm6527, %v6392
      %6557 = vst.msk [vmem:[#allocation4 + $0x1d0] sm:$0xff] %vm6527, %v6394
      %6558 = vst.msk [vmem:[#allocation4 + $0x1e0] sm:$0xff] %vm6527, %v6396
      %6559 = vst.msk [vmem:[#allocation4 + $0x1f0] sm:$0xff] %vm6527, %v6398
      %6560 = vst.msk [vmem:[#allocation4 + $0x200] sm:$0xff] %vm6527, %v6400
      %6561 = vst.msk [vmem:[#allocation4 + $0x210] sm:$0xff] %vm6527, %v6402
      %6562 = vst.msk [vmem:[#allocation4 + $0x220] sm:$0xff] %vm6527, %v6404
      %6563 = vst.msk [vmem:[#allocation4 + $0x230] sm:$0xff] %vm6527, %v6406
      %6564 = vst.msk [vmem:[#allocation4 + $0x240] sm:$0xff] %vm6527, %v6408
      %6565 = vst.msk [vmem:[#allocation4 + $0x250] sm:$0xff] %vm6527, %v6410
      %6566 = vst.msk [vmem:[#allocation4 + $0x260] sm:$0xff] %vm6527, %v6412
      %6567 = vst.msk [vmem:[#allocation4 + $0x270] sm:$0xff] %vm6527, %v6414
      %6568 = vst.msk [vmem:[#allocation4 + $0x280] sm:$0xff] %vm6527, %v6416
      %6569 = vst.msk [vmem:[#allocation4 + $0x290] sm:$0xff] %vm6527, %v6418
      %6570 = vst.msk [vmem:[#allocation4 + $0x2a0] sm:$0xff] %vm6527, %v6420
      %6571 = vst.msk [vmem:[#allocation4 + $0x2b0] sm:$0xff] %vm6527, %v6422
      %6572 = vst.msk [vmem:[#allocation4 + $0x2c0] sm:$0xff] %vm6527, %v6424
      %6573 = vst.msk [vmem:[#allocation4 + $0x2d0] sm:$0xff] %vm6527, %v6426
      %6574 = vst.msk [vmem:[#allocation4 + $0x2e0] sm:$0xff] %vm6527, %v6428
      %6575 = vst.msk [vmem:[#allocation4 + $0x2f0] sm:$0xff] %vm6527, %v6430
      %6576 = vst.msk [vmem:[#allocation4 + $0x300] sm:$0xff] %vm6527, %v6432
      %6577 = vst.msk [vmem:[#allocation4 + $0x310] sm:$0xff] %vm6527, %v6434
      %6578 = vst.msk [vmem:[#allocation4 + $0x320] sm:$0xff] %vm6527, %v6436
      %6579 = vst.msk [vmem:[#allocation4 + $0x330] sm:$0xff] %vm6527, %v6438
      %6580 = vst.msk [vmem:[#allocation4 + $0x340] sm:$0xff] %vm6527, %v6440
      %6581 = vst.msk [vmem:[#allocation4 + $0x350] sm:$0xff] %vm6527, %v6442
      %6582 = vst.msk [vmem:[#allocation4 + $0x360] sm:$0xff] %vm6527, %v6444
      %6583 = vst.msk [vmem:[#allocation4 + $0x370] sm:$0xff] %vm6527, %v6446
      %6584 = vst.msk [vmem:[#allocation4 + $0x380] sm:$0xff] %vm6527, %v6448
      %6585 = vst.msk [vmem:[#allocation4 + $0x390] sm:$0xff] %vm6527, %v6450
      %6586 = vst.msk [vmem:[#allocation4 + $0x3a0] sm:$0xff] %vm6527, %v6452
      %6587 = vst.msk [vmem:[#allocation4 + $0x3b0] sm:$0xff] %vm6527, %v6454
      %6588 = vst.msk [vmem:[#allocation4 + $0x3c0] sm:$0xff] %vm6527, %v6456
      %6589 = vst.msk [vmem:[#allocation4 + $0x3d0] sm:$0xff] %vm6527, %v6458
      %6590 = vst.msk [vmem:[#allocation4 + $0x3e0] sm:$0xff] %vm6527, %v6460
      %6591 = vst.msk [vmem:[#allocation4 + $0x3f0] sm:$0xff] %vm6527, %v6462
      %v6592 = vld [vmem:[%s5821 + $0x2] sm:$0xff]
      %v6593 = vld [vmem:[%s5821 + $0xa] sm:$0xff]
      %v6594 = vld [vmem:[%s5821 + $0x1a] sm:$0xff]
      %v6595 = vld [vmem:[%s5821 + $0x22] sm:$0xff]
      %v6596 = vld [vmem:[%s5821 + $0x32] sm:$0xff]
      %v6597 = vld [vmem:[%s5821 + $0x3a] sm:$0xff]
      %v6598 = vld [vmem:[%s5821 + $0x4a] sm:$0xff]
      %v6599 = vld [vmem:[%s5821 + $0x52] sm:$0xff]
      %v6600 = vld [vmem:[%s5821 + $0x62] sm:$0xff]
      %v6601 = vld [vmem:[%s5821 + $0x6a] sm:$0xff]
      %v6602 = vld [vmem:[%s5821 + $0x7a] sm:$0xff]
      %v6603 = vld [vmem:[%s5821 + $0x82] sm:$0xff]
      %v6604 = vld [vmem:[%s5821 + $0x92] sm:$0xff]
      %v6605 = vld [vmem:[%s5821 + $0x9a] sm:$0xff]
      %v6606 = vld [vmem:[%s5821 + $0xaa] sm:$0xff]
      %v6607 = vld [vmem:[%s5821 + $0xb2] sm:$0xff]
      %v6608 = vld [vmem:[%s5821 + $0xc2] sm:$0xff]
      %v6609 = vld [vmem:[%s5821 + $0xca] sm:$0xff]
      %v6610 = vld [vmem:[%s5821 + $0xda] sm:$0xff]
      %v6611 = vld [vmem:[%s5821 + $0xe2] sm:$0xff]
      %v6612 = vld [vmem:[%s5821 + $0xf2] sm:$0xff]
      %v6613 = vld [vmem:[%s5821 + $0xfa] sm:$0xff]
      %v6614 = vld [vmem:[%s5821 + $0x10a] sm:$0xff]
      %v6615 = vld [vmem:[%s5821 + $0x112] sm:$0xff]
      %v6616 = vld [vmem:[%s5821 + $0x122] sm:$0xff]
      %v6617 = vld [vmem:[%s5821 + $0x12a] sm:$0xff]
      %v6618 = vld [vmem:[%s5821 + $0x13a] sm:$0xff]
      %v6619 = vld [vmem:[%s5821 + $0x142] sm:$0xff]
      %v6620 = vld [vmem:[%s5821 + $0x152] sm:$0xff]
      %v6621 = vld [vmem:[%s5821 + $0x15a] sm:$0xff]
      %v6622 = vld [vmem:[%s5821 + $0x16a] sm:$0xff]
      %v6623 = vld [vmem:[%s5821 + $0x172] sm:$0xff]
      %v6624 = vld [vmem:[%s5821 + $0x1b2] sm:$0xff]
      %v6625 = vld [vmem:[%s5821 + $0x1ba] sm:$0xff]
      %v6626 = vld [vmem:[%s5821 + $0x1ca] sm:$0xff]
      %v6627 = vld [vmem:[%s5821 + $0x1d2] sm:$0xff]
      %v6628 = vld [vmem:[%s5821 + $0x1e2] sm:$0xff]
      %v6629 = vld [vmem:[%s5821 + $0x1ea] sm:$0xff]
      %v6630 = vld [vmem:[%s5821 + $0x1fa] sm:$0xff]
      %v6631 = vld [vmem:[%s5821 + $0x202] sm:$0xff]
      %v6632 = vld [vmem:[%s5821 + $0x212] sm:$0xff]
      %v6633 = vld [vmem:[%s5821 + $0x21a] sm:$0xff]
      %v6634 = vld [vmem:[%s5821 + $0x22a] sm:$0xff]
      %v6635 = vld [vmem:[%s5821 + $0x232] sm:$0xff]
      %v6636 = vld [vmem:[%s5821 + $0x242] sm:$0xff]
      %v6637 = vld [vmem:[%s5821 + $0x24a] sm:$0xff]
      %v6638 = vld [vmem:[%s5821 + $0x25a] sm:$0xff]
      %v6639 = vld [vmem:[%s5821 + $0x262] sm:$0xff]
      %v6640 = vld [vmem:[%s5821 + $0x272] sm:$0xff]
      %v6641 = vld [vmem:[%s5821 + $0x27a] sm:$0xff]
      %v6642 = vld [vmem:[%s5821 + $0x28a] sm:$0xff]
      %v6643 = vld [vmem:[%s5821 + $0x292] sm:$0xff]
      %v6644 = vld [vmem:[%s5821 + $0x2a2] sm:$0xff]
      %v6645 = vld [vmem:[%s5821 + $0x2aa] sm:$0xff]
      %v6646 = vld [vmem:[%s5821 + $0x2ba] sm:$0xff]
      %v6647 = vld [vmem:[%s5821 + $0x2c2] sm:$0xff]
      %v6648 = vld [vmem:[%s5821 + $0x2d2] sm:$0xff]
      %v6649 = vld [vmem:[%s5821 + $0x2da] sm:$0xff]
      %v6650 = vld [vmem:[%s5821 + $0x2ea] sm:$0xff]
      %v6651 = vld [vmem:[%s5821 + $0x2f2] sm:$0xff]
      %v6652 = vld [vmem:[%s5821 + $0x302] sm:$0xff]
      %v6653 = vld [vmem:[%s5821 + $0x30a] sm:$0xff]
      %v6654 = vld [vmem:[%s5821 + $0x31a] sm:$0xff]
      %v6655 = vld [vmem:[%s5821 + $0x322] sm:$0xff]
      %6656 = vst.msk [vmem:[#allocation4 + $0x8] sm:$0xff] %vm337, %v6592
      %6657 = vst.msk [vmem:[#allocation4 + $0x18] sm:$0xff] %vm337, %v6593
      %6658 = vst.msk [vmem:[#allocation4 + $0x28] sm:$0xff] %vm337, %v6594
      %6659 = vst.msk [vmem:[#allocation4 + $0x38] sm:$0xff] %vm337, %v6595
      %6660 = vst.msk [vmem:[#allocation4 + $0x48] sm:$0xff] %vm337, %v6596
      %6661 = vst.msk [vmem:[#allocation4 + $0x58] sm:$0xff] %vm337, %v6597
      %6662 = vst.msk [vmem:[#allocation4 + $0x68] sm:$0xff] %vm337, %v6598
      %6663 = vst.msk [vmem:[#allocation4 + $0x78] sm:$0xff] %vm337, %v6599
      %6664 = vst.msk [vmem:[#allocation4 + $0x88] sm:$0xff] %vm337, %v6600
      %6665 = vst.msk [vmem:[#allocation4 + $0x98] sm:$0xff] %vm337, %v6601
      %6666 = vst.msk [vmem:[#allocation4 + $0xa8] sm:$0xff] %vm337, %v6602
      %6667 = vst.msk [vmem:[#allocation4 + $0xb8] sm:$0xff] %vm337, %v6603
      %6668 = vst.msk [vmem:[#allocation4 + $0xc8] sm:$0xff] %vm337, %v6604
      %6669 = vst.msk [vmem:[#allocation4 + $0xd8] sm:$0xff] %vm337, %v6605
      %6670 = vst.msk [vmem:[#allocation4 + $0xe8] sm:$0xff] %vm337, %v6606
      %6671 = vst.msk [vmem:[#allocation4 + $0xf8] sm:$0xff] %vm337, %v6607
      %6672 = vst.msk [vmem:[#allocation4 + $0x108] sm:$0xff] %vm337, %v6608
      %6673 = vst.msk [vmem:[#allocation4 + $0x118] sm:$0xff] %vm337, %v6609
      %6674 = vst.msk [vmem:[#allocation4 + $0x128] sm:$0xff] %vm337, %v6610
      %6675 = vst.msk [vmem:[#allocation4 + $0x138] sm:$0xff] %vm337, %v6611
      %6676 = vst.msk [vmem:[#allocation4 + $0x148] sm:$0xff] %vm337, %v6612
      %6677 = vst.msk [vmem:[#allocation4 + $0x158] sm:$0xff] %vm337, %v6613
      %6678 = vst.msk [vmem:[#allocation4 + $0x168] sm:$0xff] %vm337, %v6614
      %6679 = vst.msk [vmem:[#allocation4 + $0x178] sm:$0xff] %vm337, %v6615
      %6680 = vst.msk [vmem:[#allocation4 + $0x188] sm:$0xff] %vm337, %v6616
      %6681 = vst.msk [vmem:[#allocation4 + $0x198] sm:$0xff] %vm337, %v6617
      %6682 = vst.msk [vmem:[#allocation4 + $0x1a8] sm:$0xff] %vm337, %v6618
      %6683 = vst.msk [vmem:[#allocation4 + $0x1b8] sm:$0xff] %vm337, %v6619
      %6684 = vst.msk [vmem:[#allocation4 + $0x1c8] sm:$0xff] %vm337, %v6620
      %6685 = vst.msk [vmem:[#allocation4 + $0x1d8] sm:$0xff] %vm337, %v6621
      %6686 = vst.msk [vmem:[#allocation4 + $0x1e8] sm:$0xff] %vm337, %v6622
      %6687 = vst.msk [vmem:[#allocation4 + $0x1f8] sm:$0xff] %vm337, %v6623
      %6688 = vst.msk [vmem:[#allocation4 + $0x208] sm:$0xff] %vm337, %v6624
      %6689 = vst.msk [vmem:[#allocation4 + $0x218] sm:$0xff] %vm337, %v6625
      %6690 = vst.msk [vmem:[#allocation4 + $0x228] sm:$0xff] %vm337, %v6626
      %6691 = vst.msk [vmem:[#allocation4 + $0x238] sm:$0xff] %vm337, %v6627
      %6692 = vst.msk [vmem:[#allocation4 + $0x248] sm:$0xff] %vm337, %v6628
      %6693 = vst.msk [vmem:[#allocation4 + $0x258] sm:$0xff] %vm337, %v6629
      %6694 = vst.msk [vmem:[#allocation4 + $0x268] sm:$0xff] %vm337, %v6630
      %6695 = vst.msk [vmem:[#allocation4 + $0x278] sm:$0xff] %vm337, %v6631
      %6696 = vst.msk [vmem:[#allocation4 + $0x288] sm:$0xff] %vm337, %v6632
      %6697 = vst.msk [vmem:[#allocation4 + $0x298] sm:$0xff] %vm337, %v6633
      %6698 = vst.msk [vmem:[#allocation4 + $0x2a8] sm:$0xff] %vm337, %v6634
      %6699 = vst.msk [vmem:[#allocation4 + $0x2b8] sm:$0xff] %vm337, %v6635
      %6700 = vst.msk [vmem:[#allocation4 + $0x2c8] sm:$0xff] %vm337, %v6636
      %6701 = vst.msk [vmem:[#allocation4 + $0x2d8] sm:$0xff] %vm337, %v6637
      %6702 = vst.msk [vmem:[#allocation4 + $0x2e8] sm:$0xff] %vm337, %v6638
      %6703 = vst.msk [vmem:[#allocation4 + $0x2f8] sm:$0xff] %vm337, %v6639
      %6704 = vst.msk [vmem:[#allocation4 + $0x308] sm:$0xff] %vm337, %v6640
      %6705 = vst.msk [vmem:[#allocation4 + $0x318] sm:$0xff] %vm337, %v6641
      %6706 = vst.msk [vmem:[#allocation4 + $0x328] sm:$0xff] %vm337, %v6642
      %6707 = vst.msk [vmem:[#allocation4 + $0x338] sm:$0xff] %vm337, %v6643
      %6708 = vst.msk [vmem:[#allocation4 + $0x348] sm:$0xff] %vm337, %v6644
      %6709 = vst.msk [vmem:[#allocation4 + $0x358] sm:$0xff] %vm337, %v6645
      %6710 = vst.msk [vmem:[#allocation4 + $0x368] sm:$0xff] %vm337, %v6646
      %6711 = vst.msk [vmem:[#allocation4 + $0x378] sm:$0xff] %vm337, %v6647
      %6712 = vst.msk [vmem:[#allocation4 + $0x388] sm:$0xff] %vm337, %v6648
      %6713 = vst.msk [vmem:[#allocation4 + $0x398] sm:$0xff] %vm337, %v6649
      %6714 = vst.msk [vmem:[#allocation4 + $0x3a8] sm:$0xff] %vm337, %v6650
      %6715 = vst.msk [vmem:[#allocation4 + $0x3b8] sm:$0xff] %vm337, %v6651
      %6716 = vst.msk [vmem:[#allocation4 + $0x3c8] sm:$0xff] %vm337, %v6652
      %6717 = vst.msk [vmem:[#allocation4 + $0x3d8] sm:$0xff] %vm337, %v6653
      %6718 = vst.msk [vmem:[#allocation4 + $0x3e8] sm:$0xff] %vm337, %v6654
      %6719 = vst.msk [vmem:[#allocation4 + $0x3f8] sm:$0xff] %vm337, %v6655
      %v6720 = vld [vmem:[#allocation4] sm:$0xff]
      %v6721 = vld [vmem:[#allocation4 + $0x8] sm:$0xff]
      %v6722 = vld [vmem:[#allocation4 + $0x10] sm:$0xff]
      %v6723 = vld [vmem:[#allocation4 + $0x18] sm:$0xff]
      %v6724 = vld [vmem:[#allocation4 + $0x20] sm:$0xff]
      %v6725 = vld [vmem:[#allocation4 + $0x28] sm:$0xff]
      %v6726 = vld [vmem:[#allocation4 + $0x30] sm:$0xff]
      %v6727 = vld [vmem:[#allocation4 + $0x38] sm:$0xff]
      %v6728 = vld [vmem:[#allocation4 + $0x40] sm:$0xff]
      %v6729 = vld [vmem:[#allocation4 + $0x48] sm:$0xff]
      %v6730 = vld [vmem:[#allocation4 + $0x50] sm:$0xff]
      %v6731 = vld [vmem:[#allocation4 + $0x58] sm:$0xff]
      %v6732 = vld [vmem:[#allocation4 + $0x60] sm:$0xff]
      %v6733 = vld [vmem:[#allocation4 + $0x68] sm:$0xff]
      %v6734 = vld [vmem:[#allocation4 + $0x70] sm:$0xff]
      %v6735 = vld [vmem:[#allocation4 + $0x78] sm:$0xff]
      %v6736 = vld [vmem:[#allocation4 + $0x80] sm:$0xff]
      %v6737 = vld [vmem:[#allocation4 + $0x88] sm:$0xff]
      %v6738 = vld [vmem:[#allocation4 + $0x90] sm:$0xff]
      %v6739 = vld [vmem:[#allocation4 + $0x98] sm:$0xff]
      %v6740 = vld [vmem:[#allocation4 + $0xa0] sm:$0xff]
      %v6741 = vld [vmem:[#allocation4 + $0xa8] sm:$0xff]
      %v6742 = vld [vmem:[#allocation4 + $0xb0] sm:$0xff]
      %v6743 = vld [vmem:[#allocation4 + $0xb8] sm:$0xff]
      %v6744 = vld [vmem:[#allocation4 + $0xc0] sm:$0xff]
      %v6745 = vld [vmem:[#allocation4 + $0xc8] sm:$0xff]
      %v6746 = vld [vmem:[#allocation4 + $0xd0] sm:$0xff]
      %v6747 = vld [vmem:[#allocation4 + $0xd8] sm:$0xff]
      %v6748 = vld [vmem:[#allocation4 + $0xe0] sm:$0xff]
      %v6749 = vld [vmem:[#allocation4 + $0xe8] sm:$0xff]
      %v6750 = vld [vmem:[#allocation4 + $0xf0] sm:$0xff]
      %v6751 = vld [vmem:[#allocation4 + $0xf8] sm:$0xff]
      %v6752 = vld [vmem:[#allocation4 + $0x100] sm:$0xff]
      %v6753 = vld [vmem:[#allocation4 + $0x108] sm:$0xff]
      %v6754 = vld [vmem:[#allocation4 + $0x110] sm:$0xff]
      %v6755 = vld [vmem:[#allocation4 + $0x118] sm:$0xff]
      %v6756 = vld [vmem:[#allocation4 + $0x120] sm:$0xff]
      %v6757 = vld [vmem:[#allocation4 + $0x128] sm:$0xff]
      %v6758 = vld [vmem:[#allocation4 + $0x130] sm:$0xff]
      %v6759 = vld [vmem:[#allocation4 + $0x138] sm:$0xff]
      %v6760 = vld [vmem:[#allocation4 + $0x140] sm:$0xff]
      %v6761 = vld [vmem:[#allocation4 + $0x148] sm:$0xff]
      %v6762 = vld [vmem:[#allocation4 + $0x150] sm:$0xff]
      %v6763 = vld [vmem:[#allocation4 + $0x158] sm:$0xff]
      %v6764 = vld [vmem:[#allocation4 + $0x160] sm:$0xff]
      %v6765 = vld [vmem:[#allocation4 + $0x168] sm:$0xff]
      %v6766 = vld [vmem:[#allocation4 + $0x170] sm:$0xff]
      %v6767 = vld [vmem:[#allocation4 + $0x178] sm:$0xff]
      %v6768 = vld [vmem:[#allocation4 + $0x180] sm:$0xff]
      %v6769 = vld [vmem:[#allocation4 + $0x188] sm:$0xff]
      %v6770 = vld [vmem:[#allocation4 + $0x190] sm:$0xff]
      %v6771 = vld [vmem:[#allocation4 + $0x198] sm:$0xff]
      %v6772 = vld [vmem:[#allocation4 + $0x1a0] sm:$0xff]
      %v6773 = vld [vmem:[#allocation4 + $0x1a8] sm:$0xff]
      %v6774 = vld [vmem:[#allocation4 + $0x1b0] sm:$0xff]
      %v6775 = vld [vmem:[#allocation4 + $0x1b8] sm:$0xff]
      %v6776 = vld [vmem:[#allocation4 + $0x1c0] sm:$0xff]
      %v6777 = vld [vmem:[#allocation4 + $0x1c8] sm:$0xff]
      %v6778 = vld [vmem:[#allocation4 + $0x1d0] sm:$0xff]
      %v6779 = vld [vmem:[#allocation4 + $0x1d8] sm:$0xff]
      %v6780 = vld [vmem:[#allocation4 + $0x1e0] sm:$0xff]
      %v6781 = vld [vmem:[#allocation4 + $0x1e8] sm:$0xff]
      %v6782 = vld [vmem:[#allocation4 + $0x1f0] sm:$0xff]
      %v6783 = vld [vmem:[#allocation4 + $0x1f8] sm:$0xff]
      %v6784 = vld [vmem:[#allocation4 + $0x200] sm:$0xff]
      %v6785 = vld [vmem:[#allocation4 + $0x208] sm:$0xff]
      %v6786 = vld [vmem:[#allocation4 + $0x210] sm:$0xff]
      %v6787 = vld [vmem:[#allocation4 + $0x218] sm:$0xff]
      %v6788 = vld [vmem:[#allocation4 + $0x220] sm:$0xff]
      %v6789 = vld [vmem:[#allocation4 + $0x228] sm:$0xff]
      %v6790 = vld [vmem:[#allocation4 + $0x230] sm:$0xff]
      %v6791 = vld [vmem:[#allocation4 + $0x238] sm:$0xff]
      %v6792 = vld [vmem:[#allocation4 + $0x240] sm:$0xff]
      %v6793 = vld [vmem:[#allocation4 + $0x248] sm:$0xff]
      %v6794 = vld [vmem:[#allocation4 + $0x250] sm:$0xff]
      %v6795 = vld [vmem:[#allocation4 + $0x258] sm:$0xff]
      %v6796 = vld [vmem:[#allocation4 + $0x260] sm:$0xff]
      %v6797 = vld [vmem:[#allocation4 + $0x268] sm:$0xff]
      %v6798 = vld [vmem:[#allocation4 + $0x270] sm:$0xff]
      %v6799 = vld [vmem:[#allocation4 + $0x278] sm:$0xff]
      %v6800 = vld [vmem:[#allocation4 + $0x280] sm:$0xff]
      %v6801 = vld [vmem:[#allocation4 + $0x288] sm:$0xff]
      %v6802 = vld [vmem:[#allocation4 + $0x290] sm:$0xff]
      %v6803 = vld [vmem:[#allocation4 + $0x298] sm:$0xff]
      %v6804 = vld [vmem:[#allocation4 + $0x2a0] sm:$0xff]
      %v6805 = vld [vmem:[#allocation4 + $0x2a8] sm:$0xff]
      %v6806 = vld [vmem:[#allocation4 + $0x2b0] sm:$0xff]
      %v6807 = vld [vmem:[#allocation4 + $0x2b8] sm:$0xff]
      %v6808 = vld [vmem:[#allocation4 + $0x2c0] sm:$0xff]
      %v6809 = vld [vmem:[#allocation4 + $0x2c8] sm:$0xff]
      %v6810 = vld [vmem:[#allocation4 + $0x2d0] sm:$0xff]
      %v6811 = vld [vmem:[#allocation4 + $0x2d8] sm:$0xff]
      %v6812 = vld [vmem:[#allocation4 + $0x2e0] sm:$0xff]
      %v6813 = vld [vmem:[#allocation4 + $0x2e8] sm:$0xff]
      %v6814 = vld [vmem:[#allocation4 + $0x2f0] sm:$0xff]
      %v6815 = vld [vmem:[#allocation4 + $0x2f8] sm:$0xff]
      %v6816 = vld [vmem:[#allocation4 + $0x300] sm:$0xff]
      %v6817 = vld [vmem:[#allocation4 + $0x308] sm:$0xff]
      %v6818 = vld [vmem:[#allocation4 + $0x310] sm:$0xff]
      %v6819 = vld [vmem:[#allocation4 + $0x318] sm:$0xff]
      %v6820 = vld [vmem:[#allocation4 + $0x320] sm:$0xff]
      %v6821 = vld [vmem:[#allocation4 + $0x328] sm:$0xff]
      %v6822 = vld [vmem:[#allocation4 + $0x330] sm:$0xff]
      %v6823 = vld [vmem:[#allocation4 + $0x338] sm:$0xff]
      %v6824 = vld [vmem:[#allocation4 + $0x340] sm:$0xff]
      %v6825 = vld [vmem:[#allocation4 + $0x348] sm:$0xff]
      %v6826 = vld [vmem:[#allocation4 + $0x350] sm:$0xff]
      %v6827 = vld [vmem:[#allocation4 + $0x358] sm:$0xff]
      %v6828 = vld [vmem:[#allocation4 + $0x360] sm:$0xff]
      %v6829 = vld [vmem:[#allocation4 + $0x368] sm:$0xff]
      %v6830 = vld [vmem:[#allocation4 + $0x370] sm:$0xff]
      %v6831 = vld [vmem:[#allocation4 + $0x378] sm:$0xff]
      %v6832 = vld [vmem:[#allocation4 + $0x380] sm:$0xff]
      %v6833 = vld [vmem:[#allocation4 + $0x388] sm:$0xff]
      %v6834 = vld [vmem:[#allocation4 + $0x390] sm:$0xff]
      %v6835 = vld [vmem:[#allocation4 + $0x398] sm:$0xff]
      %v6836 = vld [vmem:[#allocation4 + $0x3a0] sm:$0xff]
      %v6837 = vld [vmem:[#allocation4 + $0x3a8] sm:$0xff]
      %v6838 = vld [vmem:[#allocation4 + $0x3b0] sm:$0xff]
      %v6839 = vld [vmem:[#allocation4 + $0x3b8] sm:$0xff]
      %v6840 = vld [vmem:[#allocation4 + $0x3c0] sm:$0xff]
      %v6841 = vld [vmem:[#allocation4 + $0x3c8] sm:$0xff]
      %v6842 = vld [vmem:[#allocation4 + $0x3d0] sm:$0xff]
      %v6843 = vld [vmem:[#allocation4 + $0x3d8] sm:$0xff]
      %v6844 = vld [vmem:[#allocation4 + $0x3e0] sm:$0xff]
      %v6845 = vld [vmem:[#allocation4 + $0x3e8] sm:$0xff]
      %v6846 = vld [vmem:[#allocation4 + $0x3f0] sm:$0xff]
      %v6847 = vld [vmem:[#allocation4 + $0x3f8] sm:$0xff]
      %v6848 = vld [vmem:[%s3] sm:$0xff]
      %v6849 = vld [vmem:[%s3 + $0x8] sm:$0xff]
      %v6850 = vld [vmem:[%s3 + $0x10] sm:$0xff]
      %v6851 = vld [vmem:[%s3 + $0x18] sm:$0xff]
      %v6852 = vld [vmem:[%s3 + $0x20] sm:$0xff]
      %v6853 = vld [vmem:[%s3 + $0x28] sm:$0xff]
      %v6854 = vld [vmem:[%s3 + $0x30] sm:$0xff]
      %v6855 = vld [vmem:[%s3 + $0x38] sm:$0xff]
      %v6856 = vld [vmem:[%s3 + $0x40] sm:$0xff]
      %v6857 = vld [vmem:[%s3 + $0x48] sm:$0xff]
      %v6858 = vld [vmem:[%s3 + $0x50] sm:$0xff]
      %v6859 = vld [vmem:[%s3 + $0x58] sm:$0xff]
      %v6860 = vld [vmem:[%s3 + $0x60] sm:$0xff]
      %v6861 = vld [vmem:[%s3 + $0x68] sm:$0xff]
      %v6862 = vld [vmem:[%s3 + $0x70] sm:$0xff]
      %v6863 = vld [vmem:[%s3 + $0x78] sm:$0xff]
      %v6864 = vld [vmem:[%s3 + $0x80] sm:$0xff]
      %v6865 = vld [vmem:[%s3 + $0x88] sm:$0xff]
      %v6866 = vld [vmem:[%s4] sm:$0x1]
      %v6868 = vlaneseq
      %v6869 = vshrl.u32 %v6868, 7
      %v6870 = vsub.s32 0, %v6869
      %v6871 = vrot.slane %v6866, %v6870
      %v6874 = vsel %vm337, %v6721, 0
      %v6877 = vsel %vm337, %v6723, 0
      %v6880 = vsel %vm337, %v6725, 0
      %v6883 = vsel %vm337, %v6727, 0
      %v6886 = vsel %vm337, %v6729, 0
      %v6889 = vsel %vm337, %v6731, 0
      %v6892 = vsel %vm337, %v6733, 0
      %v6895 = vsel %vm337, %v6735, 0
      %v6898 = vsel %vm337, %v6737, 0
      %v6901 = vsel %vm337, %v6739, 0
      %v6904 = vsel %vm337, %v6741, 0
      %v6907 = vsel %vm337, %v6743, 0
      %v6910 = vsel %vm337, %v6745, 0
      %v6913 = vsel %vm337, %v6747, 0
      %v6916 = vsel %vm337, %v6749, 0
      %v6919 = vsel %vm337, %v6751, 0
      %v6922 = vsel %vm337, %v6753, 0
      %v6925 = vsel %vm337, %v6755, 0
      %v6928 = vsel %vm337, %v6757, 0
      %v6931 = vsel %vm337, %v6759, 0
      %v6934 = vsel %vm337, %v6761, 0
      %v6937 = vsel %vm337, %v6763, 0
      %v6940 = vsel %vm337, %v6765, 0
      %v6943 = vsel %vm337, %v6767, 0
      %v6946 = vsel %vm337, %v6769, 0
      %v6949 = vsel %vm337, %v6771, 0
      %v6952 = vsel %vm337, %v6773, 0
      %v6955 = vsel %vm337, %v6775, 0
      %v6958 = vsel %vm337, %v6777, 0
      %v6961 = vsel %vm337, %v6779, 0
      %v6964 = vsel %vm337, %v6781, 0
      %v6967 = vsel %vm337, %v6783, 0
      %v6970 = vsel %vm337, %v6785, 0
      %v6973 = vsel %vm337, %v6787, 0
      %v6976 = vsel %vm337, %v6789, 0
      %v6979 = vsel %vm337, %v6791, 0
      %v6982 = vsel %vm337, %v6793, 0
      %v6985 = vsel %vm337, %v6795, 0
      %v6988 = vsel %vm337, %v6797, 0
      %v6991 = vsel %vm337, %v6799, 0
      %v6994 = vsel %vm337, %v6801, 0
      %v6997 = vsel %vm337, %v6803, 0
      %v7000 = vsel %vm337, %v6805, 0
      %v7003 = vsel %vm337, %v6807, 0
      %v7006 = vsel %vm337, %v6809, 0
      %v7009 = vsel %vm337, %v6811, 0
      %v7012 = vsel %vm337, %v6813, 0
      %v7015 = vsel %vm337, %v6815, 0
      %v7018 = vsel %vm337, %v6817, 0
      %v7021 = vsel %vm337, %v6819, 0
      %v7024 = vsel %vm337, %v6821, 0
      %v7027 = vsel %vm337, %v6823, 0
      %v7030 = vsel %vm337, %v6825, 0
      %v7033 = vsel %vm337, %v6827, 0
      %v7036 = vsel %vm337, %v6829, 0
      %v7039 = vsel %vm337, %v6831, 0
      %v7042 = vsel %vm337, %v6833, 0
      %v7045 = vsel %vm337, %v6835, 0
      %v7048 = vsel %vm337, %v6837, 0
      %v7051 = vsel %vm337, %v6839, 0
      %v7054 = vsel %vm337, %v6841, 0
      %v7057 = vsel %vm337, %v6843, 0
      %v7060 = vsel %vm337, %v6845, 0
      %v7063 = vsel %vm337, %v6847, 0
      %7065 = vmatprep.subr.mxu0 0.0
      %7066 = vmatpush1.msra.mxu0 %v6848
      %7067 = vmatprep.subr.mxu0 0.0
      %7068 = vmatpush1.msra.mxu0 %v6849
      %7069 = vmatprep.subr.mxu0 0.0
      %7070 = vmatpush1.msra.mxu0 %v6850
      %7071 = vmatprep.subr.mxu0 0.0
      %7072 = vmatpush1.msra.mxu0 %v6851
      %7073 = vmatprep.subr.mxu0 0.0
      %7074 = vmatpush1.msra.mxu0 %v6852
      %7075 = vmatprep.subr.mxu0 0.0
      %7076 = vmatpush1.msra.mxu0 %v6853
      %7077 = vmatprep.subr.mxu0 0.0
      %7078 = vmatpush1.msra.mxu0 %v6854
      %7079 = vmatprep.subr.mxu0 0.0
      %7080 = vmatpush1.msra.mxu0 %v6855
      %7081 = vmatprep.subr.mxu0 0.0
      %7082 = vmatpush1.msra.mxu0 %v6856
      %7083 = vmatprep.subr.mxu0 0.0
      %7084 = vmatpush1.msra.mxu0 %v6857
      %7085 = vmatprep.subr.mxu0 0.0
      %7086 = vmatpush1.msra.mxu0 %v6858
      %7087 = vmatprep.subr.mxu0 0.0
      %7088 = vmatpush1.msra.mxu0 %v6859
      %7089 = vmatprep.subr.mxu0 0.0
      %7090 = vmatpush1.msra.mxu0 %v6860
      %7091 = vmatprep.subr.mxu0 0.0
      %7092 = vmatpush1.msra.mxu0 %v6861
      %7093 = vmatprep.subr.mxu0 0.0
      %7094 = vmatpush1.msra.mxu0 %v6862
      %7095 = vmatprep.subr.mxu0 0.0
      %7096 = vmatpush1.msra.mxu0 %v6863
      %7097 = vmatprep.subr.mxu0 0.0
      %7098 = vmatpush1.msra.mxu0 %v6864
      %7099 = vmatprep.subr.mxu0 0.0
      %7100 = vmatpush1.msra.mxu0 %v6865
      %7101 = vmatprep.subr.mxu0 0.0
      %7102 = vmatpush1.msra.mxu0 0.0
      %7103 = vmatprep.subr.mxu0 0.0
      %7104 = vmatpush1.msra.mxu0 0.0
      %7105 = vmatprep.subr.mxu0 0.0
      %7106 = vmatpush1.msra.mxu0 0.0
      %7107 = vmatprep.subr.mxu0 0.0
      %7108 = vmatpush1.msra.mxu0 0.0
      %7109 = vmatprep.subr.mxu0 0.0
      %7110 = vmatpush1.msra.mxu0 0.0
      %7111 = vmatprep.subr.mxu0 0.0
      %7112 = vmatpush1.msra.mxu0 0.0
      %7113 = vmatprep.subr.mxu0 0.0
      %7114 = vmatpush1.msra.mxu0 0.0
      %7115 = vmatprep.subr.mxu0 0.0
      %7116 = vmatpush1.msra.mxu0 0.0
      %7117 = vmatprep.subr.mxu0 0.0
      %7118 = vmatpush1.msra.mxu0 0.0
      %7119 = vmatprep.subr.mxu0 0.0
      %7120 = vmatpush1.msra.mxu0 0.0
      %7121 = vmatprep.subr.mxu0 0.0
      %7122 = vmatpush1.msra.mxu0 0.0
      %7123 = vmatprep.subr.mxu0 0.0
      %7124 = vmatpush1.msra.mxu0 0.0
      %7125 = vmatprep.subr.mxu0 0.0
      %7126 = vmatpush1.msra.mxu0 0.0
      %7127 = vmatprep.subr.mxu0 0.0
      %7128 = vmatpush1.msra.mxu0 0.0
      %7129 = vmatprep.mubr.f32.mxu0 %v6874
      %7130 = vmatmul.mubr.f32.gmra.mrb[0].mxu0 %v6720
      %v7131 = vpop.f32.mrb[0].mxu0
      %v7132 = vadd.f32 %v6871, %v7131
      %v7133 = vpop.f32.mrb[0].mxu0
      %7134 = vmatprep.mubr.f32.mxu0 %v6877
      %7135 = vmatmul.mubr.f32.gmra.mrb[0].mxu0 %v6722
      %v7136 = vpop.f32.mrb[0].mxu0
      %v7137 = vadd.f32 %v6871, %v7136
      %v7138 = vpop.f32.mrb[0].mxu0
      %7139 = vmatprep.mubr.f32.mxu0 %v6880
      %7140 = vmatmul.mubr.f32.gmra.mrb[0].mxu0 %v6724
      %v7141 = vpop.f32.mrb[0].mxu0
      %v7142 = vadd.f32 %v6871, %v7141
      %v7143 = vpop.f32.mrb[0].mxu0
      %7144 = vmatprep.mubr.f32.mxu0 %v6883
      %7145 = vmatmul.mubr.f32.gmra.mrb[0].mxu0 %v6726
      %v7146 = vpop.f32.mrb[0].mxu0
      %v7147 = vadd.f32 %v6871, %v7146
      %v7148 = vpop.f32.mrb[0].mxu0
      %7149 = vmatprep.mubr.f32.mxu0 %v6886
      %7150 = vmatmul.mubr.f32.gmra.mrb[0].mxu0 %v6728
      %v7151 = vpop.f32.mrb[0].mxu0
      %v7152 = vadd.f32 %v6871, %v7151
      %v7153 = vpop.f32.mrb[0].mxu0
      %7154 = vmatprep.mubr.f32.mxu0 %v6889
      %7155 = vmatmul.mubr.f32.gmra.mrb[0].mxu0 %v6730
      %v7156 = vpop.f32.mrb[0].mxu0
      %v7157 = vadd.f32 %v6871, %v7156
      %v7158 = vpop.f32.mrb[0].mxu0
      %7159 = vmatprep.mubr.f32.mxu0 %v6892
      %7160 = vmatmul.mubr.f32.gmra.mrb[0].mxu0 %v6732
      %v7161 = vpop.f32.mrb[0].mxu0
      %v7162 = vadd.f32 %v6871, %v7161
      %v7163 = vpop.f32.mrb[0].mxu0
      %7164 = vmatprep.mubr.f32.mxu0 %v6895
      %7165 = vmatmul.mubr.f32.gmra.mrb[0].mxu0 %v6734
      %v7166 = vpop.f32.mrb[0].mxu0
      %v7167 = vadd.f32 %v6871, %v7166
      %v7168 = vpop.f32.mrb[0].mxu0
      %7169 = vmatprep.mubr.f32.mxu0 %v6898
      %7170 = vmatmul.mubr.f32.gmra.mrb[0].mxu0 %v6736
      %v7171 = vpop.f32.mrb[0].mxu0
      %v7172 = vadd.f32 %v6871, %v7171
      %v7173 = vpop.f32.mrb[0].mxu0
      %7174 = vmatprep.mubr.f32.mxu0 %v6901
      %7175 = vmatmul.mubr.f32.gmra.mrb[0].mxu0 %v6738
      %v7176 = vpop.f32.mrb[0].mxu0
      %v7177 = vadd.f32 %v6871, %v7176
      %v7178 = vpop.f32.mrb[0].mxu0
      %7179 = vmatprep.mubr.f32.mxu0 %v6904
      %7180 = vmatmul.mubr.f32.gmra.mrb[0].mxu0 %v6740
      %v7181 = vpop.f32.mrb[0].mxu0
      %v7182 = vadd.f32 %v6871, %v7181
      %v7183 = vpop.f32.mrb[0].mxu0
      %7184 = vmatprep.mubr.f32.mxu0 %v6907
      %7185 = vmatmul.mubr.f32.gmra.mrb[0].mxu0 %v6742
      %v7186 = vpop.f32.mrb[0].mxu0
      %v7187 = vadd.f32 %v6871, %v7186
      %v7188 = vpop.f32.mrb[0].mxu0
      %7189 = vmatprep.mubr.f32.mxu0 %v6910
      %7190 = vmatmul.mubr.f32.gmra.mrb[0].mxu0 %v6744
      %v7191 = vpop.f32.mrb[0].mxu0
      %v7192 = vadd.f32 %v6871, %v7191
      %v7193 = vpop.f32.mrb[0].mxu0
      %7194 = vmatprep.mubr.f32.mxu0 %v6913
      %7195 = vmatmul.mubr.f32.gmra.mrb[0].mxu0 %v6746
      %v7196 = vpop.f32.mrb[0].mxu0
      %v7197 = vadd.f32 %v6871, %v7196
      %v7198 = vpop.f32.mrb[0].mxu0
      %7199 = vmatprep.mubr.f32.mxu0 %v6916
      %7200 = vmatmul.mubr.f32.gmra.mrb[0].mxu0 %v6748
      %v7201 = vpop.f32.mrb[0].mxu0
      %v7202 = vadd.f32 %v6871, %v7201
      %v7203 = vpop.f32.mrb[0].mxu0
      %7204 = vmatprep.mubr.f32.mxu0 %v6919
      %7205 = vmatmul.mubr.f32.gmra.mrb[0].mxu0 %v6750
      %v7206 = vpop.f32.mrb[0].mxu0
      %v7207 = vadd.f32 %v6871, %v7206
      %v7208 = vpop.f32.mrb[0].mxu0
      %7209 = vmatprep.mubr.f32.mxu0 %v6922
      %7210 = vmatmul.mubr.f32.gmra.mrb[0].mxu0 %v6752
      %v7211 = vpop.f32.mrb[0].mxu0
      %v7212 = vadd.f32 %v6871, %v7211
      %v7213 = vpop.f32.mrb[0].mxu0
      %7214 = vmatprep.mubr.f32.mxu0 %v6925
      %7215 = vmatmul.mubr.f32.gmra.mrb[0].mxu0 %v6754
      %v7216 = vpop.f32.mrb[0].mxu0
      %v7217 = vadd.f32 %v6871, %v7216
      %v7218 = vpop.f32.mrb[0].mxu0
      %7219 = vmatprep.mubr.f32.mxu0 %v6928
      %7220 = vmatmul.mubr.f32.gmra.mrb[0].mxu0 %v6756
      %v7221 = vpop.f32.mrb[0].mxu0
      %v7222 = vadd.f32 %v6871, %v7221
      %v7223 = vpop.f32.mrb[0].mxu0
      %7224 = vmatprep.mubr.f32.mxu0 %v6931
      %7225 = vmatmul.mubr.f32.gmra.mrb[0].mxu0 %v6758
      %v7226 = vpop.f32.mrb[0].mxu0
      %v7227 = vadd.f32 %v6871, %v7226
      %v7228 = vpop.f32.mrb[0].mxu0
      %7229 = vmatprep.mubr.f32.mxu0 %v6934
      %7230 = vmatmul.mubr.f32.gmra.mrb[0].mxu0 %v6760
      %v7231 = vpop.f32.mrb[0].mxu0
      %v7232 = vadd.f32 %v6871, %v7231
      %v7233 = vpop.f32.mrb[0].mxu0
      %7234 = vmatprep.mubr.f32.mxu0 %v6937
      %7235 = vmatmul.mubr.f32.gmra.mrb[0].mxu0 %v6762
      %v7236 = vpop.f32.mrb[0].mxu0
      %v7237 = vadd.f32 %v6871, %v7236
      %v7238 = vpop.f32.mrb[0].mxu0
      %7239 = vmatprep.mubr.f32.mxu0 %v6940
      %7240 = vmatmul.mubr.f32.gmra.mrb[0].mxu0 %v6764
      %v7241 = vpop.f32.mrb[0].mxu0
      %v7242 = vadd.f32 %v6871, %v7241
      %v7243 = vpop.f32.mrb[0].mxu0
      %7244 = vmatprep.mubr.f32.mxu0 %v6943
      %7245 = vmatmul.mubr.f32.gmra.mrb[0].mxu0 %v6766
      %v7246 = vpop.f32.mrb[0].mxu0
      %v7247 = vadd.f32 %v6871, %v7246
      %v7248 = vpop.f32.mrb[0].mxu0
      %7249 = vmatprep.mubr.f32.mxu0 %v6946
      %7250 = vmatmul.mubr.f32.gmra.mrb[0].mxu0 %v6768
      %v7251 = vpop.f32.mrb[0].mxu0
      %v7252 = vadd.f32 %v6871, %v7251
      %v7253 = vpop.f32.mrb[0].mxu0
      %7254 = vmatprep.mubr.f32.mxu0 %v6949
      %7255 = vmatmul.mubr.f32.gmra.mrb[0].mxu0 %v6770
      %v7256 = vpop.f32.mrb[0].mxu0
      %v7257 = vadd.f32 %v6871, %v7256
      %v7258 = vpop.f32.mrb[0].mxu0
      %7259 = vmatprep.mubr.f32.mxu0 %v6952
      %7260 = vmatmul.mubr.f32.gmra.mrb[0].mxu0 %v6772
      %v7261 = vpop.f32.mrb[0].mxu0
      %v7262 = vadd.f32 %v6871, %v7261
      %v7263 = vpop.f32.mrb[0].mxu0
      %7264 = vmatprep.mubr.f32.mxu0 %v6955
      %7265 = vmatmul.mubr.f32.gmra.mrb[0].mxu0 %v6774
      %v7266 = vpop.f32.mrb[0].mxu0
      %v7267 = vadd.f32 %v6871, %v7266
      %v7268 = vpop.f32.mrb[0].mxu0
      %7269 = vmatprep.mubr.f32.mxu0 %v6958
      %7270 = vmatmul.mubr.f32.gmra.mrb[0].mxu0 %v6776
      %v7271 = vpop.f32.mrb[0].mxu0
      %v7272 = vadd.f32 %v6871, %v7271
      %v7273 = vpop.f32.mrb[0].mxu0
      %7274 = vmatprep.mubr.f32.mxu0 %v6961
      %7275 = vmatmul.mubr.f32.gmra.mrb[0].mxu0 %v6778
      %v7276 = vpop.f32.mrb[0].mxu0
      %v7277 = vadd.f32 %v6871, %v7276
      %v7278 = vpop.f32.mrb[0].mxu0
      %7279 = vmatprep.mubr.f32.mxu0 %v6964
      %7280 = vmatmul.mubr.f32.gmra.mrb[0].mxu0 %v6780
      %v7281 = vpop.f32.mrb[0].mxu0
      %v7282 = vadd.f32 %v6871, %v7281
      %v7283 = vpop.f32.mrb[0].mxu0
      %7284 = vmatprep.mubr.f32.mxu0 %v6967
      %7285 = vmatmul.mubr.f32.gmra.mrb[0].mxu0 %v6782
      %v7286 = vpop.f32.mrb[0].mxu0
      %v7287 = vadd.f32 %v6871, %v7286
      %v7288 = vpop.f32.mrb[0].mxu0
      %7289 = vmatprep.mubr.f32.mxu0 %v6970
      %7290 = vmatmul.mubr.f32.gmra.mrb[0].mxu0 %v6784
      %v7291 = vpop.f32.mrb[0].mxu0
      %v7292 = vadd.f32 %v6871, %v7291
      %v7293 = vpop.f32.mrb[0].mxu0
      %7294 = vmatprep.mubr.f32.mxu0 %v6973
      %7295 = vmatmul.mubr.f32.gmra.mrb[0].mxu0 %v6786
      %v7296 = vpop.f32.mrb[0].mxu0
      %v7297 = vadd.f32 %v6871, %v7296
      %v7298 = vpop.f32.mrb[0].mxu0
      %7299 = vmatprep.mubr.f32.mxu0 %v6976
      %7300 = vmatmul.mubr.f32.gmra.mrb[0].mxu0 %v6788
      %v7301 = vpop.f32.mrb[0].mxu0
      %v7302 = vadd.f32 %v6871, %v7301
      %v7303 = vpop.f32.mrb[0].mxu0
      %7304 = vmatprep.mubr.f32.mxu0 %v6979
      %7305 = vmatmul.mubr.f32.gmra.mrb[0].mxu0 %v6790
      %v7306 = vpop.f32.mrb[0].mxu0
      %v7307 = vadd.f32 %v6871, %v7306
      %v7308 = vpop.f32.mrb[0].mxu0
      %7309 = vmatprep.mubr.f32.mxu0 %v6982
      %7310 = vmatmul.mubr.f32.gmra.mrb[0].mxu0 %v6792
      %v7311 = vpop.f32.mrb[0].mxu0
      %v7312 = vadd.f32 %v6871, %v7311
      %v7313 = vpop.f32.mrb[0].mxu0
      %7314 = vmatprep.mubr.f32.mxu0 %v6985
      %7315 = vmatmul.mubr.f32.gmra.mrb[0].mxu0 %v6794
      %v7316 = vpop.f32.mrb[0].mxu0
      %v7317 = vadd.f32 %v6871, %v7316
      %v7318 = vpop.f32.mrb[0].mxu0
      %7319 = vmatprep.mubr.f32.mxu0 %v6988
      %7320 = vmatmul.mubr.f32.gmra.mrb[0].mxu0 %v6796
      %v7321 = vpop.f32.mrb[0].mxu0
      %v7322 = vadd.f32 %v6871, %v7321
      %v7323 = vpop.f32.mrb[0].mxu0
      %7324 = vmatprep.mubr.f32.mxu0 %v6991
      %7325 = vmatmul.mubr.f32.gmra.mrb[0].mxu0 %v6798
      %v7326 = vpop.f32.mrb[0].mxu0
      %v7327 = vadd.f32 %v6871, %v7326
      %v7328 = vpop.f32.mrb[0].mxu0
      %7329 = vmatprep.mubr.f32.mxu0 %v6994
      %7330 = vmatmul.mubr.f32.gmra.mrb[0].mxu0 %v6800
      %v7331 = vpop.f32.mrb[0].mxu0
      %v7332 = vadd.f32 %v6871, %v7331
      %v7333 = vpop.f32.mrb[0].mxu0
      %7334 = vmatprep.mubr.f32.mxu0 %v6997
      %7335 = vmatmul.mubr.f32.gmra.mrb[0].mxu0 %v6802
      %v7336 = vpop.f32.mrb[0].mxu0
      %v7337 = vadd.f32 %v6871, %v7336
      %v7338 = vpop.f32.mrb[0].mxu0
      %7339 = vmatprep.mubr.f32.mxu0 %v7000
      %7340 = vmatmul.mubr.f32.gmra.mrb[0].mxu0 %v6804
      %v7341 = vpop.f32.mrb[0].mxu0
      %v7342 = vadd.f32 %v6871, %v7341
      %v7343 = vpop.f32.mrb[0].mxu0
      %7344 = vmatprep.mubr.f32.mxu0 %v7003
      %7345 = vmatmul.mubr.f32.gmra.mrb[0].mxu0 %v6806
      %v7346 = vpop.f32.mrb[0].mxu0
      %v7347 = vadd.f32 %v6871, %v7346
      %v7348 = vpop.f32.mrb[0].mxu0
      %7349 = vmatprep.mubr.f32.mxu0 %v7006
      %7350 = vmatmul.mubr.f32.gmra.mrb[0].mxu0 %v6808
      %v7351 = vpop.f32.mrb[0].mxu0
      %v7352 = vadd.f32 %v6871, %v7351
      %v7353 = vpop.f32.mrb[0].mxu0
      %7354 = vmatprep.mubr.f32.mxu0 %v7009
      %7355 = vmatmul.mubr.f32.gmra.mrb[0].mxu0 %v6810
      %v7356 = vpop.f32.mrb[0].mxu0
      %v7357 = vadd.f32 %v6871, %v7356
      %v7358 = vpop.f32.mrb[0].mxu0
      %7359 = vmatprep.mubr.f32.mxu0 %v7012
      %7360 = vmatmul.mubr.f32.gmra.mrb[0].mxu0 %v6812
      %v7361 = vpop.f32.mrb[0].mxu0
      %v7362 = vadd.f32 %v6871, %v7361
      %v7363 = vpop.f32.mrb[0].mxu0
      %7364 = vmatprep.mubr.f32.mxu0 %v7015
      %7365 = vmatmul.mubr.f32.gmra.mrb[0].mxu0 %v6814
      %v7366 = vpop.f32.mrb[0].mxu0
      %v7367 = vadd.f32 %v6871, %v7366
      %v7368 = vpop.f32.mrb[0].mxu0
      %7369 = vmatprep.mubr.f32.mxu0 %v7018
      %7370 = vmatmul.mubr.f32.gmra.mrb[0].mxu0 %v6816
      %v7371 = vpop.f32.mrb[0].mxu0
      %v7372 = vadd.f32 %v6871, %v7371
      %v7373 = vpop.f32.mrb[0].mxu0
      %7374 = vmatprep.mubr.f32.mxu0 %v7021
      %7375 = vmatmul.mubr.f32.gmra.mrb[0].mxu0 %v6818
      %v7376 = vpop.f32.mrb[0].mxu0
      %v7377 = vadd.f32 %v6871, %v7376
      %v7378 = vpop.f32.mrb[0].mxu0
      %7379 = vmatprep.mubr.f32.mxu0 %v7024
      %7380 = vmatmul.mubr.f32.gmra.mrb[0].mxu0 %v6820
      %v7381 = vpop.f32.mrb[0].mxu0
      %v7382 = vadd.f32 %v6871, %v7381
      %v7383 = vpop.f32.mrb[0].mxu0
      %7384 = vmatprep.mubr.f32.mxu0 %v7027
      %7385 = vmatmul.mubr.f32.gmra.mrb[0].mxu0 %v6822
      %v7386 = vpop.f32.mrb[0].mxu0
      %v7387 = vadd.f32 %v6871, %v7386
      %v7388 = vpop.f32.mrb[0].mxu0
      %7389 = vmatprep.mubr.f32.mxu0 %v7030
      %7390 = vmatmul.mubr.f32.gmra.mrb[0].mxu0 %v6824
      %v7391 = vpop.f32.mrb[0].mxu0
      %v7392 = vadd.f32 %v6871, %v7391
      %v7393 = vpop.f32.mrb[0].mxu0
      %7394 = vmatprep.mubr.f32.mxu0 %v7033
      %7395 = vmatmul.mubr.f32.gmra.mrb[0].mxu0 %v6826
      %v7396 = vpop.f32.mrb[0].mxu0
      %v7397 = vadd.f32 %v6871, %v7396
      %v7398 = vpop.f32.mrb[0].mxu0
      %7399 = vmatprep.mubr.f32.mxu0 %v7036
      %7400 = vmatmul.mubr.f32.gmra.mrb[0].mxu0 %v6828
      %v7401 = vpop.f32.mrb[0].mxu0
      %v7402 = vadd.f32 %v6871, %v7401
      %v7403 = vpop.f32.mrb[0].mxu0
      %7404 = vmatprep.mubr.f32.mxu0 %v7039
      %7405 = vmatmul.mubr.f32.gmra.mrb[0].mxu0 %v6830
      %v7406 = vpop.f32.mrb[0].mxu0
      %v7407 = vadd.f32 %v6871, %v7406
      %v7408 = vpop.f32.mrb[0].mxu0
      %7409 = vmatprep.mubr.f32.mxu0 %v7042
      %7410 = vmatmul.mubr.f32.gmra.mrb[0].mxu0 %v6832
      %v7411 = vpop.f32.mrb[0].mxu0
      %v7412 = vadd.f32 %v6871, %v7411
      %v7413 = vpop.f32.mrb[0].mxu0
      %7414 = vmatprep.mubr.f32.mxu0 %v7045
      %7415 = vmatmul.mubr.f32.gmra.mrb[0].mxu0 %v6834
      %v7416 = vpop.f32.mrb[0].mxu0
      %v7417 = vadd.f32 %v6871, %v7416
      %v7418 = vpop.f32.mrb[0].mxu0
      %7419 = vmatprep.mubr.f32.mxu0 %v7048
      %7420 = vmatmul.mubr.f32.gmra.mrb[0].mxu0 %v6836
      %v7421 = vpop.f32.mrb[0].mxu0
      %v7422 = vadd.f32 %v6871, %v7421
      %v7423 = vpop.f32.mrb[0].mxu0
      %7424 = vmatprep.mubr.f32.mxu0 %v7051
      %7425 = vmatmul.mubr.f32.gmra.mrb[0].mxu0 %v6838
      %v7426 = vpop.f32.mrb[0].mxu0
      %v7427 = vadd.f32 %v6871, %v7426
      %v7428 = vpop.f32.mrb[0].mxu0
      %7429 = vmatprep.mubr.f32.mxu0 %v7054
      %7430 = vmatmul.mubr.f32.gmra.mrb[0].mxu0 %v6840
      %v7431 = vpop.f32.mrb[0].mxu0
      %v7432 = vadd.f32 %v6871, %v7431
      %v7433 = vpop.f32.mrb[0].mxu0
      %7434 = vmatprep.mubr.f32.mxu0 %v7057
      %7435 = vmatmul.mubr.f32.gmra.mrb[0].mxu0 %v6842
      %v7436 = vpop.f32.mrb[0].mxu0
      %v7437 = vadd.f32 %v6871, %v7436
      %v7438 = vpop.f32.mrb[0].mxu0
      %7439 = vmatprep.mubr.f32.mxu0 %v7060
      %7440 = vmatmul.mubr.f32.gmra.mrb[0].mxu0 %v6844
      %v7441 = vpop.f32.mrb[0].mxu0
      %v7442 = vadd.f32 %v6871, %v7441
      %v7443 = vpop.f32.mrb[0].mxu0
      %7444 = vmatprep.mubr.f32.mxu0 %v7063
      %7445 = vmatmul.mubr.f32.gmra.mrb[0].mxu0 %v6846
      %v7446 = vpop.f32.mrb[0].mxu0
      %v7447 = vadd.f32 %v6871, %v7446
      %v7448 = vpop.f32.mrb[0].mxu0
      %7449 = vdwg.mxu0
      %v7450 = vmax.f32 %v7132, 0.0
      %v7451 = vmax.f32 %v7137, 0.0
      %v7452 = vmax.f32 %v7142, 0.0
      %v7453 = vmax.f32 %v7147, 0.0
      %v7454 = vmax.f32 %v7152, 0.0
      %v7455 = vmax.f32 %v7157, 0.0
      %v7456 = vmax.f32 %v7162, 0.0
      %v7457 = vmax.f32 %v7167, 0.0
      %v7458 = vmax.f32 %v7172, 0.0
      %v7459 = vmax.f32 %v7177, 0.0
      %v7460 = vmax.f32 %v7182, 0.0
      %v7461 = vmax.f32 %v7187, 0.0
      %v7462 = vmax.f32 %v7192, 0.0
      %v7463 = vmax.f32 %v7197, 0.0
      %v7464 = vmax.f32 %v7202, 0.0
      %v7465 = vmax.f32 %v7207, 0.0
      %v7466 = vmax.f32 %v7212, 0.0
      %v7467 = vmax.f32 %v7217, 0.0
      %v7468 = vmax.f32 %v7222, 0.0
      %v7469 = vmax.f32 %v7227, 0.0
      %v7470 = vmax.f32 %v7232, 0.0
      %v7471 = vmax.f32 %v7237, 0.0
      %v7472 = vmax.f32 %v7242, 0.0
      %v7473 = vmax.f32 %v7247, 0.0
      %v7474 = vmax.f32 %v7252, 0.0
      %v7475 = vmax.f32 %v7257, 0.0
      %v7476 = vmax.f32 %v7262, 0.0
      %v7477 = vmax.f32 %v7267, 0.0
      %v7478 = vmax.f32 %v7272, 0.0
      %v7479 = vmax.f32 %v7277, 0.0
      %v7480 = vmax.f32 %v7282, 0.0
      %v7481 = vmax.f32 %v7287, 0.0
      %v7482 = vmax.f32 %v7292, 0.0
      %v7483 = vmax.f32 %v7297, 0.0
      %v7484 = vmax.f32 %v7302, 0.0
      %v7485 = vmax.f32 %v7307, 0.0
      %v7486 = vmax.f32 %v7312, 0.0
      %v7487 = vmax.f32 %v7317, 0.0
      %v7488 = vmax.f32 %v7322, 0.0
      %v7489 = vmax.f32 %v7327, 0.0
      %v7490 = vmax.f32 %v7332, 0.0
      %v7491 = vmax.f32 %v7337, 0.0
      %v7492 = vmax.f32 %v7342, 0.0
      %v7493 = vmax.f32 %v7347, 0.0
      %v7494 = vmax.f32 %v7352, 0.0
      %v7495 = vmax.f32 %v7357, 0.0
      %v7496 = vmax.f32 %v7362, 0.0
      %v7497 = vmax.f32 %v7367, 0.0
      %v7498 = vmax.f32 %v7372, 0.0
      %v7499 = vmax.f32 %v7377, 0.0
      %v7500 = vmax.f32 %v7382, 0.0
      %v7501 = vmax.f32 %v7387, 0.0
      %v7502 = vmax.f32 %v7392, 0.0
      %v7503 = vmax.f32 %v7397, 0.0
      %v7504 = vmax.f32 %v7402, 0.0
      %v7505 = vmax.f32 %v7407, 0.0
      %v7506 = vmax.f32 %v7412, 0.0
      %v7507 = vmax.f32 %v7417, 0.0
      %v7508 = vmax.f32 %v7422, 0.0
      %v7509 = vmax.f32 %v7427, 0.0
      %v7510 = vmax.f32 %v7432, 0.0
      %v7511 = vmax.f32 %v7437, 0.0
      %v7512 = vmax.f32 %v7442, 0.0
      %v7513 = vmax.f32 %v7447, 0.0
      %v7514 = vmax.f32 %v7450, %v7452
      %v7515 = vmax.f32 %v7451, %v7453
      %v7516 = vmax.f32 %v7454, %v7456
      %v7517 = vmax.f32 %v7455, %v7457
      %v7518 = vmax.f32 %v7458, %v7460
      %v7519 = vmax.f32 %v7459, %v7461
      %v7520 = vmax.f32 %v7462, %v7464
      %v7521 = vmax.f32 %v7463, %v7465
      %v7522 = vmax.f32 %v7466, %v7468
      %v7523 = vmax.f32 %v7467, %v7469
      %v7524 = vmax.f32 %v7470, %v7472
      %v7525 = vmax.f32 %v7471, %v7473
      %v7526 = vmax.f32 %v7474, %v7476
      %v7527 = vmax.f32 %v7475, %v7477
      %v7528 = vmax.f32 %v7478, %v7480
      %v7529 = vmax.f32 %v7479, %v7481
      %v7530 = vmax.f32 %v7482, %v7484
      %v7531 = vmax.f32 %v7483, %v7485
      %v7532 = vmax.f32 %v7486, %v7488
      %v7533 = vmax.f32 %v7487, %v7489
      %v7534 = vmax.f32 %v7490, %v7492
      %v7535 = vmax.f32 %v7491, %v7493
      %v7536 = vmax.f32 %v7494, %v7496
      %v7537 = vmax.f32 %v7495, %v7497
      %v7538 = vmax.f32 %v7498, %v7500
      %v7539 = vmax.f32 %v7499, %v7501
      %v7540 = vmax.f32 %v7502, %v7504
      %v7541 = vmax.f32 %v7503, %v7505
      %v7542 = vmax.f32 %v7506, %v7508
      %v7543 = vmax.f32 %v7507, %v7509
      %v7544 = vmax.f32 %v7510, %v7512
      %v7545 = vmax.f32 %v7511, %v7513
      %7546 = vst.msk [vmem:[#allocation5] sm:$0xff] %vm447, %v7514
      %7547 = vst.msk [vmem:[#allocation5 + $0x8] sm:$0xff] %vm447, %v7515
      %7548 = vst.msk [vmem:[#allocation5 + $0x10] sm:$0xff] %vm447, %v7516
      %7549 = vst.msk [vmem:[#allocation5 + $0x18] sm:$0xff] %vm447, %v7517
      %7550 = vst.msk [vmem:[#allocation5 + $0x20] sm:$0xff] %vm447, %v7518
      %7551 = vst.msk [vmem:[#allocation5 + $0x28] sm:$0xff] %vm447, %v7519
      %7552 = vst.msk [vmem:[#allocation5 + $0x30] sm:$0xff] %vm447, %v7520
      %7553 = vst.msk [vmem:[#allocation5 + $0x38] sm:$0xff] %vm447, %v7521
      %7554 = vst.msk [vmem:[#allocation5 + $0x40] sm:$0xff] %vm447, %v7522
      %7555 = vst.msk [vmem:[#allocation5 + $0x48] sm:$0xff] %vm447, %v7523
      %7556 = vst.msk [vmem:[#allocation5 + $0x50] sm:$0xff] %vm447, %v7524
      %7557 = vst.msk [vmem:[#allocation5 + $0x58] sm:$0xff] %vm447, %v7525
      %7558 = vst.msk [vmem:[#allocation5 + $0x60] sm:$0xff] %vm447, %v7526
      %7559 = vst.msk [vmem:[#allocation5 + $0x68] sm:$0xff] %vm447, %v7527
      %7560 = vst.msk [vmem:[#allocation5 + $0x70] sm:$0xff] %vm447, %v7528
      %7561 = vst.msk [vmem:[#allocation5 + $0x78] sm:$0xff] %vm447, %v7529
      %7562 = vst.msk [vmem:[#allocation5 + $0x80] sm:$0xff] %vm447, %v7530
      %7563 = vst.msk [vmem:[#allocation5 + $0x88] sm:$0xff] %vm447, %v7531
      %7564 = vst.msk [vmem:[#allocation5 + $0x90] sm:$0xff] %vm447, %v7532
      %7565 = vst.msk [vmem:[#allocation5 + $0x98] sm:$0xff] %vm447, %v7533
      %7566 = vst.msk [vmem:[#allocation5 + $0xa0] sm:$0xff] %vm447, %v7534
      %7567 = vst.msk [vmem:[#allocation5 + $0xa8] sm:$0xff] %vm447, %v7535
      %7568 = vst.msk [vmem:[#allocation5 + $0xb0] sm:$0xff] %vm447, %v7536
      %7569 = vst.msk [vmem:[#allocation5 + $0xb8] sm:$0xff] %vm447, %v7537
      %7570 = vst.msk [vmem:[#allocation5 + $0xc0] sm:$0xff] %vm447, %v7538
      %7571 = vst.msk [vmem:[#allocation5 + $0xc8] sm:$0xff] %vm447, %v7539
      %7572 = vst.msk [vmem:[#allocation5 + $0xd0] sm:$0xff] %vm447, %v7540
      %7573 = vst.msk [vmem:[#allocation5 + $0xd8] sm:$0xff] %vm447, %v7541
      %7574 = vst.msk [vmem:[#allocation5 + $0xe0] sm:$0xff] %vm447, %v7542
      %7575 = vst.msk [vmem:[#allocation5 + $0xe8] sm:$0xff] %vm447, %v7543
      %7576 = vst.msk [vmem:[#allocation5 + $0xf0] sm:$0xff] %vm447, %v7544
      %7577 = vst.msk [vmem:[#allocation5 + $0xf8] sm:$0xff] %vm447, %v7545
      %v7578 = vld [vmem:[#allocation5] ss:$2 sm:$0xff]
      %s7579 = scalar_lea.vmem [#allocation5], 16
      %v7580 = vld [vmem:[%s7579] ss:$2 sm:$0xff]
      %s7581 = scalar_lea.vmem [#allocation5], 32
      %v7582 = vld [vmem:[%s7581] ss:$2 sm:$0xff]
      %s7583 = scalar_lea.vmem [#allocation5], 48
      %v7584 = vld [vmem:[%s7583] ss:$2 sm:$0xff]
      %s7585 = scalar_lea.vmem [#allocation5], 64
      %v7586 = vld [vmem:[%s7585] ss:$2 sm:$0xff]
      %s7587 = scalar_lea.vmem [#allocation5], 80
      %v7588 = vld [vmem:[%s7587] ss:$2 sm:$0xff]
      %s7589 = scalar_lea.vmem [#allocation5], 96
      %v7590 = vld [vmem:[%s7589] ss:$2 sm:$0xff]
      %s7591 = scalar_lea.vmem [#allocation5], 112
      %v7592 = vld [vmem:[%s7591] ss:$2 sm:$0xff]
      %s7593 = scalar_lea.vmem [#allocation5], 128
      %v7594 = vld [vmem:[%s7593] ss:$2 sm:$0xff]
      %s7595 = scalar_lea.vmem [#allocation5], 144
      %v7596 = vld [vmem:[%s7595] ss:$2 sm:$0xff]
      %s7597 = scalar_lea.vmem [#allocation5], 160
      %v7598 = vld [vmem:[%s7597] ss:$2 sm:$0xff]
      %s7599 = scalar_lea.vmem [#allocation5], 176
      %v7600 = vld [vmem:[%s7599] ss:$2 sm:$0xff]
      %s7601 = scalar_lea.vmem [#allocation5], 192
      %v7602 = vld [vmem:[%s7601] ss:$2 sm:$0xff]
      %s7603 = scalar_lea.vmem [#allocation5], 208
      %v7604 = vld [vmem:[%s7603] ss:$2 sm:$0xff]
      %s7605 = scalar_lea.vmem [#allocation5], 224
      %v7606 = vld [vmem:[%s7605] ss:$2 sm:$0xff]
      %s7607 = scalar_lea.vmem [#allocation5], 240
      %v7608 = vld [vmem:[%s7607] ss:$2 sm:$0xff]
      %s7609 = scalar_lea.vmem [#allocation5], 1
      %v7610 = vld [vmem:[%s7609] ss:$2 sm:$0xff]
      %s7611 = scalar_lea.vmem [#allocation5], 17
      %v7612 = vld [vmem:[%s7611] ss:$2 sm:$0xff]
      %s7613 = scalar_lea.vmem [#allocation5], 33
      %v7614 = vld [vmem:[%s7613] ss:$2 sm:$0xff]
      %s7615 = scalar_lea.vmem [#allocation5], 49
      %v7616 = vld [vmem:[%s7615] ss:$2 sm:$0xff]
      %s7617 = scalar_lea.vmem [#allocation5], 65
      %v7618 = vld [vmem:[%s7617] ss:$2 sm:$0xff]
      %s7619 = scalar_lea.vmem [#allocation5], 81
      %v7620 = vld [vmem:[%s7619] ss:$2 sm:$0xff]
      %s7621 = scalar_lea.vmem [#allocation5], 97
      %v7622 = vld [vmem:[%s7621] ss:$2 sm:$0xff]
      %s7623 = scalar_lea.vmem [#allocation5], 113
      %v7624 = vld [vmem:[%s7623] ss:$2 sm:$0xff]
      %s7625 = scalar_lea.vmem [#allocation5], 129
      %v7626 = vld [vmem:[%s7625] ss:$2 sm:$0xff]
      %s7627 = scalar_lea.vmem [#allocation5], 145
      %v7628 = vld [vmem:[%s7627] ss:$2 sm:$0xff]
      %s7629 = scalar_lea.vmem [#allocation5], 161
      %v7630 = vld [vmem:[%s7629] ss:$2 sm:$0xff]
      %s7631 = scalar_lea.vmem [#allocation5], 177
      %v7632 = vld [vmem:[%s7631] ss:$2 sm:$0xff]
      %s7633 = scalar_lea.vmem [#allocation5], 193
      %v7634 = vld [vmem:[%s7633] ss:$2 sm:$0xff]
      %s7635 = scalar_lea.vmem [#allocation5], 209
      %v7636 = vld [vmem:[%s7635] ss:$2 sm:$0xff]
      %s7637 = scalar_lea.vmem [#allocation5], 225
      %v7638 = vld [vmem:[%s7637] ss:$2 sm:$0xff]
      %s7639 = scalar_lea.vmem [#allocation5], 241
      %v7640 = vld [vmem:[%s7639] ss:$2 sm:$0xff]
      %v7641 = vmax.f32 %v7578, %v7610
      %v7642 = vmax.f32 %v7580, %v7612
      %v7643 = vmax.f32 %v7582, %v7614
      %v7644 = vmax.f32 %v7584, %v7616
      %v7645 = vmax.f32 %v7586, %v7618
      %v7646 = vmax.f32 %v7588, %v7620
      %v7647 = vmax.f32 %v7590, %v7622
      %v7648 = vmax.f32 %v7592, %v7624
      %v7649 = vmax.f32 %v7594, %v7626
      %v7650 = vmax.f32 %v7596, %v7628
      %v7651 = vmax.f32 %v7598, %v7630
      %v7652 = vmax.f32 %v7600, %v7632
      %v7653 = vmax.f32 %v7602, %v7634
      %v7654 = vmax.f32 %v7604, %v7636
      %v7655 = vmax.f32 %v7606, %v7638
      %v7656 = vmax.f32 %v7608, %v7640
      %s7657 = scalar_lea.vmem [#allocation6], 16
      %7658 = vst.msk [vmem:[%s7657 + $0x1] sm:$0xff] %vm447, %v7641
      %7659 = vst.msk [vmem:[%s7657 + $0x11] sm:$0xff] %vm447, %v7642
      %7660 = vst.msk [vmem:[%s7657 + $0x21] sm:$0xff] %vm447, %v7643
      %7661 = vst.msk [vmem:[%s7657 + $0x31] sm:$0xff] %vm447, %v7644
      %7662 = vst.msk [vmem:[%s7657 + $0x41] sm:$0xff] %vm447, %v7645
      %7663 = vst.msk [vmem:[%s7657 + $0x51] sm:$0xff] %vm447, %v7646
      %7664 = vst.msk [vmem:[%s7657 + $0x61] sm:$0xff] %vm447, %v7647
      %7665 = vst.msk [vmem:[%s7657 + $0x71] sm:$0xff] %vm447, %v7648
      %7666 = vst.msk [vmem:[%s7657 + $0xa1] sm:$0xff] %vm447, %v7649
      %7667 = vst.msk [vmem:[%s7657 + $0xb1] sm:$0xff] %vm447, %v7650
      %7668 = vst.msk [vmem:[%s7657 + $0xc1] sm:$0xff] %vm447, %v7651
      %7669 = vst.msk [vmem:[%s7657 + $0xd1] sm:$0xff] %vm447, %v7652
      %7670 = vst.msk [vmem:[%s7657 + $0xe1] sm:$0xff] %vm447, %v7653
      %7671 = vst.msk [vmem:[%s7657 + $0xf1] sm:$0xff] %vm447, %v7654
      %7672 = vst.msk [vmem:[%s7657 + $0x101] sm:$0xff] %vm447, %v7655
      %7673 = vst.msk [vmem:[%s7657 + $0x111] sm:$0xff] %vm447, %v7656
      %v7674 = vld [vmem:[#allocation6] sm:$0xff]
      %v7675 = vld [vmem:[#allocation6 + $0x10] sm:$0xff]
      %v7676 = vld [vmem:[#allocation6 + $0x20] sm:$0xff]
      %v7677 = vld [vmem:[#allocation6 + $0x30] sm:$0xff]
      %v7678 = vld [vmem:[#allocation6 + $0x40] sm:$0xff]
      %v7679 = vld [vmem:[#allocation6 + $0x50] sm:$0xff]
      %v7680 = vld [vmem:[#allocation6 + $0x60] sm:$0xff]
      %v7681 = vld [vmem:[#allocation6 + $0x70] sm:$0xff]
      %v7682 = vld [vmem:[#allocation6 + $0xa0] sm:$0xff]
      %v7683 = vld [vmem:[#allocation6 + $0xb0] sm:$0xff]
      %v7684 = vld [vmem:[#allocation6 + $0xc0] sm:$0xff]
      %v7685 = vld [vmem:[#allocation6 + $0xd0] sm:$0xff]
      %v7686 = vld [vmem:[#allocation6 + $0xe0] sm:$0xff]
      %v7687 = vld [vmem:[#allocation6 + $0xf0] sm:$0xff]
      %v7688 = vld [vmem:[#allocation6 + $0x100] sm:$0xff]
      %v7689 = vld [vmem:[#allocation6 + $0x110] sm:$0xff]
      %7690 = vst.msk [vmem:[#allocation7] sm:$0xff] %vm447, %v7674
      %7691 = vst.msk [vmem:[#allocation7 + $0x18] sm:$0xff] %vm447, %v7675
      %7692 = vst.msk [vmem:[#allocation7 + $0x30] sm:$0xff] %vm447, %v7676
      %7693 = vst.msk [vmem:[#allocation7 + $0x48] sm:$0xff] %vm447, %v7677
      %7694 = vst.msk [vmem:[#allocation7 + $0x60] sm:$0xff] %vm447, %v7678
      %7695 = vst.msk [vmem:[#allocation7 + $0x78] sm:$0xff] %vm447, %v7679
      %7696 = vst.msk [vmem:[#allocation7 + $0x90] sm:$0xff] %vm447, %v7680
      %7697 = vst.msk [vmem:[#allocation7 + $0xa8] sm:$0xff] %vm447, %v7681
      %7698 = vst.msk [vmem:[#allocation7 + $0xc0] sm:$0xff] %vm447, %v7682
      %7699 = vst.msk [vmem:[#allocation7 + $0xd8] sm:$0xff] %vm447, %v7683
      %7700 = vst.msk [vmem:[#allocation7 + $0xf0] sm:$0xff] %vm447, %v7684
      %7701 = vst.msk [vmem:[#allocation7 + $0x108] sm:$0xff] %vm447, %v7685
      %7702 = vst.msk [vmem:[#allocation7 + $0x120] sm:$0xff] %vm447, %v7686
      %7703 = vst.msk [vmem:[#allocation7 + $0x138] sm:$0xff] %vm447, %v7687
      %7704 = vst.msk [vmem:[#allocation7 + $0x150] sm:$0xff] %vm447, %v7688
      %7705 = vst.msk [vmem:[#allocation7 + $0x168] sm:$0xff] %vm447, %v7689
      %v7706 = vld [vmem:[#allocation6 + $0x1] sm:$0xff]
      %v7707 = vld [vmem:[#allocation6 + $0x11] sm:$0xff]
      %v7708 = vld [vmem:[#allocation6 + $0x21] sm:$0xff]
      %v7709 = vld [vmem:[#allocation6 + $0x31] sm:$0xff]
      %v7710 = vld [vmem:[#allocation6 + $0x41] sm:$0xff]
      %v7711 = vld [vmem:[#allocation6 + $0x51] sm:$0xff]
      %v7712 = vld [vmem:[#allocation6 + $0x61] sm:$0xff]
      %v7713 = vld [vmem:[#allocation6 + $0x71] sm:$0xff]
      %v7714 = vld [vmem:[#allocation6 + $0xa1] sm:$0xff]
      %v7715 = vld [vmem:[#allocation6 + $0xb1] sm:$0xff]
      %v7716 = vld [vmem:[#allocation6 + $0xc1] sm:$0xff]
      %v7717 = vld [vmem:[#allocation6 + $0xd1] sm:$0xff]
      %v7718 = vld [vmem:[#allocation6 + $0xe1] sm:$0xff]
      %v7719 = vld [vmem:[#allocation6 + $0xf1] sm:$0xff]
      %v7720 = vld [vmem:[#allocation6 + $0x101] sm:$0xff]
      %v7721 = vld [vmem:[#allocation6 + $0x111] sm:$0xff]
      %7738 = vrot.lane.b32.xlu0 %v7706, 32
      %v7739 = vpop.permute.xlu0 %7738
      %7740 = vrot.lane.b32.xlu0 %v7707, 32
      %v7741 = vpop.permute.xlu0 %7740
      %7742 = vrot.lane.b32.xlu0 %v7708, 32
      %v7743 = vpop.permute.xlu0 %7742
      %7744 = vrot.lane.b32.xlu0 %v7709, 32
      %v7745 = vpop.permute.xlu0 %7744
      %7746 = vrot.lane.b32.xlu0 %v7710, 32
      %v7747 = vpop.permute.xlu0 %7746
      %7748 = vrot.lane.b32.xlu0 %v7711, 32
      %v7749 = vpop.permute.xlu0 %7748
      %7750 = vrot.lane.b32.xlu0 %v7712, 32
      %v7751 = vpop.permute.xlu0 %7750
      %7752 = vrot.lane.b32.xlu0 %v7713, 32
      %v7753 = vpop.permute.xlu0 %7752
      %7754 = vrot.lane.b32.xlu0 %v7714, 32
      %v7755 = vpop.permute.xlu0 %7754
      %7756 = vrot.lane.b32.xlu0 %v7715, 32
      %v7757 = vpop.permute.xlu0 %7756
      %7758 = vrot.lane.b32.xlu0 %v7716, 32
      %v7759 = vpop.permute.xlu0 %7758
      %7760 = vrot.lane.b32.xlu0 %v7717, 32
      %v7761 = vpop.permute.xlu0 %7760
      %7762 = vrot.lane.b32.xlu0 %v7718, 32
      %v7763 = vpop.permute.xlu0 %7762
      %7764 = vrot.lane.b32.xlu0 %v7719, 32
      %v7765 = vpop.permute.xlu0 %7764
      %7766 = vrot.lane.b32.xlu0 %v7720, 32
      %v7767 = vpop.permute.xlu0 %7766
      %7768 = vrot.lane.b32.xlu0 %v7721, 32
      %v7769 = vpop.permute.xlu0 %7768
      %vm7786 = vcmask 523520
      %7787 = vst.msk [vmem:[#allocation7] sm:$0xff] %vm7786, %v7739
      %7788 = vst.msk [vmem:[#allocation7 + $0x18] sm:$0xff] %vm7786, %v7741
      %7789 = vst.msk [vmem:[#allocation7 + $0x30] sm:$0xff] %vm7786, %v7743
      %7790 = vst.msk [vmem:[#allocation7 + $0x48] sm:$0xff] %vm7786, %v7745
      %7791 = vst.msk [vmem:[#allocation7 + $0x60] sm:$0xff] %vm7786, %v7747
      %7792 = vst.msk [vmem:[#allocation7 + $0x78] sm:$0xff] %vm7786, %v7749
      %7793 = vst.msk [vmem:[#allocation7 + $0x90] sm:$0xff] %vm7786, %v7751
      %7794 = vst.msk [vmem:[#allocation7 + $0xa8] sm:$0xff] %vm7786, %v7753
      %7795 = vst.msk [vmem:[#allocation7 + $0xc0] sm:$0xff] %vm7786, %v7755
      %7796 = vst.msk [vmem:[#allocation7 + $0xd8] sm:$0xff] %vm7786, %v7757
      %7797 = vst.msk [vmem:[#allocation7 + $0xf0] sm:$0xff] %vm7786, %v7759
      %7798 = vst.msk [vmem:[#allocation7 + $0x108] sm:$0xff] %vm7786, %v7761
      %7799 = vst.msk [vmem:[#allocation7 + $0x120] sm:$0xff] %vm7786, %v7763
      %7800 = vst.msk [vmem:[#allocation7 + $0x138] sm:$0xff] %vm7786, %v7765
      %7801 = vst.msk [vmem:[#allocation7 + $0x150] sm:$0xff] %vm7786, %v7767
      %7802 = vst.msk [vmem:[#allocation7 + $0x168] sm:$0xff] %vm7786, %v7769
      %v7803 = vld [vmem:[#allocation6 + $0x2] sm:$0xff]
      %v7804 = vld [vmem:[#allocation6 + $0x12] sm:$0xff]
      %v7805 = vld [vmem:[#allocation6 + $0x22] sm:$0xff]
      %v7806 = vld [vmem:[#allocation6 + $0x32] sm:$0xff]
      %v7807 = vld [vmem:[#allocation6 + $0x42] sm:$0xff]
      %v7808 = vld [vmem:[#allocation6 + $0x52] sm:$0xff]
      %v7809 = vld [vmem:[#allocation6 + $0x62] sm:$0xff]
      %v7810 = vld [vmem:[#allocation6 + $0x72] sm:$0xff]
      %v7811 = vld [vmem:[#allocation6 + $0xa2] sm:$0xff]
      %v7812 = vld [vmem:[#allocation6 + $0xb2] sm:$0xff]
      %v7813 = vld [vmem:[#allocation6 + $0xc2] sm:$0xff]
      %v7814 = vld [vmem:[#allocation6 + $0xd2] sm:$0xff]
      %v7815 = vld [vmem:[#allocation6 + $0xe2] sm:$0xff]
      %v7816 = vld [vmem:[#allocation6 + $0xf2] sm:$0xff]
      %v7817 = vld [vmem:[#allocation6 + $0x102] sm:$0xff]
      %v7818 = vld [vmem:[#allocation6 + $0x112] sm:$0xff]
      %7835 = vrot.lane.b32.xlu0 %v7803, 64
      %v7836 = vpop.permute.xlu0 %7835
      %7837 = vrot.lane.b32.xlu0 %v7804, 64
      %v7838 = vpop.permute.xlu0 %7837
      %7839 = vrot.lane.b32.xlu0 %v7805, 64
      %v7840 = vpop.permute.xlu0 %7839
      %7841 = vrot.lane.b32.xlu0 %v7806, 64
      %v7842 = vpop.permute.xlu0 %7841
      %7843 = vrot.lane.b32.xlu0 %v7807, 64
      %v7844 = vpop.permute.xlu0 %7843
      %7845 = vrot.lane.b32.xlu0 %v7808, 64
      %v7846 = vpop.permute.xlu0 %7845
      %7847 = vrot.lane.b32.xlu0 %v7809, 64
      %v7848 = vpop.permute.xlu0 %7847
      %7849 = vrot.lane.b32.xlu0 %v7810, 64
      %v7850 = vpop.permute.xlu0 %7849
      %7851 = vrot.lane.b32.xlu0 %v7811, 64
      %v7852 = vpop.permute.xlu0 %7851
      %7853 = vrot.lane.b32.xlu0 %v7812, 64
      %v7854 = vpop.permute.xlu0 %7853
      %7855 = vrot.lane.b32.xlu0 %v7813, 64
      %v7856 = vpop.permute.xlu0 %7855
      %7857 = vrot.lane.b32.xlu0 %v7814, 64
      %v7858 = vpop.permute.xlu0 %7857
      %7859 = vrot.lane.b32.xlu0 %v7815, 64
      %v7860 = vpop.permute.xlu0 %7859
      %7861 = vrot.lane.b32.xlu0 %v7816, 64
      %v7862 = vpop.permute.xlu0 %7861
      %7863 = vrot.lane.b32.xlu0 %v7817, 64
      %v7864 = vpop.permute.xlu0 %7863
      %7865 = vrot.lane.b32.xlu0 %v7818, 64
      %v7866 = vpop.permute.xlu0 %7865
      %vm7883 = vcmask 785920
      %7884 = vst.msk [vmem:[#allocation7] sm:$0xff] %vm7883, %v7836
      %7885 = vst.msk [vmem:[#allocation7 + $0x18] sm:$0xff] %vm7883, %v7838
      %7886 = vst.msk [vmem:[#allocation7 + $0x30] sm:$0xff] %vm7883, %v7840
      %7887 = vst.msk [vmem:[#allocation7 + $0x48] sm:$0xff] %vm7883, %v7842
      %7888 = vst.msk [vmem:[#allocation7 + $0x60] sm:$0xff] %vm7883, %v7844
      %7889 = vst.msk [vmem:[#allocation7 + $0x78] sm:$0xff] %vm7883, %v7846
      %7890 = vst.msk [vmem:[#allocation7 + $0x90] sm:$0xff] %vm7883, %v7848
      %7891 = vst.msk [vmem:[#allocation7 + $0xa8] sm:$0xff] %vm7883, %v7850
      %7892 = vst.msk [vmem:[#allocation7 + $0xc0] sm:$0xff] %vm7883, %v7852
      %7893 = vst.msk [vmem:[#allocation7 + $0xd8] sm:$0xff] %vm7883, %v7854
      %7894 = vst.msk [vmem:[#allocation7 + $0xf0] sm:$0xff] %vm7883, %v7856
      %7895 = vst.msk [vmem:[#allocation7 + $0x108] sm:$0xff] %vm7883, %v7858
      %7896 = vst.msk [vmem:[#allocation7 + $0x120] sm:$0xff] %vm7883, %v7860
      %7897 = vst.msk [vmem:[#allocation7 + $0x138] sm:$0xff] %vm7883, %v7862
      %7898 = vst.msk [vmem:[#allocation7 + $0x150] sm:$0xff] %vm7883, %v7864
      %7899 = vst.msk [vmem:[#allocation7 + $0x168] sm:$0xff] %vm7883, %v7866
      %v7900 = vld [vmem:[%s7657] sm:$0xff]
      %v7901 = vld [vmem:[%s7657 + $0x10] sm:$0xff]
      %v7902 = vld [vmem:[%s7657 + $0x20] sm:$0xff]
      %v7903 = vld [vmem:[%s7657 + $0x30] sm:$0xff]
      %v7904 = vld [vmem:[%s7657 + $0x40] sm:$0xff]
      %v7905 = vld [vmem:[%s7657 + $0x50] sm:$0xff]
      %v7906 = vld [vmem:[%s7657 + $0x60] sm:$0xff]
      %v7907 = vld [vmem:[%s7657 + $0x70] sm:$0xff]
      %v7908 = vld [vmem:[%s7657 + $0xa0] sm:$0xff]
      %v7909 = vld [vmem:[%s7657 + $0xb0] sm:$0xff]
      %v7910 = vld [vmem:[%s7657 + $0xc0] sm:$0xff]
      %v7911 = vld [vmem:[%s7657 + $0xd0] sm:$0xff]
      %v7912 = vld [vmem:[%s7657 + $0xe0] sm:$0xff]
      %v7913 = vld [vmem:[%s7657 + $0xf0] sm:$0xff]
      %v7914 = vld [vmem:[%s7657 + $0x100] sm:$0xff]
      %v7915 = vld [vmem:[%s7657 + $0x110] sm:$0xff]
      %7932 = vrot.lane.b32.xlu0 %v7900, 96
      %v7933 = vpop.permute.xlu0 %7932
      %7934 = vrot.lane.b32.xlu0 %v7901, 96
      %v7935 = vpop.permute.xlu0 %7934
      %7936 = vrot.lane.b32.xlu0 %v7902, 96
      %v7937 = vpop.permute.xlu0 %7936
      %7938 = vrot.lane.b32.xlu0 %v7903, 96
      %v7939 = vpop.permute.xlu0 %7938
      %7940 = vrot.lane.b32.xlu0 %v7904, 96
      %v7941 = vpop.permute.xlu0 %7940
      %7942 = vrot.lane.b32.xlu0 %v7905, 96
      %v7943 = vpop.permute.xlu0 %7942
      %7944 = vrot.lane.b32.xlu0 %v7906, 96
      %v7945 = vpop.permute.xlu0 %7944
      %7946 = vrot.lane.b32.xlu0 %v7907, 96
      %v7947 = vpop.permute.xlu0 %7946
      %7948 = vrot.lane.b32.xlu0 %v7908, 96
      %v7949 = vpop.permute.xlu0 %7948
      %7950 = vrot.lane.b32.xlu0 %v7909, 96
      %v7951 = vpop.permute.xlu0 %7950
      %7952 = vrot.lane.b32.xlu0 %v7910, 96
      %v7953 = vpop.permute.xlu0 %7952
      %7954 = vrot.lane.b32.xlu0 %v7911, 96
      %v7955 = vpop.permute.xlu0 %7954
      %7956 = vrot.lane.b32.xlu0 %v7912, 96
      %v7957 = vpop.permute.xlu0 %7956
      %7958 = vrot.lane.b32.xlu0 %v7913, 96
      %v7959 = vpop.permute.xlu0 %7958
      %7960 = vrot.lane.b32.xlu0 %v7914, 96
      %v7961 = vpop.permute.xlu0 %7960
      %7962 = vrot.lane.b32.xlu0 %v7915, 96
      %v7963 = vpop.permute.xlu0 %7962
      %vm7980 = vcmask 1048320
      %7981 = vst.msk [vmem:[#allocation7] sm:$0xff] %vm7980, %v7933
      %7982 = vst.msk [vmem:[#allocation7 + $0x18] sm:$0xff] %vm7980, %v7935
      %7983 = vst.msk [vmem:[#allocation7 + $0x30] sm:$0xff] %vm7980, %v7937
      %7984 = vst.msk [vmem:[#allocation7 + $0x48] sm:$0xff] %vm7980, %v7939
      %7985 = vst.msk [vmem:[#allocation7 + $0x60] sm:$0xff] %vm7980, %v7941
      %7986 = vst.msk [vmem:[#allocation7 + $0x78] sm:$0xff] %vm7980, %v7943
      %7987 = vst.msk [vmem:[#allocation7 + $0x90] sm:$0xff] %vm7980, %v7945
      %7988 = vst.msk [vmem:[#allocation7 + $0xa8] sm:$0xff] %vm7980, %v7947
      %7989 = vst.msk [vmem:[#allocation7 + $0xc0] sm:$0xff] %vm7980, %v7949
      %7990 = vst.msk [vmem:[#allocation7 + $0xd8] sm:$0xff] %vm7980, %v7951
      %7991 = vst.msk [vmem:[#allocation7 + $0xf0] sm:$0xff] %vm7980, %v7953
      %7992 = vst.msk [vmem:[#allocation7 + $0x108] sm:$0xff] %vm7980, %v7955
      %7993 = vst.msk [vmem:[#allocation7 + $0x120] sm:$0xff] %vm7980, %v7957
      %7994 = vst.msk [vmem:[#allocation7 + $0x138] sm:$0xff] %vm7980, %v7959
      %7995 = vst.msk [vmem:[#allocation7 + $0x150] sm:$0xff] %vm7980, %v7961
      %7996 = vst.msk [vmem:[#allocation7 + $0x168] sm:$0xff] %vm7980, %v7963
      %v7997 = vld [vmem:[%s7657 + $0x1] sm:$0xff]
      %v7998 = vld [vmem:[%s7657 + $0x11] sm:$0xff]
      %v7999 = vld [vmem:[%s7657 + $0x21] sm:$0xff]
      %v8000 = vld [vmem:[%s7657 + $0x31] sm:$0xff]
      %v8001 = vld [vmem:[%s7657 + $0x41] sm:$0xff]
      %v8002 = vld [vmem:[%s7657 + $0x51] sm:$0xff]
      %v8003 = vld [vmem:[%s7657 + $0x61] sm:$0xff]
      %v8004 = vld [vmem:[%s7657 + $0x71] sm:$0xff]
      %v8005 = vld [vmem:[%s7657 + $0xa1] sm:$0xff]
      %v8006 = vld [vmem:[%s7657 + $0xb1] sm:$0xff]
      %v8007 = vld [vmem:[%s7657 + $0xc1] sm:$0xff]
      %v8008 = vld [vmem:[%s7657 + $0xd1] sm:$0xff]
      %v8009 = vld [vmem:[%s7657 + $0xe1] sm:$0xff]
      %v8010 = vld [vmem:[%s7657 + $0xf1] sm:$0xff]
      %v8011 = vld [vmem:[%s7657 + $0x101] sm:$0xff]
      %v8012 = vld [vmem:[%s7657 + $0x111] sm:$0xff]
      %8013 = vst.msk [vmem:[#allocation7 + $0x8] sm:$0xff] %vm447, %v7997
      %8014 = vst.msk [vmem:[#allocation7 + $0x20] sm:$0xff] %vm447, %v7998
      %8015 = vst.msk [vmem:[#allocation7 + $0x38] sm:$0xff] %vm447, %v7999
      %8016 = vst.msk [vmem:[#allocation7 + $0x50] sm:$0xff] %vm447, %v8000
      %8017 = vst.msk [vmem:[#allocation7 + $0x68] sm:$0xff] %vm447, %v8001
      %8018 = vst.msk [vmem:[#allocation7 + $0x80] sm:$0xff] %vm447, %v8002
      %8019 = vst.msk [vmem:[#allocation7 + $0x98] sm:$0xff] %vm447, %v8003
      %8020 = vst.msk [vmem:[#allocation7 + $0xb0] sm:$0xff] %vm447, %v8004
      %8021 = vst.msk [vmem:[#allocation7 + $0xc8] sm:$0xff] %vm447, %v8005
      %8022 = vst.msk [vmem:[#allocation7 + $0xe0] sm:$0xff] %vm447, %v8006
      %8023 = vst.msk [vmem:[#allocation7 + $0xf8] sm:$0xff] %vm447, %v8007
      %8024 = vst.msk [vmem:[#allocation7 + $0x110] sm:$0xff] %vm447, %v8008
      %8025 = vst.msk [vmem:[#allocation7 + $0x128] sm:$0xff] %vm447, %v8009
      %8026 = vst.msk [vmem:[#allocation7 + $0x140] sm:$0xff] %vm447, %v8010
      %8027 = vst.msk [vmem:[#allocation7 + $0x158] sm:$0xff] %vm447, %v8011
      %8028 = vst.msk [vmem:[#allocation7 + $0x170] sm:$0xff] %vm447, %v8012
      %v8029 = vld [vmem:[%s7657 + $0x2] sm:$0xff]
      %v8030 = vld [vmem:[%s7657 + $0x12] sm:$0xff]
      %v8031 = vld [vmem:[%s7657 + $0x22] sm:$0xff]
      %v8032 = vld [vmem:[%s7657 + $0x32] sm:$0xff]
      %v8033 = vld [vmem:[%s7657 + $0x42] sm:$0xff]
      %v8034 = vld [vmem:[%s7657 + $0x52] sm:$0xff]
      %v8035 = vld [vmem:[%s7657 + $0x62] sm:$0xff]
      %v8036 = vld [vmem:[%s7657 + $0x72] sm:$0xff]
      %v8037 = vld [vmem:[%s7657 + $0xa2] sm:$0xff]
      %v8038 = vld [vmem:[%s7657 + $0xb2] sm:$0xff]
      %v8039 = vld [vmem:[%s7657 + $0xc2] sm:$0xff]
      %v8040 = vld [vmem:[%s7657 + $0xd2] sm:$0xff]
      %v8041 = vld [vmem:[%s7657 + $0xe2] sm:$0xff]
      %v8042 = vld [vmem:[%s7657 + $0xf2] sm:$0xff]
      %v8043 = vld [vmem:[%s7657 + $0x102] sm:$0xff]
      %v8044 = vld [vmem:[%s7657 + $0x112] sm:$0xff]
      %8061 = vrot.lane.b32.xlu0 %v8029, 32
      %v8062 = vpop.permute.xlu0 %8061
      %8063 = vrot.lane.b32.xlu0 %v8030, 32
      %v8064 = vpop.permute.xlu0 %8063
      %8065 = vrot.lane.b32.xlu0 %v8031, 32
      %v8066 = vpop.permute.xlu0 %8065
      %8067 = vrot.lane.b32.xlu0 %v8032, 32
      %v8068 = vpop.permute.xlu0 %8067
      %8069 = vrot.lane.b32.xlu0 %v8033, 32
      %v8070 = vpop.permute.xlu0 %8069
      %8071 = vrot.lane.b32.xlu0 %v8034, 32
      %v8072 = vpop.permute.xlu0 %8071
      %8073 = vrot.lane.b32.xlu0 %v8035, 32
      %v8074 = vpop.permute.xlu0 %8073
      %8075 = vrot.lane.b32.xlu0 %v8036, 32
      %v8076 = vpop.permute.xlu0 %8075
      %8077 = vrot.lane.b32.xlu0 %v8037, 32
      %v8078 = vpop.permute.xlu0 %8077
      %8079 = vrot.lane.b32.xlu0 %v8038, 32
      %v8080 = vpop.permute.xlu0 %8079
      %8081 = vrot.lane.b32.xlu0 %v8039, 32
      %v8082 = vpop.permute.xlu0 %8081
      %8083 = vrot.lane.b32.xlu0 %v8040, 32
      %v8084 = vpop.permute.xlu0 %8083
      %8085 = vrot.lane.b32.xlu0 %v8041, 32
      %v8086 = vpop.permute.xlu0 %8085
      %8087 = vrot.lane.b32.xlu0 %v8042, 32
      %v8088 = vpop.permute.xlu0 %8087
      %8089 = vrot.lane.b32.xlu0 %v8043, 32
      %v8090 = vpop.permute.xlu0 %8089
      %8091 = vrot.lane.b32.xlu0 %v8044, 32
      %v8092 = vpop.permute.xlu0 %8091
      %8109 = vst.msk [vmem:[#allocation7 + $0x8] sm:$0xff] %vm7786, %v8062
      %8110 = vst.msk [vmem:[#allocation7 + $0x20] sm:$0xff] %vm7786, %v8064
      %8111 = vst.msk [vmem:[#allocation7 + $0x38] sm:$0xff] %vm7786, %v8066
      %8112 = vst.msk [vmem:[#allocation7 + $0x50] sm:$0xff] %vm7786, %v8068
      %8113 = vst.msk [vmem:[#allocation7 + $0x68] sm:$0xff] %vm7786, %v8070
      %8114 = vst.msk [vmem:[#allocation7 + $0x80] sm:$0xff] %vm7786, %v8072
      %8115 = vst.msk [vmem:[#allocation7 + $0x98] sm:$0xff] %vm7786, %v8074
      %8116 = vst.msk [vmem:[#allocation7 + $0xb0] sm:$0xff] %vm7786, %v8076
      %8117 = vst.msk [vmem:[#allocation7 + $0xc8] sm:$0xff] %vm7786, %v8078
      %8118 = vst.msk [vmem:[#allocation7 + $0xe0] sm:$0xff] %vm7786, %v8080
      %8119 = vst.msk [vmem:[#allocation7 + $0xf8] sm:$0xff] %vm7786, %v8082
      %8120 = vst.msk [vmem:[#allocation7 + $0x110] sm:$0xff] %vm7786, %v8084
      %8121 = vst.msk [vmem:[#allocation7 + $0x128] sm:$0xff] %vm7786, %v8086
      %8122 = vst.msk [vmem:[#allocation7 + $0x140] sm:$0xff] %vm7786, %v8088
      %8123 = vst.msk [vmem:[#allocation7 + $0x158] sm:$0xff] %vm7786, %v8090
      %8124 = vst.msk [vmem:[#allocation7 + $0x170] sm:$0xff] %vm7786, %v8092
      %s8125 = scalar_lea.vmem [#allocation6], 32
      %v8126 = vld [vmem:[%s8125] sm:$0xff]
      %v8127 = vld [vmem:[%s8125 + $0x10] sm:$0xff]
      %v8128 = vld [vmem:[%s8125 + $0x20] sm:$0xff]
      %v8129 = vld [vmem:[%s8125 + $0x30] sm:$0xff]
      %v8130 = vld [vmem:[%s8125 + $0x40] sm:$0xff]
      %v8131 = vld [vmem:[%s8125 + $0x50] sm:$0xff]
      %v8132 = vld [vmem:[%s8125 + $0x60] sm:$0xff]
      %v8133 = vld [vmem:[%s8125 + $0x70] sm:$0xff]
      %v8134 = vld [vmem:[%s8125 + $0xa0] sm:$0xff]
      %v8135 = vld [vmem:[%s8125 + $0xb0] sm:$0xff]
      %v8136 = vld [vmem:[%s8125 + $0xc0] sm:$0xff]
      %v8137 = vld [vmem:[%s8125 + $0xd0] sm:$0xff]
      %v8138 = vld [vmem:[%s8125 + $0xe0] sm:$0xff]
      %v8139 = vld [vmem:[%s8125 + $0xf0] sm:$0xff]
      %v8140 = vld [vmem:[%s8125 + $0x100] sm:$0xff]
      %v8141 = vld [vmem:[%s8125 + $0x110] sm:$0xff]
      %8158 = vrot.lane.b32.xlu0 %v8126, 64
      %v8159 = vpop.permute.xlu0 %8158
      %8160 = vrot.lane.b32.xlu0 %v8127, 64
      %v8161 = vpop.permute.xlu0 %8160
      %8162 = vrot.lane.b32.xlu0 %v8128, 64
      %v8163 = vpop.permute.xlu0 %8162
      %8164 = vrot.lane.b32.xlu0 %v8129, 64
      %v8165 = vpop.permute.xlu0 %8164
      %8166 = vrot.lane.b32.xlu0 %v8130, 64
      %v8167 = vpop.permute.xlu0 %8166
      %8168 = vrot.lane.b32.xlu0 %v8131, 64
      %v8169 = vpop.permute.xlu0 %8168
      %8170 = vrot.lane.b32.xlu0 %v8132, 64
      %v8171 = vpop.permute.xlu0 %8170
      %8172 = vrot.lane.b32.xlu0 %v8133, 64
      %v8173 = vpop.permute.xlu0 %8172
      %8174 = vrot.lane.b32.xlu0 %v8134, 64
      %v8175 = vpop.permute.xlu0 %8174
      %8176 = vrot.lane.b32.xlu0 %v8135, 64
      %v8177 = vpop.permute.xlu0 %8176
      %8178 = vrot.lane.b32.xlu0 %v8136, 64
      %v8179 = vpop.permute.xlu0 %8178
      %8180 = vrot.lane.b32.xlu0 %v8137, 64
      %v8181 = vpop.permute.xlu0 %8180
      %8182 = vrot.lane.b32.xlu0 %v8138, 64
      %v8183 = vpop.permute.xlu0 %8182
      %8184 = vrot.lane.b32.xlu0 %v8139, 64
      %v8185 = vpop.permute.xlu0 %8184
      %8186 = vrot.lane.b32.xlu0 %v8140, 64
      %v8187 = vpop.permute.xlu0 %8186
      %8188 = vrot.lane.b32.xlu0 %v8141, 64
      %v8189 = vpop.permute.xlu0 %8188
      %8206 = vst.msk [vmem:[#allocation7 + $0x8] sm:$0xff] %vm7883, %v8159
      %8207 = vst.msk [vmem:[#allocation7 + $0x20] sm:$0xff] %vm7883, %v8161
      %8208 = vst.msk [vmem:[#allocation7 + $0x38] sm:$0xff] %vm7883, %v8163
      %8209 = vst.msk [vmem:[#allocation7 + $0x50] sm:$0xff] %vm7883, %v8165
      %8210 = vst.msk [vmem:[#allocation7 + $0x68] sm:$0xff] %vm7883, %v8167
      %8211 = vst.msk [vmem:[#allocation7 + $0x80] sm:$0xff] %vm7883, %v8169
      %8212 = vst.msk [vmem:[#allocation7 + $0x98] sm:$0xff] %vm7883, %v8171
      %8213 = vst.msk [vmem:[#allocation7 + $0xb0] sm:$0xff] %vm7883, %v8173
      %8214 = vst.msk [vmem:[#allocation7 + $0xc8] sm:$0xff] %vm7883, %v8175
      %8215 = vst.msk [vmem:[#allocation7 + $0xe0] sm:$0xff] %vm7883, %v8177
      %8216 = vst.msk [vmem:[#allocation7 + $0xf8] sm:$0xff] %vm7883, %v8179
      %8217 = vst.msk [vmem:[#allocation7 + $0x110] sm:$0xff] %vm7883, %v8181
      %8218 = vst.msk [vmem:[#allocation7 + $0x128] sm:$0xff] %vm7883, %v8183
      %8219 = vst.msk [vmem:[#allocation7 + $0x140] sm:$0xff] %vm7883, %v8185
      %8220 = vst.msk [vmem:[#allocation7 + $0x158] sm:$0xff] %vm7883, %v8187
      %8221 = vst.msk [vmem:[#allocation7 + $0x170] sm:$0xff] %vm7883, %v8189
      %v8222 = vld [vmem:[%s8125 + $0x1] sm:$0xff]
      %v8223 = vld [vmem:[%s8125 + $0x11] sm:$0xff]
      %v8224 = vld [vmem:[%s8125 + $0x21] sm:$0xff]
      %v8225 = vld [vmem:[%s8125 + $0x31] sm:$0xff]
      %v8226 = vld [vmem:[%s8125 + $0x41] sm:$0xff]
      %v8227 = vld [vmem:[%s8125 + $0x51] sm:$0xff]
      %v8228 = vld [vmem:[%s8125 + $0x61] sm:$0xff]
      %v8229 = vld [vmem:[%s8125 + $0x71] sm:$0xff]
      %v8230 = vld [vmem:[%s8125 + $0xa1] sm:$0xff]
      %v8231 = vld [vmem:[%s8125 + $0xb1] sm:$0xff]
      %v8232 = vld [vmem:[%s8125 + $0xc1] sm:$0xff]
      %v8233 = vld [vmem:[%s8125 + $0xd1] sm:$0xff]
      %v8234 = vld [vmem:[%s8125 + $0xe1] sm:$0xff]
      %v8235 = vld [vmem:[%s8125 + $0xf1] sm:$0xff]
      %v8236 = vld [vmem:[%s8125 + $0x101] sm:$0xff]
      %v8237 = vld [vmem:[%s8125 + $0x111] sm:$0xff]
      %8254 = vrot.lane.b32.xlu0 %v8222, 96
      %v8255 = vpop.permute.xlu0 %8254
      %8256 = vrot.lane.b32.xlu0 %v8223, 96
      %v8257 = vpop.permute.xlu0 %8256
      %8258 = vrot.lane.b32.xlu0 %v8224, 96
      %v8259 = vpop.permute.xlu0 %8258
      %8260 = vrot.lane.b32.xlu0 %v8225, 96
      %v8261 = vpop.permute.xlu0 %8260
      %8262 = vrot.lane.b32.xlu0 %v8226, 96
      %v8263 = vpop.permute.xlu0 %8262
      %8264 = vrot.lane.b32.xlu0 %v8227, 96
      %v8265 = vpop.permute.xlu0 %8264
      %8266 = vrot.lane.b32.xlu0 %v8228, 96
      %v8267 = vpop.permute.xlu0 %8266
      %8268 = vrot.lane.b32.xlu0 %v8229, 96
      %v8269 = vpop.permute.xlu0 %8268
      %8270 = vrot.lane.b32.xlu0 %v8230, 96
      %v8271 = vpop.permute.xlu0 %8270
      %8272 = vrot.lane.b32.xlu0 %v8231, 96
      %v8273 = vpop.permute.xlu0 %8272
      %8274 = vrot.lane.b32.xlu0 %v8232, 96
      %v8275 = vpop.permute.xlu0 %8274
      %8276 = vrot.lane.b32.xlu0 %v8233, 96
      %v8277 = vpop.permute.xlu0 %8276
      %8278 = vrot.lane.b32.xlu0 %v8234, 96
      %v8279 = vpop.permute.xlu0 %8278
      %8280 = vrot.lane.b32.xlu0 %v8235, 96
      %v8281 = vpop.permute.xlu0 %8280
      %8282 = vrot.lane.b32.xlu0 %v8236, 96
      %v8283 = vpop.permute.xlu0 %8282
      %8284 = vrot.lane.b32.xlu0 %v8237, 96
      %v8285 = vpop.permute.xlu0 %8284
      %8302 = vst.msk [vmem:[#allocation7 + $0x8] sm:$0xff] %vm7980, %v8255
      %8303 = vst.msk [vmem:[#allocation7 + $0x20] sm:$0xff] %vm7980, %v8257
      %8304 = vst.msk [vmem:[#allocation7 + $0x38] sm:$0xff] %vm7980, %v8259
      %8305 = vst.msk [vmem:[#allocation7 + $0x50] sm:$0xff] %vm7980, %v8261
      %8306 = vst.msk [vmem:[#allocation7 + $0x68] sm:$0xff] %vm7980, %v8263
      %8307 = vst.msk [vmem:[#allocation7 + $0x80] sm:$0xff] %vm7980, %v8265
      %8308 = vst.msk [vmem:[#allocation7 + $0x98] sm:$0xff] %vm7980, %v8267
      %8309 = vst.msk [vmem:[#allocation7 + $0xb0] sm:$0xff] %vm7980, %v8269
      %8310 = vst.msk [vmem:[#allocation7 + $0xc8] sm:$0xff] %vm7980, %v8271
      %8311 = vst.msk [vmem:[#allocation7 + $0xe0] sm:$0xff] %vm7980, %v8273
      %8312 = vst.msk [vmem:[#allocation7 + $0xf8] sm:$0xff] %vm7980, %v8275
      %8313 = vst.msk [vmem:[#allocation7 + $0x110] sm:$0xff] %vm7980, %v8277
      %8314 = vst.msk [vmem:[#allocation7 + $0x128] sm:$0xff] %vm7980, %v8279
      %8315 = vst.msk [vmem:[#allocation7 + $0x140] sm:$0xff] %vm7980, %v8281
      %8316 = vst.msk [vmem:[#allocation7 + $0x158] sm:$0xff] %vm7980, %v8283
      %8317 = vst.msk [vmem:[#allocation7 + $0x170] sm:$0xff] %vm7980, %v8285
      %v8318 = vld [vmem:[%s8125 + $0x2] sm:$0xff]
      %v8319 = vld [vmem:[%s8125 + $0x12] sm:$0xff]
      %v8320 = vld [vmem:[%s8125 + $0x22] sm:$0xff]
      %v8321 = vld [vmem:[%s8125 + $0x32] sm:$0xff]
      %v8322 = vld [vmem:[%s8125 + $0x42] sm:$0xff]
      %v8323 = vld [vmem:[%s8125 + $0x52] sm:$0xff]
      %v8324 = vld [vmem:[%s8125 + $0x62] sm:$0xff]
      %v8325 = vld [vmem:[%s8125 + $0x72] sm:$0xff]
      %v8326 = vld [vmem:[%s8125 + $0xa2] sm:$0xff]
      %v8327 = vld [vmem:[%s8125 + $0xb2] sm:$0xff]
      %v8328 = vld [vmem:[%s8125 + $0xc2] sm:$0xff]
      %v8329 = vld [vmem:[%s8125 + $0xd2] sm:$0xff]
      %v8330 = vld [vmem:[%s8125 + $0xe2] sm:$0xff]
      %v8331 = vld [vmem:[%s8125 + $0xf2] sm:$0xff]
      %v8332 = vld [vmem:[%s8125 + $0x102] sm:$0xff]
      %v8333 = vld [vmem:[%s8125 + $0x112] sm:$0xff]
      %8334 = vst.msk [vmem:[#allocation7 + $0x10] sm:$0xff] %vm447, %v8318
      %8335 = vst.msk [vmem:[#allocation7 + $0x28] sm:$0xff] %vm447, %v8319
      %8336 = vst.msk [vmem:[#allocation7 + $0x40] sm:$0xff] %vm447, %v8320
      %8337 = vst.msk [vmem:[#allocation7 + $0x58] sm:$0xff] %vm447, %v8321
      %8338 = vst.msk [vmem:[#allocation7 + $0x70] sm:$0xff] %vm447, %v8322
      %8339 = vst.msk [vmem:[#allocation7 + $0x88] sm:$0xff] %vm447, %v8323
      %8340 = vst.msk [vmem:[#allocation7 + $0xa0] sm:$0xff] %vm447, %v8324
      %8341 = vst.msk [vmem:[#allocation7 + $0xb8] sm:$0xff] %vm447, %v8325
      %8342 = vst.msk [vmem:[#allocation7 + $0xd0] sm:$0xff] %vm447, %v8326
      %8343 = vst.msk [vmem:[#allocation7 + $0xe8] sm:$0xff] %vm447, %v8327
      %8344 = vst.msk [vmem:[#allocation7 + $0x100] sm:$0xff] %vm447, %v8328
      %8345 = vst.msk [vmem:[#allocation7 + $0x118] sm:$0xff] %vm447, %v8329
      %8346 = vst.msk [vmem:[#allocation7 + $0x130] sm:$0xff] %vm447, %v8330
      %8347 = vst.msk [vmem:[#allocation7 + $0x148] sm:$0xff] %vm447, %v8331
      %8348 = vst.msk [vmem:[#allocation7 + $0x160] sm:$0xff] %vm447, %v8332
      %8349 = vst.msk [vmem:[#allocation7 + $0x178] sm:$0xff] %vm447, %v8333
      %v8350 = vld [vmem:[#allocation7] sm:$0xff]
      %v8351 = vld [vmem:[#allocation7 + $0x8] sm:$0xff]
      %v8352 = vld [vmem:[#allocation7 + $0x10] sm:$0xff]
      %v8353 = vld [vmem:[#allocation7 + $0x18] sm:$0xff]
      %v8354 = vld [vmem:[#allocation7 + $0x20] sm:$0xff]
      %v8355 = vld [vmem:[#allocation7 + $0x28] sm:$0xff]
      %v8356 = vld [vmem:[#allocation7 + $0x30] sm:$0xff]
      %v8357 = vld [vmem:[#allocation7 + $0x38] sm:$0xff]
      %v8358 = vld [vmem:[#allocation7 + $0x40] sm:$0xff]
      %v8359 = vld [vmem:[#allocation7 + $0x48] sm:$0xff]
      %v8360 = vld [vmem:[#allocation7 + $0x50] sm:$0xff]
      %v8361 = vld [vmem:[#allocation7 + $0x58] sm:$0xff]
      %v8362 = vld [vmem:[#allocation7 + $0x60] sm:$0xff]
      %v8363 = vld [vmem:[#allocation7 + $0x68] sm:$0xff]
      %v8364 = vld [vmem:[#allocation7 + $0x70] sm:$0xff]
      %v8365 = vld [vmem:[#allocation7 + $0x78] sm:$0xff]
      %v8366 = vld [vmem:[#allocation7 + $0x80] sm:$0xff]
      %v8367 = vld [vmem:[#allocation7 + $0x88] sm:$0xff]
      %v8368 = vld [vmem:[#allocation7 + $0x90] sm:$0xff]
      %v8369 = vld [vmem:[#allocation7 + $0x98] sm:$0xff]
      %v8370 = vld [vmem:[#allocation7 + $0xa0] sm:$0xff]
      %v8371 = vld [vmem:[#allocation7 + $0xa8] sm:$0xff]
      %v8372 = vld [vmem:[#allocation7 + $0xb0] sm:$0xff]
      %v8373 = vld [vmem:[#allocation7 + $0xb8] sm:$0xff]
      %v8374 = vld [vmem:[#allocation7 + $0xc0] sm:$0xff]
      %v8375 = vld [vmem:[#allocation7 + $0xc8] sm:$0xff]
      %v8376 = vld [vmem:[#allocation7 + $0xd0] sm:$0xff]
      %v8377 = vld [vmem:[#allocation7 + $0xd8] sm:$0xff]
      %v8378 = vld [vmem:[#allocation7 + $0xe0] sm:$0xff]
      %v8379 = vld [vmem:[#allocation7 + $0xe8] sm:$0xff]
      %v8380 = vld [vmem:[#allocation7 + $0xf0] sm:$0xff]
      %v8381 = vld [vmem:[#allocation7 + $0xf8] sm:$0xff]
      %v8382 = vld [vmem:[#allocation7 + $0x100] sm:$0xff]
      %v8383 = vld [vmem:[#allocation7 + $0x108] sm:$0xff]
      %v8384 = vld [vmem:[#allocation7 + $0x110] sm:$0xff]
      %v8385 = vld [vmem:[#allocation7 + $0x118] sm:$0xff]
      %v8386 = vld [vmem:[#allocation7 + $0x120] sm:$0xff]
      %v8387 = vld [vmem:[#allocation7 + $0x128] sm:$0xff]
      %v8388 = vld [vmem:[#allocation7 + $0x130] sm:$0xff]
      %v8389 = vld [vmem:[#allocation7 + $0x138] sm:$0xff]
      %v8390 = vld [vmem:[#allocation7 + $0x140] sm:$0xff]
      %v8391 = vld [vmem:[#allocation7 + $0x148] sm:$0xff]
      %v8392 = vld [vmem:[#allocation7 + $0x150] sm:$0xff]
      %v8393 = vld [vmem:[#allocation7 + $0x158] sm:$0xff]
      %v8394 = vld [vmem:[#allocation7 + $0x160] sm:$0xff]
      %v8395 = vld [vmem:[#allocation7 + $0x168] sm:$0xff]
      %v8396 = vld [vmem:[#allocation7 + $0x170] sm:$0xff]
      %v8397 = vld [vmem:[#allocation7 + $0x178] sm:$0xff]
      %v8398 = vld [vmem:[%s5] sm:$0xff]
      %v8399 = vld [vmem:[%s5 + $0x8] sm:$0xff]
      %v8400 = vld [vmem:[%s5 + $0x10] sm:$0xff]
      %v8401 = vld [vmem:[%s5 + $0x18] sm:$0xff]
      %v8402 = vld [vmem:[%s5 + $0x20] sm:$0xff]
      %v8403 = vld [vmem:[%s5 + $0x28] sm:$0xff]
      %v8404 = vld [vmem:[%s5 + $0x30] sm:$0xff]
      %v8405 = vld [vmem:[%s5 + $0x38] sm:$0xff]
      %v8406 = vld [vmem:[%s5 + $0x40] sm:$0xff]
      %v8407 = vld [vmem:[%s5 + $0x48] sm:$0xff]
      %v8408 = vld [vmem:[%s5 + $0x50] sm:$0xff]
      %v8409 = vld [vmem:[%s5 + $0x58] sm:$0xff]
      %v8410 = vld [vmem:[%s5 + $0x60] sm:$0xff]
      %v8411 = vld [vmem:[%s5 + $0x68] sm:$0xff]
      %v8412 = vld [vmem:[%s5 + $0x70] sm:$0xff]
      %v8413 = vld [vmem:[%s5 + $0x78] sm:$0xff]
      %v8414 = vld [vmem:[%s5 + $0x80] sm:$0xff]
      %v8415 = vld [vmem:[%s5 + $0x88] sm:$0xff]
      %v8416 = vld [vmem:[%s5 + $0x90] sm:$0xff]
      %v8417 = vld [vmem:[%s5 + $0x98] sm:$0xff]
      %v8418 = vld [vmem:[%s5 + $0xa0] sm:$0xff]
      %v8419 = vld [vmem:[%s5 + $0xa8] sm:$0xff]
      %v8420 = vld [vmem:[%s5 + $0xb0] sm:$0xff]
      %v8421 = vld [vmem:[%s5 + $0xb8] sm:$0xff]
      %v8422 = vld [vmem:[%s5 + $0xc0] sm:$0xff]
      %v8423 = vld [vmem:[%s5 + $0xc8] sm:$0xff]
      %v8424 = vld [vmem:[%s5 + $0xd0] sm:$0xff]
      %v8425 = vld [vmem:[%s5 + $0xd8] sm:$0xff]
      %v8426 = vld [vmem:[%s5 + $0xe0] sm:$0xff]
      %v8427 = vld [vmem:[%s5 + $0xe8] sm:$0xff]
      %v8428 = vld [vmem:[%s5 + $0xf0] sm:$0xff]
      %v8429 = vld [vmem:[%s5 + $0xf8] sm:$0xff]
      %v8430 = vld [vmem:[%s5 + $0x100] sm:$0xff]
      %v8431 = vld [vmem:[%s5 + $0x108] sm:$0xff]
      %v8432 = vld [vmem:[%s5 + $0x110] sm:$0xff]
      %v8433 = vld [vmem:[%s5 + $0x118] sm:$0xff]
      %v8434 = vld [vmem:[%s6] sm:$0x1]
      %v8436 = vlaneseq
      %v8437 = vshrl.u32 %v8436, 7
      %v8438 = vsub.s32 0, %v8437
      %v8439 = vrot.slane %v8434, %v8438
      %v8442 = vsel %vm447, %v8352, 0
      %v8445 = vsel %vm447, %v8355, 0
      %v8448 = vsel %vm447, %v8358, 0
      %v8451 = vsel %vm447, %v8361, 0
      %v8454 = vsel %vm447, %v8364, 0
      %v8457 = vsel %vm447, %v8367, 0
      %v8460 = vsel %vm447, %v8370, 0
      %v8463 = vsel %vm447, %v8373, 0
      %v8466 = vsel %vm447, %v8376, 0
      %v8469 = vsel %vm447, %v8379, 0
      %v8472 = vsel %vm447, %v8382, 0
      %v8475 = vsel %vm447, %v8385, 0
      %v8478 = vsel %vm447, %v8388, 0
      %v8481 = vsel %vm447, %v8391, 0
      %v8484 = vsel %vm447, %v8394, 0
      %v8487 = vsel %vm447, %v8397, 0
      %8489 = vmatprep.subr.mxu0 0.0
      %8490 = vmatpush1.msra.mxu0 %v8398
      %8491 = vmatprep.subr.mxu0 0.0
      %8492 = vmatpush1.msra.mxu0 %v8399
      %8493 = vmatprep.subr.mxu0 0.0
      %8494 = vmatpush1.msra.mxu0 %v8400
      %8495 = vmatprep.subr.mxu0 0.0
      %8496 = vmatpush1.msra.mxu0 %v8401
      %8497 = vmatprep.subr.mxu0 0.0
      %8498 = vmatpush1.msra.mxu0 %v8402
      %8499 = vmatprep.subr.mxu0 0.0
      %8500 = vmatpush1.msra.mxu0 %v8403
      %8501 = vmatprep.subr.mxu0 0.0
      %8502 = vmatpush1.msra.mxu0 %v8404
      %8503 = vmatprep.subr.mxu0 0.0
      %8504 = vmatpush1.msra.mxu0 %v8405
      %8505 = vmatprep.subr.mxu0 0.0
      %8506 = vmatpush1.msra.mxu0 %v8406
      %8507 = vmatprep.subr.mxu0 0.0
      %8508 = vmatpush1.msra.mxu0 %v8407
      %8509 = vmatprep.subr.mxu0 0.0
      %8510 = vmatpush1.msra.mxu0 %v8408
      %8511 = vmatprep.subr.mxu0 0.0
      %8512 = vmatpush1.msra.mxu0 %v8409
      %8513 = vmatprep.subr.mxu0 0.0
      %8514 = vmatpush1.msra.mxu0 %v8410
      %8515 = vmatprep.subr.mxu0 0.0
      %8516 = vmatpush1.msra.mxu0 %v8411
      %8517 = vmatprep.subr.mxu0 0.0
      %8518 = vmatpush1.msra.mxu0 %v8412
      %8519 = vmatprep.subr.mxu0 0.0
      %8520 = vmatpush1.msra.mxu0 %v8413
      %8521 = vmatprep.subr.mxu0 0.0
      %8522 = vmatpush1.msra.mxu0 %v8414
      %8523 = vmatprep.subr.mxu0 0.0
      %8524 = vmatpush1.msra.mxu0 %v8415
      %8525 = vmatprep.subr.mxu0 0.0
      %8526 = vmatpush1.msra.mxu0 %v8416
      %8527 = vmatprep.subr.mxu0 0.0
      %8528 = vmatpush1.msra.mxu0 %v8417
      %8529 = vmatprep.subr.mxu0 0.0
      %8530 = vmatpush1.msra.mxu0 %v8418
      %8531 = vmatprep.subr.mxu0 0.0
      %8532 = vmatpush1.msra.mxu0 %v8419
      %8533 = vmatprep.subr.mxu0 0.0
      %8534 = vmatpush1.msra.mxu0 %v8420
      %8535 = vmatprep.subr.mxu0 0.0
      %8536 = vmatpush1.msra.mxu0 %v8421
      %8537 = vmatprep.subr.mxu0 0.0
      %8538 = vmatpush1.msra.mxu0 %v8422
      %8539 = vmatprep.subr.mxu0 0.0
      %8540 = vmatpush1.msra.mxu0 %v8423
      %8541 = vmatprep.subr.mxu0 0.0
      %8542 = vmatpush1.msra.mxu0 %v8424
      %8543 = vmatprep.subr.mxu0 0.0
      %8544 = vmatpush1.msra.mxu0 %v8425
      %8545 = vmatprep.subr.mxu0 0.0
      %8546 = vmatpush1.msra.mxu0 %v8426
      %8547 = vmatprep.subr.mxu0 0.0
      %8548 = vmatpush1.msra.mxu0 %v8427
      %8549 = vmatprep.subr.mxu0 0.0
      %8550 = vmatpush1.msra.mxu0 %v8428
      %8551 = vmatprep.subr.mxu0 0.0
      %8552 = vmatpush1.msra.mxu0 %v8429
      %8553 = vmatprep.mubr.f32.mxu0 %v8351
      %8554 = vmatmul.mubr.f32.gmra.mrb[0].mxu0 %v8350
      %v8555 = vpop.f32.mrb[0].mxu0
      %v8556 = vadd.f32 %v8439, %v8555
      %v8557 = vpop.f32.mrb[0].mxu0
      %8558 = vmatprep.mubr.f32.mxu0 %v8354
      %8559 = vmatmul.mubr.f32.gmra.mrb[0].mxu0 %v8353
      %v8560 = vpop.f32.mrb[0].mxu0
      %v8561 = vadd.f32 %v8439, %v8560
      %v8562 = vpop.f32.mrb[0].mxu0
      %8563 = vmatprep.mubr.f32.mxu0 %v8357
      %8564 = vmatmul.mubr.f32.gmra.mrb[0].mxu0 %v8356
      %v8565 = vpop.f32.mrb[0].mxu0
      %v8566 = vadd.f32 %v8439, %v8565
      %v8567 = vpop.f32.mrb[0].mxu0
      %8568 = vmatprep.mubr.f32.mxu0 %v8360
      %8569 = vmatmul.mubr.f32.gmra.mrb[0].mxu0 %v8359
      %v8570 = vpop.f32.mrb[0].mxu0
      %v8571 = vadd.f32 %v8439, %v8570
      %v8572 = vpop.f32.mrb[0].mxu0
      %8573 = vmatprep.mubr.f32.mxu0 %v8363
      %8574 = vmatmul.mubr.f32.gmra.mrb[0].mxu0 %v8362
      %v8575 = vpop.f32.mrb[0].mxu0
      %v8576 = vadd.f32 %v8439, %v8575
      %v8577 = vpop.f32.mrb[0].mxu0
      %8578 = vmatprep.mubr.f32.mxu0 %v8366
      %8579 = vmatmul.mubr.f32.gmra.mrb[0].mxu0 %v8365
      %v8580 = vpop.f32.mrb[0].mxu0
      %v8581 = vadd.f32 %v8439, %v8580
      %v8582 = vpop.f32.mrb[0].mxu0
      %8583 = vmatprep.mubr.f32.mxu0 %v8369
      %8584 = vmatmul.mubr.f32.gmra.mrb[0].mxu0 %v8368
      %v8585 = vpop.f32.mrb[0].mxu0
      %v8586 = vadd.f32 %v8439, %v8585
      %v8587 = vpop.f32.mrb[0].mxu0
      %8588 = vmatprep.mubr.f32.mxu0 %v8372
      %8589 = vmatmul.mubr.f32.gmra.mrb[0].mxu0 %v8371
      %v8590 = vpop.f32.mrb[0].mxu0
      %v8591 = vadd.f32 %v8439, %v8590
      %v8592 = vpop.f32.mrb[0].mxu0
      %8593 = vmatprep.mubr.f32.mxu0 %v8375
      %8594 = vmatmul.mubr.f32.gmra.mrb[0].mxu0 %v8374
      %v8595 = vpop.f32.mrb[0].mxu0
      %v8596 = vadd.f32 %v8439, %v8595
      %v8597 = vpop.f32.mrb[0].mxu0
      %8598 = vmatprep.mubr.f32.mxu0 %v8378
      %8599 = vmatmul.mubr.f32.gmra.mrb[0].mxu0 %v8377
      %v8600 = vpop.f32.mrb[0].mxu0
      %v8601 = vadd.f32 %v8439, %v8600
      %v8602 = vpop.f32.mrb[0].mxu0
      %8603 = vmatprep.mubr.f32.mxu0 %v8381
      %8604 = vmatmul.mubr.f32.gmra.mrb[0].mxu0 %v8380
      %v8605 = vpop.f32.mrb[0].mxu0
      %v8606 = vadd.f32 %v8439, %v8605
      %v8607 = vpop.f32.mrb[0].mxu0
      %8608 = vmatprep.mubr.f32.mxu0 %v8384
      %8609 = vmatmul.mubr.f32.gmra.mrb[0].mxu0 %v8383
      %v8610 = vpop.f32.mrb[0].mxu0
      %v8611 = vadd.f32 %v8439, %v8610
      %v8612 = vpop.f32.mrb[0].mxu0
      %8613 = vmatprep.mubr.f32.mxu0 %v8387
      %8614 = vmatmul.mubr.f32.gmra.mrb[0].mxu0 %v8386
      %v8615 = vpop.f32.mrb[0].mxu0
      %v8616 = vadd.f32 %v8439, %v8615
      %v8617 = vpop.f32.mrb[0].mxu0
      %8618 = vmatprep.mubr.f32.mxu0 %v8390
      %8619 = vmatmul.mubr.f32.gmra.mrb[0].mxu0 %v8389
      %v8620 = vpop.f32.mrb[0].mxu0
      %v8621 = vadd.f32 %v8439, %v8620
      %v8622 = vpop.f32.mrb[0].mxu0
      %8623 = vmatprep.mubr.f32.mxu0 %v8393
      %8624 = vmatmul.mubr.f32.gmra.mrb[0].mxu0 %v8392
      %v8625 = vpop.f32.mrb[0].mxu0
      %v8626 = vadd.f32 %v8439, %v8625
      %v8627 = vpop.f32.mrb[0].mxu0
      %8628 = vmatprep.mubr.f32.mxu0 %v8396
      %8629 = vmatmul.mubr.f32.gmra.mrb[0].mxu0 %v8395
      %v8630 = vpop.f32.mrb[0].mxu0
      %v8631 = vadd.f32 %v8439, %v8630
      %v8632 = vpop.f32.mrb[0].mxu0
      %8633 = vdwg.mxu0
      %8634 = vmatprep.subr.mxu0 0.0
      %8635 = vmatpush1.msra.mxu0 %v8430
      %8636 = vmatprep.subr.mxu0 0.0
      %8637 = vmatpush1.msra.mxu0 %v8431
      %8638 = vmatprep.subr.mxu0 0.0
      %8639 = vmatpush1.msra.mxu0 %v8432
      %8640 = vmatprep.subr.mxu0 0.0
      %8641 = vmatpush1.msra.mxu0 %v8433
      %8642 = vmatprep.subr.mxu0 0.0
      %8643 = vmatpush1.msra.mxu0 0.0
      %8644 = vmatprep.subr.mxu0 0.0
      %8645 = vmatpush1.msra.mxu0 0.0
      %8646 = vmatprep.subr.mxu0 0.0
      %8647 = vmatpush1.msra.mxu0 0.0
      %8648 = vmatprep.subr.mxu0 0.0
      %8649 = vmatpush1.msra.mxu0 0.0
      %8650 = vmatprep.subr.mxu0 0.0
      %8651 = vmatpush1.msra.mxu0 0.0
      %8652 = vmatprep.subr.mxu0 0.0
      %8653 = vmatpush1.msra.mxu0 0.0
      %8654 = vmatprep.subr.mxu0 0.0
      %8655 = vmatpush1.msra.mxu0 0.0
      %8656 = vmatprep.subr.mxu0 0.0
      %8657 = vmatpush1.msra.mxu0 0.0
      %8658 = vmatprep.subr.mxu0 0.0
      %8659 = vmatpush1.msra.mxu0 0.0
      %8660 = vmatprep.subr.mxu0 0.0
      %8661 = vmatpush1.msra.mxu0 0.0
      %8662 = vmatprep.subr.mxu0 0.0
      %8663 = vmatpush1.msra.mxu0 0.0
      %8664 = vmatprep.subr.mxu0 0.0
      %8665 = vmatpush1.msra.mxu0 0.0
      %8666 = vmatprep.subr.mxu0 0.0
      %8667 = vmatpush1.msra.mxu0 0.0
      %8668 = vmatprep.subr.mxu0 0.0
      %8669 = vmatpush1.msra.mxu0 0.0
      %8670 = vmatprep.subr.mxu0 0.0
      %8671 = vmatpush1.msra.mxu0 0.0
      %8672 = vmatprep.subr.mxu0 0.0
      %8673 = vmatpush1.msra.mxu0 0.0
      %8674 = vmatprep.subr.mxu0 0.0
      %8675 = vmatpush1.msra.mxu0 0.0
      %8676 = vmatprep.subr.mxu0 0.0
      %8677 = vmatpush1.msra.mxu0 0.0
      %8678 = vmatprep.subr.mxu0 0.0
      %8679 = vmatpush1.msra.mxu0 0.0
      %8680 = vmatprep.subr.mxu0 0.0
      %8681 = vmatpush1.msra.mxu0 0.0
      %8682 = vmatprep.subr.mxu0 0.0
      %8683 = vmatpush1.msra.mxu0 0.0
      %8684 = vmatprep.subr.mxu0 0.0
      %8685 = vmatpush1.msra.mxu0 0.0
      %8686 = vmatprep.subr.mxu0 0.0
      %8687 = vmatpush1.msra.mxu0 0.0
      %8688 = vmatprep.subr.mxu0 0.0
      %8689 = vmatpush1.msra.mxu0 0.0
      %8690 = vmatprep.subr.mxu0 0.0
      %8691 = vmatpush1.msra.mxu0 0.0
      %8692 = vmatprep.subr.mxu0 0.0
      %8693 = vmatpush1.msra.mxu0 0.0
      %8694 = vmatprep.subr.mxu0 0.0
      %8695 = vmatpush1.msra.mxu0 0.0
      %8696 = vmatprep.subr.mxu0 0.0
      %8697 = vmatpush1.msra.mxu0 0.0
      %8698 = vmatprep.mubr.f32.mxu0 0.0
      %8699 = vmatmul.mubr.f32.gmra.mrb[0].mxu0 %v8442
      %v8700 = vpop.f32.mrb[0].mxu0
      %v8701 = vadd.f32 %v8556, %v8700
      %v8702 = vpop.f32.mrb[0].mxu0
      %8703 = vmatprep.mubr.f32.mxu0 0.0
      %8704 = vmatmul.mubr.f32.gmra.mrb[0].mxu0 %v8445
      %v8705 = vpop.f32.mrb[0].mxu0
      %v8706 = vadd.f32 %v8561, %v8705
      %v8707 = vpop.f32.mrb[0].mxu0
      %8708 = vmatprep.mubr.f32.mxu0 0.0
      %8709 = vmatmul.mubr.f32.gmra.mrb[0].mxu0 %v8448
      %v8710 = vpop.f32.mrb[0].mxu0
      %v8711 = vadd.f32 %v8566, %v8710
      %v8712 = vpop.f32.mrb[0].mxu0
      %8713 = vmatprep.mubr.f32.mxu0 0.0
      %8714 = vmatmul.mubr.f32.gmra.mrb[0].mxu0 %v8451
      %v8715 = vpop.f32.mrb[0].mxu0
      %v8716 = vadd.f32 %v8571, %v8715
      %v8717 = vpop.f32.mrb[0].mxu0
      %8718 = vmatprep.mubr.f32.mxu0 0.0
      %8719 = vmatmul.mubr.f32.gmra.mrb[0].mxu0 %v8454
      %v8720 = vpop.f32.mrb[0].mxu0
      %v8721 = vadd.f32 %v8576, %v8720
      %v8722 = vpop.f32.mrb[0].mxu0
      %8723 = vmatprep.mubr.f32.mxu0 0.0
      %8724 = vmatmul.mubr.f32.gmra.mrb[0].mxu0 %v8457
      %v8725 = vpop.f32.mrb[0].mxu0
      %v8726 = vadd.f32 %v8581, %v8725
      %v8727 = vpop.f32.mrb[0].mxu0
      %8728 = vmatprep.mubr.f32.mxu0 0.0
      %8729 = vmatmul.mubr.f32.gmra.mrb[0].mxu0 %v8460
      %v8730 = vpop.f32.mrb[0].mxu0
      %v8731 = vadd.f32 %v8586, %v8730
      %v8732 = vpop.f32.mrb[0].mxu0
      %8733 = vmatprep.mubr.f32.mxu0 0.0
      %8734 = vmatmul.mubr.f32.gmra.mrb[0].mxu0 %v8463
      %v8735 = vpop.f32.mrb[0].mxu0
      %v8736 = vadd.f32 %v8591, %v8735
      %v8737 = vpop.f32.mrb[0].mxu0
      %8738 = vmatprep.mubr.f32.mxu0 0.0
      %8739 = vmatmul.mubr.f32.gmra.mrb[0].mxu0 %v8466
      %v8740 = vpop.f32.mrb[0].mxu0
      %v8741 = vadd.f32 %v8596, %v8740
      %v8742 = vpop.f32.mrb[0].mxu0
      %8743 = vmatprep.mubr.f32.mxu0 0.0
      %8744 = vmatmul.mubr.f32.gmra.mrb[0].mxu0 %v8469
      %v8745 = vpop.f32.mrb[0].mxu0
      %v8746 = vadd.f32 %v8601, %v8745
      %v8747 = vpop.f32.mrb[0].mxu0
      %8748 = vmatprep.mubr.f32.mxu0 0.0
      %8749 = vmatmul.mubr.f32.gmra.mrb[0].mxu0 %v8472
      %v8750 = vpop.f32.mrb[0].mxu0
      %v8751 = vadd.f32 %v8606, %v8750
      %v8752 = vpop.f32.mrb[0].mxu0
      %8753 = vmatprep.mubr.f32.mxu0 0.0
      %8754 = vmatmul.mubr.f32.gmra.mrb[0].mxu0 %v8475
      %v8755 = vpop.f32.mrb[0].mxu0
      %v8756 = vadd.f32 %v8611, %v8755
      %v8757 = vpop.f32.mrb[0].mxu0
      %8758 = vmatprep.mubr.f32.mxu0 0.0
      %8759 = vmatmul.mubr.f32.gmra.mrb[0].mxu0 %v8478
      %v8760 = vpop.f32.mrb[0].mxu0
      %v8761 = vadd.f32 %v8616, %v8760
      %v8762 = vpop.f32.mrb[0].mxu0
      %8763 = vmatprep.mubr.f32.mxu0 0.0
      %8764 = vmatmul.mubr.f32.gmra.mrb[0].mxu0 %v8481
      %v8765 = vpop.f32.mrb[0].mxu0
      %v8766 = vadd.f32 %v8621, %v8765
      %v8767 = vpop.f32.mrb[0].mxu0
      %8768 = vmatprep.mubr.f32.mxu0 0.0
      %8769 = vmatmul.mubr.f32.gmra.mrb[0].mxu0 %v8484
      %v8770 = vpop.f32.mrb[0].mxu0
      %v8771 = vadd.f32 %v8626, %v8770
      %v8772 = vpop.f32.mrb[0].mxu0
      %8773 = vmatprep.mubr.f32.mxu0 0.0
      %8774 = vmatmul.mubr.f32.gmra.mrb[0].mxu0 %v8487
      %v8775 = vpop.f32.mrb[0].mxu0
      %v8776 = vadd.f32 %v8631, %v8775
      %v8777 = vpop.f32.mrb[0].mxu0
      %8778 = vdwg.mxu0
      %v8779 = vmax.f32 %v8701, 0.0
      %v8780 = vmax.f32 %v8706, 0.0
      %v8781 = vmax.f32 %v8711, 0.0
      %v8782 = vmax.f32 %v8716, 0.0
      %v8783 = vmax.f32 %v8721, 0.0
      %v8784 = vmax.f32 %v8726, 0.0
      %v8785 = vmax.f32 %v8731, 0.0
      %v8786 = vmax.f32 %v8736, 0.0
      %v8787 = vmax.f32 %v8741, 0.0
      %v8788 = vmax.f32 %v8746, 0.0
      %v8789 = vmax.f32 %v8751, 0.0
      %v8790 = vmax.f32 %v8756, 0.0
      %v8791 = vmax.f32 %v8761, 0.0
      %v8792 = vmax.f32 %v8766, 0.0
      %v8793 = vmax.f32 %v8771, 0.0
      %v8794 = vmax.f32 %v8776, 0.0
      %v8795 = vadd.f32 %v8779, %v8780
      %v8796 = vadd.f32 %v8781, %v8782
      %v8797 = vadd.f32 %v8783, %v8784
      %v8798 = vadd.f32 %v8785, %v8786
      %v8799 = vadd.f32 %v8787, %v8788
      %v8800 = vadd.f32 %v8789, %v8790
      %v8801 = vadd.f32 %v8791, %v8792
      %v8802 = vadd.f32 %v8793, %v8794
      %v8811 = vrot.slane %v8795, 1
      %v8812 = vrot.slane %v8796, 1
      %v8813 = vrot.slane %v8797, 1
      %v8814 = vrot.slane %v8798, 1
      %v8815 = vrot.slane %v8799, 1
      %v8816 = vrot.slane %v8800, 1
      %v8817 = vrot.slane %v8801, 1
      %v8818 = vrot.slane %v8802, 1
      %v8827 = vadd.f32 %v8795, %v8811
      %v8828 = vadd.f32 %v8796, %v8812
      %v8829 = vadd.f32 %v8797, %v8813
      %v8830 = vadd.f32 %v8798, %v8814
      %v8831 = vadd.f32 %v8799, %v8815
      %v8832 = vadd.f32 %v8800, %v8816
      %v8833 = vadd.f32 %v8801, %v8817
      %v8834 = vadd.f32 %v8802, %v8818
      %v8835 = vmul.f32 %v8827, 0.25
      %v8836 = vmul.f32 %v8828, 0.25
      %v8837 = vmul.f32 %v8829, 0.25
      %v8838 = vmul.f32 %v8830, 0.25
      %v8839 = vmul.f32 %v8831, 0.25
      %v8840 = vmul.f32 %v8832, 0.25
      %v8841 = vmul.f32 %v8833, 0.25
      %v8842 = vmul.f32 %v8834, 0.25
      %v8846 = vunpack.c.l.s4 1983009808
      %v8847 = vunpack.c.0.s8 %v8846
      %v8848 = vlaneseq
      %v8849 = vshrl.u32 %v8848, 7
      %v8850 = vsub.s32 %v8847, %v8849
      %v8851 = vrot.slane %v8835, %v8850
      %v8853 = vunpack.c.l.s4 1983009808
      %v8854 = vunpack.c.0.s8 %v8853
      %v8855 = vlaneseq
      %v8856 = vshrl.u32 %v8855, 7
      %v8857 = vsub.s32 %v8854, %v8856
      %v8858 = vrot.slane %v8839, %v8857
      %vm8859 = vcmask 1044484
      %v8860 = vsel %vm8859, %v8851, %v8851
      %vm8861 = vcmask 1046534
      %v8862 = vsel %vm8861, %v8851, %v8860
      %v8863 = vrot.slane %v8858, 7
      %vm8864 = vcmask 1041409
      %v8865 = vsel %vm8864, %v8863, %v8862
      %vm8866 = vcmask 1043459
      %v8867 = vsel %vm8866, %v8863, %v8865
      %vm8868 = vcmask 1045509
      %v8869 = vsel %vm8868, %v8863, %v8867
      %vm8870 = vcmask 1047559
      %v8871 = vsel %vm8870, %v8863, %v8869
      %vm8873 = vcmask 517120
      %8874 = vst.msk [vmem:[#allocation8] sm:$0x3] %vm8873, %v8871
      %v8878 = vunpack.c.l.s4 1983009808
      %v8879 = vunpack.c.0.s8 %v8878
      %v8880 = vlaneseq
      %v8881 = vshrl.u32 %v8880, 7
      %v8882 = vsub.s32 %v8879, %v8881
      %v8883 = vrot.slane %v8836, %v8882
      %v8885 = vunpack.c.l.s4 1983009808
      %v8886 = vunpack.c.0.s8 %v8885
      %v8887 = vlaneseq
      %v8888 = vshrl.u32 %v8887, 7
      %v8889 = vsub.s32 %v8886, %v8888
      %v8890 = vrot.slane %v8840, %v8889
      %v8891 = vsel %vm8859, %v8883, %v8883
      %v8892 = vsel %vm8861, %v8883, %v8891
      %v8893 = vrot.slane %v8890, 7
      %v8894 = vsel %vm8864, %v8893, %v8892
      %v8895 = vsel %vm8866, %v8893, %v8894
      %v8896 = vsel %vm8868, %v8893, %v8895
      %v8897 = vsel %vm8870, %v8893, %v8896
      %8899 = vst.msk [vmem:[#allocation8 + $0x4] sm:$0x3] %vm8873, %v8897
      %v8903 = vunpack.c.l.s4 1983009808
      %v8904 = vunpack.c.0.s8 %v8903
      %v8905 = vlaneseq
      %v8906 = vshrl.u32 %v8905, 7
      %v8907 = vsub.s32 %v8904, %v8906
      %v8908 = vrot.slane %v8837, %v8907
      %v8910 = vunpack.c.l.s4 1983009808
      %v8911 = vunpack.c.0.s8 %v8910
      %v8912 = vlaneseq
      %v8913 = vshrl.u32 %v8912, 7
      %v8914 = vsub.s32 %v8911, %v8913
      %v8915 = vrot.slane %v8841, %v8914
      %v8916 = vsel %vm8859, %v8908, %v8908
      %v8917 = vsel %vm8861, %v8908, %v8916
      %v8918 = vrot.slane %v8915, 7
      %v8919 = vsel %vm8864, %v8918, %v8917
      %v8920 = vsel %vm8866, %v8918, %v8919
      %v8921 = vsel %vm8868, %v8918, %v8920
      %v8922 = vsel %vm8870, %v8918, %v8921
      %8924 = vst.msk [vmem:[#allocation8 + $0x8] sm:$0x3] %vm8873, %v8922
      %v8928 = vunpack.c.l.s4 1983009808
      %v8929 = vunpack.c.0.s8 %v8928
      %v8930 = vlaneseq
      %v8931 = vshrl.u32 %v8930, 7
      %v8932 = vsub.s32 %v8929, %v8931
      %v8933 = vrot.slane %v8838, %v8932
      %v8935 = vunpack.c.l.s4 1983009808
      %v8936 = vunpack.c.0.s8 %v8935
      %v8937 = vlaneseq
      %v8938 = vshrl.u32 %v8937, 7
      %v8939 = vsub.s32 %v8936, %v8938
      %v8940 = vrot.slane %v8842, %v8939
      %v8941 = vsel %vm8859, %v8933, %v8933
      %v8942 = vsel %vm8861, %v8933, %v8941
      %v8943 = vrot.slane %v8940, 7
      %v8944 = vsel %vm8864, %v8943, %v8942
      %v8945 = vsel %vm8866, %v8943, %v8944
      %v8946 = vsel %vm8868, %v8943, %v8945
      %v8947 = vsel %vm8870, %v8943, %v8946
      %8949 = vst.msk [vmem:[#allocation8 + $0xc] sm:$0x3] %vm8873, %v8947
      %v8950 = vcombine.high %v8851, %v8851
      %v8951 = vcombine.high %v8858, %v8858
      %v8952 = vsel %vm8859, %v8950, %v8950
      %v8953 = vsel %vm8861, %v8950, %v8952
      %v8954 = vrot.slane %v8951, 7
      %v8955 = vsel %vm8864, %v8954, %v8953
      %v8956 = vsel %vm8866, %v8954, %v8955
      %v8957 = vsel %vm8868, %v8954, %v8956
      %v8958 = vsel %vm8870, %v8954, %v8957
      %8959 = vrot.lane.b32.xlu0 %v8958, 64
      %v8960 = vpop.permute.xlu0 %8959
      %vm8962 = vcmask 1041920
      %8963 = vst.msk [vmem:[#allocation8] sm:$0x3] %vm8962, %v8960
      %v8964 = vcombine.high %v8883, %v8883
      %v8965 = vcombine.high %v8890, %v8890
      %v8966 = vsel %vm8859, %v8964, %v8964
      %v8967 = vsel %vm8861, %v8964, %v8966
      %v8968 = vrot.slane %v8965, 7
      %v8969 = vsel %vm8864, %v8968, %v8967
      %v8970 = vsel %vm8866, %v8968, %v8969
      %v8971 = vsel %vm8868, %v8968, %v8970
      %v8972 = vsel %vm8870, %v8968, %v8971
      %8973 = vrot.lane.b32.xlu0 %v8972, 64
      %v8974 = vpop.permute.xlu0 %8973
      %8976 = vst.msk [vmem:[#allocation8 + $0x4] sm:$0x3] %vm8962, %v8974
      %v8977 = vcombine.high %v8908, %v8908
      %v8978 = vcombine.high %v8915, %v8915
      %v8979 = vsel %vm8859, %v8977, %v8977
      %v8980 = vsel %vm8861, %v8977, %v8979
      %v8981 = vrot.slane %v8978, 7
      %v8982 = vsel %vm8864, %v8981, %v8980
      %v8983 = vsel %vm8866, %v8981, %v8982
      %v8984 = vsel %vm8868, %v8981, %v8983
      %v8985 = vsel %vm8870, %v8981, %v8984
      %8986 = vrot.lane.b32.xlu0 %v8985, 64
      %v8987 = vpop.permute.xlu0 %8986
      %8989 = vst.msk [vmem:[#allocation8 + $0x8] sm:$0x3] %vm8962, %v8987
      %v8990 = vcombine.high %v8933, %v8933
      %v8991 = vcombine.high %v8940, %v8940
      %v8992 = vsel %vm8859, %v8990, %v8990
      %v8993 = vsel %vm8861, %v8990, %v8992
      %v8994 = vrot.slane %v8991, 7
      %v8995 = vsel %vm8864, %v8994, %v8993
      %v8996 = vsel %vm8866, %v8994, %v8995
      %v8997 = vsel %vm8868, %v8994, %v8996
      %v8998 = vsel %vm8870, %v8994, %v8997
      %8999 = vrot.lane.b32.xlu0 %v8998, 64
      %v9000 = vpop.permute.xlu0 %8999
      %9002 = vst.msk [vmem:[#allocation8 + $0xc] sm:$0x3] %vm8962, %v9000
      %v9003 = vcombine.high %v8835, %v8835
      %v9005 = vunpack.c.l.s4 1983009808
      %v9006 = vunpack.c.0.s8 %v9005
      %v9007 = vlaneseq
      %v9008 = vshrl.u32 %v9007, 7
      %v9009 = vsub.s32 %v9006, %v9008
      %v9010 = vrot.slane %v9003, %v9009
      %v9011 = vcombine.high %v8839, %v8839
      %v9013 = vunpack.c.l.s4 1983009808
      %v9014 = vunpack.c.0.s8 %v9013
      %v9015 = vlaneseq
      %v9016 = vshrl.u32 %v9015, 7
      %v9017 = vsub.s32 %v9014, %v9016
      %v9018 = vrot.slane %v9011, %v9017
      %v9019 = vsel %vm8859, %v9010, %v9010
      %v9020 = vsel %vm8861, %v9010, %v9019
      %v9021 = vrot.slane %v9018, 7
      %v9022 = vsel %vm8864, %v9021, %v9020
      %v9023 = vsel %vm8866, %v9021, %v9022
      %v9024 = vsel %vm8868, %v9021, %v9023
      %v9025 = vsel %vm8870, %v9021, %v9024
      %9027 = vst.msk [vmem:[#allocation8 + $0x2] sm:$0x3] %vm8873, %v9025
      %v9028 = vcombine.high %v8836, %v8836
      %v9030 = vunpack.c.l.s4 1983009808
      %v9031 = vunpack.c.0.s8 %v9030
      %v9032 = vlaneseq
      %v9033 = vshrl.u32 %v9032, 7
      %v9034 = vsub.s32 %v9031, %v9033
      %v9035 = vrot.slane %v9028, %v9034
      %v9036 = vcombine.high %v8840, %v8840
      %v9038 = vunpack.c.l.s4 1983009808
      %v9039 = vunpack.c.0.s8 %v9038
      %v9040 = vlaneseq
      %v9041 = vshrl.u32 %v9040, 7
      %v9042 = vsub.s32 %v9039, %v9041
      %v9043 = vrot.slane %v9036, %v9042
      %v9044 = vsel %vm8859, %v9035, %v9035
      %v9045 = vsel %vm8861, %v9035, %v9044
      %v9046 = vrot.slane %v9043, 7
      %v9047 = vsel %vm8864, %v9046, %v9045
      %v9048 = vsel %vm8866, %v9046, %v9047
      %v9049 = vsel %vm8868, %v9046, %v9048
      %v9050 = vsel %vm8870, %v9046, %v9049
      %9052 = vst.msk [vmem:[#allocation8 + $0x6] sm:$0x3] %vm8873, %v9050
      %v9053 = vcombine.high %v8837, %v8837
      %v9055 = vunpack.c.l.s4 1983009808
      %v9056 = vunpack.c.0.s8 %v9055
      %v9057 = vlaneseq
      %v9058 = vshrl.u32 %v9057, 7
      %v9059 = vsub.s32 %v9056, %v9058
      %v9060 = vrot.slane %v9053, %v9059
      %v9061 = vcombine.high %v8841, %v8841
      %v9063 = vunpack.c.l.s4 1983009808
      %v9064 = vunpack.c.0.s8 %v9063
      %v9065 = vlaneseq
      %v9066 = vshrl.u32 %v9065, 7
      %v9067 = vsub.s32 %v9064, %v9066
      %v9068 = vrot.slane %v9061, %v9067
      %v9069 = vsel %vm8859, %v9060, %v9060
      %v9070 = vsel %vm8861, %v9060, %v9069
      %v9071 = vrot.slane %v9068, 7
      %v9072 = vsel %vm8864, %v9071, %v9070
      %v9073 = vsel %vm8866, %v9071, %v9072
      %v9074 = vsel %vm8868, %v9071, %v9073
      %v9075 = vsel %vm8870, %v9071, %v9074
      %9077 = vst.msk [vmem:[#allocation8 + $0xa] sm:$0x3] %vm8873, %v9075
      %v9078 = vcombine.high %v8838, %v8838
      %v9080 = vunpack.c.l.s4 1983009808
      %v9081 = vunpack.c.0.s8 %v9080
      %v9082 = vlaneseq
      %v9083 = vshrl.u32 %v9082, 7
      %v9084 = vsub.s32 %v9081, %v9083
      %v9085 = vrot.slane %v9078, %v9084
      %v9086 = vcombine.high %v8842, %v8842
      %v9088 = vunpack.c.l.s4 1983009808
      %v9089 = vunpack.c.0.s8 %v9088
      %v9090 = vlaneseq
      %v9091 = vshrl.u32 %v9090, 7
      %v9092 = vsub.s32 %v9089, %v9091
      %v9093 = vrot.slane %v9086, %v9092
      %v9094 = vsel %vm8859, %v9085, %v9085
      %v9095 = vsel %vm8861, %v9085, %v9094
      %v9096 = vrot.slane %v9093, 7
      %v9097 = vsel %vm8864, %v9096, %v9095
      %v9098 = vsel %vm8866, %v9096, %v9097
      %v9099 = vsel %vm8868, %v9096, %v9098
      %v9100 = vsel %vm8870, %v9096, %v9099
      %9102 = vst.msk [vmem:[#allocation8 + $0xe] sm:$0x3] %vm8873, %v9100
      %v9103 = vcombine.high %v9010, %v9010
      %v9104 = vcombine.high %v9018, %v9018
      %v9105 = vsel %vm8859, %v9103, %v9103
      %v9106 = vsel %vm8861, %v9103, %v9105
      %v9107 = vrot.slane %v9104, 7
      %v9108 = vsel %vm8864, %v9107, %v9106
      %v9109 = vsel %vm8866, %v9107, %v9108
      %v9110 = vsel %vm8868, %v9107, %v9109
      %v9111 = vsel %vm8870, %v9107, %v9110
      %9112 = vrot.lane.b32.xlu0 %v9111, 64
      %v9113 = vpop.permute.xlu0 %9112
      %9115 = vst.msk [vmem:[#allocation8 + $0x2] sm:$0x3] %vm8962, %v9113
      %v9116 = vcombine.high %v9035, %v9035
      %v9117 = vcombine.high %v9043, %v9043
      %v9118 = vsel %vm8859, %v9116, %v9116
      %v9119 = vsel %vm8861, %v9116, %v9118
      %v9120 = vrot.slane %v9117, 7
      %v9121 = vsel %vm8864, %v9120, %v9119
      %v9122 = vsel %vm8866, %v9120, %v9121
      %v9123 = vsel %vm8868, %v9120, %v9122
      %v9124 = vsel %vm8870, %v9120, %v9123
      %9125 = vrot.lane.b32.xlu0 %v9124, 64
      %v9126 = vpop.permute.xlu0 %9125
      %9128 = vst.msk [vmem:[#allocation8 + $0x6] sm:$0x3] %vm8962, %v9126
      %v9129 = vcombine.high %v9060, %v9060
      %v9130 = vcombine.high %v9068, %v9068
      %v9131 = vsel %vm8859, %v9129, %v9129
      %v9132 = vsel %vm8861, %v9129, %v9131
      %v9133 = vrot.slane %v9130, 7
      %v9134 = vsel %vm8864, %v9133, %v9132
      %v9135 = vsel %vm8866, %v9133, %v9134
      %v9136 = vsel %vm8868, %v9133, %v9135
      %v9137 = vsel %vm8870, %v9133, %v9136
      %9138 = vrot.lane.b32.xlu0 %v9137, 64
      %v9139 = vpop.permute.xlu0 %9138
      %9141 = vst.msk [vmem:[#allocation8 + $0xa] sm:$0x3] %vm8962, %v9139
      %v9142 = vcombine.high %v9085, %v9085
      %v9143 = vcombine.high %v9093, %v9093
      %v9144 = vsel %vm8859, %v9142, %v9142
      %v9145 = vsel %vm8861, %v9142, %v9144
      %v9146 = vrot.slane %v9143, 7
      %v9147 = vsel %vm8864, %v9146, %v9145
      %v9148 = vsel %vm8866, %v9146, %v9147
      %v9149 = vsel %vm8868, %v9146, %v9148
      %v9150 = vsel %vm8870, %v9146, %v9149
      %9151 = vrot.lane.b32.xlu0 %v9150, 64
      %v9152 = vpop.permute.xlu0 %9151
      %9154 = vst.msk [vmem:[#allocation8 + $0xe] sm:$0x3] %vm8962, %v9152
      %v9155 = vld [vmem:[#allocation8] sm:$0xff]
      %v9156 = vld [vmem:[#allocation8 + $0x8] sm:$0xff]
      %v9157 = vld [vmem:[%s7] sm:$0xff]
      %v9158 = vld [vmem:[%s7 + $0x8] sm:$0xff]
      %v9159 = vld [vmem:[%s7 + $0x10] sm:$0xff]
      %v9160 = vld [vmem:[%s7 + $0x18] sm:$0xff]
      %v9161 = vld [vmem:[%s7 + $0x20] sm:$0xff]
      %v9162 = vld [vmem:[%s7 + $0x28] sm:$0xff]
      %v9163 = vld [vmem:[%s7 + $0x30] sm:$0xff]
      %v9164 = vld [vmem:[%s7 + $0x38] sm:$0xff]
      %v9165 = vld [vmem:[%s7 + $0x40] sm:$0xff]
      %v9166 = vld [vmem:[%s7 + $0x48] sm:$0xff]
      %v9167 = vld [vmem:[%s7 + $0x50] sm:$0xff]
      %v9168 = vld [vmem:[%s7 + $0x58] sm:$0xff]
      %v9169 = vld [vmem:[%s7 + $0x60] sm:$0xff]
      %v9170 = vld [vmem:[%s7 + $0x68] sm:$0xff]
      %v9171 = vld [vmem:[%s7 + $0x70] sm:$0xff]
      %v9172 = vld [vmem:[%s7 + $0x78] sm:$0xff]
      %v9173 = vld [vmem:[%s7 + $0x80] sm:$0xff]
      %v9174 = vld [vmem:[%s7 + $0x88] sm:$0xff]
      %v9175 = vld [vmem:[%s7 + $0x90] sm:$0xff]
      %v9176 = vld [vmem:[%s7 + $0x98] sm:$0xff]
      %v9177 = vld [vmem:[%s7 + $0xa0] sm:$0xff]
      %v9178 = vld [vmem:[%s7 + $0xa8] sm:$0xff]
      %v9179 = vld [vmem:[%s7 + $0xb0] sm:$0xff]
      %v9180 = vld [vmem:[%s7 + $0xb8] sm:$0xff]
      %v9181 = vld [vmem:[%s7 + $0xc0] sm:$0xff]
      %v9182 = vld [vmem:[%s7 + $0xc8] sm:$0xff]
      %v9183 = vld [vmem:[%s7 + $0xd0] sm:$0xff]
      %v9184 = vld [vmem:[%s7 + $0xd8] sm:$0xff]
      %v9185 = vld [vmem:[%s7 + $0xe0] sm:$0xff]
      %v9186 = vld [vmem:[%s7 + $0xe8] sm:$0xff]
      %v9187 = vld [vmem:[%s7 + $0xf0] sm:$0xff]
      %v9188 = vld [vmem:[%s7 + $0xf8] sm:$0xff]
      %v9189 = vld [vmem:[%s7 + $0x100] sm:$0xff]
      %v9190 = vld [vmem:[%s7 + $0x108] sm:$0xff]
      %v9191 = vld [vmem:[%s7 + $0x110] sm:$0xff]
      %v9192 = vld [vmem:[%s7 + $0x118] sm:$0xff]
      %v9193 = vld [vmem:[%s7 + $0x120] sm:$0xff]
      %v9194 = vld [vmem:[%s7 + $0x128] sm:$0xff]
      %v9195 = vld [vmem:[%s7 + $0x130] sm:$0xff]
      %v9196 = vld [vmem:[%s7 + $0x138] sm:$0xff]
      %v9197 = vld [vmem:[%s7 + $0x140] sm:$0xff]
      %v9198 = vld [vmem:[%s7 + $0x148] sm:$0xff]
      %v9199 = vld [vmem:[%s7 + $0x150] sm:$0xff]
      %v9200 = vld [vmem:[%s7 + $0x158] sm:$0xff]
      %v9201 = vld [vmem:[%s7 + $0x160] sm:$0xff]
      %v9202 = vld [vmem:[%s7 + $0x168] sm:$0xff]
      %v9203 = vld [vmem:[%s7 + $0x170] sm:$0xff]
      %v9204 = vld [vmem:[%s7 + $0x178] sm:$0xff]
      %v9205 = vld [vmem:[%s7 + $0x180] sm:$0xff]
      %v9206 = vld [vmem:[%s7 + $0x188] sm:$0xff]
      %v9207 = vld [vmem:[%s7 + $0x190] sm:$0xff]
      %v9208 = vld [vmem:[%s7 + $0x198] sm:$0xff]
      %v9209 = vld [vmem:[%s7 + $0x1a0] sm:$0xff]
      %v9210 = vld [vmem:[%s7 + $0x1a8] sm:$0xff]
      %v9211 = vld [vmem:[%s7 + $0x1b0] sm:$0xff]
      %v9212 = vld [vmem:[%s7 + $0x1b8] sm:$0xff]
      %v9213 = vld [vmem:[%s7 + $0x1c0] sm:$0xff]
      %v9214 = vld [vmem:[%s7 + $0x1c8] sm:$0xff]
      %v9215 = vld [vmem:[%s7 + $0x1d0] sm:$0xff]
      %v9216 = vld [vmem:[%s7 + $0x1d8] sm:$0xff]
      %v9217 = vld [vmem:[%s7 + $0x1e0] sm:$0xff]
      %v9218 = vld [vmem:[%s7 + $0x1e8] sm:$0xff]
      %v9219 = vld [vmem:[%s7 + $0x1f0] sm:$0xff]
      %v9220 = vld [vmem:[%s7 + $0x1f8] sm:$0xff]
      %v9221 = vld [vmem:[%s7 + $0x200] sm:$0xff]
      %v9222 = vld [vmem:[%s7 + $0x208] sm:$0xff]
      %v9223 = vld [vmem:[%s7 + $0x210] sm:$0xff]
      %v9224 = vld [vmem:[%s7 + $0x218] sm:$0xff]
      %v9225 = vld [vmem:[%s7 + $0x220] sm:$0xff]
      %v9226 = vld [vmem:[%s7 + $0x228] sm:$0xff]
      %v9227 = vld [vmem:[%s7 + $0x230] sm:$0xff]
      %v9228 = vld [vmem:[%s7 + $0x238] sm:$0xff]
      %v9229 = vld [vmem:[%s7 + $0x240] sm:$0xff]
      %v9230 = vld [vmem:[%s7 + $0x248] sm:$0xff]
      %v9231 = vld [vmem:[%s7 + $0x250] sm:$0xff]
      %v9232 = vld [vmem:[%s7 + $0x258] sm:$0xff]
      %v9233 = vld [vmem:[%s7 + $0x260] sm:$0xff]
      %v9234 = vld [vmem:[%s7 + $0x268] sm:$0xff]
      %v9235 = vld [vmem:[%s7 + $0x270] sm:$0xff]
      %v9236 = vld [vmem:[%s7 + $0x278] sm:$0xff]
      %v9237 = vld [vmem:[%s7 + $0x280] sm:$0xff]
      %v9238 = vld [vmem:[%s7 + $0x288] sm:$0xff]
      %v9239 = vld [vmem:[%s7 + $0x290] sm:$0xff]
      %v9240 = vld [vmem:[%s7 + $0x298] sm:$0xff]
      %v9241 = vld [vmem:[%s7 + $0x2a0] sm:$0xff]
      %v9242 = vld [vmem:[%s7 + $0x2a8] sm:$0xff]
      %v9243 = vld [vmem:[%s7 + $0x2b0] sm:$0xff]
      %v9244 = vld [vmem:[%s7 + $0x2b8] sm:$0xff]
      %v9245 = vld [vmem:[%s7 + $0x2c0] sm:$0xff]
      %v9246 = vld [vmem:[%s7 + $0x2c8] sm:$0xff]
      %v9247 = vld [vmem:[%s7 + $0x2d0] sm:$0xff]
      %v9248 = vld [vmem:[%s7 + $0x2d8] sm:$0xff]
      %v9249 = vld [vmem:[%s7 + $0x2e0] sm:$0xff]
      %v9250 = vld [vmem:[%s7 + $0x2e8] sm:$0xff]
      %v9251 = vld [vmem:[%s7 + $0x2f0] sm:$0xff]
      %v9252 = vld [vmem:[%s7 + $0x2f8] sm:$0xff]
      %v9253 = vld [vmem:[%s7 + $0x300] sm:$0xff]
      %v9254 = vld [vmem:[%s7 + $0x308] sm:$0xff]
      %v9255 = vld [vmem:[%s7 + $0x310] sm:$0xff]
      %v9256 = vld [vmem:[%s7 + $0x318] sm:$0xff]
      %v9257 = vld [vmem:[%s7 + $0x320] sm:$0xff]
      %v9258 = vld [vmem:[%s7 + $0x328] sm:$0xff]
      %v9259 = vld [vmem:[%s7 + $0x330] sm:$0xff]
      %v9260 = vld [vmem:[%s7 + $0x338] sm:$0xff]
      %v9261 = vld [vmem:[%s7 + $0x340] sm:$0xff]
      %v9262 = vld [vmem:[%s7 + $0x348] sm:$0xff]
      %v9263 = vld [vmem:[%s7 + $0x350] sm:$0xff]
      %v9264 = vld [vmem:[%s7 + $0x358] sm:$0xff]
      %v9265 = vld [vmem:[%s7 + $0x360] sm:$0xff]
      %v9266 = vld [vmem:[%s7 + $0x368] sm:$0xff]
      %v9267 = vld [vmem:[%s7 + $0x370] sm:$0xff]
      %v9268 = vld [vmem:[%s7 + $0x378] sm:$0xff]
      %v9269 = vld [vmem:[%s7 + $0x380] sm:$0xff]
      %v9270 = vld [vmem:[%s7 + $0x388] sm:$0xff]
      %v9271 = vld [vmem:[%s7 + $0x390] sm:$0xff]
      %v9272 = vld [vmem:[%s7 + $0x398] sm:$0xff]
      %v9273 = vld [vmem:[%s7 + $0x3a0] sm:$0xff]
      %v9274 = vld [vmem:[%s7 + $0x3a8] sm:$0xff]
      %v9275 = vld [vmem:[%s7 + $0x3b0] sm:$0xff]
      %v9276 = vld [vmem:[%s7 + $0x3b8] sm:$0xff]
      %v9277 = vld [vmem:[%s7 + $0x3c0] sm:$0xff]
      %v9278 = vld [vmem:[%s7 + $0x3c8] sm:$0xff]
      %v9279 = vld [vmem:[%s7 + $0x3d0] sm:$0xff]
      %v9280 = vld [vmem:[%s7 + $0x3d8] sm:$0xff]
      %v9281 = vld [vmem:[%s7 + $0x3e0] sm:$0xff]
      %v9282 = vld [vmem:[%s7 + $0x3e8] sm:$0xff]
      %v9283 = vld [vmem:[%s7 + $0x3f0] sm:$0xff]
      %v9284 = vld [vmem:[%s7 + $0x3f8] sm:$0xff]
      %v9285 = vld [vmem:[%s8] sm:$0x1]
      %v9287 = vlaneseq
      %v9288 = vshrl.u32 %v9287, 7
      %v9289 = vsub.s32 0, %v9288
      %v9290 = vrot.slane %v9285, %v9289
      %v9294 = vcombine.high %v9155, %v9155
      %v9296 = vunpack.c.l.s4 1983009808
      %v9297 = vunpack.c.0.s8 %v9296
      %v9298 = vlaneseq
      %v9299 = vshrl.u32 %v9298, 7
      %v9300 = vsub.s32 %v9297, %v9299
      %v9301 = vrot.slane %v9155, %v9300
      %v9303 = vunpack.c.l.s4 1983009808
      %v9304 = vunpack.c.0.s8 %v9303
      %v9305 = vlaneseq
      %v9306 = vshrl.u32 %v9305, 7
      %v9307 = vsub.s32 %v9304, %v9306
      %v9308 = vrot.slane %v9294, %v9307
      %v9309 = vcombine.high %v9301, %v9301
      %v9310 = vcombine.high %v9308, %v9308
      %v9311 = vcombine.high %v9156, %v9156
      %v9313 = vunpack.c.l.s4 1983009808
      %v9314 = vunpack.c.0.s8 %v9313
      %v9315 = vlaneseq
      %v9316 = vshrl.u32 %v9315, 7
      %v9317 = vsub.s32 %v9314, %v9316
      %v9318 = vrot.slane %v9156, %v9317
      %v9320 = vunpack.c.l.s4 1983009808
      %v9321 = vunpack.c.0.s8 %v9320
      %v9322 = vlaneseq
      %v9323 = vshrl.u32 %v9322, 7
      %v9324 = vsub.s32 %v9321, %v9323
      %v9325 = vrot.slane %v9311, %v9324
      %v9326 = vcombine.high %v9318, %v9318
      %v9327 = vcombine.high %v9325, %v9325
      %9336 = vmatprep.subr.mxu0 0.0
      %9337 = vmatpush1.msra.mxu0 %v9157
      %9338 = vmatprep.subr.mxu0 0.0
      %9339 = vmatpush1.msra.mxu0 %v9158
      %9340 = vmatprep.subr.mxu0 0.0
      %9341 = vmatpush1.msra.mxu0 %v9159
      %9342 = vmatprep.subr.mxu0 0.0
      %9343 = vmatpush1.msra.mxu0 %v9160
      %9344 = vmatprep.subr.mxu0 0.0
      %9345 = vmatpush1.msra.mxu0 %v9161
      %9346 = vmatprep.subr.mxu0 0.0
      %9347 = vmatpush1.msra.mxu0 %v9162
      %9348 = vmatprep.subr.mxu0 0.0
      %9349 = vmatpush1.msra.mxu0 %v9163
      %9350 = vmatprep.subr.mxu0 0.0
      %9351 = vmatpush1.msra.mxu0 %v9164
      %9352 = vmatprep.subr.mxu0 0.0
      %9353 = vmatpush1.msra.mxu0 %v9165
      %9354 = vmatprep.subr.mxu0 0.0
      %9355 = vmatpush1.msra.mxu0 %v9166
      %9356 = vmatprep.subr.mxu0 0.0
      %9357 = vmatpush1.msra.mxu0 %v9167
      %9358 = vmatprep.subr.mxu0 0.0
      %9359 = vmatpush1.msra.mxu0 %v9168
      %9360 = vmatprep.subr.mxu0 0.0
      %9361 = vmatpush1.msra.mxu0 %v9169
      %9362 = vmatprep.subr.mxu0 0.0
      %9363 = vmatpush1.msra.mxu0 %v9170
      %9364 = vmatprep.subr.mxu0 0.0
      %9365 = vmatpush1.msra.mxu0 %v9171
      %9366 = vmatprep.subr.mxu0 0.0
      %9367 = vmatpush1.msra.mxu0 %v9172
      %9368 = vmatprep.subr.mxu0 0.0
      %9369 = vmatpush1.msra.mxu0 %v9173
      %9370 = vmatprep.subr.mxu0 0.0
      %9371 = vmatpush1.msra.mxu0 %v9174
      %9372 = vmatprep.subr.mxu0 0.0
      %9373 = vmatpush1.msra.mxu0 %v9175
      %9374 = vmatprep.subr.mxu0 0.0
      %9375 = vmatpush1.msra.mxu0 %v9176
      %9376 = vmatprep.subr.mxu0 0.0
      %9377 = vmatpush1.msra.mxu0 %v9177
      %9378 = vmatprep.subr.mxu0 0.0
      %9379 = vmatpush1.msra.mxu0 %v9178
      %9380 = vmatprep.subr.mxu0 0.0
      %9381 = vmatpush1.msra.mxu0 %v9179
      %9382 = vmatprep.subr.mxu0 0.0
      %9383 = vmatpush1.msra.mxu0 %v9180
      %9384 = vmatprep.subr.mxu0 0.0
      %9385 = vmatpush1.msra.mxu0 %v9181
      %9386 = vmatprep.subr.mxu0 0.0
      %9387 = vmatpush1.msra.mxu0 %v9182
      %9388 = vmatprep.subr.mxu0 0.0
      %9389 = vmatpush1.msra.mxu0 %v9183
      %9390 = vmatprep.subr.mxu0 0.0
      %9391 = vmatpush1.msra.mxu0 %v9184
      %9392 = vmatprep.subr.mxu0 0.0
      %9393 = vmatpush1.msra.mxu0 %v9185
      %9394 = vmatprep.subr.mxu0 0.0
      %9395 = vmatpush1.msra.mxu0 %v9186
      %9396 = vmatprep.subr.mxu0 0.0
      %9397 = vmatpush1.msra.mxu0 %v9187
      %9398 = vmatprep.subr.mxu0 0.0
      %9399 = vmatpush1.msra.mxu0 %v9188
      %9400 = vmatprep.mubr.f32.mxu0 %v9309
      %9401 = vmatmul.mubr.f32.gmra.mrb[0].mxu0 %v9301
      %v9402 = vpop.f32.mrb[0].mxu0
      %v9403 = vadd.f32 %v9290, %v9402
      %v9404 = vpop.f32.mrb[0].mxu0
      %9405 = vdwg.mxu0
      %9406 = vmatprep.subr.mxu0 0.0
      %9407 = vmatpush1.msra.mxu0 %v9189
      %9408 = vmatprep.subr.mxu0 0.0
      %9409 = vmatpush1.msra.mxu0 %v9190
      %9410 = vmatprep.subr.mxu0 0.0
      %9411 = vmatpush1.msra.mxu0 %v9191
      %9412 = vmatprep.subr.mxu0 0.0
      %9413 = vmatpush1.msra.mxu0 %v9192
      %9414 = vmatprep.subr.mxu0 0.0
      %9415 = vmatpush1.msra.mxu0 %v9193
      %9416 = vmatprep.subr.mxu0 0.0
      %9417 = vmatpush1.msra.mxu0 %v9194
      %9418 = vmatprep.subr.mxu0 0.0
      %9419 = vmatpush1.msra.mxu0 %v9195
      %9420 = vmatprep.subr.mxu0 0.0
      %9421 = vmatpush1.msra.mxu0 %v9196
      %9422 = vmatprep.subr.mxu0 0.0
      %9423 = vmatpush1.msra.mxu0 %v9197
      %9424 = vmatprep.subr.mxu0 0.0
      %9425 = vmatpush1.msra.mxu0 %v9198
      %9426 = vmatprep.subr.mxu0 0.0
      %9427 = vmatpush1.msra.mxu0 %v9199
      %9428 = vmatprep.subr.mxu0 0.0
      %9429 = vmatpush1.msra.mxu0 %v9200
      %9430 = vmatprep.subr.mxu0 0.0
      %9431 = vmatpush1.msra.mxu0 %v9201
      %9432 = vmatprep.subr.mxu0 0.0
      %9433 = vmatpush1.msra.mxu0 %v9202
      %9434 = vmatprep.subr.mxu0 0.0
      %9435 = vmatpush1.msra.mxu0 %v9203
      %9436 = vmatprep.subr.mxu0 0.0
      %9437 = vmatpush1.msra.mxu0 %v9204
      %9438 = vmatprep.subr.mxu0 0.0
      %9439 = vmatpush1.msra.mxu0 %v9205
      %9440 = vmatprep.subr.mxu0 0.0
      %9441 = vmatpush1.msra.mxu0 %v9206
      %9442 = vmatprep.subr.mxu0 0.0
      %9443 = vmatpush1.msra.mxu0 %v9207
      %9444 = vmatprep.subr.mxu0 0.0
      %9445 = vmatpush1.msra.mxu0 %v9208
      %9446 = vmatprep.subr.mxu0 0.0
      %9447 = vmatpush1.msra.mxu0 %v9209
      %9448 = vmatprep.subr.mxu0 0.0
      %9449 = vmatpush1.msra.mxu0 %v9210
      %9450 = vmatprep.subr.mxu0 0.0
      %9451 = vmatpush1.msra.mxu0 %v9211
      %9452 = vmatprep.subr.mxu0 0.0
      %9453 = vmatpush1.msra.mxu0 %v9212
      %9454 = vmatprep.subr.mxu0 0.0
      %9455 = vmatpush1.msra.mxu0 %v9213
      %9456 = vmatprep.subr.mxu0 0.0
      %9457 = vmatpush1.msra.mxu0 %v9214
      %9458 = vmatprep.subr.mxu0 0.0
      %9459 = vmatpush1.msra.mxu0 %v9215
      %9460 = vmatprep.subr.mxu0 0.0
      %9461 = vmatpush1.msra.mxu0 %v9216
      %9462 = vmatprep.subr.mxu0 0.0
      %9463 = vmatpush1.msra.mxu0 %v9217
      %9464 = vmatprep.subr.mxu0 0.0
      %9465 = vmatpush1.msra.mxu0 %v9218
      %9466 = vmatprep.subr.mxu0 0.0
      %9467 = vmatpush1.msra.mxu0 %v9219
      %9468 = vmatprep.subr.mxu0 0.0
      %9469 = vmatpush1.msra.mxu0 %v9220
      %9470 = vmatprep.mubr.f32.mxu0 %v9310
      %9471 = vmatmul.mubr.f32.gmra.mrb[0].mxu0 %v9308
      %v9472 = vpop.f32.mrb[0].mxu0
      %v9473 = vadd.f32 %v9403, %v9472
      %v9474 = vpop.f32.mrb[0].mxu0
      %9475 = vdwg.mxu0
      %9476 = vmatprep.subr.mxu0 0.0
      %9477 = vmatpush1.msra.mxu0 %v9221
      %9478 = vmatprep.subr.mxu0 0.0
      %9479 = vmatpush1.msra.mxu0 %v9222
      %9480 = vmatprep.subr.mxu0 0.0
      %9481 = vmatpush1.msra.mxu0 %v9223
      %9482 = vmatprep.subr.mxu0 0.0
      %9483 = vmatpush1.msra.mxu0 %v9224
      %9484 = vmatprep.subr.mxu0 0.0
      %9485 = vmatpush1.msra.mxu0 %v9225
      %9486 = vmatprep.subr.mxu0 0.0
      %9487 = vmatpush1.msra.mxu0 %v9226
      %9488 = vmatprep.subr.mxu0 0.0
      %9489 = vmatpush1.msra.mxu0 %v9227
      %9490 = vmatprep.subr.mxu0 0.0
      %9491 = vmatpush1.msra.mxu0 %v9228
      %9492 = vmatprep.subr.mxu0 0.0
      %9493 = vmatpush1.msra.mxu0 %v9229
      %9494 = vmatprep.subr.mxu0 0.0
      %9495 = vmatpush1.msra.mxu0 %v9230
      %9496 = vmatprep.subr.mxu0 0.0
      %9497 = vmatpush1.msra.mxu0 %v9231
      %9498 = vmatprep.subr.mxu0 0.0
      %9499 = vmatpush1.msra.mxu0 %v9232
      %9500 = vmatprep.subr.mxu0 0.0
      %9501 = vmatpush1.msra.mxu0 %v9233
      %9502 = vmatprep.subr.mxu0 0.0
      %9503 = vmatpush1.msra.mxu0 %v9234
      %9504 = vmatprep.subr.mxu0 0.0
      %9505 = vmatpush1.msra.mxu0 %v9235
      %9506 = vmatprep.subr.mxu0 0.0
      %9507 = vmatpush1.msra.mxu0 %v9236
      %9508 = vmatprep.subr.mxu0 0.0
      %9509 = vmatpush1.msra.mxu0 %v9237
      %9510 = vmatprep.subr.mxu0 0.0
      %9511 = vmatpush1.msra.mxu0 %v9238
      %9512 = vmatprep.subr.mxu0 0.0
      %9513 = vmatpush1.msra.mxu0 %v9239
      %9514 = vmatprep.subr.mxu0 0.0
      %9515 = vmatpush1.msra.mxu0 %v9240
      %9516 = vmatprep.subr.mxu0 0.0
      %9517 = vmatpush1.msra.mxu0 %v9241
      %9518 = vmatprep.subr.mxu0 0.0
      %9519 = vmatpush1.msra.mxu0 %v9242
      %9520 = vmatprep.subr.mxu0 0.0
      %9521 = vmatpush1.msra.mxu0 %v9243
      %9522 = vmatprep.subr.mxu0 0.0
      %9523 = vmatpush1.msra.mxu0 %v9244
      %9524 = vmatprep.subr.mxu0 0.0
      %9525 = vmatpush1.msra.mxu0 %v9245
      %9526 = vmatprep.subr.mxu0 0.0
      %9527 = vmatpush1.msra.mxu0 %v9246
      %9528 = vmatprep.subr.mxu0 0.0
      %9529 = vmatpush1.msra.mxu0 %v9247
      %9530 = vmatprep.subr.mxu0 0.0
      %9531 = vmatpush1.msra.mxu0 %v9248
      %9532 = vmatprep.subr.mxu0 0.0
      %9533 = vmatpush1.msra.mxu0 %v9249
      %9534 = vmatprep.subr.mxu0 0.0
      %9535 = vmatpush1.msra.mxu0 %v9250
      %9536 = vmatprep.subr.mxu0 0.0
      %9537 = vmatpush1.msra.mxu0 %v9251
      %9538 = vmatprep.subr.mxu0 0.0
      %9539 = vmatpush1.msra.mxu0 %v9252
      %9540 = vmatprep.mubr.f32.mxu0 %v9326
      %9541 = vmatmul.mubr.f32.gmra.mrb[0].mxu0 %v9318
      %v9542 = vpop.f32.mrb[0].mxu0
      %v9543 = vadd.f32 %v9473, %v9542
      %v9544 = vpop.f32.mrb[0].mxu0
      %9545 = vdwg.mxu0
      %9546 = vmatprep.subr.mxu0 0.0
      %9547 = vmatpush1.msra.mxu0 %v9253
      %9548 = vmatprep.subr.mxu0 0.0
      %9549 = vmatpush1.msra.mxu0 %v9254
      %9550 = vmatprep.subr.mxu0 0.0
      %9551 = vmatpush1.msra.mxu0 %v9255
      %9552 = vmatprep.subr.mxu0 0.0
      %9553 = vmatpush1.msra.mxu0 %v9256
      %9554 = vmatprep.subr.mxu0 0.0
      %9555 = vmatpush1.msra.mxu0 %v9257
      %9556 = vmatprep.subr.mxu0 0.0
      %9557 = vmatpush1.msra.mxu0 %v9258
      %9558 = vmatprep.subr.mxu0 0.0
      %9559 = vmatpush1.msra.mxu0 %v9259
      %9560 = vmatprep.subr.mxu0 0.0
      %9561 = vmatpush1.msra.mxu0 %v9260
      %9562 = vmatprep.subr.mxu0 0.0
      %9563 = vmatpush1.msra.mxu0 %v9261
      %9564 = vmatprep.subr.mxu0 0.0
      %9565 = vmatpush1.msra.mxu0 %v9262
      %9566 = vmatprep.subr.mxu0 0.0
      %9567 = vmatpush1.msra.mxu0 %v9263
      %9568 = vmatprep.subr.mxu0 0.0
      %9569 = vmatpush1.msra.mxu0 %v9264
      %9570 = vmatprep.subr.mxu0 0.0
      %9571 = vmatpush1.msra.mxu0 %v9265
      %9572 = vmatprep.subr.mxu0 0.0
      %9573 = vmatpush1.msra.mxu0 %v9266
      %9574 = vmatprep.subr.mxu0 0.0
      %9575 = vmatpush1.msra.mxu0 %v9267
      %9576 = vmatprep.subr.mxu0 0.0
      %9577 = vmatpush1.msra.mxu0 %v9268
      %9578 = vmatprep.subr.mxu0 0.0
      %9579 = vmatpush1.msra.mxu0 %v9269
      %9580 = vmatprep.subr.mxu0 0.0
      %9581 = vmatpush1.msra.mxu0 %v9270
      %9582 = vmatprep.subr.mxu0 0.0
      %9583 = vmatpush1.msra.mxu0 %v9271
      %9584 = vmatprep.subr.mxu0 0.0
      %9585 = vmatpush1.msra.mxu0 %v9272
      %9586 = vmatprep.subr.mxu0 0.0
      %9587 = vmatpush1.msra.mxu0 %v9273
      %9588 = vmatprep.subr.mxu0 0.0
      %9589 = vmatpush1.msra.mxu0 %v9274
      %9590 = vmatprep.subr.mxu0 0.0
      %9591 = vmatpush1.msra.mxu0 %v9275
      %9592 = vmatprep.subr.mxu0 0.0
      %9593 = vmatpush1.msra.mxu0 %v9276
      %9594 = vmatprep.subr.mxu0 0.0
      %9595 = vmatpush1.msra.mxu0 %v9277
      %9596 = vmatprep.subr.mxu0 0.0
      %9597 = vmatpush1.msra.mxu0 %v9278
      %9598 = vmatprep.subr.mxu0 0.0
      %9599 = vmatpush1.msra.mxu0 %v9279
      %9600 = vmatprep.subr.mxu0 0.0
      %9601 = vmatpush1.msra.mxu0 %v9280
      %9602 = vmatprep.subr.mxu0 0.0
      %9603 = vmatpush1.msra.mxu0 %v9281
      %9604 = vmatprep.subr.mxu0 0.0
      %9605 = vmatpush1.msra.mxu0 %v9282
      %9606 = vmatprep.subr.mxu0 0.0
      %9607 = vmatpush1.msra.mxu0 %v9283
      %9608 = vmatprep.subr.mxu0 0.0
      %9609 = vmatpush1.msra.mxu0 %v9284
      %9610 = vmatprep.mubr.f32.mxu0 %v9327
      %9611 = vmatmul.mubr.f32.gmra.mrb[0].mxu0 %v9325
      %v9612 = vpop.f32.mrb[0].mxu0
      %v9613 = vadd.f32 %v9543, %v9612
      %v9614 = vpop.f32.mrb[0].mxu0
      %9615 = vdwg.mxu0
      %v9618 = vunpack.c.l.s4 1966171168
      %v9619 = vunpack.c.0.s8 %v9618
      %v9620 = vlaneseq
      %v9621 = vshrl.u32 %v9620, 7
      %v9622 = vsub.s32 %v9619, %v9621
      %v9623 = vrot.slane %v9613, %v9622
      %v9624 = vcombine.high %v9623, %v9623
      %v9626 = vunpack.c.l.s4 1966171168
      %v9627 = vunpack.c.0.s8 %v9626
      %v9628 = vlaneseq
      %v9629 = vshrl.u32 %v9628, 7
      %v9630 = vsub.s32 %v9627, %v9629
      %v9631 = vrot.slane %v9623, %v9630
      %v9633 = vunpack.c.l.s4 1966171168
      %v9634 = vunpack.c.0.s8 %v9633
      %v9635 = vlaneseq
      %v9636 = vshrl.u32 %v9635, 7
      %v9637 = vsub.s32 %v9634, %v9636
      %v9638 = vrot.slane %v9624, %v9637
      %9641 = vst [vmem:[%s335] sm:$0x1] %v9631
      %9642 = vst [vmem:[%s335 + $0x1] sm:$0x1] %v9638
      %s9643 = smul.u32 2, %s20
      %p9644 = scmp.lt.s32.totalorder %s9643, 3
      %s9645 = scalar_select %p9644, %s9643, 3
      %s9646 = scalar_lea.vmem %s9, %s9645
      // Predicated region
      $region57: #{_lambda_.1} parent=55 // pred_check
        %p9647 = pneg %p232
      $region58: #{_lambda_.1} parent=55 // pred_check_branch
        %9649 = sbr.rel (%p9647) target = $region60
      $region59: #{_lambda_.1} parent=55 // pred_region
        %s9650 = smul.u32 2, %s20
      $region60: #{_lambda_.1} parent=55 // pred_fallthru
        _
    $region56: #{_lambda_.1} parent=5 // pred_fallthru
      _
    %p9651 = scmp.le.s32.totalorder 2, %s15
    // Predicated region
    $region61: #{_lambda_.1} parent=5 // pred_check
      %p9652 = pneg %p9651
    $region62: #{_lambda_.1} parent=5 // pred_check_branch
      %9654 = sbr.rel (%p9652) target = $region64
    $region63: #{_lambda_.1} parent=5 // pred_region
      %s9655 = ssub.s32 %s15, 2
      // Predicated region
      $region65: #{_lambda_.1} parent=63 // pred_check
        %p9656 = pneg %p238
      $region66: #{_lambda_.1} parent=63 // pred_check_branch
        %9658 = sbr.rel (%p9656) target = $region68
      $region67: #{_lambda_.1} parent=63 // pred_region
        %s9659 = smul.u32 2, %s21
        %p9660 = scmp.lt.s32.totalorder %s9659, 3
        %s9661 = scalar_select %p9660, %s9659, 3
        %s9662 = scalar_lea.vmem %s9, %s9661
      $region68: #{_lambda_.1} parent=63 // pred_fallthru
        _
    $region64: #{_lambda_.1} parent=5 // pred_fallthru
      _
  $region6: #{_lambda_.1} parent=0 // loop_footer
    %s19 = sadd.s32 1, %s15
  $region7: #{_lambda_.1} parent=0 // loop_footer_branch
    %14 = sbr.rel target = $region3
  $region8: #{_lambda_.1} parent=0 // loop_exit
    _

</llo_original>
